<compile_context>
chip_gen: v7x
topology: tpu7x:2x2x1
jax: 0.10.0
libtpu: 0.0.40
codegen_flags: <defaults>
</compile_context>

<pallas_src>
import jax
import jax.numpy as jnp
from jax.experimental import pallas as pl
from jax.experimental.pallas import tpu as pltpu

# ---- config (mirrors the PyTorch module constants) ----
N_EMBD = 128
N_HEAD = 6
HEAD_SIZE = N_EMBD // N_HEAD          # 21 (so concat width = 126, proj: 126 -> 128)
HEAD_PAD = 128                        # lane-aligned per-head slot width
N_LAYER = 6
VOCAB_SIZE = 512 + 2                  # 514
VOCAB_PAD = 640                       # next multiple of 128 (lane-dense lm_head)
BLOCK_SIZE = 256
LN_EPS = 1e-5
ATTN_SCALE = HEAD_SIZE ** (-0.5)      # k.shape[-1] ** -0.5 in the reference
MM_DTYPE = jnp.bfloat16               # MXU operand dtype (f32 accumulation everywhere)

QKV_W = 3 * N_HEAD * HEAD_PAD         # 2304
K_OFF = N_HEAD * HEAD_PAD             # 768
V_OFF = 2 * N_HEAD * HEAD_PAD         # 1536


def _round_up(x, m):
    return ((x + m - 1) // m) * m


# ---------------------------------------------------------------------------
# In-kernel helpers
# ---------------------------------------------------------------------------
def _layernorm(x, g, b):
    # x: (M, C) f32; g/b: (1, C) f32.  Biased variance (matches torch LayerNorm).
    mean = jnp.mean(x, axis=-1, keepdims=True)
    xc = x - mean
    var = jnp.mean(xc * xc, axis=-1, keepdims=True)
    return xc * jax.lax.rsqrt(var + LN_EPS) * g + b


# ---------------------------------------------------------------------------
# Pallas kernels
# ---------------------------------------------------------------------------
def _block_kernel(x_ref, ln1g_ref, ln1b_ref, wqkv_ref, wo_ref, bo_ref,
                  ln2g_ref, ln2b_ref, w1_ref, b1_ref, w2_ref, b2_ref, o_ref):
    """One full transformer block for one batch element, resident in VMEM."""
    x = x_ref[0].astype(jnp.float32)                       # (T, C)
    t = x.shape[0]

    # ---- LayerNorm 1 fused into the (padded, fused) QKV projection ----
    h = _layernorm(x, ln1g_ref[...], ln1b_ref[...])        # (T, C) f32
    qkv = jnp.dot(h.astype(MM_DTYPE), wqkv_ref[...],
                  preferred_element_type=jnp.float32)      # (T, 2304)

    # causal mask shared by all heads
    row = jax.lax.broadcasted_iota(jnp.int32, (t, t), 0)
    col = jax.lax.broadcasted_iota(jnp.int32, (t, t), 1)
    causal = col <= row

    wo_full = wo_ref[...]                                  # (768, C) bf16

    acc = jnp.zeros((t, N_EMBD), jnp.float32)
    for hh in range(N_HEAD):
        # lane-aligned 128-wide per-head slots (cols >= HEAD_SIZE are zero)
        q_h = qkv[:, hh * HEAD_PAD:(hh + 1) * HEAD_PAD]
        k_h = qkv[:, K_OFF + hh * HEAD_PAD:K_OFF + (hh + 1) * HEAD_PAD]
        v_h = qkv[:, V_OFF + hh * HEAD_PAD:V_OFF + (hh + 1) * HEAD_PAD]

        # q @ k^T via dot_general on last dims (no explicit transpose);
        # zero-padded lanes contribute nothing to the contraction.
        s = jax.lax.dot_general(
            q_h.astype(MM_DTYPE), k_h.astype(MM_DTYPE),
            (((1,), (1,)), ((), ())),
            preferred_element_type=jnp.float32) * ATTN_SCALE     # (T, T)
        s = jnp.where(causal, s, -jnp.inf)
        m = jnp.max(s, axis=-1, keepdims=True)
        p = jnp.exp(s - m)
        p = p / jnp.sum(p, axis=-1, keepdims=True)               # f32 softmax

        o_h = jnp.dot(p.astype(MM_DTYPE), v_h.astype(MM_DTYPE),
                      preferred_element_type=jnp.float32)        # (T, 128)
        # output projection folded in per head (padded rows of wo are zero)
        acc = acc + jnp.dot(o_h.astype(MM_DTYPE),
                            wo_full[hh * HEAD_PAD:(hh + 1) * HEAD_PAD, :],
                            preferred_element_type=jnp.float32)  # (T, C)

    x = x + acc + bo_ref[...]                                    # residual 1

    # ---- LayerNorm 2 fused into the MLP ----
    h2 = _layernorm(x, ln2g_ref[...], ln2b_ref[...])
    m1 = jnp.dot(h2.astype(MM_DTYPE), w1_ref[...],
                 preferred_element_type=jnp.float32) + b1_ref[...]
    m1 = jnp.maximum(m1, 0.0)                                    # ReLU
    m2 = jnp.dot(m1.astype(MM_DTYPE), w2_ref[...],
                 preferred_element_type=jnp.float32) + b2_ref[...]
    x = x + m2                                                   # residual 2

    o_ref[0] = x.astype(o_ref.dtype)


def _lnf_lmhead_kernel(x_ref, g_ref, b_ref, w_ref, wb_ref, o_ref):
    # final LayerNorm fused into the (padded, lane-dense) lm_head matmul
    h = _layernorm(x_ref[...].astype(jnp.float32), g_ref[...], b_ref[...])
    y = jnp.dot(h.astype(MM_DTYPE), w_ref[...],
                preferred_element_type=jnp.float32) + wb_ref[...]
    o_ref[...] = y.astype(o_ref.dtype)


# ---------------------------------------------------------------------------
# Wrappers (pallas_call plumbing)
# ---------------------------------------------------------------------------
def pallas_transformer_block(x, blk):
    B, T, C = x.shape
    full = lambda b: (0, 0)
    return pl.pallas_call(
        _block_kernel,
        out_shape=jax.ShapeDtypeStruct((B, T, C), x.dtype),
        grid=(B,),
        in_specs=[
            pl.BlockSpec((1, T, C), lambda b: (b, 0, 0)),        # x
            pl.BlockSpec((1, C), full),                          # ln1_g
            pl.BlockSpec((1, C), full),                          # ln1_b
            pl.BlockSpec((C, QKV_W), full),                      # wqkv (padded/fused)
            pl.BlockSpec((N_HEAD * HEAD_PAD, C), full),          # wo (padded)
            pl.BlockSpec((1, C), full),                          # bo
            pl.BlockSpec((1, C), full),                          # ln2_g
            pl.BlockSpec((1, C), full),                          # ln2_b
            pl.BlockSpec((C, 4 * C), full),                      # w1
            pl.BlockSpec((1, 4 * C), full),                      # b1
            pl.BlockSpec((4 * C, C), full),                      # w2
            pl.BlockSpec((1, C), full),                          # b2
        ],
        out_specs=pl.BlockSpec((1, T, C), lambda b: (b, 0, 0)),
        compiler_params=pltpu.CompilerParams(
            dimension_semantics=("parallel",)),
    )(x, blk["ln1_g"], blk["ln1_b"], blk["wqkv_p"], blk["wo_p"], blk["bo"],
      blk["ln2_g"], blk["ln2_b"], blk["w1"], blk["b1"], blk["w2"], blk["b2"])


def pallas_lnf_lmhead(xf, g, b, w_pad, b_pad, tm_max=512):
    M, C = xf.shape
    Np = w_pad.shape[1]
    tm = min(tm_max, _round_up(M, 8))          # M-tiling for the DMA pipeline
    Mp = _round_up(M, tm)
    if Mp != M:
        xf = jnp.pad(xf, ((0, Mp - M), (0, 0)))
    out = pl.pallas_call(
        _lnf_lmhead_kernel,
        out_shape=jax.ShapeDtypeStruct((Mp, Np), jnp.float32),
        grid=(Mp // tm,),
        in_specs=[
            pl.BlockSpec((tm, C), lambda i: (i, 0)),
            pl.BlockSpec((1, C), lambda i: (0, 0)),
            pl.BlockSpec((1, C), lambda i: (0, 0)),
            pl.BlockSpec((C, Np), lambda i: (0, 0)),
            pl.BlockSpec((1, Np), lambda i: (0, 0)),
        ],
        out_specs=pl.BlockSpec((tm, Np), lambda i: (i, 0)),
        compiler_params=pltpu.CompilerParams(
            dimension_semantics=("parallel",)),
    )(xf, g, b, w_pad, b_pad)
    return out[:M]


# ---------------------------------------------------------------------------
# Parameter init (deterministic, matches module semantics; normal(0, 0.02)
# for Linear/Embedding weights, zeros for biases, ones/zeros for LayerNorm).
# Weights are stored pre-padded / pre-fused in the lane-aligned kernel layout.
# ---------------------------------------------------------------------------
def _pad_head_cols(w):
    # (C, N_HEAD*HEAD_SIZE) -> (C, N_HEAD*HEAD_PAD); head h occupies cols
    # [h*HEAD_PAD, h*HEAD_PAD+HEAD_SIZE), rest zero.
    parts = []
    for h in range(N_HEAD):
        blk = w[:, h * HEAD_SIZE:(h + 1) * HEAD_SIZE]
        parts.append(jnp.pad(blk, ((0, 0), (0, HEAD_PAD - HEAD_SIZE))))
    return jnp.concatenate(parts, axis=1)


def _pad_head_rows(w):
    # (N_HEAD*HEAD_SIZE, C) -> (N_HEAD*HEAD_PAD, C); head h occupies rows
    # [h*HEAD_PAD, h*HEAD_PAD+HEAD_SIZE), rest zero.
    parts = []
    for h in range(N_HEAD):
        blk = w[h * HEAD_SIZE:(h + 1) * HEAD_SIZE]
        parts.append(jnp.pad(blk, ((0, HEAD_PAD - HEAD_SIZE), (0, 0))))
    return jnp.concatenate(parts, axis=0)


def init_params(key):
    keys = iter(jax.random.split(key, 64))

    def nrm(shape):
        return 0.02 * jax.random.normal(next(keys), shape, dtype=jnp.float32)

    params = {
        "tok_emb": nrm((VOCAB_SIZE, N_EMBD)),
        "pos_emb": nrm((BLOCK_SIZE, N_EMBD)),
        "blocks": [],
        "ln_f_g": jnp.ones((1, N_EMBD), jnp.float32),
        "ln_f_b": jnp.zeros((1, N_EMBD), jnp.float32),
    }
    lm_w = nrm((N_EMBD, VOCAB_SIZE))
    params["lm_w_p"] = jnp.pad(
        lm_w, ((0, 0), (0, VOCAB_PAD - VOCAB_SIZE))).astype(MM_DTYPE)
    params["lm_b_p"] = jnp.zeros((1, VOCAB_PAD), jnp.float32)

    cat = N_HEAD * HEAD_SIZE  # 126
    for _ in range(N_LAYER):
        wq = nrm((N_EMBD, cat))     # per-head K/Q/V Linears, bias=False
        wk = nrm((N_EMBD, cat))
        wv = nrm((N_EMBD, cat))
        wo = nrm((cat, N_EMBD))     # MultiHeadAttention.proj (126 -> 128)
        params["blocks"].append({
            "ln1_g": jnp.ones((1, N_EMBD), jnp.float32),
            "ln1_b": jnp.zeros((1, N_EMBD), jnp.float32),
            "wqkv_p": jnp.concatenate(
                [_pad_head_cols(wq), _pad_head_cols(wk), _pad_head_cols(wv)],
                axis=1).astype(MM_DTYPE),                        # (128, 2304)
            "wo_p": _pad_head_rows(wo).astype(MM_DTYPE),         # (768, 128)
            "bo": jnp.zeros((1, N_EMBD), jnp.float32),
            "ln2_g": jnp.ones((1, N_EMBD), jnp.float32),
            "ln2_b": jnp.zeros((1, N_EMBD), jnp.float32),
            "w1": nrm((N_EMBD, 4 * N_EMBD)).astype(MM_DTYPE),
            "b1": jnp.zeros((1, 4 * N_EMBD), jnp.float32),
            "w2": nrm((4 * N_EMBD, N_EMBD)).astype(MM_DTYPE),
            "b2": jnp.zeros((1, N_EMBD), jnp.float32),
        })
    return params


# ---------------------------------------------------------------------------
# Forward pass (targets=None path -> returns logits)
# ---------------------------------------------------------------------------
def gpt_forward(params, idx):
    B, T = idx.shape
    # TODO(synk): embedding gather stays as JAX glue (no clean simple Pallas gather).
    tok = jnp.take(params["tok_emb"], idx, axis=0)        # (B, T, C)
    pos = params["pos_emb"][:T]                           # (T, C)
    x = tok + pos[None, :, :]                             # (B, T, C) f32

    for blk in params["blocks"]:
        x = pallas_transformer_block(x, blk)              # one fused call per layer

    xf = x.reshape(B * T, N_EMBD)
    logits = pallas_lnf_lmhead(xf, params["ln_f_g"], params["ln_f_b"],
                               params["lm_w_p"], params["lm_b_p"])
    return logits[:, :VOCAB_SIZE].reshape(B, T, VOCAB_SIZE)


if __name__ == "__main__":
    B, T = 2, 16   # small seq length (<= block_size)
    key = jax.random.PRNGKey(0)
    idx = jax.random.randint(key, (B, T), 0, VOCAB_SIZE, dtype=jnp.int32)

    params = init_params(jax.random.PRNGKey(1))
    logits = jax.jit(gpt_forward)(params, idx)
    jax.block_until_ready(logits)
    assert logits.shape == (B, T, VOCAB_SIZE)
    assert bool(jnp.all(jnp.isfinite(logits)))
    print("KERNEL_OK")
</pallas_src>

<mosaic_0001>
module attributes {stable_mosaic.version = 11 : i64} {
  func.func @_lnf_lmhead_kernel(%arg0: i32, %arg1: memref<32x128xf32, #tpu.memory_space<vmem>>, %arg2: memref<1x128xf32, #tpu.memory_space<vmem>>, %arg3: memref<1x128xf32, #tpu.memory_space<vmem>>, %arg4: memref<128x640xbf16, #tpu.memory_space<vmem>>, %arg5: memref<1x640xf32, #tpu.memory_space<vmem>>, %arg6: memref<32x640xf32, #tpu.memory_space<vmem>>) attributes {dimension_semantics = [#tpu.dimension_semantics<parallel>], iteration_bounds = array<i64: 1>, scalar_prefetch = 0 : i64, scratch_operands = 0 : i64, tpu.core_type = #tpu.core_type<tc>, window_params = [{transform_indices = @transform_0, window_bounds = array<i64: 32, 128>}, {pipeline_mode = #tpu.pipeline_mode<synchronous>, transform_indices = @transform_1, window_bounds = array<i64: 1, 128>}, {pipeline_mode = #tpu.pipeline_mode<synchronous>, transform_indices = @transform_2, window_bounds = array<i64: 1, 128>}, {pipeline_mode = #tpu.pipeline_mode<synchronous>, transform_indices = @transform_3, window_bounds = array<i64: 128, 640>}, {pipeline_mode = #tpu.pipeline_mode<synchronous>, transform_indices = @transform_4, window_bounds = array<i64: 1, 640>}, {transform_indices = @transform_5, window_bounds = array<i64: 32, 640>}]} {
    %c0 = arith.constant 0 : index
    %c0_0 = arith.constant 0 : index
    %0 = vector.load %arg1[%c0, %c0_0] : memref<32x128xf32, #tpu.memory_space<vmem>>, vector<32x128xf32>
    %c0_1 = arith.constant 0 : index
    %c0_2 = arith.constant 0 : index
    %1 = vector.load %arg2[%c0_1, %c0_2] : memref<1x128xf32, #tpu.memory_space<vmem>>, vector<1x128xf32>
    %c0_3 = arith.constant 0 : index
    %c0_4 = arith.constant 0 : index
    %2 = vector.load %arg3[%c0_3, %c0_4] : memref<1x128xf32, #tpu.memory_space<vmem>>, vector<1x128xf32>
    %cst = arith.constant dense<0.000000e+00> : vector<32xf32>
    %3 = vector.multi_reduction <add>, %0, %cst [1] : vector<32x128xf32> to vector<32xf32>
    %4 = vector.shape_cast %3 : vector<32xf32> to vector<32x1xf32>
    %cst_5 = arith.constant 1.280000e+02 : f32
    %5 = vector.broadcast %cst_5 : f32 to vector<32x1xf32>
    %6 = arith.divf %4, %5 : vector<32x1xf32>
    %7 = vector.broadcast %6 : vector<32x1xf32> to vector<32x128xf32>
    %8 = arith.subf %0, %7 : vector<32x128xf32>
    %9 = arith.mulf %8, %8 : vector<32x128xf32>
    %cst_6 = arith.constant dense<0.000000e+00> : vector<32xf32>
    %10 = vector.multi_reduction <add>, %9, %cst_6 [1] : vector<32x128xf32> to vector<32xf32>
    %11 = vector.shape_cast %10 : vector<32xf32> to vector<32x1xf32>
    %cst_7 = arith.constant 1.280000e+02 : f32
    %12 = vector.broadcast %cst_7 : f32 to vector<32x1xf32>
    %13 = arith.divf %11, %12 : vector<32x1xf32>
    %cst_8 = arith.constant 9.99999974E-6 : f32
    %14 = vector.broadcast %cst_8 : f32 to vector<32x1xf32>
    %15 = arith.addf %13, %14 : vector<32x1xf32>
    %16 = math.rsqrt %15 : vector<32x1xf32>
    %17 = vector.broadcast %16 : vector<32x1xf32> to vector<32x128xf32>
    %18 = arith.mulf %8, %17 : vector<32x128xf32>
    %19 = vector.broadcast %1 : vector<1x128xf32> to vector<32x128xf32>
    %20 = arith.mulf %18, %19 : vector<32x128xf32>
    %21 = vector.broadcast %2 : vector<1x128xf32> to vector<32x128xf32>
    %22 = arith.addf %20, %21 : vector<32x128xf32>
    %23 = arith.truncf %22 : vector<32x128xf32> to vector<32x128xbf16>
    %c0_9 = arith.constant 0 : index
    %c0_10 = arith.constant 0 : index
    %24 = vector.load %arg4[%c0_9, %c0_10] : memref<128x640xbf16, #tpu.memory_space<vmem>>, vector<128x640xbf16>
    %cst_11 = arith.constant dense<0.000000e+00> : vector<32x640xf32>
    %25 = tpu.matmul %23, %24, %cst_11 {dimension_numbers = #tpu.dot_dimension_numbers<[1], [0], [0], [1], [0, 0, 1, 1], [], []>} : vector<32x128xbf16>, vector<128x640xbf16>, vector<32x640xf32> -> vector<32x640xf32>
    %c0_12 = arith.constant 0 : index
    %c0_13 = arith.constant 0 : index
    %26 = vector.load %arg5[%c0_12, %c0_13] : memref<1x640xf32, #tpu.memory_space<vmem>>, vector<1x640xf32>
    %27 = vector.broadcast %26 : vector<1x640xf32> to vector<32x640xf32>
    %28 = arith.addf %25, %27 : vector<32x640xf32>
    %c0_14 = arith.constant 0 : index
    %c0_15 = arith.constant 0 : index
    %29 = vector.load %arg6[%c0_14, %c0_15] : memref<32x640xf32, #tpu.memory_space<vmem>>, vector<32x640xf32>
    tpu.vector_store %arg6[%c0_14, %c0_15], %28 {strides = array<i32>} : memref<32x640xf32, #tpu.memory_space<vmem>>, vector<32x640xf32>,
    return
  }
  func.func @transform_0(%arg0: i32) -> (i32, i32) {
    %c0_i32 = arith.constant 0 : i32
    %c0_i32_0 = arith.constant 0 : i32
    return %arg0, %c0_i32 : i32, i32
  }
  func.func @transform_1(%arg0: i32) -> (i32, i32) {
    %c0_i32 = arith.constant 0 : i32
    %c0_i32_0 = arith.constant 0 : i32
    %c0_i32_1 = arith.constant 0 : i32
    return %c0_i32, %c0_i32_0 : i32, i32
  }
  func.func @transform_2(%arg0: i32) -> (i32, i32) {
    %c0_i32 = arith.constant 0 : i32
    %c0_i32_0 = arith.constant 0 : i32
    %c0_i32_1 = arith.constant 0 : i32
    return %c0_i32, %c0_i32_0 : i32, i32
  }
  func.func @transform_3(%arg0: i32) -> (i32, i32) {
    %c0_i32 = arith.constant 0 : i32
    %c0_i32_0 = arith.constant 0 : i32
    %c0_i32_1 = arith.constant 0 : i32
    return %c0_i32, %c0_i32_0 : i32, i32
  }
  func.func @transform_4(%arg0: i32) -> (i32, i32) {
    %c0_i32 = arith.constant 0 : i32
    %c0_i32_0 = arith.constant 0 : i32
    %c0_i32_1 = arith.constant 0 : i32
    return %c0_i32, %c0_i32_0 : i32, i32
  }
  func.func @transform_5(%arg0: i32) -> (i32, i32) {
    %c0_i32 = arith.constant 0 : i32
    %c0_i32_0 = arith.constant 0 : i32
    return %arg0, %c0_i32 : i32, i32
  }
}

module attributes {stable_mosaic.version = 11 : i64} {
  func.func @_block_kernel(%arg0: i32, %arg1: memref<1x16x128xf32, #tpu.memory_space<vmem>>, %arg2: memref<1x128xf32, #tpu.memory_space<vmem>>, %arg3: memref<1x128xf32, #tpu.memory_space<vmem>>, %arg4: memref<128x2304xbf16, #tpu.memory_space<vmem>>, %arg5: memref<768x128xbf16, #tpu.memory_space<vmem>>, %arg6: memref<1x128xf32, #tpu.memory_space<vmem>>, %arg7: memref<1x128xf32, #tpu.memory_space<vmem>>, %arg8: memref<1x128xf32, #tpu.memory_space<vmem>>, %arg9: memref<128x512xbf16, #tpu.memory_space<vmem>>, %arg10: memref<1x512xf32, #tpu.memory_space<vmem>>, %arg11: memref<512x128xbf16, #tpu.memory_space<vmem>>, %arg12: memref<1x128xf32, #tpu.memory_space<vmem>>, %arg13: memref<1x16x128xf32, #tpu.memory_space<vmem>>) attributes {dimension_semantics = [#tpu.dimension_semantics<parallel>], iteration_bounds = array<i64: 2>, scalar_prefetch = 0 : i64, scratch_operands = 0 : i64, tpu.core_type = #tpu.core_type<tc>, window_params = [{transform_indices = @transform_0, window_bounds = array<i64: 1, 16, 128>}, {pipeline_mode = #tpu.pipeline_mode<synchronous>, transform_indices = @transform_1, window_bounds = array<i64: 1, 128>}, {pipeline_mode = #tpu.pipeline_mode<synchronous>, transform_indices = @transform_2, window_bounds = array<i64: 1, 128>}, {pipeline_mode = #tpu.pipeline_mode<synchronous>, transform_indices = @transform_3, window_bounds = array<i64: 128, 2304>}, {pipeline_mode = #tpu.pipeline_mode<synchronous>, transform_indices = @transform_4, window_bounds = array<i64: 768, 128>}, {pipeline_mode = #tpu.pipeline_mode<synchronous>, transform_indices = @transform_5, window_bounds = array<i64: 1, 128>}, {pipeline_mode = #tpu.pipeline_mode<synchronous>, transform_indices = @transform_6, window_bounds = array<i64: 1, 128>}, {pipeline_mode = #tpu.pipeline_mode<synchronous>, transform_indices = @transform_7, window_bounds = array<i64: 1, 128>}, {pipeline_mode = #tpu.pipeline_mode<synchronous>, transform_indices = @transform_8, window_bounds = array<i64: 128, 512>}, {pipeline_mode = #tpu.pipeline_mode<synchronous>, transform_indices = @transform_9, window_bounds = array<i64: 1, 512>}, {pipeline_mode = #tpu.pipeline_mode<synchronous>, transform_indices = @transform_10, window_bounds = array<i64: 512, 128>}, {pipeline_mode = #tpu.pipeline_mode<synchronous>, transform_indices = @transform_11, window_bounds = array<i64: 1, 128>}, {transform_indices = @transform_12, window_bounds = array<i64: 1, 16, 128>}]} {
    %c0 = arith.constant 0 : index
    %c0_0 = arith.constant 0 : index
    %c0_1 = arith.constant 0 : index
    %0 = vector.load %arg1[%c0, %c0_0, %c0_1] : memref<1x16x128xf32, #tpu.memory_space<vmem>>, vector<1x16x128xf32>
    %1 = vector.shape_cast %0 : vector<1x16x128xf32> to vector<16x128xf32>
    %c0_2 = arith.constant 0 : index
    %c0_3 = arith.constant 0 : index
    %2 = vector.load %arg2[%c0_2, %c0_3] : memref<1x128xf32, #tpu.memory_space<vmem>>, vector<1x128xf32>
    %c0_4 = arith.constant 0 : index
    %c0_5 = arith.constant 0 : index
    %3 = vector.load %arg3[%c0_4, %c0_5] : memref<1x128xf32, #tpu.memory_space<vmem>>, vector<1x128xf32>
    %cst = arith.constant dense<0.000000e+00> : vector<16xf32>
    %4 = vector.multi_reduction <add>, %1, %cst [1] : vector<16x128xf32> to vector<16xf32>
    %5 = vector.shape_cast %4 : vector<16xf32> to vector<16x1xf32>
    %cst_6 = arith.constant 1.280000e+02 : f32
    %6 = vector.broadcast %cst_6 : f32 to vector<16x1xf32>
    %7 = arith.divf %5, %6 : vector<16x1xf32>
    %8 = vector.broadcast %7 : vector<16x1xf32> to vector<16x128xf32>
    %9 = arith.subf %1, %8 : vector<16x128xf32>
    %10 = arith.mulf %9, %9 : vector<16x128xf32>
    %cst_7 = arith.constant dense<0.000000e+00> : vector<16xf32>
    %11 = vector.multi_reduction <add>, %10, %cst_7 [1] : vector<16x128xf32> to vector<16xf32>
    %12 = vector.shape_cast %11 : vector<16xf32> to vector<16x1xf32>
    %cst_8 = arith.constant 1.280000e+02 : f32
    %13 = vector.broadcast %cst_8 : f32 to vector<16x1xf32>
    %14 = arith.divf %12, %13 : vector<16x1xf32>
    %cst_9 = arith.constant 9.99999974E-6 : f32
    %15 = vector.broadcast %cst_9 : f32 to vector<16x1xf32>
    %16 = arith.addf %14, %15 : vector<16x1xf32>
    %17 = math.rsqrt %16 : vector<16x1xf32>
    %18 = vector.broadcast %17 : vector<16x1xf32> to vector<16x128xf32>
    %19 = arith.mulf %9, %18 : vector<16x128xf32>
    %20 = vector.broadcast %2 : vector<1x128xf32> to vector<16x128xf32>
    %21 = arith.mulf %19, %20 : vector<16x128xf32>
    %22 = vector.broadcast %3 : vector<1x128xf32> to vector<16x128xf32>
    %23 = arith.addf %21, %22 : vector<16x128xf32>
    %24 = arith.truncf %23 : vector<16x128xf32> to vector<16x128xbf16>
    %c0_10 = arith.constant 0 : index
    %c0_11 = arith.constant 0 : index
    %25 = vector.load %arg4[%c0_10, %c0_11] : memref<128x2304xbf16, #tpu.memory_space<vmem>>, vector<128x2304xbf16>
    %cst_12 = arith.constant dense<0.000000e+00> : vector<16x2304xf32>
    %26 = tpu.matmul %24, %25, %cst_12 {dimension_numbers = #tpu.dot_dimension_numbers<[1], [0], [0], [1], [0, 0, 1, 1], [], []>} : vector<16x128xbf16>, vector<128x2304xbf16>, vector<16x2304xf32> -> vector<16x2304xf32>
    %27 = tpu.iota {dimensions = array<i32: 0>} : vector<16x16xi32>
    %28 = tpu.iota {dimensions = array<i32: 1>} : vector<16x16xi32>
    %29 = arith.cmpi sle, %28, %27 : vector<16x16xi32>
    %c0_13 = arith.constant 0 : index
    %c0_14 = arith.constant 0 : index
    %30 = vector.load %arg5[%c0_13, %c0_14] : memref<768x128xbf16, #tpu.memory_space<vmem>>, vector<768x128xbf16>
    %cst_15 = arith.constant 0.000000e+00 : f32
    %31 = vector.broadcast %cst_15 : f32 to vector<16x128xf32>
    %32 = vector.extract_strided_slice %26 {offsets = [0, 0], sizes = [16, 128], strides = [1, 1]} : vector<16x2304xf32> to vector<16x128xf32>
    %33 = vector.extract_strided_slice %26 {offsets = [0, 768], sizes = [16, 128], strides = [1, 1]} : vector<16x2304xf32> to vector<16x128xf32>
    %34 = vector.extract_strided_slice %26 {offsets = [0, 1536], sizes = [16, 128], strides = [1, 1]} : vector<16x2304xf32> to vector<16x128xf32>
    %35 = arith.truncf %32 : vector<16x128xf32> to vector<16x128xbf16>
    %36 = arith.truncf %33 : vector<16x128xf32> to vector<16x128xbf16>
    %cst_16 = arith.constant dense<0.000000e+00> : vector<16x16xf32>
    %37 = tpu.matmul %35, %36, %cst_16 {dimension_numbers = #tpu.dot_dimension_numbers<[1], [1], [0], [0], [0, 0, 1, 0], [], []>} : vector<16x128xbf16>, vector<16x128xbf16>, vector<16x16xf32> -> vector<16x16xf32>
    %cst_17 = arith.constant 0.218217894 : f32
    %38 = vector.broadcast %cst_17 : f32 to vector<16x16xf32>
    %39 = arith.mulf %37, %38 : vector<16x16xf32>
    %cst_18 = arith.constant 0xFF800000 : f32
    %40 = vector.broadcast %cst_18 : f32 to vector<16x16xf32>
    %41 = arith.select %29, %39, %40 : vector<16x16xi1>, vector<16x16xf32>
    %cst_19 = arith.constant dense<0xFF800000> : vector<16xf32>
    %42 = vector.multi_reduction <maximumf>, %41, %cst_19 [1] : vector<16x16xf32> to vector<16xf32>
    %43 = vector.shape_cast %42 : vector<16xf32> to vector<16x1xf32>
    %44 = vector.broadcast %43 : vector<16x1xf32> to vector<16x16xf32>
    %45 = arith.subf %41, %44 : vector<16x16xf32>
    %46 = math.exp %45 : vector<16x16xf32>
    %cst_20 = arith.constant dense<0.000000e+00> : vector<16xf32>
    %47 = vector.multi_reduction <add>, %46, %cst_20 [1] : vector<16x16xf32> to vector<16xf32>
    %48 = vector.shape_cast %47 : vector<16xf32> to vector<16x1xf32>
    %49 = vector.broadcast %48 : vector<16x1xf32> to vector<16x16xf32>
    %50 = arith.divf %46, %49 : vector<16x16xf32>
    %51 = arith.truncf %50 : vector<16x16xf32> to vector<16x16xbf16>
    %52 = arith.truncf %34 : vector<16x128xf32> to vector<16x128xbf16>
    %cst_21 = arith.constant dense<0.000000e+00> : vector<16x128xf32>
    %53 = tpu.matmul %51, %52, %cst_21 {dimension_numbers = #tpu.dot_dimension_numbers<[1], [0], [0], [1], [0, 0, 1, 1], [], []>} : vector<16x16xbf16>, vector<16x128xbf16>, vector<16x128xf32> -> vector<16x128xf32>
    %54 = arith.truncf %53 : vector<16x128xf32> to vector<16x128xbf16>
    %55 = vector.extract_strided_slice %30 {offsets = [0, 0], sizes = [128, 128], strides = [1, 1]} : vector<768x128xbf16> to vector<128x128xbf16>
    %cst_22 = arith.constant dense<0.000000e+00> : vector<16x128xf32>
    %56 = tpu.matmul %54, %55, %cst_22 {dimension_numbers = #tpu.dot_dimension_numbers<[1], [0], [0], [1], [0, 0, 1, 1], [], []>} : vector<16x128xbf16>, vector<128x128xbf16>, vector<16x128xf32> -> vector<16x128xf32>
    %57 = arith.addf %31, %56 : vector<16x128xf32>
    %58 = vector.extract_strided_slice %26 {offsets = [0, 128], sizes = [16, 128], strides = [1, 1]} : vector<16x2304xf32> to vector<16x128xf32>
    %59 = vector.extract_strided_slice %26 {offsets = [0, 896], sizes = [16, 128], strides = [1, 1]} : vector<16x2304xf32> to vector<16x128xf32>
    %60 = vector.extract_strided_slice %26 {offsets = [0, 1664], sizes = [16, 128], strides = [1, 1]} : vector<16x2304xf32> to vector<16x128xf32>
    %61 = arith.truncf %58 : vector<16x128xf32> to vector<16x128xbf16>
    %62 = arith.truncf %59 : vector<16x128xf32> to vector<16x128xbf16>
    %cst_23 = arith.constant dense<0.000000e+00> : vector<16x16xf32>
    %63 = tpu.matmul %61, %62, %cst_23 {dimension_numbers = #tpu.dot_dimension_numbers<[1], [1], [0], [0], [0, 0, 1, 0], [], []>} : vector<16x128xbf16>, vector<16x128xbf16>, vector<16x16xf32> -> vector<16x16xf32>
    %cst_24 = arith.constant 0.218217894 : f32
    %64 = vector.broadcast %cst_24 : f32 to vector<16x16xf32>
    %65 = arith.mulf %63, %64 : vector<16x16xf32>
    %cst_25 = arith.constant 0xFF800000 : f32
    %66 = vector.broadcast %cst_25 : f32 to vector<16x16xf32>
    %67 = arith.select %29, %65, %66 : vector<16x16xi1>, vector<16x16xf32>
    %cst_26 = arith.constant dense<0xFF800000> : vector<16xf32>
    %68 = vector.multi_reduction <maximumf>, %67, %cst_26 [1] : vector<16x16xf32> to vector<16xf32>
    %69 = vector.shape_cast %68 : vector<16xf32> to vector<16x1xf32>
    %70 = vector.broadcast %69 : vector<16x1xf32> to vector<16x16xf32>
    %71 = arith.subf %67, %70 : vector<16x16xf32>
    %72 = math.exp %71 : vector<16x16xf32>
    %cst_27 = arith.constant dense<0.000000e+00> : vector<16xf32>
    %73 = vector.multi_reduction <add>, %72, %cst_27 [1] : vector<16x16xf32> to vector<16xf32>
    %74 = vector.shape_cast %73 : vector<16xf32> to vector<16x1xf32>
    %75 = vector.broadcast %74 : vector<16x1xf32> to vector<16x16xf32>
    %76 = arith.divf %72, %75 : vector<16x16xf32>
    %77 = arith.truncf %76 : vector<16x16xf32> to vector<16x16xbf16>
    %78 = arith.truncf %60 : vector<16x128xf32> to vector<16x128xbf16>
    %cst_28 = arith.constant dense<0.000000e+00> : vector<16x128xf32>
    %79 = tpu.matmul %77, %78, %cst_28 {dimension_numbers = #tpu.dot_dimension_numbers<[1], [0], [0], [1], [0, 0, 1, 1], [], []>} : vector<16x16xbf16>, vector<16x128xbf16>, vector<16x128xf32> -> vector<16x128xf32>
    %80 = arith.truncf %79 : vector<16x128xf32> to vector<16x128xbf16>
    %81 = vector.extract_strided_slice %30 {offsets = [128, 0], sizes = [128, 128], strides = [1, 1]} : vector<768x128xbf16> to vector<128x128xbf16>
    %cst_29 = arith.constant dense<0.000000e+00> : vector<16x128xf32>
    %82 = tpu.matmul %80, %81, %cst_29 {dimension_numbers = #tpu.dot_dimension_numbers<[1], [0], [0], [1], [0, 0, 1, 1], [], []>} : vector<16x128xbf16>, vector<128x128xbf16>, vector<16x128xf32> -> vector<16x128xf32>
    %83 = arith.addf %57, %82 : vector<16x128xf32>
    %84 = vector.extract_strided_slice %26 {offsets = [0, 256], sizes = [16, 128], strides = [1, 1]} : vector<16x2304xf32> to vector<16x128xf32>
    %85 = vector.extract_strided_slice %26 {offsets = [0, 1024], sizes = [16, 128], strides = [1, 1]} : vector<16x2304xf32> to vector<16x128xf32>
    %86 = vector.extract_strided_slice %26 {offsets = [0, 1792], sizes = [16, 128], strides = [1, 1]} : vector<16x2304xf32> to vector<16x128xf32>
    %87 = arith.truncf %84 : vector<16x128xf32> to vector<16x128xbf16>
    %88 = arith.truncf %85 : vector<16x128xf32> to vector<16x128xbf16>
    %cst_30 = arith.constant dense<0.000000e+00> : vector<16x16xf32>
    %89 = tpu.matmul %87, %88, %cst_30 {dimension_numbers = #tpu.dot_dimension_numbers<[1], [1], [0], [0], [0, 0, 1, 0], [], []>} : vector<16x128xbf16>, vector<16x128xbf16>, vector<16x16xf32> -> vector<16x16xf32>
    %cst_31 = arith.constant 0.218217894 : f32
    %90 = vector.broadcast %cst_31 : f32 to vector<16x16xf32>
    %91 = arith.mulf %89, %90 : vector<16x16xf32>
    %cst_32 = arith.constant 0xFF800000 : f32
    %92 = vector.broadcast %cst_32 : f32 to vector<16x16xf32>
    %93 = arith.select %29, %91, %92 : vector<16x16xi1>, vector<16x16xf32>
    %cst_33 = arith.constant dense<0xFF800000> : vector<16xf32>
    %94 = vector.multi_reduction <maximumf>, %93, %cst_33 [1] : vector<16x16xf32> to vector<16xf32>
    %95 = vector.shape_cast %94 : vector<16xf32> to vector<16x1xf32>
    %96 = vector.broadcast %95 : vector<16x1xf32> to vector<16x16xf32>
    %97 = arith.subf %93, %96 : vector<16x16xf32>
    %98 = math.exp %97 : vector<16x16xf32>
    %cst_34 = arith.constant dense<0.000000e+00> : vector<16xf32>
    %99 = vector.multi_reduction <add>, %98, %cst_34 [1] : vector<16x16xf32> to vector<16xf32>
    %100 = vector.shape_cast %99 : vector<16xf32> to vector<16x1xf32>
    %101 = vector.broadcast %100 : vector<16x1xf32> to vector<16x16xf32>
    %102 = arith.divf %98, %101 : vector<16x16xf32>
    %103 = arith.truncf %102 : vector<16x16xf32> to vector<16x16xbf16>
    %104 = arith.truncf %86 : vector<16x128xf32> to vector<16x128xbf16>
    %cst_35 = arith.constant dense<0.000000e+00> : vector<16x128xf32>
    %105 = tpu.matmul %103, %104, %cst_35 {dimension_numbers = #tpu.dot_dimension_numbers<[1], [0], [0], [1], [0, 0, 1, 1], [], []>} : vector<16x16xbf16>, vector<16x128xbf16>, vector<16x128xf32> -> vector<16x128xf32>
    %106 = arith.truncf %105 : vector<16x128xf32> to vector<16x128xbf16>
    %107 = vector.extract_strided_slice %30 {offsets = [256, 0], sizes = [128, 128], strides = [1, 1]} : vector<768x128xbf16> to vector<128x128xbf16>
    %cst_36 = arith.constant dense<0.000000e+00> : vector<16x128xf32>
    %108 = tpu.matmul %106, %107, %cst_36 {dimension_numbers = #tpu.dot_dimension_numbers<[1], [0], [0], [1], [0, 0, 1, 1], [], []>} : vector<16x128xbf16>, vector<128x128xbf16>, vector<16x128xf32> -> vector<16x128xf32>
    %109 = arith.addf %83, %108 : vector<16x128xf32>
    %110 = vector.extract_strided_slice %26 {offsets = [0, 384], sizes = [16, 128], strides = [1, 1]} : vector<16x2304xf32> to vector<16x128xf32>
    %111 = vector.extract_strided_slice %26 {offsets = [0, 1152], sizes = [16, 128], strides = [1, 1]} : vector<16x2304xf32> to vector<16x128xf32>
    %112 = vector.extract_strided_slice %26 {offsets = [0, 1920], sizes = [16, 128], strides = [1, 1]} : vector<16x2304xf32> to vector<16x128xf32>
    %113 = arith.truncf %110 : vector<16x128xf32> to vector<16x128xbf16>
    %114 = arith.truncf %111 : vector<16x128xf32> to vector<16x128xbf16>
    %cst_37 = arith.constant dense<0.000000e+00> : vector<16x16xf32>
    %115 = tpu.matmul %113, %114, %cst_37 {dimension_numbers = #tpu.dot_dimension_numbers<[1], [1], [0], [0], [0, 0, 1, 0], [], []>} : vector<16x128xbf16>, vector<16x128xbf16>, vector<16x16xf32> -> vector<16x16xf32>
    %cst_38 = arith.constant 0.218217894 : f32
    %116 = vector.broadcast %cst_38 : f32 to vector<16x16xf32>
    %117 = arith.mulf %115, %116 : vector<16x16xf32>
    %cst_39 = arith.constant 0xFF800000 : f32
    %118 = vector.broadcast %cst_39 : f32 to vector<16x16xf32>
    %119 = arith.select %29, %117, %118 : vector<16x16xi1>, vector<16x16xf32>
    %cst_40 = arith.constant dense<0xFF800000> : vector<16xf32>
    %120 = vector.multi_reduction <maximumf>, %119, %cst_40 [1] : vector<16x16xf32> to vector<16xf32>
    %121 = vector.shape_cast %120 : vector<16xf32> to vector<16x1xf32>
    %122 = vector.broadcast %121 : vector<16x1xf32> to vector<16x16xf32>
    %123 = arith.subf %119, %122 : vector<16x16xf32>
    %124 = math.exp %123 : vector<16x16xf32>
    %cst_41 = arith.constant dense<0.000000e+00> : vector<16xf32>
    %125 = vector.multi_reduction <add>, %124, %cst_41 [1] : vector<16x16xf32> to vector<16xf32>
    %126 = vector.shape_cast %125 : vector<16xf32> to vector<16x1xf32>
    %127 = vector.broadcast %126 : vector<16x1xf32> to vector<16x16xf32>
    %128 = arith.divf %124, %127 : vector<16x16xf32>
    %129 = arith.truncf %128 : vector<16x16xf32> to vector<16x16xbf16>
    %130 = arith.truncf %112 : vector<16x128xf32> to vector<16x128xbf16>
    %cst_42 = arith.constant dense<0.000000e+00> : vector<16x128xf32>
    %131 = tpu.matmul %129, %130, %cst_42 {dimension_numbers = #tpu.dot_dimension_numbers<[1], [0], [0], [1], [0, 0, 1, 1], [], []>} : vector<16x16xbf16>, vector<16x128xbf16>, vector<16x128xf32> -> vector<16x128xf32>
    %132 = arith.truncf %131 : vector<16x128xf32> to vector<16x128xbf16>
    %133 = vector.extract_strided_slice %30 {offsets = [384, 0], sizes = [128, 128], strides = [1, 1]} : vector<768x128xbf16> to vector<128x128xbf16>
    %cst_43 = arith.constant dense<0.000000e+00> : vector<16x128xf32>
    %134 = tpu.matmul %132, %133, %cst_43 {dimension_numbers = #tpu.dot_dimension_numbers<[1], [0], [0], [1], [0, 0, 1, 1], [], []>} : vector<16x128xbf16>, vector<128x128xbf16>, vector<16x128xf32> -> vector<16x128xf32>
    %135 = arith.addf %109, %134 : vector<16x128xf32>
    %136 = vector.extract_strided_slice %26 {offsets = [0, 512], sizes = [16, 128], strides = [1, 1]} : vector<16x2304xf32> to vector<16x128xf32>
    %137 = vector.extract_strided_slice %26 {offsets = [0, 1280], sizes = [16, 128], strides = [1, 1]} : vector<16x2304xf32> to vector<16x128xf32>
    %138 = vector.extract_strided_slice %26 {offsets = [0, 2048], sizes = [16, 128], strides = [1, 1]} : vector<16x2304xf32> to vector<16x128xf32>
    %139 = arith.truncf %136 : vector<16x128xf32> to vector<16x128xbf16>
    %140 = arith.truncf %137 : vector<16x128xf32> to vector<16x128xbf16>
    %cst_44 = arith.constant dense<0.000000e+00> : vector<16x16xf32>
    %141 = tpu.matmul %139, %140, %cst_44 {dimension_numbers = #tpu.dot_dimension_numbers<[1], [1], [0], [0], [0, 0, 1, 0], [], []>} : vector<16x128xbf16>, vector<16x128xbf16>, vector<16x16xf32> -> vector<16x16xf32>
    %cst_45 = arith.constant 0.218217894 : f32
    %142 = vector.broadcast %cst_45 : f32 to vector<16x16xf32>
    %143 = arith.mulf %141, %142 : vector<16x16xf32>
    %cst_46 = arith.constant 0xFF800000 : f32
    %144 = vector.broadcast %cst_46 : f32 to vector<16x16xf32>
    %145 = arith.select %29, %143, %144 : vector<16x16xi1>, vector<16x16xf32>
    %cst_47 = arith.constant dense<0xFF800000> : vector<16xf32>
    %146 = vector.multi_reduction <maximumf>, %145, %cst_47 [1] : vector<16x16xf32> to vector<16xf32>
    %147 = vector.shape_cast %146 : vector<16xf32> to vector<16x1xf32>
    %148 = vector.broadcast %147 : vector<16x1xf32> to vector<16x16xf32>
    %149 = arith.subf %145, %148 : vector<16x16xf32>
    %150 = math.exp %149 : vector<16x16xf32>
    %cst_48 = arith.constant dense<0.000000e+00> : vector<16xf32>
    %151 = vector.multi_reduction <add>, %150, %cst_48 [1] : vector<16x16xf32> to vector<16xf32>
    %152 = vector.shape_cast %151 : vector<16xf32> to vector<16x1xf32>
    %153 = vector.broadcast %152 : vector<16x1xf32> to vector<16x16xf32>
    %154 = arith.divf %150, %153 : vector<16x16xf32>
    %155 = arith.truncf %154 : vector<16x16xf32> to vector<16x16xbf16>
    %156 = arith.truncf %138 : vector<16x128xf32> to vector<16x128xbf16>
    %cst_49 = arith.constant dense<0.000000e+00> : vector<16x128xf32>
    %157 = tpu.matmul %155, %156, %cst_49 {dimension_numbers = #tpu.dot_dimension_numbers<[1], [0], [0], [1], [0, 0, 1, 1], [], []>} : vector<16x16xbf16>, vector<16x128xbf16>, vector<16x128xf32> -> vector<16x128xf32>
    %158 = arith.truncf %157 : vector<16x128xf32> to vector<16x128xbf16>
    %159 = vector.extract_strided_slice %30 {offsets = [512, 0], sizes = [128, 128], strides = [1, 1]} : vector<768x128xbf16> to vector<128x128xbf16>
    %cst_50 = arith.constant dense<0.000000e+00> : vector<16x128xf32>
    %160 = tpu.matmul %158, %159, %cst_50 {dimension_numbers = #tpu.dot_dimension_numbers<[1], [0], [0], [1], [0, 0, 1, 1], [], []>} : vector<16x128xbf16>, vector<128x128xbf16>, vector<16x128xf32> -> vector<16x128xf32>
    %161 = arith.addf %135, %160 : vector<16x128xf32>
    %162 = vector.extract_strided_slice %26 {offsets = [0, 640], sizes = [16, 128], strides = [1, 1]} : vector<16x2304xf32> to vector<16x128xf32>
    %163 = vector.extract_strided_slice %26 {offsets = [0, 1408], sizes = [16, 128], strides = [1, 1]} : vector<16x2304xf32> to vector<16x128xf32>
    %164 = vector.extract_strided_slice %26 {offsets = [0, 2176], sizes = [16, 128], strides = [1, 1]} : vector<16x2304xf32> to vector<16x128xf32>
    %165 = arith.truncf %162 : vector<16x128xf32> to vector<16x128xbf16>
    %166 = arith.truncf %163 : vector<16x128xf32> to vector<16x128xbf16>
    %cst_51 = arith.constant dense<0.000000e+00> : vector<16x16xf32>
    %167 = tpu.matmul %165, %166, %cst_51 {dimension_numbers = #tpu.dot_dimension_numbers<[1], [1], [0], [0], [0, 0, 1, 0], [], []>} : vector<16x128xbf16>, vector<16x128xbf16>, vector<16x16xf32> -> vector<16x16xf32>
    %cst_52 = arith.constant 0.218217894 : f32
    %168 = vector.broadcast %cst_52 : f32 to vector<16x16xf32>
    %169 = arith.mulf %167, %168 : vector<16x16xf32>
    %cst_53 = arith.constant 0xFF800000 : f32
    %170 = vector.broadcast %cst_53 : f32 to vector<16x16xf32>
    %171 = arith.select %29, %169, %170 : vector<16x16xi1>, vector<16x16xf32>
    %cst_54 = arith.constant dense<0xFF800000> : vector<16xf32>
    %172 = vector.multi_reduction <maximumf>, %171, %cst_54 [1] : vector<16x16xf32> to vector<16xf32>
    %173 = vector.shape_cast %172 : vector<16xf32> to vector<16x1xf32>
    %174 = vector.broadcast %173 : vector<16x1xf32> to vector<16x16xf32>
    %175 = arith.subf %171, %174 : vector<16x16xf32>
    %176 = math.exp %175 : vector<16x16xf32>
    %cst_55 = arith.constant dense<0.000000e+00> : vector<16xf32>
    %177 = vector.multi_reduction <add>, %176, %cst_55 [1] : vector<16x16xf32> to vector<16xf32>
    %178 = vector.shape_cast %177 : vector<16xf32> to vector<16x1xf32>
    %179 = vector.broadcast %178 : vector<16x1xf32> to vector<16x16xf32>
    %180 = arith.divf %176, %179 : vector<16x16xf32>
    %181 = arith.truncf %180 : vector<16x16xf32> to vector<16x16xbf16>
    %182 = arith.truncf %164 : vector<16x128xf32> to vector<16x128xbf16>
    %cst_56 = arith.constant dense<0.000000e+00> : vector<16x128xf32>
    %183 = tpu.matmul %181, %182, %cst_56 {dimension_numbers = #tpu.dot_dimension_numbers<[1], [0], [0], [1], [0, 0, 1, 1], [], []>} : vector<16x16xbf16>, vector<16x128xbf16>, vector<16x128xf32> -> vector<16x128xf32>
    %184 = arith.truncf %183 : vector<16x128xf32> to vector<16x128xbf16>
    %185 = vector.extract_strided_slice %30 {offsets = [640, 0], sizes = [128, 128], strides = [1, 1]} : vector<768x128xbf16> to vector<128x128xbf16>
    %cst_57 = arith.constant dense<0.000000e+00> : vector<16x128xf32>
    %186 = tpu.matmul %184, %185, %cst_57 {dimension_numbers = #tpu.dot_dimension_numbers<[1], [0], [0], [1], [0, 0, 1, 1], [], []>} : vector<16x128xbf16>, vector<128x128xbf16>, vector<16x128xf32> -> vector<16x128xf32>
    %187 = arith.addf %161, %186 : vector<16x128xf32>
    %188 = arith.addf %1, %187 : vector<16x128xf32>
    %c0_58 = arith.constant 0 : index
    %c0_59 = arith.constant 0 : index
    %189 = vector.load %arg6[%c0_58, %c0_59] : memref<1x128xf32, #tpu.memory_space<vmem>>, vector<1x128xf32>
    %190 = vector.broadcast %189 : vector<1x128xf32> to vector<16x128xf32>
    %191 = arith.addf %188, %190 : vector<16x128xf32>
    %c0_60 = arith.constant 0 : index
    %c0_61 = arith.constant 0 : index
    %192 = vector.load %arg7[%c0_60, %c0_61] : memref<1x128xf32, #tpu.memory_space<vmem>>, vector<1x128xf32>
    %c0_62 = arith.constant 0 : index
    %c0_63 = arith.constant 0 : index
    %193 = vector.load %arg8[%c0_62, %c0_63] : memref<1x128xf32, #tpu.memory_space<vmem>>, vector<1x128xf32>
    %cst_64 = arith.constant dense<0.000000e+00> : vector<16xf32>
    %194 = vector.multi_reduction <add>, %191, %cst_64 [1] : vector<16x128xf32> to vector<16xf32>
    %195 = vector.shape_cast %194 : vector<16xf32> to vector<16x1xf32>
    %cst_65 = arith.constant 1.280000e+02 : f32
    %196 = vector.broadcast %cst_65 : f32 to vector<16x1xf32>
    %197 = arith.divf %195, %196 : vector<16x1xf32>
    %198 = vector.broadcast %197 : vector<16x1xf32> to vector<16x128xf32>
    %199 = arith.subf %191, %198 : vector<16x128xf32>
    %200 = arith.mulf %199, %199 : vector<16x128xf32>
    %cst_66 = arith.constant dense<0.000000e+00> : vector<16xf32>
    %201 = vector.multi_reduction <add>, %200, %cst_66 [1] : vector<16x128xf32> to vector<16xf32>
    %202 = vector.shape_cast %201 : vector<16xf32> to vector<16x1xf32>
    %cst_67 = arith.constant 1.280000e+02 : f32
    %203 = vector.broadcast %cst_67 : f32 to vector<16x1xf32>
    %204 = arith.divf %202, %203 : vector<16x1xf32>
    %cst_68 = arith.constant 9.99999974E-6 : f32
    %205 = vector.broadcast %cst_68 : f32 to vector<16x1xf32>
    %206 = arith.addf %204, %205 : vector<16x1xf32>
    %207 = math.rsqrt %206 : vector<16x1xf32>
    %208 = vector.broadcast %207 : vector<16x1xf32> to vector<16x128xf32>
    %209 = arith.mulf %199, %208 : vector<16x128xf32>
    %210 = vector.broadcast %192 : vector<1x128xf32> to vector<16x128xf32>
    %211 = arith.mulf %209, %210 : vector<16x128xf32>
    %212 = vector.broadcast %193 : vector<1x128xf32> to vector<16x128xf32>
    %213 = arith.addf %211, %212 : vector<16x128xf32>
    %214 = arith.truncf %213 : vector<16x128xf32> to vector<16x128xbf16>
    %c0_69 = arith.constant 0 : index
    %c0_70 = arith.constant 0 : index
    %215 = vector.load %arg9[%c0_69, %c0_70] : memref<128x512xbf16, #tpu.memory_space<vmem>>, vector<128x512xbf16>
    %cst_71 = arith.constant dense<0.000000e+00> : vector<16x512xf32>
    %216 = tpu.matmul %214, %215, %cst_71 {dimension_numbers = #tpu.dot_dimension_numbers<[1], [0], [0], [1], [0, 0, 1, 1], [], []>} : vector<16x128xbf16>, vector<128x512xbf16>, vector<16x512xf32> -> vector<16x512xf32>
    %c0_72 = arith.constant 0 : index
    %c0_73 = arith.constant 0 : index
    %217 = vector.load %arg10[%c0_72, %c0_73] : memref<1x512xf32, #tpu.memory_space<vmem>>, vector<1x512xf32>
    %218 = vector.broadcast %217 : vector<1x512xf32> to vector<16x512xf32>
    %219 = arith.addf %216, %218 : vector<16x512xf32>
    %cst_74 = arith.constant 0.000000e+00 : f32
    %220 = vector.broadcast %cst_74 : f32 to vector<16x512xf32>
    %221 = arith.maximumf %219, %220 : vector<16x512xf32>
    %222 = arith.truncf %221 : vector<16x512xf32> to vector<16x512xbf16>
    %c0_75 = arith.constant 0 : index
    %c0_76 = arith.constant 0 : index
    %223 = vector.load %arg11[%c0_75, %c0_76] : memref<512x128xbf16, #tpu.memory_space<vmem>>, vector<512x128xbf16>
    %cst_77 = arith.constant dense<0.000000e+00> : vector<16x128xf32>
    %224 = tpu.matmul %222, %223, %cst_77 {dimension_numbers = #tpu.dot_dimension_numbers<[1], [0], [0], [1], [0, 0, 1, 1], [], []>} : vector<16x512xbf16>, vector<512x128xbf16>, vector<16x128xf32> -> vector<16x128xf32>
    %c0_78 = arith.constant 0 : index
    %c0_79 = arith.constant 0 : index
    %225 = vector.load %arg12[%c0_78, %c0_79] : memref<1x128xf32, #tpu.memory_space<vmem>>, vector<1x128xf32>
    %226 = vector.broadcast %225 : vector<1x128xf32> to vector<16x128xf32>
    %227 = arith.addf %224, %226 : vector<16x128xf32>
    %228 = arith.addf %191, %227 : vector<16x128xf32>
    %c0_80 = arith.constant 0 : index
    %c0_81 = arith.constant 0 : index
    %c0_82 = arith.constant 0 : index
    %229 = vector.load %arg13[%c0_80, %c0_81, %c0_82] : memref<1x16x128xf32, #tpu.memory_space<vmem>>, vector<1x16x128xf32>
    %230 = vector.shape_cast %229 : vector<1x16x128xf32> to vector<16x128xf32>
    %231 = vector.shape_cast %228 : vector<16x128xf32> to vector<1x16x128xf32>
    tpu.vector_store %arg13[%c0_80, %c0_81, %c0_82], %231 {strides = array<i32>} : memref<1x16x128xf32, #tpu.memory_space<vmem>>, vector<1x16x128xf32>,
    return
  }
  func.func @transform_0(%arg0: i32) -> (i32, i32, i32) {
    %c0_i32 = arith.constant 0 : i32
    %c0_i32_0 = arith.constant 0 : i32
    %c0_i32_1 = arith.constant 0 : i32
    return %arg0, %c0_i32, %c0_i32_0 : i32, i32, i32
  }
  func.func @transform_1(%arg0: i32) -> (i32, i32) {
    %c0_i32 = arith.constant 0 : i32
    %c0_i32_0 = arith.constant 0 : i32
    %c0_i32_1 = arith.constant 0 : i32
    return %c0_i32, %c0_i32_0 : i32, i32
  }
  func.func @transform_2(%arg0: i32) -> (i32, i32) {
    %c0_i32 = arith.constant 0 : i32
    %c0_i32_0 = arith.constant 0 : i32
    %c0_i32_1 = arith.constant 0 : i32
    return %c0_i32, %c0_i32_0 : i32, i32
  }
  func.func @transform_3(%arg0: i32) -> (i32, i32) {
    %c0_i32 = arith.constant 0 : i32
    %c0_i32_0 = arith.constant 0 : i32
    %c0_i32_1 = arith.constant 0 : i32
    return %c0_i32, %c0_i32_0 : i32, i32
  }
  func.func @transform_4(%arg0: i32) -> (i32, i32) {
    %c0_i32 = arith.constant 0 : i32
    %c0_i32_0 = arith.constant 0 : i32
    %c0_i32_1 = arith.constant 0 : i32
    return %c0_i32, %c0_i32_0 : i32, i32
  }
  func.func @transform_5(%arg0: i32) -> (i32, i32) {
    %c0_i32 = arith.constant 0 : i32
    %c0_i32_0 = arith.constant 0 : i32
    %c0_i32_1 = arith.constant 0 : i32
    return %c0_i32, %c0_i32_0 : i32, i32
  }
  func.func @transform_6(%arg0: i32) -> (i32, i32) {
    %c0_i32 = arith.constant 0 : i32
    %c0_i32_0 = arith.constant 0 : i32
    %c0_i32_1 = arith.constant 0 : i32
    return %c0_i32, %c0_i32_0 : i32, i32
  }
  func.func @transform_7(%arg0: i32) -> (i32, i32) {
    %c0_i32 = arith.constant 0 : i32
    %c0_i32_0 = arith.constant 0 : i32
    %c0_i32_1 = arith.constant 0 : i32
    return %c0_i32, %c0_i32_0 : i32, i32
  }
  func.func @transform_8(%arg0: i32) -> (i32, i32) {
    %c0_i32 = arith.constant 0 : i32
    %c0_i32_0 = arith.constant 0 : i32
    %c0_i32_1 = arith.constant 0 : i32
    return %c0_i32, %c0_i32_0 : i32, i32
  }
  func.func @transform_9(%arg0: i32) -> (i32, i32) {
    %c0_i32 = arith.constant 0 : i32
    %c0_i32_0 = arith.constant 0 : i32
    %c0_i32_1 = arith.constant 0 : i32
    return %c0_i32, %c0_i32_0 : i32, i32
  }
  func.func @transform_10(%arg0: i32) -> (i32, i32) {
    %c0_i32 = arith.constant 0 : i32
    %c0_i32_0 = arith.constant 0 : i32
    %c0_i32_1 = arith.constant 0 : i32
    return %c0_i32, %c0_i32_0 : i32, i32
  }
  func.func @transform_11(%arg0: i32) -> (i32, i32) {
    %c0_i32 = arith.constant 0 : i32
    %c0_i32_0 = arith.constant 0 : i32
    %c0_i32_1 = arith.constant 0 : i32
    return %c0_i32, %c0_i32_0 : i32, i32
  }
  func.func @transform_12(%arg0: i32) -> (i32, i32, i32) {
    %c0_i32 = arith.constant 0 : i32
    %c0_i32_0 = arith.constant 0 : i32
    %c0_i32_1 = arith.constant 0 : i32
    return %arg0, %c0_i32, %c0_i32_0 : i32, i32, i32
  }
}

module attributes {stable_mosaic.version = 11 : i64} {
  func.func @_block_kernel(%arg0: i32, %arg1: memref<1x16x128xf32, #tpu.memory_space<vmem>>, %arg2: memref<1x128xf32, #tpu.memory_space<vmem>>, %arg3: memref<1x128xf32, #tpu.memory_space<vmem>>, %arg4: memref<128x2304xbf16, #tpu.memory_space<vmem>>, %arg5: memref<768x128xbf16, #tpu.memory_space<vmem>>, %arg6: memref<1x128xf32, #tpu.memory_space<vmem>>, %arg7: memref<1x128xf32, #tpu.memory_space<vmem>>, %arg8: memref<1x128xf32, #tpu.memory_space<vmem>>, %arg9: memref<128x512xbf16, #tpu.memory_space<vmem>>, %arg10: memref<1x512xf32, #tpu.memory_space<vmem>>, %arg11: memref<512x128xbf16, #tpu.memory_space<vmem>>, %arg12: memref<1x128xf32, #tpu.memory_space<vmem>>, %arg13: memref<1x16x128xf32, #tpu.memory_space<vmem>>) attributes {dimension_semantics = [#tpu.dimension_semantics<parallel>], iteration_bounds = array<i64: 2>, scalar_prefetch = 0 : i64, scratch_operands = 0 : i64, tpu.core_type = #tpu.core_type<tc>, window_params = [{transform_indices = @transform_0, window_bounds = array<i64: 1, 16, 128>}, {pipeline_mode = #tpu.pipeline_mode<synchronous>, transform_indices = @transform_1, window_bounds = array<i64: 1, 128>}, {pipeline_mode = #tpu.pipeline_mode<synchronous>, transform_indices = @transform_2, window_bounds = array<i64: 1, 128>}, {pipeline_mode = #tpu.pipeline_mode<synchronous>, transform_indices = @transform_3, window_bounds = array<i64: 128, 2304>}, {pipeline_mode = #tpu.pipeline_mode<synchronous>, transform_indices = @transform_4, window_bounds = array<i64: 768, 128>}, {pipeline_mode = #tpu.pipeline_mode<synchronous>, transform_indices = @transform_5, window_bounds = array<i64: 1, 128>}, {pipeline_mode = #tpu.pipeline_mode<synchronous>, transform_indices = @transform_6, window_bounds = array<i64: 1, 128>}, {pipeline_mode = #tpu.pipeline_mode<synchronous>, transform_indices = @transform_7, window_bounds = array<i64: 1, 128>}, {pipeline_mode = #tpu.pipeline_mode<synchronous>, transform_indices = @transform_8, window_bounds = array<i64: 128, 512>}, {pipeline_mode = #tpu.pipeline_mode<synchronous>, transform_indices = @transform_9, window_bounds = array<i64: 1, 512>}, {pipeline_mode = #tpu.pipeline_mode<synchronous>, transform_indices = @transform_10, window_bounds = array<i64: 512, 128>}, {pipeline_mode = #tpu.pipeline_mode<synchronous>, transform_indices = @transform_11, window_bounds = array<i64: 1, 128>}, {transform_indices = @transform_12, window_bounds = array<i64: 1, 16, 128>}]} {
    %c0 = arith.constant 0 : index
    %c0_0 = arith.constant 0 : index
    %c0_1 = arith.constant 0 : index
    %0 = vector.load %arg1[%c0, %c0_0, %c0_1] : memref<1x16x128xf32, #tpu.memory_space<vmem>>, vector<1x16x128xf32>
    %1 = vector.shape_cast %0 : vector<1x16x128xf32> to vector<16x128xf32>
    %c0_2 = arith.constant 0 : index
    %c0_3 = arith.constant 0 : index
    %2 = vector.load %arg2[%c0_2, %c0_3] : memref<1x128xf32, #tpu.memory_space<vmem>>, vector<1x128xf32>
    %c0_4 = arith.constant 0 : index
    %c0_5 = arith.constant 0 : index
    %3 = vector.load %arg3[%c0_4, %c0_5] : memref<1x128xf32, #tpu.memory_space<vmem>>, vector<1x128xf32>
    %cst = arith.constant dense<0.000000e+00> : vector<16xf32>
    %4 = vector.multi_reduction <add>, %1, %cst [1] : vector<16x128xf32> to vector<16xf32>
    %5 = vector.shape_cast %4 : vector<16xf32> to vector<16x1xf32>
    %cst_6 = arith.constant 1.280000e+02 : f32
    %6 = vector.broadcast %cst_6 : f32 to vector<16x1xf32>
    %7 = arith.divf %5, %6 : vector<16x1xf32>
    %8 = vector.broadcast %7 : vector<16x1xf32> to vector<16x128xf32>
    %9 = arith.subf %1, %8 : vector<16x128xf32>
    %10 = arith.mulf %9, %9 : vector<16x128xf32>
    %cst_7 = arith.constant dense<0.000000e+00> : vector<16xf32>
    %11 = vector.multi_reduction <add>, %10, %cst_7 [1] : vector<16x128xf32> to vector<16xf32>
    %12 = vector.shape_cast %11 : vector<16xf32> to vector<16x1xf32>
    %cst_8 = arith.constant 1.280000e+02 : f32
    %13 = vector.broadcast %cst_8 : f32 to vector<16x1xf32>
    %14 = arith.divf %12, %13 : vector<16x1xf32>
    %cst_9 = arith.constant 9.99999974E-6 : f32
    %15 = vector.broadcast %cst_9 : f32 to vector<16x1xf32>
    %16 = arith.addf %14, %15 : vector<16x1xf32>
    %17 = math.rsqrt %16 : vector<16x1xf32>
    %18 = vector.broadcast %17 : vector<16x1xf32> to vector<16x128xf32>
    %19 = arith.mulf %9, %18 : vector<16x128xf32>
    %20 = vector.broadcast %2 : vector<1x128xf32> to vector<16x128xf32>
    %21 = arith.mulf %19, %20 : vector<16x128xf32>
    %22 = vector.broadcast %3 : vector<1x128xf32> to vector<16x128xf32>
    %23 = arith.addf %21, %22 : vector<16x128xf32>
    %24 = arith.truncf %23 : vector<16x128xf32> to vector<16x128xbf16>
    %c0_10 = arith.constant 0 : index
    %c0_11 = arith.constant 0 : index
    %25 = vector.load %arg4[%c0_10, %c0_11] : memref<128x2304xbf16, #tpu.memory_space<vmem>>, vector<128x2304xbf16>
    %cst_12 = arith.constant dense<0.000000e+00> : vector<16x2304xf32>
    %26 = tpu.matmul %24, %25, %cst_12 {dimension_numbers = #tpu.dot_dimension_numbers<[1], [0], [0], [1], [0, 0, 1, 1], [], []>} : vector<16x128xbf16>, vector<128x2304xbf16>, vector<16x2304xf32> -> vector<16x2304xf32>
    %27 = tpu.iota {dimensions = array<i32: 0>} : vector<16x16xi32>
    %28 = tpu.iota {dimensions = array<i32: 1>} : vector<16x16xi32>
    %29 = arith.cmpi sle, %28, %27 : vector<16x16xi32>
    %c0_13 = arith.constant 0 : index
    %c0_14 = arith.constant 0 : index
    %30 = vector.load %arg5[%c0_13, %c0_14] : memref<768x128xbf16, #tpu.memory_space<vmem>>, vector<768x128xbf16>
    %cst_15 = arith.constant 0.000000e+00 : f32
    %31 = vector.broadcast %cst_15 : f32 to vector<16x128xf32>
    %32 = vector.extract_strided_slice %26 {offsets = [0, 0], sizes = [16, 128], strides = [1, 1]} : vector<16x2304xf32> to vector<16x128xf32>
    %33 = vector.extract_strided_slice %26 {offsets = [0, 768], sizes = [16, 128], strides = [1, 1]} : vector<16x2304xf32> to vector<16x128xf32>
    %34 = vector.extract_strided_slice %26 {offsets = [0, 1536], sizes = [16, 128], strides = [1, 1]} : vector<16x2304xf32> to vector<16x128xf32>
    %35 = arith.truncf %32 : vector<16x128xf32> to vector<16x128xbf16>
    %36 = arith.truncf %33 : vector<16x128xf32> to vector<16x128xbf16>
    %cst_16 = arith.constant dense<0.000000e+00> : vector<16x16xf32>
    %37 = tpu.matmul %35, %36, %cst_16 {dimension_numbers = #tpu.dot_dimension_numbers<[1], [1], [0], [0], [0, 0, 1, 0], [], []>} : vector<16x128xbf16>, vector<16x128xbf16>, vector<16x16xf32> -> vector<16x16xf32>
    %cst_17 = arith.constant 0.218217894 : f32
    %38 = vector.broadcast %cst_17 : f32 to vector<16x16xf32>
    %39 = arith.mulf %37, %38 : vector<16x16xf32>
    %cst_18 = arith.constant 0xFF800000 : f32
    %40 = vector.broadcast %cst_18 : f32 to vector<16x16xf32>
    %41 = arith.select %29, %39, %40 : vector<16x16xi1>, vector<16x16xf32>
    %cst_19 = arith.constant dense<0xFF800000> : vector<16xf32>
    %42 = vector.multi_reduction <maximumf>, %41, %cst_19 [1] : vector<16x16xf32> to vector<16xf32>
    %43 = vector.shape_cast %42 : vector<16xf32> to vector<16x1xf32>
    %44 = vector.broadcast %43 : vector<16x1xf32> to vector<16x16xf32>
    %45 = arith.subf %41, %44 : vector<16x16xf32>
    %46 = math.exp %45 : vector<16x16xf32>
    %cst_20 = arith.constant dense<0.000000e+00> : vector<16xf32>
    %47 = vector.multi_reduction <add>, %46, %cst_20 [1] : vector<16x16xf32> to vector<16xf32>
    %48 = vector.shape_cast %47 : vector<16xf32> to vector<16x1xf32>
    %49 = vector.broadcast %48 : vector<16x1xf32> to vector<16x16xf32>
    %50 = arith.divf %46, %49 : vector<16x16xf32>
    %51 = arith.truncf %50 : vector<16x16xf32> to vector<16x16xbf16>
    %52 = arith.truncf %34 : vector<16x128xf32> to vector<16x128xbf16>
    %cst_21 = arith.constant dense<0.000000e+00> : vector<16x128xf32>
    %53 = tpu.matmul %51, %52, %cst_21 {dimension_numbers = #tpu.dot_dimension_numbers<[1], [0], [0], [1], [0, 0, 1, 1], [], []>} : vector<16x16xbf16>, vector<16x128xbf16>, vector<16x128xf32> -> vector<16x128xf32>
    %54 = arith.truncf %53 : vector<16x128xf32> to vector<16x128xbf16>
    %55 = vector.extract_strided_slice %30 {offsets = [0, 0], sizes = [128, 128], strides = [1, 1]} : vector<768x128xbf16> to vector<128x128xbf16>
    %cst_22 = arith.constant dense<0.000000e+00> : vector<16x128xf32>
    %56 = tpu.matmul %54, %55, %cst_22 {dimension_numbers = #tpu.dot_dimension_numbers<[1], [0], [0], [1], [0, 0, 1, 1], [], []>} : vector<16x128xbf16>, vector<128x128xbf16>, vector<16x128xf32> -> vector<16x128xf32>
    %57 = arith.addf %31, %56 : vector<16x128xf32>
    %58 = vector.extract_strided_slice %26 {offsets = [0, 128], sizes = [16, 128], strides = [1, 1]} : vector<16x2304xf32> to vector<16x128xf32>
    %59 = vector.extract_strided_slice %26 {offsets = [0, 896], sizes = [16, 128], strides = [1, 1]} : vector<16x2304xf32> to vector<16x128xf32>
    %60 = vector.extract_strided_slice %26 {offsets = [0, 1664], sizes = [16, 128], strides = [1, 1]} : vector<16x2304xf32> to vector<16x128xf32>
    %61 = arith.truncf %58 : vector<16x128xf32> to vector<16x128xbf16>
    %62 = arith.truncf %59 : vector<16x128xf32> to vector<16x128xbf16>
    %cst_23 = arith.constant dense<0.000000e+00> : vector<16x16xf32>
    %63 = tpu.matmul %61, %62, %cst_23 {dimension_numbers = #tpu.dot_dimension_numbers<[1], [1], [0], [0], [0, 0, 1, 0], [], []>} : vector<16x128xbf16>, vector<16x128xbf16>, vector<16x16xf32> -> vector<16x16xf32>
    %cst_24 = arith.constant 0.218217894 : f32
    %64 = vector.broadcast %cst_24 : f32 to vector<16x16xf32>
    %65 = arith.mulf %63, %64 : vector<16x16xf32>
    %cst_25 = arith.constant 0xFF800000 : f32
    %66 = vector.broadcast %cst_25 : f32 to vector<16x16xf32>
    %67 = arith.select %29, %65, %66 : vector<16x16xi1>, vector<16x16xf32>
    %cst_26 = arith.constant dense<0xFF800000> : vector<16xf32>
    %68 = vector.multi_reduction <maximumf>, %67, %cst_26 [1] : vector<16x16xf32> to vector<16xf32>
    %69 = vector.shape_cast %68 : vector<16xf32> to vector<16x1xf32>
    %70 = vector.broadcast %69 : vector<16x1xf32> to vector<16x16xf32>
    %71 = arith.subf %67, %70 : vector<16x16xf32>
    %72 = math.exp %71 : vector<16x16xf32>
    %cst_27 = arith.constant dense<0.000000e+00> : vector<16xf32>
    %73 = vector.multi_reduction <add>, %72, %cst_27 [1] : vector<16x16xf32> to vector<16xf32>
    %74 = vector.shape_cast %73 : vector<16xf32> to vector<16x1xf32>
    %75 = vector.broadcast %74 : vector<16x1xf32> to vector<16x16xf32>
    %76 = arith.divf %72, %75 : vector<16x16xf32>
    %77 = arith.truncf %76 : vector<16x16xf32> to vector<16x16xbf16>
    %78 = arith.truncf %60 : vector<16x128xf32> to vector<16x128xbf16>
    %cst_28 = arith.constant dense<0.000000e+00> : vector<16x128xf32>
    %79 = tpu.matmul %77, %78, %cst_28 {dimension_numbers = #tpu.dot_dimension_numbers<[1], [0], [0], [1], [0, 0, 1, 1], [], []>} : vector<16x16xbf16>, vector<16x128xbf16>, vector<16x128xf32> -> vector<16x128xf32>
    %80 = arith.truncf %79 : vector<16x128xf32> to vector<16x128xbf16>
    %81 = vector.extract_strided_slice %30 {offsets = [128, 0], sizes = [128, 128], strides = [1, 1]} : vector<768x128xbf16> to vector<128x128xbf16>
    %cst_29 = arith.constant dense<0.000000e+00> : vector<16x128xf32>
    %82 = tpu.matmul %80, %81, %cst_29 {dimension_numbers = #tpu.dot_dimension_numbers<[1], [0], [0], [1], [0, 0, 1, 1], [], []>} : vector<16x128xbf16>, vector<128x128xbf16>, vector<16x128xf32> -> vector<16x128xf32>
    %83 = arith.addf %57, %82 : vector<16x128xf32>
    %84 = vector.extract_strided_slice %26 {offsets = [0, 256], sizes = [16, 128], strides = [1, 1]} : vector<16x2304xf32> to vector<16x128xf32>
    %85 = vector.extract_strided_slice %26 {offsets = [0, 1024], sizes = [16, 128], strides = [1, 1]} : vector<16x2304xf32> to vector<16x128xf32>
    %86 = vector.extract_strided_slice %26 {offsets = [0, 1792], sizes = [16, 128], strides = [1, 1]} : vector<16x2304xf32> to vector<16x128xf32>
    %87 = arith.truncf %84 : vector<16x128xf32> to vector<16x128xbf16>
    %88 = arith.truncf %85 : vector<16x128xf32> to vector<16x128xbf16>
    %cst_30 = arith.constant dense<0.000000e+00> : vector<16x16xf32>
    %89 = tpu.matmul %87, %88, %cst_30 {dimension_numbers = #tpu.dot_dimension_numbers<[1], [1], [0], [0], [0, 0, 1, 0], [], []>} : vector<16x128xbf16>, vector<16x128xbf16>, vector<16x16xf32> -> vector<16x16xf32>
    %cst_31 = arith.constant 0.218217894 : f32
    %90 = vector.broadcast %cst_31 : f32 to vector<16x16xf32>
    %91 = arith.mulf %89, %90 : vector<16x16xf32>
    %cst_32 = arith.constant 0xFF800000 : f32
    %92 = vector.broadcast %cst_32 : f32 to vector<16x16xf32>
    %93 = arith.select %29, %91, %92 : vector<16x16xi1>, vector<16x16xf32>
    %cst_33 = arith.constant dense<0xFF800000> : vector<16xf32>
    %94 = vector.multi_reduction <maximumf>, %93, %cst_33 [1] : vector<16x16xf32> to vector<16xf32>
    %95 = vector.shape_cast %94 : vector<16xf32> to vector<16x1xf32>
    %96 = vector.broadcast %95 : vector<16x1xf32> to vector<16x16xf32>
    %97 = arith.subf %93, %96 : vector<16x16xf32>
    %98 = math.exp %97 : vector<16x16xf32>
    %cst_34 = arith.constant dense<0.000000e+00> : vector<16xf32>
    %99 = vector.multi_reduction <add>, %98, %cst_34 [1] : vector<16x16xf32> to vector<16xf32>
    %100 = vector.shape_cast %99 : vector<16xf32> to vector<16x1xf32>
    %101 = vector.broadcast %100 : vector<16x1xf32> to vector<16x16xf32>
    %102 = arith.divf %98, %101 : vector<16x16xf32>
    %103 = arith.truncf %102 : vector<16x16xf32> to vector<16x16xbf16>
    %104 = arith.truncf %86 : vector<16x128xf32> to vector<16x128xbf16>
    %cst_35 = arith.constant dense<0.000000e+00> : vector<16x128xf32>
    %105 = tpu.matmul %103, %104, %cst_35 {dimension_numbers = #tpu.dot_dimension_numbers<[1], [0], [0], [1], [0, 0, 1, 1], [], []>} : vector<16x16xbf16>, vector<16x128xbf16>, vector<16x128xf32> -> vector<16x128xf32>
    %106 = arith.truncf %105 : vector<16x128xf32> to vector<16x128xbf16>
    %107 = vector.extract_strided_slice %30 {offsets = [256, 0], sizes = [128, 128], strides = [1, 1]} : vector<768x128xbf16> to vector<128x128xbf16>
    %cst_36 = arith.constant dense<0.000000e+00> : vector<16x128xf32>
    %108 = tpu.matmul %106, %107, %cst_36 {dimension_numbers = #tpu.dot_dimension_numbers<[1], [0], [0], [1], [0, 0, 1, 1], [], []>} : vector<16x128xbf16>, vector<128x128xbf16>, vector<16x128xf32> -> vector<16x128xf32>
    %109 = arith.addf %83, %108 : vector<16x128xf32>
    %110 = vector.extract_strided_slice %26 {offsets = [0, 384], sizes = [16, 128], strides = [1, 1]} : vector<16x2304xf32> to vector<16x128xf32>
    %111 = vector.extract_strided_slice %26 {offsets = [0, 1152], sizes = [16, 128], strides = [1, 1]} : vector<16x2304xf32> to vector<16x128xf32>
    %112 = vector.extract_strided_slice %26 {offsets = [0, 1920], sizes = [16, 128], strides = [1, 1]} : vector<16x2304xf32> to vector<16x128xf32>
    %113 = arith.truncf %110 : vector<16x128xf32> to vector<16x128xbf16>
    %114 = arith.truncf %111 : vector<16x128xf32> to vector<16x128xbf16>
    %cst_37 = arith.constant dense<0.000000e+00> : vector<16x16xf32>
    %115 = tpu.matmul %113, %114, %cst_37 {dimension_numbers = #tpu.dot_dimension_numbers<[1], [1], [0], [0], [0, 0, 1, 0], [], []>} : vector<16x128xbf16>, vector<16x128xbf16>, vector<16x16xf32> -> vector<16x16xf32>
    %cst_38 = arith.constant 0.218217894 : f32
    %116 = vector.broadcast %cst_38 : f32 to vector<16x16xf32>
    %117 = arith.mulf %115, %116 : vector<16x16xf32>
    %cst_39 = arith.constant 0xFF800000 : f32
    %118 = vector.broadcast %cst_39 : f32 to vector<16x16xf32>
    %119 = arith.select %29, %117, %118 : vector<16x16xi1>, vector<16x16xf32>
    %cst_40 = arith.constant dense<0xFF800000> : vector<16xf32>
    %120 = vector.multi_reduction <maximumf>, %119, %cst_40 [1] : vector<16x16xf32> to vector<16xf32>
    %121 = vector.shape_cast %120 : vector<16xf32> to vector<16x1xf32>
    %122 = vector.broadcast %121 : vector<16x1xf32> to vector<16x16xf32>
    %123 = arith.subf %119, %122 : vector<16x16xf32>
    %124 = math.exp %123 : vector<16x16xf32>
    %cst_41 = arith.constant dense<0.000000e+00> : vector<16xf32>
    %125 = vector.multi_reduction <add>, %124, %cst_41 [1] : vector<16x16xf32> to vector<16xf32>
    %126 = vector.shape_cast %125 : vector<16xf32> to vector<16x1xf32>
    %127 = vector.broadcast %126 : vector<16x1xf32> to vector<16x16xf32>
    %128 = arith.divf %124, %127 : vector<16x16xf32>
    %129 = arith.truncf %128 : vector<16x16xf32> to vector<16x16xbf16>
    %130 = arith.truncf %112 : vector<16x128xf32> to vector<16x128xbf16>
    %cst_42 = arith.constant dense<0.000000e+00> : vector<16x128xf32>
    %131 = tpu.matmul %129, %130, %cst_42 {dimension_numbers = #tpu.dot_dimension_numbers<[1], [0], [0], [1], [0, 0, 1, 1], [], []>} : vector<16x16xbf16>, vector<16x128xbf16>, vector<16x128xf32> -> vector<16x128xf32>
    %132 = arith.truncf %131 : vector<16x128xf32> to vector<16x128xbf16>
    %133 = vector.extract_strided_slice %30 {offsets = [384, 0], sizes = [128, 128], strides = [1, 1]} : vector<768x128xbf16> to vector<128x128xbf16>
    %cst_43 = arith.constant dense<0.000000e+00> : vector<16x128xf32>
    %134 = tpu.matmul %132, %133, %cst_43 {dimension_numbers = #tpu.dot_dimension_numbers<[1], [0], [0], [1], [0, 0, 1, 1], [], []>} : vector<16x128xbf16>, vector<128x128xbf16>, vector<16x128xf32> -> vector<16x128xf32>
    %135 = arith.addf %109, %134 : vector<16x128xf32>
    %136 = vector.extract_strided_slice %26 {offsets = [0, 512], sizes = [16, 128], strides = [1, 1]} : vector<16x2304xf32> to vector<16x128xf32>
    %137 = vector.extract_strided_slice %26 {offsets = [0, 1280], sizes = [16, 128], strides = [1, 1]} : vector<16x2304xf32> to vector<16x128xf32>
    %138 = vector.extract_strided_slice %26 {offsets = [0, 2048], sizes = [16, 128], strides = [1, 1]} : vector<16x2304xf32> to vector<16x128xf32>
    %139 = arith.truncf %136 : vector<16x128xf32> to vector<16x128xbf16>
    %140 = arith.truncf %137 : vector<16x128xf32> to vector<16x128xbf16>
    %cst_44 = arith.constant dense<0.000000e+00> : vector<16x16xf32>
    %141 = tpu.matmul %139, %140, %cst_44 {dimension_numbers = #tpu.dot_dimension_numbers<[1], [1], [0], [0], [0, 0, 1, 0], [], []>} : vector<16x128xbf16>, vector<16x128xbf16>, vector<16x16xf32> -> vector<16x16xf32>
    %cst_45 = arith.constant 0.218217894 : f32
    %142 = vector.broadcast %cst_45 : f32 to vector<16x16xf32>
    %143 = arith.mulf %141, %142 : vector<16x16xf32>
    %cst_46 = arith.constant 0xFF800000 : f32
    %144 = vector.broadcast %cst_46 : f32 to vector<16x16xf32>
    %145 = arith.select %29, %143, %144 : vector<16x16xi1>, vector<16x16xf32>
    %cst_47 = arith.constant dense<0xFF800000> : vector<16xf32>
    %146 = vector.multi_reduction <maximumf>, %145, %cst_47 [1] : vector<16x16xf32> to vector<16xf32>
    %147 = vector.shape_cast %146 : vector<16xf32> to vector<16x1xf32>
    %148 = vector.broadcast %147 : vector<16x1xf32> to vector<16x16xf32>
    %149 = arith.subf %145, %148 : vector<16x16xf32>
    %150 = math.exp %149 : vector<16x16xf32>
    %cst_48 = arith.constant dense<0.000000e+00> : vector<16xf32>
    %151 = vector.multi_reduction <add>, %150, %cst_48 [1] : vector<16x16xf32> to vector<16xf32>
    %152 = vector.shape_cast %151 : vector<16xf32> to vector<16x1xf32>
    %153 = vector.broadcast %152 : vector<16x1xf32> to vector<16x16xf32>
    %154 = arith.divf %150, %153 : vector<16x16xf32>
    %155 = arith.truncf %154 : vector<16x16xf32> to vector<16x16xbf16>
    %156 = arith.truncf %138 : vector<16x128xf32> to vector<16x128xbf16>
    %cst_49 = arith.constant dense<0.000000e+00> : vector<16x128xf32>
    %157 = tpu.matmul %155, %156, %cst_49 {dimension_numbers = #tpu.dot_dimension_numbers<[1], [0], [0], [1], [0, 0, 1, 1], [], []>} : vector<16x16xbf16>, vector<16x128xbf16>, vector<16x128xf32> -> vector<16x128xf32>
    %158 = arith.truncf %157 : vector<16x128xf32> to vector<16x128xbf16>
    %159 = vector.extract_strided_slice %30 {offsets = [512, 0], sizes = [128, 128], strides = [1, 1]} : vector<768x128xbf16> to vector<128x128xbf16>
    %cst_50 = arith.constant dense<0.000000e+00> : vector<16x128xf32>
    %160 = tpu.matmul %158, %159, %cst_50 {dimension_numbers = #tpu.dot_dimension_numbers<[1], [0], [0], [1], [0, 0, 1, 1], [], []>} : vector<16x128xbf16>, vector<128x128xbf16>, vector<16x128xf32> -> vector<16x128xf32>
    %161 = arith.addf %135, %160 : vector<16x128xf32>
    %162 = vector.extract_strided_slice %26 {offsets = [0, 640], sizes = [16, 128], strides = [1, 1]} : vector<16x2304xf32> to vector<16x128xf32>
    %163 = vector.extract_strided_slice %26 {offsets = [0, 1408], sizes = [16, 128], strides = [1, 1]} : vector<16x2304xf32> to vector<16x128xf32>
    %164 = vector.extract_strided_slice %26 {offsets = [0, 2176], sizes = [16, 128], strides = [1, 1]} : vector<16x2304xf32> to vector<16x128xf32>
    %165 = arith.truncf %162 : vector<16x128xf32> to vector<16x128xbf16>
    %166 = arith.truncf %163 : vector<16x128xf32> to vector<16x128xbf16>
    %cst_51 = arith.constant dense<0.000000e+00> : vector<16x16xf32>
    %167 = tpu.matmul %165, %166, %cst_51 {dimension_numbers = #tpu.dot_dimension_numbers<[1], [1], [0], [0], [0, 0, 1, 0], [], []>} : vector<16x128xbf16>, vector<16x128xbf16>, vector<16x16xf32> -> vector<16x16xf32>
    %cst_52 = arith.constant 0.218217894 : f32
    %168 = vector.broadcast %cst_52 : f32 to vector<16x16xf32>
    %169 = arith.mulf %167, %168 : vector<16x16xf32>
    %cst_53 = arith.constant 0xFF800000 : f32
    %170 = vector.broadcast %cst_53 : f32 to vector<16x16xf32>
    %171 = arith.select %29, %169, %170 : vector<16x16xi1>, vector<16x16xf32>
    %cst_54 = arith.constant dense<0xFF800000> : vector<16xf32>
    %172 = vector.multi_reduction <maximumf>, %171, %cst_54 [1] : vector<16x16xf32> to vector<16xf32>
    %173 = vector.shape_cast %172 : vector<16xf32> to vector<16x1xf32>
    %174 = vector.broadcast %173 : vector<16x1xf32> to vector<16x16xf32>
    %175 = arith.subf %171, %174 : vector<16x16xf32>
    %176 = math.exp %175 : vector<16x16xf32>
    %cst_55 = arith.constant dense<0.000000e+00> : vector<16xf32>
    %177 = vector.multi_reduction <add>, %176, %cst_55 [1] : vector<16x16xf32> to vector<16xf32>
    %178 = vector.shape_cast %177 : vector<16xf32> to vector<16x1xf32>
    %179 = vector.broadcast %178 : vector<16x1xf32> to vector<16x16xf32>
    %180 = arith.divf %176, %179 : vector<16x16xf32>
    %181 = arith.truncf %180 : vector<16x16xf32> to vector<16x16xbf16>
    %182 = arith.truncf %164 : vector<16x128xf32> to vector<16x128xbf16>
    %cst_56 = arith.constant dense<0.000000e+00> : vector<16x128xf32>
    %183 = tpu.matmul %181, %182, %cst_56 {dimension_numbers = #tpu.dot_dimension_numbers<[1], [0], [0], [1], [0, 0, 1, 1], [], []>} : vector<16x16xbf16>, vector<16x128xbf16>, vector<16x128xf32> -> vector<16x128xf32>
    %184 = arith.truncf %183 : vector<16x128xf32> to vector<16x128xbf16>
    %185 = vector.extract_strided_slice %30 {offsets = [640, 0], sizes = [128, 128], strides = [1, 1]} : vector<768x128xbf16> to vector<128x128xbf16>
    %cst_57 = arith.constant dense<0.000000e+00> : vector<16x128xf32>
    %186 = tpu.matmul %184, %185, %cst_57 {dimension_numbers = #tpu.dot_dimension_numbers<[1], [0], [0], [1], [0, 0, 1, 1], [], []>} : vector<16x128xbf16>, vector<128x128xbf16>, vector<16x128xf32> -> vector<16x128xf32>
    %187 = arith.addf %161, %186 : vector<16x128xf32>
    %188 = arith.addf %1, %187 : vector<16x128xf32>
    %c0_58 = arith.constant 0 : index
    %c0_59 = arith.constant 0 : index
    %189 = vector.load %arg6[%c0_58, %c0_59] : memref<1x128xf32, #tpu.memory_space<vmem>>, vector<1x128xf32>
    %190 = vector.broadcast %189 : vector<1x128xf32> to vector<16x128xf32>
    %191 = arith.addf %188, %190 : vector<16x128xf32>
    %c0_60 = arith.constant 0 : index
    %c0_61 = arith.constant 0 : index
    %192 = vector.load %arg7[%c0_60, %c0_61] : memref<1x128xf32, #tpu.memory_space<vmem>>, vector<1x128xf32>
    %c0_62 = arith.constant 0 : index
    %c0_63 = arith.constant 0 : index
    %193 = vector.load %arg8[%c0_62, %c0_63] : memref<1x128xf32, #tpu.memory_space<vmem>>, vector<1x128xf32>
    %cst_64 = arith.constant dense<0.000000e+00> : vector<16xf32>
    %194 = vector.multi_reduction <add>, %191, %cst_64 [1] : vector<16x128xf32> to vector<16xf32>
    %195 = vector.shape_cast %194 : vector<16xf32> to vector<16x1xf32>
    %cst_65 = arith.constant 1.280000e+02 : f32
    %196 = vector.broadcast %cst_65 : f32 to vector<16x1xf32>
    %197 = arith.divf %195, %196 : vector<16x1xf32>
    %198 = vector.broadcast %197 : vector<16x1xf32> to vector<16x128xf32>
    %199 = arith.subf %191, %198 : vector<16x128xf32>
    %200 = arith.mulf %199, %199 : vector<16x128xf32>
    %cst_66 = arith.constant dense<0.000000e+00> : vector<16xf32>
    %201 = vector.multi_reduction <add>, %200, %cst_66 [1] : vector<16x128xf32> to vector<16xf32>
    %202 = vector.shape_cast %201 : vector<16xf32> to vector<16x1xf32>
    %cst_67 = arith.constant 1.280000e+02 : f32
    %203 = vector.broadcast %cst_67 : f32 to vector<16x1xf32>
    %204 = arith.divf %202, %203 : vector<16x1xf32>
    %cst_68 = arith.constant 9.99999974E-6 : f32
    %205 = vector.broadcast %cst_68 : f32 to vector<16x1xf32>
    %206 = arith.addf %204, %205 : vector<16x1xf32>
    %207 = math.rsqrt %206 : vector<16x1xf32>
    %208 = vector.broadcast %207 : vector<16x1xf32> to vector<16x128xf32>
    %209 = arith.mulf %199, %208 : vector<16x128xf32>
    %210 = vector.broadcast %192 : vector<1x128xf32> to vector<16x128xf32>
    %211 = arith.mulf %209, %210 : vector<16x128xf32>
    %212 = vector.broadcast %193 : vector<1x128xf32> to vector<16x128xf32>
    %213 = arith.addf %211, %212 : vector<16x128xf32>
    %214 = arith.truncf %213 : vector<16x128xf32> to vector<16x128xbf16>
    %c0_69 = arith.constant 0 : index
    %c0_70 = arith.constant 0 : index
    %215 = vector.load %arg9[%c0_69, %c0_70] : memref<128x512xbf16, #tpu.memory_space<vmem>>, vector<128x512xbf16>
    %cst_71 = arith.constant dense<0.000000e+00> : vector<16x512xf32>
    %216 = tpu.matmul %214, %215, %cst_71 {dimension_numbers = #tpu.dot_dimension_numbers<[1], [0], [0], [1], [0, 0, 1, 1], [], []>} : vector<16x128xbf16>, vector<128x512xbf16>, vector<16x512xf32> -> vector<16x512xf32>
    %c0_72 = arith.constant 0 : index
    %c0_73 = arith.constant 0 : index
    %217 = vector.load %arg10[%c0_72, %c0_73] : memref<1x512xf32, #tpu.memory_space<vmem>>, vector<1x512xf32>
    %218 = vector.broadcast %217 : vector<1x512xf32> to vector<16x512xf32>
    %219 = arith.addf %216, %218 : vector<16x512xf32>
    %cst_74 = arith.constant 0.000000e+00 : f32
    %220 = vector.broadcast %cst_74 : f32 to vector<16x512xf32>
    %221 = arith.maximumf %219, %220 : vector<16x512xf32>
    %222 = arith.truncf %221 : vector<16x512xf32> to vector<16x512xbf16>
    %c0_75 = arith.constant 0 : index
    %c0_76 = arith.constant 0 : index
    %223 = vector.load %arg11[%c0_75, %c0_76] : memref<512x128xbf16, #tpu.memory_space<vmem>>, vector<512x128xbf16>
    %cst_77 = arith.constant dense<0.000000e+00> : vector<16x128xf32>
    %224 = tpu.matmul %222, %223, %cst_77 {dimension_numbers = #tpu.dot_dimension_numbers<[1], [0], [0], [1], [0, 0, 1, 1], [], []>} : vector<16x512xbf16>, vector<512x128xbf16>, vector<16x128xf32> -> vector<16x128xf32>
    %c0_78 = arith.constant 0 : index
    %c0_79 = arith.constant 0 : index
    %225 = vector.load %arg12[%c0_78, %c0_79] : memref<1x128xf32, #tpu.memory_space<vmem>>, vector<1x128xf32>
    %226 = vector.broadcast %225 : vector<1x128xf32> to vector<16x128xf32>
    %227 = arith.addf %224, %226 : vector<16x128xf32>
    %228 = arith.addf %191, %227 : vector<16x128xf32>
    %c0_80 = arith.constant 0 : index
    %c0_81 = arith.constant 0 : index
    %c0_82 = arith.constant 0 : index
    %229 = vector.load %arg13[%c0_80, %c0_81, %c0_82] : memref<1x16x128xf32, #tpu.memory_space<vmem>>, vector<1x16x128xf32>
    %230 = vector.shape_cast %229 : vector<1x16x128xf32> to vector<16x128xf32>
    %231 = vector.shape_cast %228 : vector<16x128xf32> to vector<1x16x128xf32>
    tpu.vector_store %arg13[%c0_80, %c0_81, %c0_82], %231 {strides = array<i32>} : memref<1x16x128xf32, #tpu.memory_space<vmem>>, vector<1x16x128xf32>,
    return
  }
  func.func @transform_0(%arg0: i32) -> (i32, i32, i32) {
    %c0_i32 = arith.constant 0 : i32
    %c0_i32_0 = arith.constant 0 : i32
    %c0_i32_1 = arith.constant 0 : i32
    return %arg0, %c0_i32, %c0_i32_0 : i32, i32, i32
  }
  func.func @transform_1(%arg0: i32) -> (i32, i32) {
    %c0_i32 = arith.constant 0 : i32
    %c0_i32_0 = arith.constant 0 : i32
    %c0_i32_1 = arith.constant 0 : i32
    return %c0_i32, %c0_i32_0 : i32, i32
  }
  func.func @transform_2(%arg0: i32) -> (i32, i32) {
    %c0_i32 = arith.constant 0 : i32
    %c0_i32_0 = arith.constant 0 : i32
    %c0_i32_1 = arith.constant 0 : i32
    return %c0_i32, %c0_i32_0 : i32, i32
  }
  func.func @transform_3(%arg0: i32) -> (i32, i32) {
    %c0_i32 = arith.constant 0 : i32
    %c0_i32_0 = arith.constant 0 : i32
    %c0_i32_1 = arith.constant 0 : i32
    return %c0_i32, %c0_i32_0 : i32, i32
  }
  func.func @transform_4(%arg0: i32) -> (i32, i32) {
    %c0_i32 = arith.constant 0 : i32
    %c0_i32_0 = arith.constant 0 : i32
    %c0_i32_1 = arith.constant 0 : i32
    return %c0_i32, %c0_i32_0 : i32, i32
  }
  func.func @transform_5(%arg0: i32) -> (i32, i32) {
    %c0_i32 = arith.constant 0 : i32
    %c0_i32_0 = arith.constant 0 : i32
    %c0_i32_1 = arith.constant 0 : i32
    return %c0_i32, %c0_i32_0 : i32, i32
  }
  func.func @transform_6(%arg0: i32) -> (i32, i32) {
    %c0_i32 = arith.constant 0 : i32
    %c0_i32_0 = arith.constant 0 : i32
    %c0_i32_1 = arith.constant 0 : i32
    return %c0_i32, %c0_i32_0 : i32, i32
  }
  func.func @transform_7(%arg0: i32) -> (i32, i32) {
    %c0_i32 = arith.constant 0 : i32
    %c0_i32_0 = arith.constant 0 : i32
    %c0_i32_1 = arith.constant 0 : i32
    return %c0_i32, %c0_i32_0 : i32, i32
  }
  func.func @transform_8(%arg0: i32) -> (i32, i32) {
    %c0_i32 = arith.constant 0 : i32
    %c0_i32_0 = arith.constant 0 : i32
    %c0_i32_1 = arith.constant 0 : i32
    return %c0_i32, %c0_i32_0 : i32, i32
  }
  func.func @transform_9(%arg0: i32) -> (i32, i32) {
    %c0_i32 = arith.constant 0 : i32
    %c0_i32_0 = arith.constant 0 : i32
    %c0_i32_1 = arith.constant 0 : i32
    return %c0_i32, %c0_i32_0 : i32, i32
  }
  func.func @transform_10(%arg0: i32) -> (i32, i32) {
    %c0_i32 = arith.constant 0 : i32
    %c0_i32_0 = arith.constant 0 : i32
    %c0_i32_1 = arith.constant 0 : i32
    return %c0_i32, %c0_i32_0 : i32, i32
  }
  func.func @transform_11(%arg0: i32) -> (i32, i32) {
    %c0_i32 = arith.constant 0 : i32
    %c0_i32_0 = arith.constant 0 : i32
    %c0_i32_1 = arith.constant 0 : i32
    return %c0_i32, %c0_i32_0 : i32, i32
  }
  func.func @transform_12(%arg0: i32) -> (i32, i32, i32) {
    %c0_i32 = arith.constant 0 : i32
    %c0_i32_0 = arith.constant 0 : i32
    %c0_i32_1 = arith.constant 0 : i32
    return %arg0, %c0_i32, %c0_i32_0 : i32, i32, i32
  }
}

</mosaic_0001>

<llo_original>
// kernel: gpt_forward.13
$region0: #{gpt_forward.13}
  #allocation0 [shape = 'u32[]', space=smem, size = 0x4, offset = 0x4, fixed_abs, tag = 'smem constant byte address 0x4 - core index']
  #allocation1 [shape = 'u32[144,128]{1,0:T(1,128)}', space=vmem, size = 0x12000, scoped, tag = 'internal scratch']
  %s0 = inlined_call_operand.vmem [shape: f32[32,128], index: 0, kind: input, shape index: {}]
  %s1 = inlined_call_operand.vmem [shape: f32[1,128], index: 1, kind: input, shape index: {}]
  %s2 = inlined_call_operand.vmem [shape: f32[1,128], index: 2, kind: input, shape index: {}]
  %s3 = inlined_call_operand.vmem [shape: bf16[128,640], index: 3, kind: input, shape index: {}]
  %s4 = inlined_call_operand.vmem [shape: f32[1,640], index: 4, kind: input, shape index: {}]
  %s5 = inlined_call_operand.hbm [shape: f32[32,640], index: 5, kind: output, shape index: {}]
  %s6 = sld [smem:[#allocation0]]
  $region30: #{gpt_forward.13} parent=0
    _
  %s8 = ssub.s32 1, %s6
  %s9 = scalar_select 0, %s8, %s6
  $region1: #{gpt_forward.13} parent=0
    #allocation2 [shape = 'u8[81920]{0}', space=vmem, size = 0x14000, scoped, tag = 'output window, operand 0, single buffered']
    #allocation3 [shape = 's32[1]{0}', space=sflag, size = 0x4, scoped, tag = 'scoped memory for gpt_forward.13']
    %10 = vsyncpa [#allocation3], 0
    // Predicated region
    $region2: #{gpt_forward.13} parent=1 // pred_check
      _
    $region3: #{gpt_forward.13} parent=1 // pred_check_branch
      %12 = sbr.rel (0) target = $region5
    $region4: #{gpt_forward.13} parent=1 // pred_region
      _
    $region5: #{gpt_forward.13} parent=1 // pred_fallthru
      _
    // Predicated region
    $region6: #{gpt_forward.13} parent=1 // pred_check
      _
    $region7: #{gpt_forward.13} parent=1 // pred_check_branch
      %14 = sbr.rel (0) target = $region9
    $region8: #{gpt_forward.13} parent=1 // pred_region
      _
    $region9: #{gpt_forward.13} parent=1 // pred_fallthru
      _
    // Predicated region
    $region10: #{gpt_forward.13} parent=1 // pred_check
      _
    $region11: #{gpt_forward.13} parent=1 // pred_check_branch
      %16 = sbr.rel (0) target = $region13
    $region12: #{gpt_forward.13} parent=1 // pred_region
      _
    $region13: #{gpt_forward.13} parent=1 // pred_fallthru
      _
    // Predicated region
    $region14: #{gpt_forward.13} parent=1 // pred_check
      _
    $region15: #{gpt_forward.13} parent=1 // pred_check_branch
      %18 = sbr.rel (0) target = $region17
    $region16: #{gpt_forward.13} parent=1 // pred_region
      _
    $region17: #{gpt_forward.13} parent=1 // pred_fallthru
      _
    // Predicated region
    $region18: #{gpt_forward.13} parent=1 // pred_check
      _
    $region19: #{gpt_forward.13} parent=1 // pred_check_branch
      %20 = sbr.rel (0) target = $region21
    $region20: #{gpt_forward.13} parent=1 // pred_region
      _
    $region21: #{gpt_forward.13} parent=1 // pred_fallthru
      _
    %v22 = vld [vmem:[%s0] sm:$0xff]
    %v23 = vld [vmem:[%s0 + $0x8] sm:$0xff]
    %v24 = vld [vmem:[%s0 + $0x10] sm:$0xff]
    %v25 = vld [vmem:[%s0 + $0x18] sm:$0xff]
    %v26 = vld [vmem:[%s1] sm:$0x1]
    %v27 = vld [vmem:[%s2] sm:$0x1]
    %28 = vadd.xlane.f32.xlu0 %v22
    %v29 = vpop.xlane.xlu0 %28
    %30 = vadd.xlane.f32.xlu0 %v23
    %v31 = vpop.xlane.xlu0 %30
    %32 = vadd.xlane.f32.xlu0 %v24
    %v33 = vpop.xlane.xlu0 %32
    %34 = vadd.xlane.f32.xlu0 %v25
    %v35 = vpop.xlane.xlu0 %34
    %v36 = vrcp.pop 128.0
    %v37 = vmul.f32 %v29, %v36
    %v38 = vmul.f32 %v31, %v36
    %v39 = vmul.f32 %v33, %v36
    %v40 = vmul.f32 %v35, %v36
    %v41 = vsub.f32 %v22, %v37
    %v42 = vsub.f32 %v23, %v38
    %v43 = vsub.f32 %v24, %v39
    %v44 = vsub.f32 %v25, %v40
    %v45 = vmul.f32 %v41, %v41
    %v46 = vmul.f32 %v42, %v42
    %v47 = vmul.f32 %v43, %v43
    %v48 = vmul.f32 %v44, %v44
    %49 = vadd.xlane.f32.xlu0 %v45
    %v50 = vpop.xlane.xlu0 %49
    %51 = vadd.xlane.f32.xlu0 %v46
    %v52 = vpop.xlane.xlu0 %51
    %53 = vadd.xlane.f32.xlu0 %v47
    %v54 = vpop.xlane.xlu0 %53
    %55 = vadd.xlane.f32.xlu0 %v48
    %v56 = vpop.xlane.xlu0 %55
    %v57 = vmul.f32 %v50, %v36
    %v58 = vmul.f32 %v52, %v36
    %v59 = vmul.f32 %v54, %v36
    %v60 = vmul.f32 %v56, %v36
    %v61 = vadd.f32 %v57, 1e-05
    %v62 = vadd.f32 %v58, 1e-05
    %v63 = vadd.f32 %v59, 1e-05
    %v64 = vadd.f32 %v60, 1e-05
    %v65 = vrsqrt.pop %v61
    %v66 = vrsqrt.pop %v62
    %v67 = vrsqrt.pop %v63
    %v68 = vrsqrt.pop %v64
    %v69 = vmul.f32 %v41, %v65
    %v70 = vmul.f32 %v42, %v66
    %v71 = vmul.f32 %v43, %v67
    %v72 = vmul.f32 %v44, %v68
    %v74 = vlaneseq
    %v75 = vshrl.u32 %v74, 7
    %v76 = vsub.s32 0, %v75
    %v77 = vrot.slane %v26, %v76
    %v79 = vmul.f32 %v69, %v77
    %v80 = vmul.f32 %v70, %v77
    %v81 = vmul.f32 %v71, %v77
    %v82 = vmul.f32 %v72, %v77
    %v84 = vlaneseq
    %v85 = vshrl.u32 %v84, 7
    %v86 = vsub.s32 0, %v85
    %v87 = vrot.slane %v27, %v86
    %v89 = vadd.f32 %v79, %v87
    %v90 = vadd.f32 %v80, %v87
    %v91 = vadd.f32 %v81, %v87
    %v92 = vadd.f32 %v82, %v87
    %v93 = vpack.c.bf16 %v90, %v89
    %v94 = vpack.c.bf16 %v92, %v91
    %v95 = vld [vmem:[%s3] sm:$0xff]
    %v96 = vld [vmem:[%s3 + $0x8] sm:$0xff]
    %v97 = vld [vmem:[%s3 + $0x10] sm:$0xf]
    %v98 = vld [vmem:[%s3 + $0x14] sm:$0xff]
    %v99 = vld [vmem:[%s3 + $0x1c] sm:$0xff]
    %v100 = vld [vmem:[%s3 + $0x24] sm:$0xf]
    %v101 = vld [vmem:[%s3 + $0x28] sm:$0xff]
    %v102 = vld [vmem:[%s3 + $0x30] sm:$0xff]
    %v103 = vld [vmem:[%s3 + $0x38] sm:$0xf]
    %v104 = vld [vmem:[%s3 + $0x3c] sm:$0xff]
    %v105 = vld [vmem:[%s3 + $0x44] sm:$0xff]
    %v106 = vld [vmem:[%s3 + $0x4c] sm:$0xf]
    %v107 = vld [vmem:[%s3 + $0x50] sm:$0xff]
    %v108 = vld [vmem:[%s3 + $0x58] sm:$0xff]
    %v109 = vld [vmem:[%s3 + $0x60] sm:$0xf]
    %v110 = vld [vmem:[%s3 + $0x64] sm:$0xff]
    %v111 = vld [vmem:[%s3 + $0x6c] sm:$0xff]
    %v112 = vld [vmem:[%s3 + $0x74] sm:$0xf]
    %v113 = vld [vmem:[%s3 + $0x78] sm:$0xff]
    %v114 = vld [vmem:[%s3 + $0x80] sm:$0xff]
    %v115 = vld [vmem:[%s3 + $0x88] sm:$0xf]
    %v116 = vld [vmem:[%s3 + $0x8c] sm:$0xff]
    %v117 = vld [vmem:[%s3 + $0x94] sm:$0xff]
    %v118 = vld [vmem:[%s3 + $0x9c] sm:$0xf]
    %v119 = vld [vmem:[%s3 + $0xa0] sm:$0xff]
    %v120 = vld [vmem:[%s3 + $0xa8] sm:$0xff]
    %v121 = vld [vmem:[%s3 + $0xb0] sm:$0xf]
    %v122 = vld [vmem:[%s3 + $0xb4] sm:$0xff]
    %v123 = vld [vmem:[%s3 + $0xbc] sm:$0xff]
    %v124 = vld [vmem:[%s3 + $0xc4] sm:$0xf]
    %v125 = vld [vmem:[%s3 + $0xc8] sm:$0xff]
    %v126 = vld [vmem:[%s3 + $0xd0] sm:$0xff]
    %v127 = vld [vmem:[%s3 + $0xd8] sm:$0xf]
    %v128 = vld [vmem:[%s3 + $0xdc] sm:$0xff]
    %v129 = vld [vmem:[%s3 + $0xe4] sm:$0xff]
    %v130 = vld [vmem:[%s3 + $0xec] sm:$0xf]
    %v131 = vld [vmem:[%s3 + $0xf0] sm:$0xff]
    %v132 = vld [vmem:[%s3 + $0xf8] sm:$0xff]
    %v133 = vld [vmem:[%s3 + $0x100] sm:$0xf]
    %v134 = vld [vmem:[%s3 + $0x104] sm:$0xff]
    %v135 = vld [vmem:[%s3 + $0x10c] sm:$0xff]
    %v136 = vld [vmem:[%s3 + $0x114] sm:$0xf]
    %v137 = vld [vmem:[%s3 + $0x118] sm:$0xff]
    %v138 = vld [vmem:[%s3 + $0x120] sm:$0xff]
    %v139 = vld [vmem:[%s3 + $0x128] sm:$0xf]
    %v140 = vld [vmem:[%s3 + $0x12c] sm:$0xff]
    %v141 = vld [vmem:[%s3 + $0x134] sm:$0xff]
    %v142 = vld [vmem:[%s3 + $0x13c] sm:$0xf]
    %v143 = vld [vmem:[%s4] sm:$0x1f]
    %v145 = vlaneseq
    %v146 = vshrl.u32 %v145, 7
    %v147 = vsub.s32 0, %v146
    %v148 = vrot.slane %v143, %v147
    %v149 = vlaneseq
    %v150 = vshrl.u32 %v149, 7
    %v151 = vsub.s32 1, %v150
    %v152 = vrot.slane %v143, %v151
    %v153 = vlaneseq
    %v154 = vshrl.u32 %v153, 7
    %v155 = vsub.s32 2, %v154
    %v156 = vrot.slane %v143, %v155
    %v157 = vlaneseq
    %v158 = vshrl.u32 %v157, 7
    %v159 = vsub.s32 3, %v158
    %v160 = vrot.slane %v143, %v159
    %v161 = vlaneseq
    %v162 = vshrl.u32 %v161, 7
    %v163 = vsub.s32 4, %v162
    %v164 = vrot.slane %v143, %v163
    %v218 = vunpack.c.l.b16 %v95
    %v219 = vunpack.c.h.b16 %v95
    %v220 = vunpack.c.l.b16 %v96
    %v221 = vunpack.c.h.b16 %v96
    %v222 = vunpack.c.l.b16 %v97
    %v223 = vunpack.c.l.b16 %v98
    %v224 = vunpack.c.h.b16 %v98
    %v225 = vunpack.c.l.b16 %v99
    %v226 = vunpack.c.h.b16 %v99
    %v227 = vunpack.c.l.b16 %v100
    %v228 = vunpack.c.l.b16 %v101
    %v229 = vunpack.c.h.b16 %v101
    %v230 = vunpack.c.l.b16 %v102
    %v231 = vunpack.c.h.b16 %v102
    %v232 = vunpack.c.l.b16 %v103
    %v233 = vunpack.c.l.b16 %v104
    %v234 = vunpack.c.h.b16 %v104
    %v235 = vunpack.c.l.b16 %v105
    %v236 = vunpack.c.h.b16 %v105
    %v237 = vunpack.c.l.b16 %v106
    %v238 = vunpack.c.l.b16 %v107
    %v239 = vunpack.c.h.b16 %v107
    %v240 = vunpack.c.l.b16 %v108
    %v241 = vunpack.c.h.b16 %v108
    %v242 = vunpack.c.l.b16 %v109
    %v243 = vunpack.c.l.b16 %v110
    %v244 = vunpack.c.h.b16 %v110
    %v245 = vunpack.c.l.b16 %v111
    %v246 = vunpack.c.h.b16 %v111
    %v247 = vunpack.c.l.b16 %v112
    %v248 = vunpack.c.l.b16 %v113
    %v249 = vunpack.c.h.b16 %v113
    %v250 = vunpack.c.l.b16 %v114
    %v251 = vunpack.c.h.b16 %v114
    %v252 = vunpack.c.l.b16 %v115
    %v253 = vunpack.c.l.b16 %v116
    %v254 = vunpack.c.h.b16 %v116
    %v255 = vunpack.c.l.b16 %v117
    %v256 = vunpack.c.h.b16 %v117
    %v257 = vunpack.c.l.b16 %v118
    %v258 = vunpack.c.l.b16 %v119
    %v259 = vunpack.c.h.b16 %v119
    %v260 = vunpack.c.l.b16 %v120
    %v261 = vunpack.c.h.b16 %v120
    %v262 = vunpack.c.l.b16 %v121
    %v263 = vunpack.c.l.b16 %v122
    %v264 = vunpack.c.h.b16 %v122
    %v265 = vunpack.c.l.b16 %v123
    %v266 = vunpack.c.h.b16 %v123
    %v267 = vunpack.c.l.b16 %v124
    %v268 = vunpack.c.l.b16 %v125
    %v269 = vunpack.c.h.b16 %v125
    %v270 = vunpack.c.l.b16 %v126
    %v271 = vunpack.c.h.b16 %v126
    %v272 = vunpack.c.l.b16 %v127
    %v273 = vunpack.c.l.b16 %v128
    %v274 = vunpack.c.h.b16 %v128
    %v275 = vunpack.c.l.b16 %v129
    %v276 = vunpack.c.h.b16 %v129
    %v277 = vunpack.c.l.b16 %v130
    %v278 = vunpack.c.l.b16 %v131
    %v279 = vunpack.c.h.b16 %v131
    %v280 = vunpack.c.l.b16 %v132
    %v281 = vunpack.c.h.b16 %v132
    %v282 = vunpack.c.l.b16 %v133
    %v283 = vunpack.c.l.b16 %v134
    %v284 = vunpack.c.h.b16 %v134
    %v285 = vunpack.c.l.b16 %v135
    %v286 = vunpack.c.h.b16 %v135
    %v287 = vunpack.c.l.b16 %v136
    %v288 = vunpack.c.l.b16 %v137
    %v289 = vunpack.c.h.b16 %v137
    %v290 = vunpack.c.l.b16 %v138
    %v291 = vunpack.c.h.b16 %v138
    %v292 = vunpack.c.l.b16 %v139
    %v293 = vunpack.c.l.b16 %v140
    %v294 = vunpack.c.h.b16 %v140
    %v295 = vunpack.c.l.b16 %v141
    %v296 = vunpack.c.h.b16 %v141
    %v297 = vunpack.c.l.b16 %v142
    %v298 = vpack.c.b16 %v223, %v218
    %v299 = vpack.c.b16 %v224, %v219
    %v300 = vpack.c.b16 %v225, %v220
    %v301 = vpack.c.b16 %v226, %v221
    %v302 = vpack.c.b16 %v227, %v222
    %v303 = vpack.c.b16 %v233, %v228
    %v304 = vpack.c.b16 %v234, %v229
    %v305 = vpack.c.b16 %v235, %v230
    %v306 = vpack.c.b16 %v236, %v231
    %v307 = vpack.c.b16 %v237, %v232
    %v308 = vpack.c.b16 %v243, %v238
    %v309 = vpack.c.b16 %v244, %v239
    %v310 = vpack.c.b16 %v245, %v240
    %v311 = vpack.c.b16 %v246, %v241
    %v312 = vpack.c.b16 %v247, %v242
    %v313 = vpack.c.b16 %v253, %v248
    %v314 = vpack.c.b16 %v254, %v249
    %v315 = vpack.c.b16 %v255, %v250
    %v316 = vpack.c.b16 %v256, %v251
    %v317 = vpack.c.b16 %v257, %v252
    %v318 = vpack.c.b16 %v263, %v258
    %v319 = vpack.c.b16 %v264, %v259
    %v320 = vpack.c.b16 %v265, %v260
    %v321 = vpack.c.b16 %v266, %v261
    %v322 = vpack.c.b16 %v267, %v262
    %v323 = vpack.c.b16 %v273, %v268
    %v324 = vpack.c.b16 %v274, %v269
    %v325 = vpack.c.b16 %v275, %v270
    %v326 = vpack.c.b16 %v276, %v271
    %v327 = vpack.c.b16 %v277, %v272
    %v328 = vpack.c.b16 %v283, %v278
    %v329 = vpack.c.b16 %v284, %v279
    %v330 = vpack.c.b16 %v285, %v280
    %v331 = vpack.c.b16 %v286, %v281
    %v332 = vpack.c.b16 %v287, %v282
    %v333 = vpack.c.b16 %v293, %v288
    %v334 = vpack.c.b16 %v294, %v289
    %v335 = vpack.c.b16 %v295, %v290
    %v336 = vpack.c.b16 %v296, %v291
    %v337 = vpack.c.b16 %v297, %v292
    %378 = vmatprep.subr.bf16.mxu0 %v299
    %379 = vmatpush1.bf16.msra.mxu0 %v298
    %380 = vmatprep.subr.bf16.mxu0 %v304
    %381 = vmatpush1.bf16.msra.mxu0 %v303
    %382 = vmatprep.subr.bf16.mxu0 %v309
    %383 = vmatpush1.bf16.msra.mxu0 %v308
    %384 = vmatprep.subr.bf16.mxu0 %v314
    %385 = vmatpush1.bf16.msra.mxu0 %v313
    %386 = vmatprep.subr.bf16.mxu0 %v319
    %387 = vmatpush1.bf16.msra.mxu0 %v318
    %388 = vmatprep.subr.bf16.mxu0 %v324
    %389 = vmatpush1.bf16.msra.mxu0 %v323
    %390 = vmatprep.subr.bf16.mxu0 %v329
    %391 = vmatpush1.bf16.msra.mxu0 %v328
    %392 = vmatprep.subr.bf16.mxu0 %v334
    %393 = vmatpush1.bf16.msra.mxu0 %v333
    %394 = vmatprep.subr.bf16.mxu0 0
    %395 = vmatpush1.bf16.msra.mxu0 0
    %396 = vmatprep.subr.bf16.mxu0 0
    %397 = vmatpush1.bf16.msra.mxu0 0
    %398 = vmatprep.subr.bf16.mxu0 0
    %399 = vmatpush1.bf16.msra.mxu0 0
    %400 = vmatprep.subr.bf16.mxu0 0
    %401 = vmatpush1.bf16.msra.mxu0 0
    %402 = vmatprep.subr.bf16.mxu0 0
    %403 = vmatpush1.bf16.msra.mxu0 0
    %404 = vmatprep.subr.bf16.mxu0 0
    %405 = vmatpush1.bf16.msra.mxu0 0
    %406 = vmatprep.subr.bf16.mxu0 0
    %407 = vmatpush1.bf16.msra.mxu0 0
    %408 = vmatprep.subr.bf16.mxu0 0
    %409 = vmatpush1.bf16.msra.mxu0 0
    %410 = vmatprep.mubr.bf16.mxu0 0
    %411 = vmatmul.mubr.bf16.gmra.mrb[0].mxu0 %v93
    %v412 = vpop.f32.mrb[0].mxu0
    %v413 = vadd.f32 %v148, %v412
    %v414 = vpop.f32.mrb[0].mxu0
    %v415 = vadd.f32 %v152, %v414
    %v416 = vpop.f32.mrb[0].mxu0
    %v417 = vadd.f32 %v148, %v416
    %v418 = vpop.f32.mrb[0].mxu0
    %v419 = vadd.f32 %v152, %v418
    %420 = vmatprep.mubr.bf16.mxu0 0
    %421 = vmatmul.mubr.bf16.gmra.mrb[0].mxu0 %v94
    %v422 = vpop.f32.mrb[0].mxu0
    %v423 = vadd.f32 %v148, %v422
    %v424 = vpop.f32.mrb[0].mxu0
    %v425 = vadd.f32 %v152, %v424
    %v426 = vpop.f32.mrb[0].mxu0
    %v427 = vadd.f32 %v148, %v426
    %v428 = vpop.f32.mrb[0].mxu0
    %v429 = vadd.f32 %v152, %v428
    %430 = vdwg.mxu0
    %431 = vmatprep.subr.bf16.mxu0 %v301
    %432 = vmatpush1.bf16.msra.mxu0 %v300
    %433 = vmatprep.subr.bf16.mxu0 %v306
    %434 = vmatpush1.bf16.msra.mxu0 %v305
    %435 = vmatprep.subr.bf16.mxu0 %v311
    %436 = vmatpush1.bf16.msra.mxu0 %v310
    %437 = vmatprep.subr.bf16.mxu0 %v316
    %438 = vmatpush1.bf16.msra.mxu0 %v315
    %439 = vmatprep.subr.bf16.mxu0 %v321
    %440 = vmatpush1.bf16.msra.mxu0 %v320
    %441 = vmatprep.subr.bf16.mxu0 %v326
    %442 = vmatpush1.bf16.msra.mxu0 %v325
    %443 = vmatprep.subr.bf16.mxu0 %v331
    %444 = vmatpush1.bf16.msra.mxu0 %v330
    %445 = vmatprep.subr.bf16.mxu0 %v336
    %446 = vmatpush1.bf16.msra.mxu0 %v335
    %447 = vmatprep.subr.bf16.mxu0 0
    %448 = vmatpush1.bf16.msra.mxu0 0
    %449 = vmatprep.subr.bf16.mxu0 0
    %450 = vmatpush1.bf16.msra.mxu0 0
    %451 = vmatprep.subr.bf16.mxu0 0
    %452 = vmatpush1.bf16.msra.mxu0 0
    %453 = vmatprep.subr.bf16.mxu0 0
    %454 = vmatpush1.bf16.msra.mxu0 0
    %455 = vmatprep.subr.bf16.mxu0 0
    %456 = vmatpush1.bf16.msra.mxu0 0
    %457 = vmatprep.subr.bf16.mxu0 0
    %458 = vmatpush1.bf16.msra.mxu0 0
    %459 = vmatprep.subr.bf16.mxu0 0
    %460 = vmatpush1.bf16.msra.mxu0 0
    %461 = vmatprep.subr.bf16.mxu0 0
    %462 = vmatpush1.bf16.msra.mxu0 0
    %463 = vmatprep.mubr.bf16.mxu0 0
    %464 = vmatmul.mubr.bf16.gmra.mrb[0].mxu0 %v93
    %v465 = vpop.f32.mrb[0].mxu0
    %v466 = vadd.f32 %v156, %v465
    %v467 = vpop.f32.mrb[0].mxu0
    %v468 = vadd.f32 %v160, %v467
    %v469 = vpop.f32.mrb[0].mxu0
    %v470 = vadd.f32 %v156, %v469
    %v471 = vpop.f32.mrb[0].mxu0
    %v472 = vadd.f32 %v160, %v471
    %473 = vmatprep.mubr.bf16.mxu0 0
    %474 = vmatmul.mubr.bf16.gmra.mrb[0].mxu0 %v94
    %v475 = vpop.f32.mrb[0].mxu0
    %v476 = vadd.f32 %v156, %v475
    %v477 = vpop.f32.mrb[0].mxu0
    %v478 = vadd.f32 %v160, %v477
    %v479 = vpop.f32.mrb[0].mxu0
    %v480 = vadd.f32 %v156, %v479
    %v481 = vpop.f32.mrb[0].mxu0
    %v482 = vadd.f32 %v160, %v481
    %483 = vdwg.mxu0
    %484 = vmatprep.subr.bf16.mxu0 0
    %485 = vmatpush1.bf16.msra.mxu0 %v302
    %486 = vmatprep.subr.bf16.mxu0 0
    %487 = vmatpush1.bf16.msra.mxu0 %v307
    %488 = vmatprep.subr.bf16.mxu0 0
    %489 = vmatpush1.bf16.msra.mxu0 %v312
    %490 = vmatprep.subr.bf16.mxu0 0
    %491 = vmatpush1.bf16.msra.mxu0 %v317
    %492 = vmatprep.subr.bf16.mxu0 0
    %493 = vmatpush1.bf16.msra.mxu0 %v322
    %494 = vmatprep.subr.bf16.mxu0 0
    %495 = vmatpush1.bf16.msra.mxu0 %v327
    %496 = vmatprep.subr.bf16.mxu0 0
    %497 = vmatpush1.bf16.msra.mxu0 %v332
    %498 = vmatprep.subr.bf16.mxu0 0
    %499 = vmatpush1.bf16.msra.mxu0 %v337
    %500 = vmatprep.subr.bf16.mxu0 0
    %501 = vmatpush1.bf16.msra.mxu0 0
    %502 = vmatprep.subr.bf16.mxu0 0
    %503 = vmatpush1.bf16.msra.mxu0 0
    %504 = vmatprep.subr.bf16.mxu0 0
    %505 = vmatpush1.bf16.msra.mxu0 0
    %506 = vmatprep.subr.bf16.mxu0 0
    %507 = vmatpush1.bf16.msra.mxu0 0
    %508 = vmatprep.subr.bf16.mxu0 0
    %509 = vmatpush1.bf16.msra.mxu0 0
    %510 = vmatprep.subr.bf16.mxu0 0
    %511 = vmatpush1.bf16.msra.mxu0 0
    %512 = vmatprep.subr.bf16.mxu0 0
    %513 = vmatpush1.bf16.msra.mxu0 0
    %514 = vmatprep.subr.bf16.mxu0 0
    %515 = vmatpush1.bf16.msra.mxu0 0
    %516 = vmatprep.mubr.bf16.mxu0 0
    %517 = vmatmul.mubr.bf16.gmra.mrb[0].mxu0 %v93
    %v518 = vpop.f32.mrb[0].mxu0
    %v519 = vadd.f32 %v164, %v518
    %v520 = vpop.f32.mrb[0].mxu0
    %v521 = vpop.f32.mrb[0].mxu0
    %v522 = vadd.f32 %v164, %v521
    %v523 = vpop.f32.mrb[0].mxu0
    %524 = vmatprep.mubr.bf16.mxu0 0
    %525 = vmatmul.mubr.bf16.gmra.mrb[0].mxu0 %v94
    %v526 = vpop.f32.mrb[0].mxu0
    %v527 = vadd.f32 %v164, %v526
    %v528 = vpop.f32.mrb[0].mxu0
    %v529 = vpop.f32.mrb[0].mxu0
    %v530 = vadd.f32 %v164, %v529
    %v531 = vpop.f32.mrb[0].mxu0
    %532 = vdwg.mxu0
    %533 = vst [vmem:[#allocation2] sm:$0xff] %v413
    %534 = vst [vmem:[#allocation2 + $0x8] sm:$0xff] %v415
    %535 = vst [vmem:[#allocation2 + $0x10] sm:$0xff] %v466
    %536 = vst [vmem:[#allocation2 + $0x18] sm:$0xff] %v468
    %537 = vst [vmem:[#allocation2 + $0x20] sm:$0xff] %v519
    %538 = vst [vmem:[#allocation2 + $0x28] sm:$0xff] %v417
    %539 = vst [vmem:[#allocation2 + $0x30] sm:$0xff] %v419
    %540 = vst [vmem:[#allocation2 + $0x38] sm:$0xff] %v470
    %541 = vst [vmem:[#allocation2 + $0x40] sm:$0xff] %v472
    %542 = vst [vmem:[#allocation2 + $0x48] sm:$0xff] %v522
    %543 = vst [vmem:[#allocation2 + $0x50] sm:$0xff] %v423
    %544 = vst [vmem:[#allocation2 + $0x58] sm:$0xff] %v425
    %545 = vst [vmem:[#allocation2 + $0x60] sm:$0xff] %v476
    %546 = vst [vmem:[#allocation2 + $0x68] sm:$0xff] %v478
    %547 = vst [vmem:[#allocation2 + $0x70] sm:$0xff] %v527
    %548 = vst [vmem:[#allocation2 + $0x78] sm:$0xff] %v427
    %549 = vst [vmem:[#allocation2 + $0x80] sm:$0xff] %v429
    %550 = vst [vmem:[#allocation2 + $0x88] sm:$0xff] %v480
    %551 = vst [vmem:[#allocation2 + $0x90] sm:$0xff] %v482
    %552 = vst [vmem:[#allocation2 + $0x98] sm:$0xff] %v530
    // Predicated region
    $region22: #{gpt_forward.13} parent=1 // pred_check
      _
    $region23: #{gpt_forward.13} parent=1 // pred_check_branch
      %554 = sbr.rel (0) target = $region25
    $region24: #{gpt_forward.13} parent=1 // pred_region
      %s556 = ssub.s32 2560, 2560
      %557 = vsyncadd [#allocation3], %s556
      %s558 = sshll.u32 [#allocation2], 4
      %s559 = int_to_ptr.vmem [resolvable:$true] %s558
      %564 = dma.vmem_to_hbm [thread:$0]  %s559, 2560, %s5, [#allocation3], 640, 640, 40
    $region25: #{gpt_forward.13} parent=1 // pred_fallthru
      _
    // Predicated region
    $region26: #{gpt_forward.13} parent=1 // pred_check
      _
    $region27: #{gpt_forward.13} parent=1 // pred_check_branch
      %566 = sbr.rel (0) target = $region29
    $region28: #{gpt_forward.13} parent=1 // pred_region
      %567 = dma.done [#allocation3], 2560
    $region29: #{gpt_forward.13} parent=1 // pred_fallthru
      _
    %568 = vsyncpa [#allocation3], 1

// kernel: gpt_forward.8
$region0: #{gpt_forward.8}
  #allocation0 [shape = 'u32[]', space=smem, size = 0x4, offset = 0x4, fixed_abs, tag = 'smem constant byte address 0x4 - core index']
  #allocation1 [shape = 'u32[144,128]{1,0:T(1,128)}', space=vmem, size = 0x12000, scoped, tag = 'internal scratch']
  %s0 = inlined_call_operand.vmem [shape: f32[2,16,128], index: 0, kind: input, shape index: {}]
  %s1 = inlined_call_operand.vmem [shape: f32[1,128], index: 1, kind: input, shape index: {}]
  %s2 = inlined_call_operand.vmem [shape: f32[1,128], index: 2, kind: input, shape index: {}]
  %s3 = inlined_call_operand.vmem [shape: bf16[128,2304], index: 3, kind: input, shape index: {}]
  %s4 = inlined_call_operand.vmem [shape: bf16[768,128], index: 4, kind: input, shape index: {}]
  %s5 = inlined_call_operand.vmem [shape: f32[1,128], index: 5, kind: input, shape index: {}]
  %s6 = inlined_call_operand.vmem [shape: f32[1,128], index: 6, kind: input, shape index: {}]
  %s7 = inlined_call_operand.vmem [shape: f32[1,128], index: 7, kind: input, shape index: {}]
  %s8 = inlined_call_operand.vmem [shape: bf16[128,512], index: 8, kind: input, shape index: {}]
  %s9 = inlined_call_operand.vmem [shape: f32[1,512], index: 9, kind: input, shape index: {}]
  %s10 = inlined_call_operand.vmem [shape: bf16[512,128], index: 10, kind: input, shape index: {}]
  %s11 = inlined_call_operand.vmem [shape: f32[1,128], index: 11, kind: input, shape index: {}]
  %s12 = inlined_call_operand.vmem [shape: f32[2,16,128], index: 12, kind: output, shape index: {}]
  %s13 = sld [smem:[#allocation0]]
  $region81: #{gpt_forward.8} parent=0
    _
  %s15 = ssub.s32 1, %s13
  %s16 = scalar_select 0, %s15, %s13
  loop: start=0, step=1, limit=4
  $region2: #{gpt_forward.8} parent=0 // loop_pre_header
    _
  $region3: #{gpt_forward.8} parent=0 // loop_header
    %s18 = sphi 0, %s22
    %p19 = scmp.ge.s32.totalorder %s18, 4
    %s28 = sphi 0, %s30
    %s31 = sphi 0, %s28
    %s32 = sphi 0, %s31
    %s48 = sphi 0, %s32
    %s52 = sphi 0, %s52
    %s54 = sphi 0, %s52
    %s55 = sphi 0, %s54
    %s69 = sphi 0, %s55
    %s73 = sphi 0, %s73
    %s75 = sphi 0, %s73
    %s76 = sphi 0, %s75
    %s90 = sphi 0, %s76
    %s94 = sphi 0, %s94
    %s96 = sphi 0, %s94
    %s97 = sphi 0, %s96
    %s111 = sphi 0, %s97
    %s115 = sphi 0, %s115
    %s117 = sphi 0, %s115
    %s118 = sphi 0, %s117
    %s132 = sphi 0, %s118
    %s136 = sphi 0, %s136
    %s138 = sphi 0, %s136
    %s139 = sphi 0, %s138
    %s153 = sphi 0, %s139
    %s157 = sphi 0, %s157
    %s159 = sphi 0, %s157
    %s160 = sphi 0, %s159
    %s174 = sphi 0, %s160
    %s178 = sphi 0, %s178
    %s180 = sphi 0, %s178
    %s181 = sphi 0, %s180
    %s195 = sphi 0, %s181
    %s199 = sphi 0, %s199
    %s201 = sphi 0, %s199
    %s202 = sphi 0, %s201
    %s216 = sphi 0, %s202
    %s220 = sphi 0, %s220
    %s222 = sphi 0, %s220
    %s223 = sphi 0, %s222
    %s237 = sphi 0, %s223
    %s241 = sphi 0, %s241
    %s243 = sphi 0, %s241
    %s244 = sphi 0, %s243
    %s258 = sphi 0, %s244
    %s262 = sphi 0, %s262
    %s264 = sphi 0, %s262
    %s265 = sphi 0, %s264
    %s279 = sphi 0, %s265
    %s285 = sphi 0, %s287
    %s288 = sphi 0, %s285
    %s289 = sphi 0, %s288
    %s305 = sphi 0, %s289
  $region4: #{gpt_forward.8} parent=0 // loop_header_branch
    %21 = sbr.rel (%p19) target = $region8
  $region5: #{gpt_forward.8} parent=0 // loop_body
    %s23 = ssub.s32 %s18, 1
    %s24 = ssub.s32 %s18, 2
    %s25 = sadd.s32 %s18, 1
    %s26 = ssub.s32 %s18, %s25
    %p27 = scmp.eq.s32.totalorder %s26, 0
    %s29 = sadd.s32 %s28, 1
    %s30 = scalar_select %p27, %s28, %s29
    %p33 = pneg %p27
    %p34 = scmp.eq.s32.totalorder %s18, 1
    %p35 = por %p33, %p34
    %p36 = scmp.ne.s32.totalorder %s28, %s31
    %p37 = scmp.eq.s32.totalorder %s18, 0
    %p38 = por %p36, %p37
    %p39 = scmp.ne.s32.totalorder %s28, %s31
    %p40 = scmp.eq.s32.totalorder %s23, 1
    %p41 = por %p39, %p40
    %p42 = scmp.ne.s32.totalorder %s31, %s32
    %p43 = scmp.eq.s32.totalorder %s23, 0
    %p44 = por %p42, %p43
    %p45 = scmp.ne.s32.totalorder %s31, %s32
    %p46 = scmp.eq.s32.totalorder %s24, 1
    %p47 = por %p45, %p46
    %p49 = scmp.ne.s32.totalorder %s32, %s48
    %p50 = scmp.eq.s32.totalorder %s24, 0
    %p51 = por %p49, %p50
    %s53 = sadd.s32 %s52, 1
    %p56 = scmp.eq.s32.totalorder %s18, 1
    %p57 = scmp.ne.s32.totalorder %s52, %s54
    %p58 = scmp.eq.s32.totalorder %s18, 0
    %p59 = por %p57, %p58
    %p60 = scmp.ne.s32.totalorder %s52, %s54
    %p61 = scmp.eq.s32.totalorder %s23, 1
    %p62 = por %p60, %p61
    %p63 = scmp.ne.s32.totalorder %s54, %s55
    %p64 = scmp.eq.s32.totalorder %s23, 0
    %p65 = por %p63, %p64
    %p66 = scmp.ne.s32.totalorder %s54, %s55
    %p67 = scmp.eq.s32.totalorder %s24, 1
    %p68 = por %p66, %p67
    %p70 = scmp.ne.s32.totalorder %s55, %s69
    %p71 = scmp.eq.s32.totalorder %s24, 0
    %p72 = por %p70, %p71
    %s74 = sadd.s32 %s73, 1
    %p77 = scmp.eq.s32.totalorder %s18, 1
    %p78 = scmp.ne.s32.totalorder %s73, %s75
    %p79 = scmp.eq.s32.totalorder %s18, 0
    %p80 = por %p78, %p79
    %p81 = scmp.ne.s32.totalorder %s73, %s75
    %p82 = scmp.eq.s32.totalorder %s23, 1
    %p83 = por %p81, %p82
    %p84 = scmp.ne.s32.totalorder %s75, %s76
    %p85 = scmp.eq.s32.totalorder %s23, 0
    %p86 = por %p84, %p85
    %p87 = scmp.ne.s32.totalorder %s75, %s76
    %p88 = scmp.eq.s32.totalorder %s24, 1
    %p89 = por %p87, %p88
    %p91 = scmp.ne.s32.totalorder %s76, %s90
    %p92 = scmp.eq.s32.totalorder %s24, 0
    %p93 = por %p91, %p92
    %s95 = sadd.s32 %s94, 1
    %p98 = scmp.eq.s32.totalorder %s18, 1
    %p99 = scmp.ne.s32.totalorder %s94, %s96
    %p100 = scmp.eq.s32.totalorder %s18, 0
    %p101 = por %p99, %p100
    %p102 = scmp.ne.s32.totalorder %s94, %s96
    %p103 = scmp.eq.s32.totalorder %s23, 1
    %p104 = por %p102, %p103
    %p105 = scmp.ne.s32.totalorder %s96, %s97
    %p106 = scmp.eq.s32.totalorder %s23, 0
    %p107 = por %p105, %p106
    %p108 = scmp.ne.s32.totalorder %s96, %s97
    %p109 = scmp.eq.s32.totalorder %s24, 1
    %p110 = por %p108, %p109
    %p112 = scmp.ne.s32.totalorder %s97, %s111
    %p113 = scmp.eq.s32.totalorder %s24, 0
    %p114 = por %p112, %p113
    %s116 = sadd.s32 %s115, 1
    %p119 = scmp.eq.s32.totalorder %s18, 1
    %p120 = scmp.ne.s32.totalorder %s115, %s117
    %p121 = scmp.eq.s32.totalorder %s18, 0
    %p122 = por %p120, %p121
    %p123 = scmp.ne.s32.totalorder %s115, %s117
    %p124 = scmp.eq.s32.totalorder %s23, 1
    %p125 = por %p123, %p124
    %p126 = scmp.ne.s32.totalorder %s117, %s118
    %p127 = scmp.eq.s32.totalorder %s23, 0
    %p128 = por %p126, %p127
    %p129 = scmp.ne.s32.totalorder %s117, %s118
    %p130 = scmp.eq.s32.totalorder %s24, 1
    %p131 = por %p129, %p130
    %p133 = scmp.ne.s32.totalorder %s118, %s132
    %p134 = scmp.eq.s32.totalorder %s24, 0
    %p135 = por %p133, %p134
    %s137 = sadd.s32 %s136, 1
    %p140 = scmp.eq.s32.totalorder %s18, 1
    %p141 = scmp.ne.s32.totalorder %s136, %s138
    %p142 = scmp.eq.s32.totalorder %s18, 0
    %p143 = por %p141, %p142
    %p144 = scmp.ne.s32.totalorder %s136, %s138
    %p145 = scmp.eq.s32.totalorder %s23, 1
    %p146 = por %p144, %p145
    %p147 = scmp.ne.s32.totalorder %s138, %s139
    %p148 = scmp.eq.s32.totalorder %s23, 0
    %p149 = por %p147, %p148
    %p150 = scmp.ne.s32.totalorder %s138, %s139
    %p151 = scmp.eq.s32.totalorder %s24, 1
    %p152 = por %p150, %p151
    %p154 = scmp.ne.s32.totalorder %s139, %s153
    %p155 = scmp.eq.s32.totalorder %s24, 0
    %p156 = por %p154, %p155
    %s158 = sadd.s32 %s157, 1
    %p161 = scmp.eq.s32.totalorder %s18, 1
    %p162 = scmp.ne.s32.totalorder %s157, %s159
    %p163 = scmp.eq.s32.totalorder %s18, 0
    %p164 = por %p162, %p163
    %p165 = scmp.ne.s32.totalorder %s157, %s159
    %p166 = scmp.eq.s32.totalorder %s23, 1
    %p167 = por %p165, %p166
    %p168 = scmp.ne.s32.totalorder %s159, %s160
    %p169 = scmp.eq.s32.totalorder %s23, 0
    %p170 = por %p168, %p169
    %p171 = scmp.ne.s32.totalorder %s159, %s160
    %p172 = scmp.eq.s32.totalorder %s24, 1
    %p173 = por %p171, %p172
    %p175 = scmp.ne.s32.totalorder %s160, %s174
    %p176 = scmp.eq.s32.totalorder %s24, 0
    %p177 = por %p175, %p176
    %s179 = sadd.s32 %s178, 1
    %p182 = scmp.eq.s32.totalorder %s18, 1
    %p183 = scmp.ne.s32.totalorder %s178, %s180
    %p184 = scmp.eq.s32.totalorder %s18, 0
    %p185 = por %p183, %p184
    %p186 = scmp.ne.s32.totalorder %s178, %s180
    %p187 = scmp.eq.s32.totalorder %s23, 1
    %p188 = por %p186, %p187
    %p189 = scmp.ne.s32.totalorder %s180, %s181
    %p190 = scmp.eq.s32.totalorder %s23, 0
    %p191 = por %p189, %p190
    %p192 = scmp.ne.s32.totalorder %s180, %s181
    %p193 = scmp.eq.s32.totalorder %s24, 1
    %p194 = por %p192, %p193
    %p196 = scmp.ne.s32.totalorder %s181, %s195
    %p197 = scmp.eq.s32.totalorder %s24, 0
    %p198 = por %p196, %p197
    %s200 = sadd.s32 %s199, 1
    %p203 = scmp.eq.s32.totalorder %s18, 1
    %p204 = scmp.ne.s32.totalorder %s199, %s201
    %p205 = scmp.eq.s32.totalorder %s18, 0
    %p206 = por %p204, %p205
    %p207 = scmp.ne.s32.totalorder %s199, %s201
    %p208 = scmp.eq.s32.totalorder %s23, 1
    %p209 = por %p207, %p208
    %p210 = scmp.ne.s32.totalorder %s201, %s202
    %p211 = scmp.eq.s32.totalorder %s23, 0
    %p212 = por %p210, %p211
    %p213 = scmp.ne.s32.totalorder %s201, %s202
    %p214 = scmp.eq.s32.totalorder %s24, 1
    %p215 = por %p213, %p214
    %p217 = scmp.ne.s32.totalorder %s202, %s216
    %p218 = scmp.eq.s32.totalorder %s24, 0
    %p219 = por %p217, %p218
    %s221 = sadd.s32 %s220, 1
    %p224 = scmp.eq.s32.totalorder %s18, 1
    %p225 = scmp.ne.s32.totalorder %s220, %s222
    %p226 = scmp.eq.s32.totalorder %s18, 0
    %p227 = por %p225, %p226
    %p228 = scmp.ne.s32.totalorder %s220, %s222
    %p229 = scmp.eq.s32.totalorder %s23, 1
    %p230 = por %p228, %p229
    %p231 = scmp.ne.s32.totalorder %s222, %s223
    %p232 = scmp.eq.s32.totalorder %s23, 0
    %p233 = por %p231, %p232
    %p234 = scmp.ne.s32.totalorder %s222, %s223
    %p235 = scmp.eq.s32.totalorder %s24, 1
    %p236 = por %p234, %p235
    %p238 = scmp.ne.s32.totalorder %s223, %s237
    %p239 = scmp.eq.s32.totalorder %s24, 0
    %p240 = por %p238, %p239
    %s242 = sadd.s32 %s241, 1
    %p245 = scmp.eq.s32.totalorder %s18, 1
    %p246 = scmp.ne.s32.totalorder %s241, %s243
    %p247 = scmp.eq.s32.totalorder %s18, 0
    %p248 = por %p246, %p247
    %p249 = scmp.ne.s32.totalorder %s241, %s243
    %p250 = scmp.eq.s32.totalorder %s23, 1
    %p251 = por %p249, %p250
    %p252 = scmp.ne.s32.totalorder %s243, %s244
    %p253 = scmp.eq.s32.totalorder %s23, 0
    %p254 = por %p252, %p253
    %p255 = scmp.ne.s32.totalorder %s243, %s244
    %p256 = scmp.eq.s32.totalorder %s24, 1
    %p257 = por %p255, %p256
    %p259 = scmp.ne.s32.totalorder %s244, %s258
    %p260 = scmp.eq.s32.totalorder %s24, 0
    %p261 = por %p259, %p260
    %s263 = sadd.s32 %s262, 1
    %p266 = scmp.eq.s32.totalorder %s18, 1
    %p267 = scmp.ne.s32.totalorder %s262, %s264
    %p268 = scmp.eq.s32.totalorder %s18, 0
    %p269 = por %p267, %p268
    %p270 = scmp.ne.s32.totalorder %s262, %s264
    %p271 = scmp.eq.s32.totalorder %s23, 1
    %p272 = por %p270, %p271
    %p273 = scmp.ne.s32.totalorder %s264, %s265
    %p274 = scmp.eq.s32.totalorder %s23, 0
    %p275 = por %p273, %p274
    %p276 = scmp.ne.s32.totalorder %s264, %s265
    %p277 = scmp.eq.s32.totalorder %s24, 1
    %p278 = por %p276, %p277
    %p280 = scmp.ne.s32.totalorder %s265, %s279
    %p281 = scmp.eq.s32.totalorder %s24, 0
    %p282 = por %p280, %p281
    %s283 = ssub.s32 %s18, %s25
    %p284 = scmp.eq.s32.totalorder %s283, 0
    %s286 = sadd.s32 %s285, 1
    %s287 = scalar_select %p284, %s285, %s286
    %p290 = pneg %p284
    %p291 = scmp.eq.s32.totalorder %s18, 1
    %p292 = por %p290, %p291
    %p293 = scmp.ne.s32.totalorder %s285, %s288
    %p294 = scmp.eq.s32.totalorder %s18, 0
    %p295 = por %p293, %p294
    %p296 = scmp.ne.s32.totalorder %s285, %s288
    %p297 = scmp.eq.s32.totalorder %s23, 1
    %p298 = por %p296, %p297
    %p299 = scmp.ne.s32.totalorder %s288, %s289
    %p300 = scmp.eq.s32.totalorder %s23, 0
    %p301 = por %p299, %p300
    %p302 = scmp.ne.s32.totalorder %s288, %s289
    %p303 = scmp.eq.s32.totalorder %s24, 1
    %p304 = por %p302, %p303
    %p306 = scmp.ne.s32.totalorder %s289, %s305
    %p307 = scmp.eq.s32.totalorder %s24, 0
    %p308 = por %p306, %p307
    %p309 = scmp.le.s32.totalorder 1, %s18
    %p310 = scmp.lt.s32.totalorder %s18, 3
    %p311 = pnand %p309, %p310
    %p312 = pneg %p311
    // Predicated region
    $region9: #{gpt_forward.8} parent=5 // pred_check
      _
    $region10: #{gpt_forward.8} parent=5 // pred_check_branch
      %314 = sbr.rel (%p311) target = $region12
    $region11: #{gpt_forward.8} parent=5 // pred_region
      %s315 = ssub.s32 %s18, 1
      // Predicated region
      $region13: #{gpt_forward.8} parent=11 // pred_check
        %p316 = pneg %p65
      $region14: #{gpt_forward.8} parent=11 // pred_check_branch
        %318 = sbr.rel (%p316) target = $region16
      $region15: #{gpt_forward.8} parent=11 // pred_region
        _
      $region16: #{gpt_forward.8} parent=11 // pred_fallthru
        _
      // Predicated region
      $region17: #{gpt_forward.8} parent=11 // pred_check
        %p319 = pneg %p86
      $region18: #{gpt_forward.8} parent=11 // pred_check_branch
        %321 = sbr.rel (%p319) target = $region20
      $region19: #{gpt_forward.8} parent=11 // pred_region
        _
      $region20: #{gpt_forward.8} parent=11 // pred_fallthru
        _
      // Predicated region
      $region21: #{gpt_forward.8} parent=11 // pred_check
        %p322 = pneg %p107
      $region22: #{gpt_forward.8} parent=11 // pred_check_branch
        %324 = sbr.rel (%p322) target = $region24
      $region23: #{gpt_forward.8} parent=11 // pred_region
        _
      $region24: #{gpt_forward.8} parent=11 // pred_fallthru
        _
      // Predicated region
      $region25: #{gpt_forward.8} parent=11 // pred_check
        %p325 = pneg %p128
      $region26: #{gpt_forward.8} parent=11 // pred_check_branch
        %327 = sbr.rel (%p325) target = $region28
      $region27: #{gpt_forward.8} parent=11 // pred_region
        _
      $region28: #{gpt_forward.8} parent=11 // pred_fallthru
        _
      // Predicated region
      $region29: #{gpt_forward.8} parent=11 // pred_check
        %p328 = pneg %p149
      $region30: #{gpt_forward.8} parent=11 // pred_check_branch
        %330 = sbr.rel (%p328) target = $region32
      $region31: #{gpt_forward.8} parent=11 // pred_region
        _
      $region32: #{gpt_forward.8} parent=11 // pred_fallthru
        _
      // Predicated region
      $region33: #{gpt_forward.8} parent=11 // pred_check
        %p331 = pneg %p170
      $region34: #{gpt_forward.8} parent=11 // pred_check_branch
        %333 = sbr.rel (%p331) target = $region36
      $region35: #{gpt_forward.8} parent=11 // pred_region
        _
      $region36: #{gpt_forward.8} parent=11 // pred_fallthru
        _
      // Predicated region
      $region37: #{gpt_forward.8} parent=11 // pred_check
        %p334 = pneg %p191
      $region38: #{gpt_forward.8} parent=11 // pred_check_branch
        %336 = sbr.rel (%p334) target = $region40
      $region39: #{gpt_forward.8} parent=11 // pred_region
        _
      $region40: #{gpt_forward.8} parent=11 // pred_fallthru
        _
      // Predicated region
      $region41: #{gpt_forward.8} parent=11 // pred_check
        %p337 = pneg %p212
      $region42: #{gpt_forward.8} parent=11 // pred_check_branch
        %339 = sbr.rel (%p337) target = $region44
      $region43: #{gpt_forward.8} parent=11 // pred_region
        _
      $region44: #{gpt_forward.8} parent=11 // pred_fallthru
        _
      // Predicated region
      $region45: #{gpt_forward.8} parent=11 // pred_check
        %p340 = pneg %p233
      $region46: #{gpt_forward.8} parent=11 // pred_check_branch
        %342 = sbr.rel (%p340) target = $region48
      $region47: #{gpt_forward.8} parent=11 // pred_region
        _
      $region48: #{gpt_forward.8} parent=11 // pred_fallthru
        _
      // Predicated region
      $region49: #{gpt_forward.8} parent=11 // pred_check
        %p343 = pneg %p254
      $region50: #{gpt_forward.8} parent=11 // pred_check_branch
        %345 = sbr.rel (%p343) target = $region52
      $region51: #{gpt_forward.8} parent=11 // pred_region
        _
      $region52: #{gpt_forward.8} parent=11 // pred_fallthru
        _
      // Predicated region
      $region53: #{gpt_forward.8} parent=11 // pred_check
        %p346 = pneg %p275
      $region54: #{gpt_forward.8} parent=11 // pred_check_branch
        %348 = sbr.rel (%p346) target = $region56
      $region55: #{gpt_forward.8} parent=11 // pred_region
        _
      $region56: #{gpt_forward.8} parent=11 // pred_fallthru
        _
    $region12: #{gpt_forward.8} parent=5 // pred_fallthru
      _
    %p349 = scmp.lt.s32.totalorder %s18, 2
    // Predicated region
    $region57: #{gpt_forward.8} parent=5 // pred_check
      %p350 = pneg %p349
    $region58: #{gpt_forward.8} parent=5 // pred_check_branch
      %352 = sbr.rel (%p350) target = $region60
    $region59: #{gpt_forward.8} parent=5 // pred_region
      // Predicated region
      $region61: #{gpt_forward.8} parent=59 // pred_check
        %p353 = pneg %p38
      $region62: #{gpt_forward.8} parent=59 // pred_check_branch
        %355 = sbr.rel (%p353) target = $region64
      $region63: #{gpt_forward.8} parent=59 // pred_region
        %p356 = scmp.lt.s32.totalorder %s18, 1
        %s357 = scalar_select %p356, %s18, 1
        %s358 = smul.addr %s357, 2
        %s359 = smul.addr %s358, 8
        %s360 = scalar_lea.vmem %s0, %s359
      $region64: #{gpt_forward.8} parent=59 // pred_fallthru
        _
    $region60: #{gpt_forward.8} parent=5 // pred_fallthru
      _
    %p361 = scmp.le.s32.totalorder 1, %s18
    %p362 = scmp.lt.s32.totalorder %s18, 3
    %p363 = pnand %p361, %p362
    %p364 = pneg %p363
    // Predicated region
    $region65: #{gpt_forward.8} parent=5 // pred_check
      _
    $region66: #{gpt_forward.8} parent=5 // pred_check_branch
      %366 = sbr.rel (%p363) target = $region68
    $region67: #{gpt_forward.8} parent=5 // pred_region
      %s367 = ssub.s32 %s18, 1
      %p368 = scmp.lt.s32.totalorder %s23, 1
      %s369 = scalar_select %p368, %s23, 1
      %s370 = smul.addr %s369, 2
      %s371 = smul.addr %s370, 8
      %s372 = scalar_lea.vmem %s0, %s371
      %p373 = pneg %p44
      %p374 = pneg %p41
      %p375 = pneg %p65
      %p376 = pneg %p62
      %p377 = pneg %p86
      %p378 = pneg %p83
      %p379 = pneg %p107
      %p380 = pneg %p104
      %p381 = pneg %p128
      %p382 = pneg %p125
      %p383 = pneg %p149
      %p384 = pneg %p146
      %p385 = pneg %p170
      %p386 = pneg %p167
      %p387 = pneg %p191
      %p388 = pneg %p188
      %p389 = pneg %p212
      %p390 = pneg %p209
      %p391 = pneg %p233
      %p392 = pneg %p230
      %p393 = pneg %p254
      %p394 = pneg %p251
      %p395 = pneg %p275
      %p396 = pneg %p272
      %p397 = pneg %p301
      %p398 = pneg %p298
      %p399 = scmp.lt.s32.totalorder %s23, 1
      %s400 = scalar_select %p399, %s23, 1
      %s401 = smul.addr %s400, 2
      %s402 = smul.addr %s401, 8
      %s403 = scalar_lea.vmem %s12, %s402
      %p404 = scmp.lt.s32.totalorder %s23, 1
      %s405 = scalar_select %p404, %s23, 1
      %s406 = smul.addr %s405, 2
      %s407 = smul.addr %s406, 8
      %s408 = scalar_lea.vmem %s0, %s407
      %p409 = scmp.lt.s32.totalorder %s23, 1
      %s410 = scalar_select %p409, %s23, 1
      %s411 = smul.addr %s410, 2
      %s412 = smul.addr %s411, 8
      %s413 = scalar_lea.vmem %s12, %s412
      %v415 = vld [vmem:[%s408] sm:$0xff]
      %v416 = vld [vmem:[%s408 + $0x8] sm:$0xff]
      %v417 = vld [vmem:[%s1] sm:$0x1]
      %v418 = vld [vmem:[%s2] sm:$0x1]
      %419 = vadd.xlane.f32.xlu0 %v415
      %v420 = vpop.xlane.xlu0 %419
      %421 = vadd.xlane.f32.xlu0 %v416
      %v422 = vpop.xlane.xlu0 %421
      %v423 = vrcp.pop 128.0
      %v424 = vmul.f32 %v420, %v423
      %v425 = vmul.f32 %v422, %v423
      %v426 = vsub.f32 %v415, %v424
      %v427 = vsub.f32 %v416, %v425
      %v428 = vmul.f32 %v426, %v426
      %v429 = vmul.f32 %v427, %v427
      %430 = vadd.xlane.f32.xlu0 %v428
      %v431 = vpop.xlane.xlu0 %430
      %432 = vadd.xlane.f32.xlu0 %v429
      %v433 = vpop.xlane.xlu0 %432
      %v434 = vmul.f32 %v431, %v423
      %v435 = vmul.f32 %v433, %v423
      %v436 = vadd.f32 %v434, 1e-05
      %v437 = vadd.f32 %v435, 1e-05
      %v438 = vrsqrt.pop %v436
      %v439 = vrsqrt.pop %v437
      %v440 = vmul.f32 %v426, %v438
      %v441 = vmul.f32 %v427, %v439
      %v443 = vlaneseq
      %v444 = vshrl.u32 %v443, 7
      %v445 = vsub.s32 0, %v444
      %v446 = vrot.slane %v417, %v445
      %v448 = vmul.f32 %v440, %v446
      %v449 = vmul.f32 %v441, %v446
      %v451 = vlaneseq
      %v452 = vshrl.u32 %v451, 7
      %v453 = vsub.s32 0, %v452
      %v454 = vrot.slane %v418, %v453
      %v456 = vadd.f32 %v448, %v454
      %v457 = vadd.f32 %v449, %v454
      %v458 = vpack.c.bf16 %v457, %v456
      %v459 = vld [vmem:[%s3] sm:$0xff]
      %v460 = vld [vmem:[%s3 + $0x8] sm:$0xff]
      %v461 = vld [vmem:[%s3 + $0x10] sm:$0xff]
      %v462 = vld [vmem:[%s3 + $0x18] sm:$0xff]
      %v463 = vld [vmem:[%s3 + $0x20] sm:$0xff]
      %v464 = vld [vmem:[%s3 + $0x28] sm:$0xff]
      %v465 = vld [vmem:[%s3 + $0x30] sm:$0xff]
      %v466 = vld [vmem:[%s3 + $0x38] sm:$0xff]
      %v467 = vld [vmem:[%s3 + $0x40] sm:$0xff]
      %v468 = vld [vmem:[%s3 + $0x48] sm:$0xff]
      %v469 = vld [vmem:[%s3 + $0x50] sm:$0xff]
      %v470 = vld [vmem:[%s3 + $0x58] sm:$0xff]
      %v471 = vld [vmem:[%s3 + $0x60] sm:$0xff]
      %v472 = vld [vmem:[%s3 + $0x68] sm:$0xff]
      %v473 = vld [vmem:[%s3 + $0x70] sm:$0xff]
      %v474 = vld [vmem:[%s3 + $0x78] sm:$0xff]
      %v475 = vld [vmem:[%s3 + $0x80] sm:$0xff]
      %v476 = vld [vmem:[%s3 + $0x88] sm:$0xff]
      %v477 = vld [vmem:[%s3 + $0x90] sm:$0xff]
      %v478 = vld [vmem:[%s3 + $0x98] sm:$0xff]
      %v479 = vld [vmem:[%s3 + $0xa0] sm:$0xff]
      %v480 = vld [vmem:[%s3 + $0xa8] sm:$0xff]
      %v481 = vld [vmem:[%s3 + $0xb0] sm:$0xff]
      %v482 = vld [vmem:[%s3 + $0xb8] sm:$0xff]
      %v483 = vld [vmem:[%s3 + $0xc0] sm:$0xff]
      %v484 = vld [vmem:[%s3 + $0xc8] sm:$0xff]
      %v485 = vld [vmem:[%s3 + $0xd0] sm:$0xff]
      %v486 = vld [vmem:[%s3 + $0xd8] sm:$0xff]
      %v487 = vld [vmem:[%s3 + $0xe0] sm:$0xff]
      %v488 = vld [vmem:[%s3 + $0xe8] sm:$0xff]
      %v489 = vld [vmem:[%s3 + $0xf0] sm:$0xff]
      %v490 = vld [vmem:[%s3 + $0xf8] sm:$0xff]
      %v491 = vld [vmem:[%s3 + $0x100] sm:$0xff]
      %v492 = vld [vmem:[%s3 + $0x108] sm:$0xff]
      %v493 = vld [vmem:[%s3 + $0x110] sm:$0xff]
      %v494 = vld [vmem:[%s3 + $0x118] sm:$0xff]
      %v495 = vld [vmem:[%s3 + $0x120] sm:$0xff]
      %v496 = vld [vmem:[%s3 + $0x128] sm:$0xff]
      %v497 = vld [vmem:[%s3 + $0x130] sm:$0xff]
      %v498 = vld [vmem:[%s3 + $0x138] sm:$0xff]
      %v499 = vld [vmem:[%s3 + $0x140] sm:$0xff]
      %v500 = vld [vmem:[%s3 + $0x148] sm:$0xff]
      %v501 = vld [vmem:[%s3 + $0x150] sm:$0xff]
      %v502 = vld [vmem:[%s3 + $0x158] sm:$0xff]
      %v503 = vld [vmem:[%s3 + $0x160] sm:$0xff]
      %v504 = vld [vmem:[%s3 + $0x168] sm:$0xff]
      %v505 = vld [vmem:[%s3 + $0x170] sm:$0xff]
      %v506 = vld [vmem:[%s3 + $0x178] sm:$0xff]
      %v507 = vld [vmem:[%s3 + $0x180] sm:$0xff]
      %v508 = vld [vmem:[%s3 + $0x188] sm:$0xff]
      %v509 = vld [vmem:[%s3 + $0x190] sm:$0xff]
      %v510 = vld [vmem:[%s3 + $0x198] sm:$0xff]
      %v511 = vld [vmem:[%s3 + $0x1a0] sm:$0xff]
      %v512 = vld [vmem:[%s3 + $0x1a8] sm:$0xff]
      %v513 = vld [vmem:[%s3 + $0x1b0] sm:$0xff]
      %v514 = vld [vmem:[%s3 + $0x1b8] sm:$0xff]
      %v515 = vld [vmem:[%s3 + $0x1c0] sm:$0xff]
      %v516 = vld [vmem:[%s3 + $0x1c8] sm:$0xff]
      %v517 = vld [vmem:[%s3 + $0x1d0] sm:$0xff]
      %v518 = vld [vmem:[%s3 + $0x1d8] sm:$0xff]
      %v519 = vld [vmem:[%s3 + $0x1e0] sm:$0xff]
      %v520 = vld [vmem:[%s3 + $0x1e8] sm:$0xff]
      %v521 = vld [vmem:[%s3 + $0x1f0] sm:$0xff]
      %v522 = vld [vmem:[%s3 + $0x1f8] sm:$0xff]
      %v523 = vld [vmem:[%s3 + $0x200] sm:$0xff]
      %v524 = vld [vmem:[%s3 + $0x208] sm:$0xff]
      %v525 = vld [vmem:[%s3 + $0x210] sm:$0xff]
      %v526 = vld [vmem:[%s3 + $0x218] sm:$0xff]
      %v527 = vld [vmem:[%s3 + $0x220] sm:$0xff]
      %v528 = vld [vmem:[%s3 + $0x228] sm:$0xff]
      %v529 = vld [vmem:[%s3 + $0x230] sm:$0xff]
      %v530 = vld [vmem:[%s3 + $0x238] sm:$0xff]
      %v531 = vld [vmem:[%s3 + $0x240] sm:$0xff]
      %v532 = vld [vmem:[%s3 + $0x248] sm:$0xff]
      %v533 = vld [vmem:[%s3 + $0x250] sm:$0xff]
      %v534 = vld [vmem:[%s3 + $0x258] sm:$0xff]
      %v535 = vld [vmem:[%s3 + $0x260] sm:$0xff]
      %v536 = vld [vmem:[%s3 + $0x268] sm:$0xff]
      %v537 = vld [vmem:[%s3 + $0x270] sm:$0xff]
      %v538 = vld [vmem:[%s3 + $0x278] sm:$0xff]
      %v539 = vld [vmem:[%s3 + $0x280] sm:$0xff]
      %v540 = vld [vmem:[%s3 + $0x288] sm:$0xff]
      %v541 = vld [vmem:[%s3 + $0x290] sm:$0xff]
      %v542 = vld [vmem:[%s3 + $0x298] sm:$0xff]
      %v543 = vld [vmem:[%s3 + $0x2a0] sm:$0xff]
      %v544 = vld [vmem:[%s3 + $0x2a8] sm:$0xff]
      %v545 = vld [vmem:[%s3 + $0x2b0] sm:$0xff]
      %v546 = vld [vmem:[%s3 + $0x2b8] sm:$0xff]
      %v547 = vld [vmem:[%s3 + $0x2c0] sm:$0xff]
      %v548 = vld [vmem:[%s3 + $0x2c8] sm:$0xff]
      %v549 = vld [vmem:[%s3 + $0x2d0] sm:$0xff]
      %v550 = vld [vmem:[%s3 + $0x2d8] sm:$0xff]
      %v551 = vld [vmem:[%s3 + $0x2e0] sm:$0xff]
      %v552 = vld [vmem:[%s3 + $0x2e8] sm:$0xff]
      %v553 = vld [vmem:[%s3 + $0x2f0] sm:$0xff]
      %v554 = vld [vmem:[%s3 + $0x2f8] sm:$0xff]
      %v555 = vld [vmem:[%s3 + $0x300] sm:$0xff]
      %v556 = vld [vmem:[%s3 + $0x308] sm:$0xff]
      %v557 = vld [vmem:[%s3 + $0x310] sm:$0xff]
      %v558 = vld [vmem:[%s3 + $0x318] sm:$0xff]
      %v559 = vld [vmem:[%s3 + $0x320] sm:$0xff]
      %v560 = vld [vmem:[%s3 + $0x328] sm:$0xff]
      %v561 = vld [vmem:[%s3 + $0x330] sm:$0xff]
      %v562 = vld [vmem:[%s3 + $0x338] sm:$0xff]
      %v563 = vld [vmem:[%s3 + $0x340] sm:$0xff]
      %v564 = vld [vmem:[%s3 + $0x348] sm:$0xff]
      %v565 = vld [vmem:[%s3 + $0x350] sm:$0xff]
      %v566 = vld [vmem:[%s3 + $0x358] sm:$0xff]
      %v567 = vld [vmem:[%s3 + $0x360] sm:$0xff]
      %v568 = vld [vmem:[%s3 + $0x368] sm:$0xff]
      %v569 = vld [vmem:[%s3 + $0x370] sm:$0xff]
      %v570 = vld [vmem:[%s3 + $0x378] sm:$0xff]
      %v571 = vld [vmem:[%s3 + $0x380] sm:$0xff]
      %v572 = vld [vmem:[%s3 + $0x388] sm:$0xff]
      %v573 = vld [vmem:[%s3 + $0x390] sm:$0xff]
      %v574 = vld [vmem:[%s3 + $0x398] sm:$0xff]
      %v575 = vld [vmem:[%s3 + $0x3a0] sm:$0xff]
      %v576 = vld [vmem:[%s3 + $0x3a8] sm:$0xff]
      %v577 = vld [vmem:[%s3 + $0x3b0] sm:$0xff]
      %v578 = vld [vmem:[%s3 + $0x3b8] sm:$0xff]
      %v579 = vld [vmem:[%s3 + $0x3c0] sm:$0xff]
      %v580 = vld [vmem:[%s3 + $0x3c8] sm:$0xff]
      %v581 = vld [vmem:[%s3 + $0x3d0] sm:$0xff]
      %v582 = vld [vmem:[%s3 + $0x3d8] sm:$0xff]
      %v583 = vld [vmem:[%s3 + $0x3e0] sm:$0xff]
      %v584 = vld [vmem:[%s3 + $0x3e8] sm:$0xff]
      %v585 = vld [vmem:[%s3 + $0x3f0] sm:$0xff]
      %v586 = vld [vmem:[%s3 + $0x3f8] sm:$0xff]
      %v587 = vld [vmem:[%s3 + $0x400] sm:$0xff]
      %v588 = vld [vmem:[%s3 + $0x408] sm:$0xff]
      %v589 = vld [vmem:[%s3 + $0x410] sm:$0xff]
      %v590 = vld [vmem:[%s3 + $0x418] sm:$0xff]
      %v591 = vld [vmem:[%s3 + $0x420] sm:$0xff]
      %v592 = vld [vmem:[%s3 + $0x428] sm:$0xff]
      %v593 = vld [vmem:[%s3 + $0x430] sm:$0xff]
      %v594 = vld [vmem:[%s3 + $0x438] sm:$0xff]
      %v595 = vld [vmem:[%s3 + $0x440] sm:$0xff]
      %v596 = vld [vmem:[%s3 + $0x448] sm:$0xff]
      %v597 = vld [vmem:[%s3 + $0x450] sm:$0xff]
      %v598 = vld [vmem:[%s3 + $0x458] sm:$0xff]
      %v599 = vld [vmem:[%s3 + $0x460] sm:$0xff]
      %v600 = vld [vmem:[%s3 + $0x468] sm:$0xff]
      %v601 = vld [vmem:[%s3 + $0x470] sm:$0xff]
      %v602 = vld [vmem:[%s3 + $0x478] sm:$0xff]
      %v747 = vunpack.c.l.b16 %v459
      %v748 = vunpack.c.h.b16 %v459
      %v749 = vunpack.c.l.b16 %v460
      %v750 = vunpack.c.h.b16 %v460
      %v751 = vunpack.c.l.b16 %v461
      %v752 = vunpack.c.h.b16 %v461
      %v753 = vunpack.c.l.b16 %v462
      %v754 = vunpack.c.h.b16 %v462
      %v755 = vunpack.c.l.b16 %v463
      %v756 = vunpack.c.h.b16 %v463
      %v757 = vunpack.c.l.b16 %v464
      %v758 = vunpack.c.h.b16 %v464
      %v759 = vunpack.c.l.b16 %v465
      %v760 = vunpack.c.h.b16 %v465
      %v761 = vunpack.c.l.b16 %v466
      %v762 = vunpack.c.h.b16 %v466
      %v763 = vunpack.c.l.b16 %v467
      %v764 = vunpack.c.h.b16 %v467
      %v765 = vunpack.c.l.b16 %v468
      %v766 = vunpack.c.h.b16 %v468
      %v767 = vunpack.c.l.b16 %v469
      %v768 = vunpack.c.h.b16 %v469
      %v769 = vunpack.c.l.b16 %v470
      %v770 = vunpack.c.h.b16 %v470
      %v771 = vunpack.c.l.b16 %v471
      %v772 = vunpack.c.h.b16 %v471
      %v773 = vunpack.c.l.b16 %v472
      %v774 = vunpack.c.h.b16 %v472
      %v775 = vunpack.c.l.b16 %v473
      %v776 = vunpack.c.h.b16 %v473
      %v777 = vunpack.c.l.b16 %v474
      %v778 = vunpack.c.h.b16 %v474
      %v779 = vunpack.c.l.b16 %v475
      %v780 = vunpack.c.h.b16 %v475
      %v781 = vunpack.c.l.b16 %v476
      %v782 = vunpack.c.h.b16 %v476
      %v783 = vunpack.c.l.b16 %v477
      %v784 = vunpack.c.h.b16 %v477
      %v785 = vunpack.c.l.b16 %v478
      %v786 = vunpack.c.h.b16 %v478
      %v787 = vunpack.c.l.b16 %v479
      %v788 = vunpack.c.h.b16 %v479
      %v789 = vunpack.c.l.b16 %v480
      %v790 = vunpack.c.h.b16 %v480
      %v791 = vunpack.c.l.b16 %v481
      %v792 = vunpack.c.h.b16 %v481
      %v793 = vunpack.c.l.b16 %v482
      %v794 = vunpack.c.h.b16 %v482
      %v795 = vunpack.c.l.b16 %v483
      %v796 = vunpack.c.h.b16 %v483
      %v797 = vunpack.c.l.b16 %v484
      %v798 = vunpack.c.h.b16 %v484
      %v799 = vunpack.c.l.b16 %v485
      %v800 = vunpack.c.h.b16 %v485
      %v801 = vunpack.c.l.b16 %v486
      %v802 = vunpack.c.h.b16 %v486
      %v803 = vunpack.c.l.b16 %v487
      %v804 = vunpack.c.h.b16 %v487
      %v805 = vunpack.c.l.b16 %v488
      %v806 = vunpack.c.h.b16 %v488
      %v807 = vunpack.c.l.b16 %v489
      %v808 = vunpack.c.h.b16 %v489
      %v809 = vunpack.c.l.b16 %v490
      %v810 = vunpack.c.h.b16 %v490
      %v811 = vunpack.c.l.b16 %v491
      %v812 = vunpack.c.h.b16 %v491
      %v813 = vunpack.c.l.b16 %v492
      %v814 = vunpack.c.h.b16 %v492
      %v815 = vunpack.c.l.b16 %v493
      %v816 = vunpack.c.h.b16 %v493
      %v817 = vunpack.c.l.b16 %v494
      %v818 = vunpack.c.h.b16 %v494
      %v819 = vunpack.c.l.b16 %v495
      %v820 = vunpack.c.h.b16 %v495
      %v821 = vunpack.c.l.b16 %v496
      %v822 = vunpack.c.h.b16 %v496
      %v823 = vunpack.c.l.b16 %v497
      %v824 = vunpack.c.h.b16 %v497
      %v825 = vunpack.c.l.b16 %v498
      %v826 = vunpack.c.h.b16 %v498
      %v827 = vunpack.c.l.b16 %v499
      %v828 = vunpack.c.h.b16 %v499
      %v829 = vunpack.c.l.b16 %v500
      %v830 = vunpack.c.h.b16 %v500
      %v831 = vunpack.c.l.b16 %v501
      %v832 = vunpack.c.h.b16 %v501
      %v833 = vunpack.c.l.b16 %v502
      %v834 = vunpack.c.h.b16 %v502
      %v835 = vunpack.c.l.b16 %v503
      %v836 = vunpack.c.h.b16 %v503
      %v837 = vunpack.c.l.b16 %v504
      %v838 = vunpack.c.h.b16 %v504
      %v839 = vunpack.c.l.b16 %v505
      %v840 = vunpack.c.h.b16 %v505
      %v841 = vunpack.c.l.b16 %v506
      %v842 = vunpack.c.h.b16 %v506
      %v843 = vunpack.c.l.b16 %v507
      %v844 = vunpack.c.h.b16 %v507
      %v845 = vunpack.c.l.b16 %v508
      %v846 = vunpack.c.h.b16 %v508
      %v847 = vunpack.c.l.b16 %v509
      %v848 = vunpack.c.h.b16 %v509
      %v849 = vunpack.c.l.b16 %v510
      %v850 = vunpack.c.h.b16 %v510
      %v851 = vunpack.c.l.b16 %v511
      %v852 = vunpack.c.h.b16 %v511
      %v853 = vunpack.c.l.b16 %v512
      %v854 = vunpack.c.h.b16 %v512
      %v855 = vunpack.c.l.b16 %v513
      %v856 = vunpack.c.h.b16 %v513
      %v857 = vunpack.c.l.b16 %v514
      %v858 = vunpack.c.h.b16 %v514
      %v859 = vunpack.c.l.b16 %v515
      %v860 = vunpack.c.h.b16 %v515
      %v861 = vunpack.c.l.b16 %v516
      %v862 = vunpack.c.h.b16 %v516
      %v863 = vunpack.c.l.b16 %v517
      %v864 = vunpack.c.h.b16 %v517
      %v865 = vunpack.c.l.b16 %v518
      %v866 = vunpack.c.h.b16 %v518
      %v867 = vunpack.c.l.b16 %v519
      %v868 = vunpack.c.h.b16 %v519
      %v869 = vunpack.c.l.b16 %v520
      %v870 = vunpack.c.h.b16 %v520
      %v871 = vunpack.c.l.b16 %v521
      %v872 = vunpack.c.h.b16 %v521
      %v873 = vunpack.c.l.b16 %v522
      %v874 = vunpack.c.h.b16 %v522
      %v875 = vunpack.c.l.b16 %v523
      %v876 = vunpack.c.h.b16 %v523
      %v877 = vunpack.c.l.b16 %v524
      %v878 = vunpack.c.h.b16 %v524
      %v879 = vunpack.c.l.b16 %v525
      %v880 = vunpack.c.h.b16 %v525
      %v881 = vunpack.c.l.b16 %v526
      %v882 = vunpack.c.h.b16 %v526
      %v883 = vunpack.c.l.b16 %v527
      %v884 = vunpack.c.h.b16 %v527
      %v885 = vunpack.c.l.b16 %v528
      %v886 = vunpack.c.h.b16 %v528
      %v887 = vunpack.c.l.b16 %v529
      %v888 = vunpack.c.h.b16 %v529
      %v889 = vunpack.c.l.b16 %v530
      %v890 = vunpack.c.h.b16 %v530
      %v891 = vunpack.c.l.b16 %v531
      %v892 = vunpack.c.h.b16 %v531
      %v893 = vunpack.c.l.b16 %v532
      %v894 = vunpack.c.h.b16 %v532
      %v895 = vunpack.c.l.b16 %v533
      %v896 = vunpack.c.h.b16 %v533
      %v897 = vunpack.c.l.b16 %v534
      %v898 = vunpack.c.h.b16 %v534
      %v899 = vunpack.c.l.b16 %v535
      %v900 = vunpack.c.h.b16 %v535
      %v901 = vunpack.c.l.b16 %v536
      %v902 = vunpack.c.h.b16 %v536
      %v903 = vunpack.c.l.b16 %v537
      %v904 = vunpack.c.h.b16 %v537
      %v905 = vunpack.c.l.b16 %v538
      %v906 = vunpack.c.h.b16 %v538
      %v907 = vunpack.c.l.b16 %v539
      %v908 = vunpack.c.h.b16 %v539
      %v909 = vunpack.c.l.b16 %v540
      %v910 = vunpack.c.h.b16 %v540
      %v911 = vunpack.c.l.b16 %v541
      %v912 = vunpack.c.h.b16 %v541
      %v913 = vunpack.c.l.b16 %v542
      %v914 = vunpack.c.h.b16 %v542
      %v915 = vunpack.c.l.b16 %v543
      %v916 = vunpack.c.h.b16 %v543
      %v917 = vunpack.c.l.b16 %v544
      %v918 = vunpack.c.h.b16 %v544
      %v919 = vunpack.c.l.b16 %v545
      %v920 = vunpack.c.h.b16 %v545
      %v921 = vunpack.c.l.b16 %v546
      %v922 = vunpack.c.h.b16 %v546
      %v923 = vunpack.c.l.b16 %v547
      %v924 = vunpack.c.h.b16 %v547
      %v925 = vunpack.c.l.b16 %v548
      %v926 = vunpack.c.h.b16 %v548
      %v927 = vunpack.c.l.b16 %v549
      %v928 = vunpack.c.h.b16 %v549
      %v929 = vunpack.c.l.b16 %v550
      %v930 = vunpack.c.h.b16 %v550
      %v931 = vunpack.c.l.b16 %v551
      %v932 = vunpack.c.h.b16 %v551
      %v933 = vunpack.c.l.b16 %v552
      %v934 = vunpack.c.h.b16 %v552
      %v935 = vunpack.c.l.b16 %v553
      %v936 = vunpack.c.h.b16 %v553
      %v937 = vunpack.c.l.b16 %v554
      %v938 = vunpack.c.h.b16 %v554
      %v939 = vunpack.c.l.b16 %v555
      %v940 = vunpack.c.h.b16 %v555
      %v941 = vunpack.c.l.b16 %v556
      %v942 = vunpack.c.h.b16 %v556
      %v943 = vunpack.c.l.b16 %v557
      %v944 = vunpack.c.h.b16 %v557
      %v945 = vunpack.c.l.b16 %v558
      %v946 = vunpack.c.h.b16 %v558
      %v947 = vunpack.c.l.b16 %v559
      %v948 = vunpack.c.h.b16 %v559
      %v949 = vunpack.c.l.b16 %v560
      %v950 = vunpack.c.h.b16 %v560
      %v951 = vunpack.c.l.b16 %v561
      %v952 = vunpack.c.h.b16 %v561
      %v953 = vunpack.c.l.b16 %v562
      %v954 = vunpack.c.h.b16 %v562
      %v955 = vunpack.c.l.b16 %v563
      %v956 = vunpack.c.h.b16 %v563
      %v957 = vunpack.c.l.b16 %v564
      %v958 = vunpack.c.h.b16 %v564
      %v959 = vunpack.c.l.b16 %v565
      %v960 = vunpack.c.h.b16 %v565
      %v961 = vunpack.c.l.b16 %v566
      %v962 = vunpack.c.h.b16 %v566
      %v963 = vunpack.c.l.b16 %v567
      %v964 = vunpack.c.h.b16 %v567
      %v965 = vunpack.c.l.b16 %v568
      %v966 = vunpack.c.h.b16 %v568
      %v967 = vunpack.c.l.b16 %v569
      %v968 = vunpack.c.h.b16 %v569
      %v969 = vunpack.c.l.b16 %v570
      %v970 = vunpack.c.h.b16 %v570
      %v971 = vunpack.c.l.b16 %v571
      %v972 = vunpack.c.h.b16 %v571
      %v973 = vunpack.c.l.b16 %v572
      %v974 = vunpack.c.h.b16 %v572
      %v975 = vunpack.c.l.b16 %v573
      %v976 = vunpack.c.h.b16 %v573
      %v977 = vunpack.c.l.b16 %v574
      %v978 = vunpack.c.h.b16 %v574
      %v979 = vunpack.c.l.b16 %v575
      %v980 = vunpack.c.h.b16 %v575
      %v981 = vunpack.c.l.b16 %v576
      %v982 = vunpack.c.h.b16 %v576
      %v983 = vunpack.c.l.b16 %v577
      %v984 = vunpack.c.h.b16 %v577
      %v985 = vunpack.c.l.b16 %v578
      %v986 = vunpack.c.h.b16 %v578
      %v987 = vunpack.c.l.b16 %v579
      %v988 = vunpack.c.h.b16 %v579
      %v989 = vunpack.c.l.b16 %v580
      %v990 = vunpack.c.h.b16 %v580
      %v991 = vunpack.c.l.b16 %v581
      %v992 = vunpack.c.h.b16 %v581
      %v993 = vunpack.c.l.b16 %v582
      %v994 = vunpack.c.h.b16 %v582
      %v995 = vunpack.c.l.b16 %v583
      %v996 = vunpack.c.h.b16 %v583
      %v997 = vunpack.c.l.b16 %v584
      %v998 = vunpack.c.h.b16 %v584
      %v999 = vunpack.c.l.b16 %v585
      %v1000 = vunpack.c.h.b16 %v585
      %v1001 = vunpack.c.l.b16 %v586
      %v1002 = vunpack.c.h.b16 %v586
      %v1003 = vunpack.c.l.b16 %v587
      %v1004 = vunpack.c.h.b16 %v587
      %v1005 = vunpack.c.l.b16 %v588
      %v1006 = vunpack.c.h.b16 %v588
      %v1007 = vunpack.c.l.b16 %v589
      %v1008 = vunpack.c.h.b16 %v589
      %v1009 = vunpack.c.l.b16 %v590
      %v1010 = vunpack.c.h.b16 %v590
      %v1011 = vunpack.c.l.b16 %v591
      %v1012 = vunpack.c.h.b16 %v591
      %v1013 = vunpack.c.l.b16 %v592
      %v1014 = vunpack.c.h.b16 %v592
      %v1015 = vunpack.c.l.b16 %v593
      %v1016 = vunpack.c.h.b16 %v593
      %v1017 = vunpack.c.l.b16 %v594
      %v1018 = vunpack.c.h.b16 %v594
      %v1019 = vunpack.c.l.b16 %v595
      %v1020 = vunpack.c.h.b16 %v595
      %v1021 = vunpack.c.l.b16 %v596
      %v1022 = vunpack.c.h.b16 %v596
      %v1023 = vunpack.c.l.b16 %v597
      %v1024 = vunpack.c.h.b16 %v597
      %v1025 = vunpack.c.l.b16 %v598
      %v1026 = vunpack.c.h.b16 %v598
      %v1027 = vunpack.c.l.b16 %v599
      %v1028 = vunpack.c.h.b16 %v599
      %v1029 = vunpack.c.l.b16 %v600
      %v1030 = vunpack.c.h.b16 %v600
      %v1031 = vunpack.c.l.b16 %v601
      %v1032 = vunpack.c.h.b16 %v601
      %v1033 = vunpack.c.l.b16 %v602
      %v1034 = vunpack.c.h.b16 %v602
      %v1035 = vpack.c.b16 %v765, %v747
      %v1036 = vpack.c.b16 %v766, %v748
      %v1037 = vpack.c.b16 %v767, %v749
      %v1038 = vpack.c.b16 %v768, %v750
      %v1039 = vpack.c.b16 %v769, %v751
      %v1040 = vpack.c.b16 %v770, %v752
      %v1041 = vpack.c.b16 %v771, %v753
      %v1042 = vpack.c.b16 %v772, %v754
      %v1043 = vpack.c.b16 %v773, %v755
      %v1044 = vpack.c.b16 %v774, %v756
      %v1045 = vpack.c.b16 %v775, %v757
      %v1046 = vpack.c.b16 %v776, %v758
      %v1047 = vpack.c.b16 %v777, %v759
      %v1048 = vpack.c.b16 %v778, %v760
      %v1049 = vpack.c.b16 %v779, %v761
      %v1050 = vpack.c.b16 %v780, %v762
      %v1051 = vpack.c.b16 %v781, %v763
      %v1052 = vpack.c.b16 %v782, %v764
      %v1053 = vpack.c.b16 %v801, %v783
      %v1054 = vpack.c.b16 %v802, %v784
      %v1055 = vpack.c.b16 %v803, %v785
      %v1056 = vpack.c.b16 %v804, %v786
      %v1057 = vpack.c.b16 %v805, %v787
      %v1058 = vpack.c.b16 %v806, %v788
      %v1059 = vpack.c.b16 %v807, %v789
      %v1060 = vpack.c.b16 %v808, %v790
      %v1061 = vpack.c.b16 %v809, %v791
      %v1062 = vpack.c.b16 %v810, %v792
      %v1063 = vpack.c.b16 %v811, %v793
      %v1064 = vpack.c.b16 %v812, %v794
      %v1065 = vpack.c.b16 %v813, %v795
      %v1066 = vpack.c.b16 %v814, %v796
      %v1067 = vpack.c.b16 %v815, %v797
      %v1068 = vpack.c.b16 %v816, %v798
      %v1069 = vpack.c.b16 %v817, %v799
      %v1070 = vpack.c.b16 %v818, %v800
      %v1071 = vpack.c.b16 %v837, %v819
      %v1072 = vpack.c.b16 %v838, %v820
      %v1073 = vpack.c.b16 %v839, %v821
      %v1074 = vpack.c.b16 %v840, %v822
      %v1075 = vpack.c.b16 %v841, %v823
      %v1076 = vpack.c.b16 %v842, %v824
      %v1077 = vpack.c.b16 %v843, %v825
      %v1078 = vpack.c.b16 %v844, %v826
      %v1079 = vpack.c.b16 %v845, %v827
      %v1080 = vpack.c.b16 %v846, %v828
      %v1081 = vpack.c.b16 %v847, %v829
      %v1082 = vpack.c.b16 %v848, %v830
      %v1083 = vpack.c.b16 %v849, %v831
      %v1084 = vpack.c.b16 %v850, %v832
      %v1085 = vpack.c.b16 %v851, %v833
      %v1086 = vpack.c.b16 %v852, %v834
      %v1087 = vpack.c.b16 %v853, %v835
      %v1088 = vpack.c.b16 %v854, %v836
      %v1089 = vpack.c.b16 %v873, %v855
      %v1090 = vpack.c.b16 %v874, %v856
      %v1091 = vpack.c.b16 %v875, %v857
      %v1092 = vpack.c.b16 %v876, %v858
      %v1093 = vpack.c.b16 %v877, %v859
      %v1094 = vpack.c.b16 %v878, %v860
      %v1095 = vpack.c.b16 %v879, %v861
      %v1096 = vpack.c.b16 %v880, %v862
      %v1097 = vpack.c.b16 %v881, %v863
      %v1098 = vpack.c.b16 %v882, %v864
      %v1099 = vpack.c.b16 %v883, %v865
      %v1100 = vpack.c.b16 %v884, %v866
      %v1101 = vpack.c.b16 %v885, %v867
      %v1102 = vpack.c.b16 %v886, %v868
      %v1103 = vpack.c.b16 %v887, %v869
      %v1104 = vpack.c.b16 %v888, %v870
      %v1105 = vpack.c.b16 %v889, %v871
      %v1106 = vpack.c.b16 %v890, %v872
      %v1107 = vpack.c.b16 %v909, %v891
      %v1108 = vpack.c.b16 %v910, %v892
      %v1109 = vpack.c.b16 %v911, %v893
      %v1110 = vpack.c.b16 %v912, %v894
      %v1111 = vpack.c.b16 %v913, %v895
      %v1112 = vpack.c.b16 %v914, %v896
      %v1113 = vpack.c.b16 %v915, %v897
      %v1114 = vpack.c.b16 %v916, %v898
      %v1115 = vpack.c.b16 %v917, %v899
      %v1116 = vpack.c.b16 %v918, %v900
      %v1117 = vpack.c.b16 %v919, %v901
      %v1118 = vpack.c.b16 %v920, %v902
      %v1119 = vpack.c.b16 %v921, %v903
      %v1120 = vpack.c.b16 %v922, %v904
      %v1121 = vpack.c.b16 %v923, %v905
      %v1122 = vpack.c.b16 %v924, %v906
      %v1123 = vpack.c.b16 %v925, %v907
      %v1124 = vpack.c.b16 %v926, %v908
      %v1125 = vpack.c.b16 %v945, %v927
      %v1126 = vpack.c.b16 %v946, %v928
      %v1127 = vpack.c.b16 %v947, %v929
      %v1128 = vpack.c.b16 %v948, %v930
      %v1129 = vpack.c.b16 %v949, %v931
      %v1130 = vpack.c.b16 %v950, %v932
      %v1131 = vpack.c.b16 %v951, %v933
      %v1132 = vpack.c.b16 %v952, %v934
      %v1133 = vpack.c.b16 %v953, %v935
      %v1134 = vpack.c.b16 %v954, %v936
      %v1135 = vpack.c.b16 %v955, %v937
      %v1136 = vpack.c.b16 %v956, %v938
      %v1137 = vpack.c.b16 %v957, %v939
      %v1138 = vpack.c.b16 %v958, %v940
      %v1139 = vpack.c.b16 %v959, %v941
      %v1140 = vpack.c.b16 %v960, %v942
      %v1141 = vpack.c.b16 %v961, %v943
      %v1142 = vpack.c.b16 %v962, %v944
      %v1143 = vpack.c.b16 %v981, %v963
      %v1144 = vpack.c.b16 %v982, %v964
      %v1145 = vpack.c.b16 %v983, %v965
      %v1146 = vpack.c.b16 %v984, %v966
      %v1147 = vpack.c.b16 %v985, %v967
      %v1148 = vpack.c.b16 %v986, %v968
      %v1149 = vpack.c.b16 %v987, %v969
      %v1150 = vpack.c.b16 %v988, %v970
      %v1151 = vpack.c.b16 %v989, %v971
      %v1152 = vpack.c.b16 %v990, %v972
      %v1153 = vpack.c.b16 %v991, %v973
      %v1154 = vpack.c.b16 %v992, %v974
      %v1155 = vpack.c.b16 %v993, %v975
      %v1156 = vpack.c.b16 %v994, %v976
      %v1157 = vpack.c.b16 %v995, %v977
      %v1158 = vpack.c.b16 %v996, %v978
      %v1159 = vpack.c.b16 %v997, %v979
      %v1160 = vpack.c.b16 %v998, %v980
      %v1161 = vpack.c.b16 %v1017, %v999
      %v1162 = vpack.c.b16 %v1018, %v1000
      %v1163 = vpack.c.b16 %v1019, %v1001
      %v1164 = vpack.c.b16 %v1020, %v1002
      %v1165 = vpack.c.b16 %v1021, %v1003
      %v1166 = vpack.c.b16 %v1022, %v1004
      %v1167 = vpack.c.b16 %v1023, %v1005
      %v1168 = vpack.c.b16 %v1024, %v1006
      %v1169 = vpack.c.b16 %v1025, %v1007
      %v1170 = vpack.c.b16 %v1026, %v1008
      %v1171 = vpack.c.b16 %v1027, %v1009
      %v1172 = vpack.c.b16 %v1028, %v1010
      %v1173 = vpack.c.b16 %v1029, %v1011
      %v1174 = vpack.c.b16 %v1030, %v1012
      %v1175 = vpack.c.b16 %v1031, %v1013
      %v1176 = vpack.c.b16 %v1032, %v1014
      %v1177 = vpack.c.b16 %v1033, %v1015
      %v1178 = vpack.c.b16 %v1034, %v1016
      %1323 = vmatprep.subr.bf16.mxu0 %v1036
      %1324 = vmatpush1.bf16.msra.mxu0 %v1035
      %1325 = vmatprep.subr.bf16.mxu0 %v1054
      %1326 = vmatpush1.bf16.msra.mxu0 %v1053
      %1327 = vmatprep.subr.bf16.mxu0 %v1072
      %1328 = vmatpush1.bf16.msra.mxu0 %v1071
      %1329 = vmatprep.subr.bf16.mxu0 %v1090
      %1330 = vmatpush1.bf16.msra.mxu0 %v1089
      %1331 = vmatprep.subr.bf16.mxu0 %v1108
      %1332 = vmatpush1.bf16.msra.mxu0 %v1107
      %1333 = vmatprep.subr.bf16.mxu0 %v1126
      %1334 = vmatpush1.bf16.msra.mxu0 %v1125
      %1335 = vmatprep.subr.bf16.mxu0 %v1144
      %1336 = vmatpush1.bf16.msra.mxu0 %v1143
      %1337 = vmatprep.subr.bf16.mxu0 %v1162
      %1338 = vmatpush1.bf16.msra.mxu0 %v1161
      %1339 = vmatprep.subr.bf16.mxu0 0
      %1340 = vmatpush1.bf16.msra.mxu0 0
      %1341 = vmatprep.subr.bf16.mxu0 0
      %1342 = vmatpush1.bf16.msra.mxu0 0
      %1343 = vmatprep.subr.bf16.mxu0 0
      %1344 = vmatpush1.bf16.msra.mxu0 0
      %1345 = vmatprep.subr.bf16.mxu0 0
      %1346 = vmatpush1.bf16.msra.mxu0 0
      %1347 = vmatprep.subr.bf16.mxu0 0
      %1348 = vmatpush1.bf16.msra.mxu0 0
      %1349 = vmatprep.subr.bf16.mxu0 0
      %1350 = vmatpush1.bf16.msra.mxu0 0
      %1351 = vmatprep.subr.bf16.mxu0 0
      %1352 = vmatpush1.bf16.msra.mxu0 0
      %1353 = vmatprep.subr.bf16.mxu0 0
      %1354 = vmatpush1.bf16.msra.mxu0 0
      %1355 = vmatprep.mubr.bf16.mxu0 0
      %1356 = vmatmul.mubr.bf16.gmra.mrb[0].mxu0 %v458
      %v1357 = vpop.f32.mrb[0].mxu0
      %v1358 = vadd.f32 0.0, %v1357
      %v1359 = vpop.f32.mrb[0].mxu0
      %v1360 = vadd.f32 0.0, %v1359
      %v1361 = vpop.f32.mrb[0].mxu0
      %v1362 = vadd.f32 0.0, %v1361
      %v1363 = vpop.f32.mrb[0].mxu0
      %v1364 = vadd.f32 0.0, %v1363
      %1365 = vdwg.mxu0
      %1366 = vmatprep.subr.bf16.mxu0 %v1038
      %1367 = vmatpush1.bf16.msra.mxu0 %v1037
      %1368 = vmatprep.subr.bf16.mxu0 %v1056
      %1369 = vmatpush1.bf16.msra.mxu0 %v1055
      %1370 = vmatprep.subr.bf16.mxu0 %v1074
      %1371 = vmatpush1.bf16.msra.mxu0 %v1073
      %1372 = vmatprep.subr.bf16.mxu0 %v1092
      %1373 = vmatpush1.bf16.msra.mxu0 %v1091
      %1374 = vmatprep.subr.bf16.mxu0 %v1110
      %1375 = vmatpush1.bf16.msra.mxu0 %v1109
      %1376 = vmatprep.subr.bf16.mxu0 %v1128
      %1377 = vmatpush1.bf16.msra.mxu0 %v1127
      %1378 = vmatprep.subr.bf16.mxu0 %v1146
      %1379 = vmatpush1.bf16.msra.mxu0 %v1145
      %1380 = vmatprep.subr.bf16.mxu0 %v1164
      %1381 = vmatpush1.bf16.msra.mxu0 %v1163
      %1382 = vmatprep.subr.bf16.mxu0 0
      %1383 = vmatpush1.bf16.msra.mxu0 0
      %1384 = vmatprep.subr.bf16.mxu0 0
      %1385 = vmatpush1.bf16.msra.mxu0 0
      %1386 = vmatprep.subr.bf16.mxu0 0
      %1387 = vmatpush1.bf16.msra.mxu0 0
      %1388 = vmatprep.subr.bf16.mxu0 0
      %1389 = vmatpush1.bf16.msra.mxu0 0
      %1390 = vmatprep.subr.bf16.mxu0 0
      %1391 = vmatpush1.bf16.msra.mxu0 0
      %1392 = vmatprep.subr.bf16.mxu0 0
      %1393 = vmatpush1.bf16.msra.mxu0 0
      %1394 = vmatprep.subr.bf16.mxu0 0
      %1395 = vmatpush1.bf16.msra.mxu0 0
      %1396 = vmatprep.subr.bf16.mxu0 0
      %1397 = vmatpush1.bf16.msra.mxu0 0
      %1398 = vmatprep.mubr.bf16.mxu0 0
      %1399 = vmatmul.mubr.bf16.gmra.mrb[0].mxu0 %v458
      %v1400 = vpop.f32.mrb[0].mxu0
      %v1401 = vadd.f32 0.0, %v1400
      %v1402 = vpop.f32.mrb[0].mxu0
      %v1403 = vadd.f32 0.0, %v1402
      %v1404 = vpop.f32.mrb[0].mxu0
      %v1405 = vadd.f32 0.0, %v1404
      %v1406 = vpop.f32.mrb[0].mxu0
      %v1407 = vadd.f32 0.0, %v1406
      %1408 = vdwg.mxu0
      %1409 = vmatprep.subr.bf16.mxu0 %v1040
      %1410 = vmatpush1.bf16.msra.mxu0 %v1039
      %1411 = vmatprep.subr.bf16.mxu0 %v1058
      %1412 = vmatpush1.bf16.msra.mxu0 %v1057
      %1413 = vmatprep.subr.bf16.mxu0 %v1076
      %1414 = vmatpush1.bf16.msra.mxu0 %v1075
      %1415 = vmatprep.subr.bf16.mxu0 %v1094
      %1416 = vmatpush1.bf16.msra.mxu0 %v1093
      %1417 = vmatprep.subr.bf16.mxu0 %v1112
      %1418 = vmatpush1.bf16.msra.mxu0 %v1111
      %1419 = vmatprep.subr.bf16.mxu0 %v1130
      %1420 = vmatpush1.bf16.msra.mxu0 %v1129
      %1421 = vmatprep.subr.bf16.mxu0 %v1148
      %1422 = vmatpush1.bf16.msra.mxu0 %v1147
      %1423 = vmatprep.subr.bf16.mxu0 %v1166
      %1424 = vmatpush1.bf16.msra.mxu0 %v1165
      %1425 = vmatprep.subr.bf16.mxu0 0
      %1426 = vmatpush1.bf16.msra.mxu0 0
      %1427 = vmatprep.subr.bf16.mxu0 0
      %1428 = vmatpush1.bf16.msra.mxu0 0
      %1429 = vmatprep.subr.bf16.mxu0 0
      %1430 = vmatpush1.bf16.msra.mxu0 0
      %1431 = vmatprep.subr.bf16.mxu0 0
      %1432 = vmatpush1.bf16.msra.mxu0 0
      %1433 = vmatprep.subr.bf16.mxu0 0
      %1434 = vmatpush1.bf16.msra.mxu0 0
      %1435 = vmatprep.subr.bf16.mxu0 0
      %1436 = vmatpush1.bf16.msra.mxu0 0
      %1437 = vmatprep.subr.bf16.mxu0 0
      %1438 = vmatpush1.bf16.msra.mxu0 0
      %1439 = vmatprep.subr.bf16.mxu0 0
      %1440 = vmatpush1.bf16.msra.mxu0 0
      %1441 = vmatprep.mubr.bf16.mxu0 0
      %1442 = vmatmul.mubr.bf16.gmra.mrb[0].mxu0 %v458
      %v1443 = vpop.f32.mrb[0].mxu0
      %v1444 = vadd.f32 0.0, %v1443
      %v1445 = vpop.f32.mrb[0].mxu0
      %v1446 = vadd.f32 0.0, %v1445
      %v1447 = vpop.f32.mrb[0].mxu0
      %v1448 = vadd.f32 0.0, %v1447
      %v1449 = vpop.f32.mrb[0].mxu0
      %v1450 = vadd.f32 0.0, %v1449
      %1451 = vdwg.mxu0
      %1452 = vmatprep.subr.bf16.mxu0 %v1042
      %1453 = vmatpush1.bf16.msra.mxu0 %v1041
      %1454 = vmatprep.subr.bf16.mxu0 %v1060
      %1455 = vmatpush1.bf16.msra.mxu0 %v1059
      %1456 = vmatprep.subr.bf16.mxu0 %v1078
      %1457 = vmatpush1.bf16.msra.mxu0 %v1077
      %1458 = vmatprep.subr.bf16.mxu0 %v1096
      %1459 = vmatpush1.bf16.msra.mxu0 %v1095
      %1460 = vmatprep.subr.bf16.mxu0 %v1114
      %1461 = vmatpush1.bf16.msra.mxu0 %v1113
      %1462 = vmatprep.subr.bf16.mxu0 %v1132
      %1463 = vmatpush1.bf16.msra.mxu0 %v1131
      %1464 = vmatprep.subr.bf16.mxu0 %v1150
      %1465 = vmatpush1.bf16.msra.mxu0 %v1149
      %1466 = vmatprep.subr.bf16.mxu0 %v1168
      %1467 = vmatpush1.bf16.msra.mxu0 %v1167
      %1468 = vmatprep.subr.bf16.mxu0 0
      %1469 = vmatpush1.bf16.msra.mxu0 0
      %1470 = vmatprep.subr.bf16.mxu0 0
      %1471 = vmatpush1.bf16.msra.mxu0 0
      %1472 = vmatprep.subr.bf16.mxu0 0
      %1473 = vmatpush1.bf16.msra.mxu0 0
      %1474 = vmatprep.subr.bf16.mxu0 0
      %1475 = vmatpush1.bf16.msra.mxu0 0
      %1476 = vmatprep.subr.bf16.mxu0 0
      %1477 = vmatpush1.bf16.msra.mxu0 0
      %1478 = vmatprep.subr.bf16.mxu0 0
      %1479 = vmatpush1.bf16.msra.mxu0 0
      %1480 = vmatprep.subr.bf16.mxu0 0
      %1481 = vmatpush1.bf16.msra.mxu0 0
      %1482 = vmatprep.subr.bf16.mxu0 0
      %1483 = vmatpush1.bf16.msra.mxu0 0
      %1484 = vmatprep.mubr.bf16.mxu0 0
      %1485 = vmatmul.mubr.bf16.gmra.mrb[0].mxu0 %v458
      %v1486 = vpop.f32.mrb[0].mxu0
      %v1487 = vadd.f32 0.0, %v1486
      %v1488 = vpop.f32.mrb[0].mxu0
      %v1489 = vadd.f32 0.0, %v1488
      %v1490 = vpop.f32.mrb[0].mxu0
      %v1491 = vadd.f32 0.0, %v1490
      %v1492 = vpop.f32.mrb[0].mxu0
      %v1493 = vadd.f32 0.0, %v1492
      %1494 = vdwg.mxu0
      %1495 = vmatprep.subr.bf16.mxu0 %v1044
      %1496 = vmatpush1.bf16.msra.mxu0 %v1043
      %1497 = vmatprep.subr.bf16.mxu0 %v1062
      %1498 = vmatpush1.bf16.msra.mxu0 %v1061
      %1499 = vmatprep.subr.bf16.mxu0 %v1080
      %1500 = vmatpush1.bf16.msra.mxu0 %v1079
      %1501 = vmatprep.subr.bf16.mxu0 %v1098
      %1502 = vmatpush1.bf16.msra.mxu0 %v1097
      %1503 = vmatprep.subr.bf16.mxu0 %v1116
      %1504 = vmatpush1.bf16.msra.mxu0 %v1115
      %1505 = vmatprep.subr.bf16.mxu0 %v1134
      %1506 = vmatpush1.bf16.msra.mxu0 %v1133
      %1507 = vmatprep.subr.bf16.mxu0 %v1152
      %1508 = vmatpush1.bf16.msra.mxu0 %v1151
      %1509 = vmatprep.subr.bf16.mxu0 %v1170
      %1510 = vmatpush1.bf16.msra.mxu0 %v1169
      %1511 = vmatprep.subr.bf16.mxu0 0
      %1512 = vmatpush1.bf16.msra.mxu0 0
      %1513 = vmatprep.subr.bf16.mxu0 0
      %1514 = vmatpush1.bf16.msra.mxu0 0
      %1515 = vmatprep.subr.bf16.mxu0 0
      %1516 = vmatpush1.bf16.msra.mxu0 0
      %1517 = vmatprep.subr.bf16.mxu0 0
      %1518 = vmatpush1.bf16.msra.mxu0 0
      %1519 = vmatprep.subr.bf16.mxu0 0
      %1520 = vmatpush1.bf16.msra.mxu0 0
      %1521 = vmatprep.subr.bf16.mxu0 0
      %1522 = vmatpush1.bf16.msra.mxu0 0
      %1523 = vmatprep.subr.bf16.mxu0 0
      %1524 = vmatpush1.bf16.msra.mxu0 0
      %1525 = vmatprep.subr.bf16.mxu0 0
      %1526 = vmatpush1.bf16.msra.mxu0 0
      %1527 = vmatprep.mubr.bf16.mxu0 0
      %1528 = vmatmul.mubr.bf16.gmra.mrb[0].mxu0 %v458
      %v1529 = vpop.f32.mrb[0].mxu0
      %v1530 = vadd.f32 0.0, %v1529
      %v1531 = vpop.f32.mrb[0].mxu0
      %v1532 = vadd.f32 0.0, %v1531
      %v1533 = vpop.f32.mrb[0].mxu0
      %v1534 = vadd.f32 0.0, %v1533
      %v1535 = vpop.f32.mrb[0].mxu0
      %v1536 = vadd.f32 0.0, %v1535
      %1537 = vdwg.mxu0
      %1538 = vmatprep.subr.bf16.mxu0 %v1046
      %1539 = vmatpush1.bf16.msra.mxu0 %v1045
      %1540 = vmatprep.subr.bf16.mxu0 %v1064
      %1541 = vmatpush1.bf16.msra.mxu0 %v1063
      %1542 = vmatprep.subr.bf16.mxu0 %v1082
      %1543 = vmatpush1.bf16.msra.mxu0 %v1081
      %1544 = vmatprep.subr.bf16.mxu0 %v1100
      %1545 = vmatpush1.bf16.msra.mxu0 %v1099
      %1546 = vmatprep.subr.bf16.mxu0 %v1118
      %1547 = vmatpush1.bf16.msra.mxu0 %v1117
      %1548 = vmatprep.subr.bf16.mxu0 %v1136
      %1549 = vmatpush1.bf16.msra.mxu0 %v1135
      %1550 = vmatprep.subr.bf16.mxu0 %v1154
      %1551 = vmatpush1.bf16.msra.mxu0 %v1153
      %1552 = vmatprep.subr.bf16.mxu0 %v1172
      %1553 = vmatpush1.bf16.msra.mxu0 %v1171
      %1554 = vmatprep.subr.bf16.mxu0 0
      %1555 = vmatpush1.bf16.msra.mxu0 0
      %1556 = vmatprep.subr.bf16.mxu0 0
      %1557 = vmatpush1.bf16.msra.mxu0 0
      %1558 = vmatprep.subr.bf16.mxu0 0
      %1559 = vmatpush1.bf16.msra.mxu0 0
      %1560 = vmatprep.subr.bf16.mxu0 0
      %1561 = vmatpush1.bf16.msra.mxu0 0
      %1562 = vmatprep.subr.bf16.mxu0 0
      %1563 = vmatpush1.bf16.msra.mxu0 0
      %1564 = vmatprep.subr.bf16.mxu0 0
      %1565 = vmatpush1.bf16.msra.mxu0 0
      %1566 = vmatprep.subr.bf16.mxu0 0
      %1567 = vmatpush1.bf16.msra.mxu0 0
      %1568 = vmatprep.subr.bf16.mxu0 0
      %1569 = vmatpush1.bf16.msra.mxu0 0
      %1570 = vmatprep.mubr.bf16.mxu0 0
      %1571 = vmatmul.mubr.bf16.gmra.mrb[0].mxu0 %v458
      %v1572 = vpop.f32.mrb[0].mxu0
      %v1573 = vadd.f32 0.0, %v1572
      %v1574 = vpop.f32.mrb[0].mxu0
      %v1575 = vadd.f32 0.0, %v1574
      %v1576 = vpop.f32.mrb[0].mxu0
      %v1577 = vadd.f32 0.0, %v1576
      %v1578 = vpop.f32.mrb[0].mxu0
      %v1579 = vadd.f32 0.0, %v1578
      %1580 = vdwg.mxu0
      %1581 = vmatprep.subr.bf16.mxu0 %v1048
      %1582 = vmatpush1.bf16.msra.mxu0 %v1047
      %1583 = vmatprep.subr.bf16.mxu0 %v1066
      %1584 = vmatpush1.bf16.msra.mxu0 %v1065
      %1585 = vmatprep.subr.bf16.mxu0 %v1084
      %1586 = vmatpush1.bf16.msra.mxu0 %v1083
      %1587 = vmatprep.subr.bf16.mxu0 %v1102
      %1588 = vmatpush1.bf16.msra.mxu0 %v1101
      %1589 = vmatprep.subr.bf16.mxu0 %v1120
      %1590 = vmatpush1.bf16.msra.mxu0 %v1119
      %1591 = vmatprep.subr.bf16.mxu0 %v1138
      %1592 = vmatpush1.bf16.msra.mxu0 %v1137
      %1593 = vmatprep.subr.bf16.mxu0 %v1156
      %1594 = vmatpush1.bf16.msra.mxu0 %v1155
      %1595 = vmatprep.subr.bf16.mxu0 %v1174
      %1596 = vmatpush1.bf16.msra.mxu0 %v1173
      %1597 = vmatprep.subr.bf16.mxu0 0
      %1598 = vmatpush1.bf16.msra.mxu0 0
      %1599 = vmatprep.subr.bf16.mxu0 0
      %1600 = vmatpush1.bf16.msra.mxu0 0
      %1601 = vmatprep.subr.bf16.mxu0 0
      %1602 = vmatpush1.bf16.msra.mxu0 0
      %1603 = vmatprep.subr.bf16.mxu0 0
      %1604 = vmatpush1.bf16.msra.mxu0 0
      %1605 = vmatprep.subr.bf16.mxu0 0
      %1606 = vmatpush1.bf16.msra.mxu0 0
      %1607 = vmatprep.subr.bf16.mxu0 0
      %1608 = vmatpush1.bf16.msra.mxu0 0
      %1609 = vmatprep.subr.bf16.mxu0 0
      %1610 = vmatpush1.bf16.msra.mxu0 0
      %1611 = vmatprep.subr.bf16.mxu0 0
      %1612 = vmatpush1.bf16.msra.mxu0 0
      %1613 = vmatprep.mubr.bf16.mxu0 0
      %1614 = vmatmul.mubr.bf16.gmra.mrb[0].mxu0 %v458
      %v1615 = vpop.f32.mrb[0].mxu0
      %v1616 = vadd.f32 0.0, %v1615
      %v1617 = vpop.f32.mrb[0].mxu0
      %v1618 = vadd.f32 0.0, %v1617
      %v1619 = vpop.f32.mrb[0].mxu0
      %v1620 = vadd.f32 0.0, %v1619
      %v1621 = vpop.f32.mrb[0].mxu0
      %v1622 = vadd.f32 0.0, %v1621
      %1623 = vdwg.mxu0
      %1624 = vmatprep.subr.bf16.mxu0 %v1050
      %1625 = vmatpush1.bf16.msra.mxu0 %v1049
      %1626 = vmatprep.subr.bf16.mxu0 %v1068
      %1627 = vmatpush1.bf16.msra.mxu0 %v1067
      %1628 = vmatprep.subr.bf16.mxu0 %v1086
      %1629 = vmatpush1.bf16.msra.mxu0 %v1085
      %1630 = vmatprep.subr.bf16.mxu0 %v1104
      %1631 = vmatpush1.bf16.msra.mxu0 %v1103
      %1632 = vmatprep.subr.bf16.mxu0 %v1122
      %1633 = vmatpush1.bf16.msra.mxu0 %v1121
      %1634 = vmatprep.subr.bf16.mxu0 %v1140
      %1635 = vmatpush1.bf16.msra.mxu0 %v1139
      %1636 = vmatprep.subr.bf16.mxu0 %v1158
      %1637 = vmatpush1.bf16.msra.mxu0 %v1157
      %1638 = vmatprep.subr.bf16.mxu0 %v1176
      %1639 = vmatpush1.bf16.msra.mxu0 %v1175
      %1640 = vmatprep.subr.bf16.mxu0 0
      %1641 = vmatpush1.bf16.msra.mxu0 0
      %1642 = vmatprep.subr.bf16.mxu0 0
      %1643 = vmatpush1.bf16.msra.mxu0 0
      %1644 = vmatprep.subr.bf16.mxu0 0
      %1645 = vmatpush1.bf16.msra.mxu0 0
      %1646 = vmatprep.subr.bf16.mxu0 0
      %1647 = vmatpush1.bf16.msra.mxu0 0
      %1648 = vmatprep.subr.bf16.mxu0 0
      %1649 = vmatpush1.bf16.msra.mxu0 0
      %1650 = vmatprep.subr.bf16.mxu0 0
      %1651 = vmatpush1.bf16.msra.mxu0 0
      %1652 = vmatprep.subr.bf16.mxu0 0
      %1653 = vmatpush1.bf16.msra.mxu0 0
      %1654 = vmatprep.subr.bf16.mxu0 0
      %1655 = vmatpush1.bf16.msra.mxu0 0
      %1656 = vmatprep.mubr.bf16.mxu0 0
      %1657 = vmatmul.mubr.bf16.gmra.mrb[0].mxu0 %v458
      %v1658 = vpop.f32.mrb[0].mxu0
      %v1659 = vadd.f32 0.0, %v1658
      %v1660 = vpop.f32.mrb[0].mxu0
      %v1661 = vadd.f32 0.0, %v1660
      %v1662 = vpop.f32.mrb[0].mxu0
      %v1663 = vadd.f32 0.0, %v1662
      %v1664 = vpop.f32.mrb[0].mxu0
      %v1665 = vadd.f32 0.0, %v1664
      %1666 = vdwg.mxu0
      %1667 = vmatprep.subr.bf16.mxu0 %v1052
      %1668 = vmatpush1.bf16.msra.mxu0 %v1051
      %1669 = vmatprep.subr.bf16.mxu0 %v1070
      %1670 = vmatpush1.bf16.msra.mxu0 %v1069
      %1671 = vmatprep.subr.bf16.mxu0 %v1088
      %1672 = vmatpush1.bf16.msra.mxu0 %v1087
      %1673 = vmatprep.subr.bf16.mxu0 %v1106
      %1674 = vmatpush1.bf16.msra.mxu0 %v1105
      %1675 = vmatprep.subr.bf16.mxu0 %v1124
      %1676 = vmatpush1.bf16.msra.mxu0 %v1123
      %1677 = vmatprep.subr.bf16.mxu0 %v1142
      %1678 = vmatpush1.bf16.msra.mxu0 %v1141
      %1679 = vmatprep.subr.bf16.mxu0 %v1160
      %1680 = vmatpush1.bf16.msra.mxu0 %v1159
      %1681 = vmatprep.subr.bf16.mxu0 %v1178
      %1682 = vmatpush1.bf16.msra.mxu0 %v1177
      %1683 = vmatprep.subr.bf16.mxu0 0
      %1684 = vmatpush1.bf16.msra.mxu0 0
      %1685 = vmatprep.subr.bf16.mxu0 0
      %1686 = vmatpush1.bf16.msra.mxu0 0
      %1687 = vmatprep.subr.bf16.mxu0 0
      %1688 = vmatpush1.bf16.msra.mxu0 0
      %1689 = vmatprep.subr.bf16.mxu0 0
      %1690 = vmatpush1.bf16.msra.mxu0 0
      %1691 = vmatprep.subr.bf16.mxu0 0
      %1692 = vmatpush1.bf16.msra.mxu0 0
      %1693 = vmatprep.subr.bf16.mxu0 0
      %1694 = vmatpush1.bf16.msra.mxu0 0
      %1695 = vmatprep.subr.bf16.mxu0 0
      %1696 = vmatpush1.bf16.msra.mxu0 0
      %1697 = vmatprep.subr.bf16.mxu0 0
      %1698 = vmatpush1.bf16.msra.mxu0 0
      %1699 = vmatprep.mubr.bf16.mxu0 0
      %1700 = vmatmul.mubr.bf16.gmra.mrb[0].mxu0 %v458
      %v1701 = vpop.f32.mrb[0].mxu0
      %v1702 = vadd.f32 0.0, %v1701
      %v1703 = vpop.f32.mrb[0].mxu0
      %v1704 = vadd.f32 0.0, %v1703
      %v1705 = vpop.f32.mrb[0].mxu0
      %v1706 = vadd.f32 0.0, %v1705
      %v1707 = vpop.f32.mrb[0].mxu0
      %v1708 = vadd.f32 0.0, %v1707
      %1709 = vdwg.mxu0
      %v1710 = vlaneseq
      %v1711 = vshrl.u32 %v1710, 7
      %v1712 = vadd.s32 %v1711, 8
      %v1713 = vlaneseq
      %v1714 = vand.u32 %v1713, 127
      %vm1715 = vcmp.le.s32.totalorder %v1714, %v1711
      %vm1716 = vcmp.le.s32.totalorder %v1714, %v1712
      %v1717 = vld [vmem:[%s4] sm:$0xf]
      %v1718 = vld [vmem:[%s4 + $0x4] sm:$0xf]
      %v1719 = vld [vmem:[%s4 + $0x8] sm:$0xf]
      %v1720 = vld [vmem:[%s4 + $0xc] sm:$0xf]
      %v1721 = vld [vmem:[%s4 + $0x10] sm:$0xf]
      %v1722 = vld [vmem:[%s4 + $0x14] sm:$0xf]
      %v1723 = vld [vmem:[%s4 + $0x18] sm:$0xf]
      %v1724 = vld [vmem:[%s4 + $0x1c] sm:$0xf]
      %v1725 = vld [vmem:[%s4 + $0x20] sm:$0xf]
      %v1726 = vld [vmem:[%s4 + $0x24] sm:$0xf]
      %v1727 = vld [vmem:[%s4 + $0x28] sm:$0xf]
      %v1728 = vld [vmem:[%s4 + $0x2c] sm:$0xf]
      %v1729 = vld [vmem:[%s4 + $0x30] sm:$0xf]
      %v1730 = vld [vmem:[%s4 + $0x34] sm:$0xf]
      %v1731 = vld [vmem:[%s4 + $0x38] sm:$0xf]
      %v1732 = vld [vmem:[%s4 + $0x3c] sm:$0xf]
      %v1733 = vld [vmem:[%s4 + $0x40] sm:$0xf]
      %v1734 = vld [vmem:[%s4 + $0x44] sm:$0xf]
      %v1735 = vld [vmem:[%s4 + $0x48] sm:$0xf]
      %v1736 = vld [vmem:[%s4 + $0x4c] sm:$0xf]
      %v1737 = vld [vmem:[%s4 + $0x50] sm:$0xf]
      %v1738 = vld [vmem:[%s4 + $0x54] sm:$0xf]
      %v1739 = vld [vmem:[%s4 + $0x58] sm:$0xf]
      %v1740 = vld [vmem:[%s4 + $0x5c] sm:$0xf]
      %v1741 = vld [vmem:[%s4 + $0x60] sm:$0xf]
      %v1742 = vld [vmem:[%s4 + $0x64] sm:$0xf]
      %v1743 = vld [vmem:[%s4 + $0x68] sm:$0xf]
      %v1744 = vld [vmem:[%s4 + $0x6c] sm:$0xf]
      %v1745 = vld [vmem:[%s4 + $0x70] sm:$0xf]
      %v1746 = vld [vmem:[%s4 + $0x74] sm:$0xf]
      %v1747 = vld [vmem:[%s4 + $0x78] sm:$0xf]
      %v1748 = vld [vmem:[%s4 + $0x7c] sm:$0xf]
      %v1749 = vld [vmem:[%s4 + $0x80] sm:$0xf]
      %v1750 = vld [vmem:[%s4 + $0x84] sm:$0xf]
      %v1751 = vld [vmem:[%s4 + $0x88] sm:$0xf]
      %v1752 = vld [vmem:[%s4 + $0x8c] sm:$0xf]
      %v1753 = vld [vmem:[%s4 + $0x90] sm:$0xf]
      %v1754 = vld [vmem:[%s4 + $0x94] sm:$0xf]
      %v1755 = vld [vmem:[%s4 + $0x98] sm:$0xf]
      %v1756 = vld [vmem:[%s4 + $0x9c] sm:$0xf]
      %v1757 = vld [vmem:[%s4 + $0xa0] sm:$0xf]
      %v1758 = vld [vmem:[%s4 + $0xa4] sm:$0xf]
      %v1759 = vld [vmem:[%s4 + $0xa8] sm:$0xf]
      %v1760 = vld [vmem:[%s4 + $0xac] sm:$0xf]
      %v1761 = vld [vmem:[%s4 + $0xb0] sm:$0xf]
      %v1762 = vld [vmem:[%s4 + $0xb4] sm:$0xf]
      %v1763 = vld [vmem:[%s4 + $0xb8] sm:$0xf]
      %v1764 = vld [vmem:[%s4 + $0xbc] sm:$0xf]
      %v1765 = vld [vmem:[%s4 + $0xc0] sm:$0xf]
      %v1766 = vld [vmem:[%s4 + $0xc4] sm:$0xf]
      %v1767 = vld [vmem:[%s4 + $0xc8] sm:$0xf]
      %v1768 = vld [vmem:[%s4 + $0xcc] sm:$0xf]
      %v1769 = vld [vmem:[%s4 + $0xd0] sm:$0xf]
      %v1770 = vld [vmem:[%s4 + $0xd4] sm:$0xf]
      %v1771 = vld [vmem:[%s4 + $0xd8] sm:$0xf]
      %v1772 = vld [vmem:[%s4 + $0xdc] sm:$0xf]
      %v1773 = vld [vmem:[%s4 + $0xe0] sm:$0xf]
      %v1774 = vld [vmem:[%s4 + $0xe4] sm:$0xf]
      %v1775 = vld [vmem:[%s4 + $0xe8] sm:$0xf]
      %v1776 = vld [vmem:[%s4 + $0xec] sm:$0xf]
      %v1777 = vld [vmem:[%s4 + $0xf0] sm:$0xf]
      %v1778 = vld [vmem:[%s4 + $0xf4] sm:$0xf]
      %v1779 = vld [vmem:[%s4 + $0xf8] sm:$0xf]
      %v1780 = vld [vmem:[%s4 + $0xfc] sm:$0xf]
      %v1781 = vld [vmem:[%s4 + $0x100] sm:$0xf]
      %v1782 = vld [vmem:[%s4 + $0x104] sm:$0xf]
      %v1783 = vld [vmem:[%s4 + $0x108] sm:$0xf]
      %v1784 = vld [vmem:[%s4 + $0x10c] sm:$0xf]
      %v1785 = vld [vmem:[%s4 + $0x110] sm:$0xf]
      %v1786 = vld [vmem:[%s4 + $0x114] sm:$0xf]
      %v1787 = vld [vmem:[%s4 + $0x118] sm:$0xf]
      %v1788 = vld [vmem:[%s4 + $0x11c] sm:$0xf]
      %v1789 = vld [vmem:[%s4 + $0x120] sm:$0xf]
      %v1790 = vld [vmem:[%s4 + $0x124] sm:$0xf]
      %v1791 = vld [vmem:[%s4 + $0x128] sm:$0xf]
      %v1792 = vld [vmem:[%s4 + $0x12c] sm:$0xf]
      %v1793 = vld [vmem:[%s4 + $0x130] sm:$0xf]
      %v1794 = vld [vmem:[%s4 + $0x134] sm:$0xf]
      %v1795 = vld [vmem:[%s4 + $0x138] sm:$0xf]
      %v1796 = vld [vmem:[%s4 + $0x13c] sm:$0xf]
      %v1797 = vld [vmem:[%s4 + $0x140] sm:$0xf]
      %v1798 = vld [vmem:[%s4 + $0x144] sm:$0xf]
      %v1799 = vld [vmem:[%s4 + $0x148] sm:$0xf]
      %v1800 = vld [vmem:[%s4 + $0x14c] sm:$0xf]
      %v1801 = vld [vmem:[%s4 + $0x150] sm:$0xf]
      %v1802 = vld [vmem:[%s4 + $0x154] sm:$0xf]
      %v1803 = vld [vmem:[%s4 + $0x158] sm:$0xf]
      %v1804 = vld [vmem:[%s4 + $0x15c] sm:$0xf]
      %v1805 = vld [vmem:[%s4 + $0x160] sm:$0xf]
      %v1806 = vld [vmem:[%s4 + $0x164] sm:$0xf]
      %v1807 = vld [vmem:[%s4 + $0x168] sm:$0xf]
      %v1808 = vld [vmem:[%s4 + $0x16c] sm:$0xf]
      %v1809 = vld [vmem:[%s4 + $0x170] sm:$0xf]
      %v1810 = vld [vmem:[%s4 + $0x174] sm:$0xf]
      %v1811 = vld [vmem:[%s4 + $0x178] sm:$0xf]
      %v1812 = vld [vmem:[%s4 + $0x17c] sm:$0xf]
      %v1813 = vpack.c.bf16 %v1362, %v1358
      %v1814 = vpack.c.bf16 %v1491, %v1487
      %1815 = vmatprep.subr.bf16.mxu0 0
      %1816 = vmatpush1.bf16.xpose.msra.mxu0 %v1814
      %1817 = vmatprep.subr.bf16.mxu0 0
      %1818 = vmatpush1.bf16.xpose.msra.mxu0 0
      %1819 = vmatprep.subr.bf16.mxu0 0
      %1820 = vmatpush1.bf16.xpose.msra.mxu0 0
      %1821 = vmatprep.subr.bf16.mxu0 0
      %1822 = vmatpush1.bf16.xpose.msra.mxu0 0
      %1823 = vmatprep.subr.bf16.mxu0 0
      %1824 = vmatpush1.bf16.xpose.msra.mxu0 0
      %1825 = vmatprep.subr.bf16.mxu0 0
      %1826 = vmatpush1.bf16.xpose.msra.mxu0 0
      %1827 = vmatprep.subr.bf16.mxu0 0
      %1828 = vmatpush1.bf16.xpose.msra.mxu0 0
      %1829 = vmatprep.subr.bf16.mxu0 0
      %1830 = vmatpush1.bf16.xpose.msra.mxu0 0
      %1831 = vmatprep.subr.bf16.mxu0 0
      %1832 = vmatpush1.bf16.xpose.msra.mxu0 0
      %1833 = vmatprep.subr.bf16.mxu0 0
      %1834 = vmatpush1.bf16.xpose.msra.mxu0 0
      %1835 = vmatprep.subr.bf16.mxu0 0
      %1836 = vmatpush1.bf16.xpose.msra.mxu0 0
      %1837 = vmatprep.subr.bf16.mxu0 0
      %1838 = vmatpush1.bf16.xpose.msra.mxu0 0
      %1839 = vmatprep.subr.bf16.mxu0 0
      %1840 = vmatpush1.bf16.xpose.msra.mxu0 0
      %1841 = vmatprep.subr.bf16.mxu0 0
      %1842 = vmatpush1.bf16.xpose.msra.mxu0 0
      %1843 = vmatprep.subr.bf16.mxu0 0
      %1844 = vmatpush1.bf16.xpose.msra.mxu0 0
      %1845 = vmatprep.subr.bf16.mxu0 0
      %1846 = vmatpush1.bf16.xpose.msra.mxu0 0
      %1847 = vmatprep.mubr.bf16.mxu0 0
      %1848 = vmatmul.mubr.bf16.gmra.mrb[0].mxu0 %v1813
      %v1849 = vpop.f32.mrb[0].mxu0
      %v1850 = vadd.f32 0.0, %v1849
      %v1851 = vpop.f32.mrb[0].mxu0
      %v1852 = vpop.f32.mrb[0].mxu0
      %v1853 = vadd.f32 0.0, %v1852
      %v1854 = vpop.f32.mrb[0].mxu0
      %1855 = vdwg.mxu0
      %v1856 = vmul.f32 %v1850, 0.2182179
      %v1857 = vmul.f32 %v1853, 0.2182179
      %v1858 = vsel %vm1715, %v1856, -inf
      %v1859 = vsel %vm1716, %v1857, -inf
      %vm1860 = vcmask 130048
      %v1861 = vsel %vm1860, %v1858, -inf
      %1862 = vmax.xlane.f32.xlu0 %v1861
      %v1863 = vpop.xlane.xlu0 %1862
      %v1864 = vsel %vm1860, %v1859, -inf
      %1865 = vmax.xlane.f32.xlu0 %v1864
      %v1866 = vpop.xlane.xlu0 %1865
      %v1867 = vsub.f32 %v1858, %v1863
      %v1868 = vsub.f32 %v1859, %v1866
      %v1869 = vmul.f32 %v1867, 1.442695
      %v1870 = vpow.pop %v1869
      %v1871 = vmul.f32 %v1868, 1.442695
      %v1872 = vpow.pop %v1871
      %v1873 = vsel %vm1860, %v1870, 0.0
      %1874 = vadd.xlane.f32.xlu0 %v1873
      %v1875 = vpop.xlane.xlu0 %1874
      %v1876 = vsel %vm1860, %v1872, 0.0
      %1877 = vadd.xlane.f32.xlu0 %v1876
      %v1878 = vpop.xlane.xlu0 %1877
      %v1879 = vrcp.pop %v1875
      %v1880 = vmul.f32 %v1870, %v1879
      %v1881 = vrcp.pop %v1878
      %v1882 = vmul.f32 %v1872, %v1881
      %v1883 = vpack.c.bf16 %v1882, %v1880
      %v1884 = vpack.c.bf16 %v1620, %v1616
      %v1886 = vsel %vm1860, %v1883, 0
      %1888 = vmatprep.subr.bf16.mxu0 0
      %1889 = vmatpush1.bf16.msra.mxu0 %v1884
      %1890 = vmatprep.subr.bf16.mxu0 0
      %1891 = vmatpush1.bf16.msra.mxu0 0
      %1892 = vmatprep.subr.bf16.mxu0 0
      %1893 = vmatpush1.bf16.msra.mxu0 0
      %1894 = vmatprep.subr.bf16.mxu0 0
      %1895 = vmatpush1.bf16.msra.mxu0 0
      %1896 = vmatprep.subr.bf16.mxu0 0
      %1897 = vmatpush1.bf16.msra.mxu0 0
      %1898 = vmatprep.subr.bf16.mxu0 0
      %1899 = vmatpush1.bf16.msra.mxu0 0
      %1900 = vmatprep.subr.bf16.mxu0 0
      %1901 = vmatpush1.bf16.msra.mxu0 0
      %1902 = vmatprep.subr.bf16.mxu0 0
      %1903 = vmatpush1.bf16.msra.mxu0 0
      %1904 = vmatprep.subr.bf16.mxu0 0
      %1905 = vmatpush1.bf16.msra.mxu0 0
      %1906 = vmatprep.subr.bf16.mxu0 0
      %1907 = vmatpush1.bf16.msra.mxu0 0
      %1908 = vmatprep.subr.bf16.mxu0 0
      %1909 = vmatpush1.bf16.msra.mxu0 0
      %1910 = vmatprep.subr.bf16.mxu0 0
      %1911 = vmatpush1.bf16.msra.mxu0 0
      %1912 = vmatprep.subr.bf16.mxu0 0
      %1913 = vmatpush1.bf16.msra.mxu0 0
      %1914 = vmatprep.subr.bf16.mxu0 0
      %1915 = vmatpush1.bf16.msra.mxu0 0
      %1916 = vmatprep.subr.bf16.mxu0 0
      %1917 = vmatpush1.bf16.msra.mxu0 0
      %1918 = vmatprep.subr.bf16.mxu0 0
      %1919 = vmatpush1.bf16.msra.mxu0 0
      %1920 = vmatprep.mubr.bf16.mxu0 0
      %1921 = vmatmul.mubr.bf16.gmra.mrb[0].mxu0 %v1886
      %v1922 = vpop.f32.mrb[0].mxu0
      %v1923 = vadd.f32 0.0, %v1922
      %v1924 = vpop.f32.mrb[0].mxu0
      %v1925 = vpop.f32.mrb[0].mxu0
      %v1926 = vadd.f32 0.0, %v1925
      %v1927 = vpop.f32.mrb[0].mxu0
      %1928 = vdwg.mxu0
      %v1929 = vpack.c.bf16 %v1926, %v1923
      %v1930 = vpack.c.bf16 %v1364, %v1360
      %v1931 = vpack.c.bf16 %v1493, %v1489
      %1932 = vmatprep.subr.bf16.mxu0 0
      %1933 = vmatpush1.bf16.xpose.msra.mxu0 %v1931
      %1934 = vmatprep.subr.bf16.mxu0 0
      %1935 = vmatpush1.bf16.xpose.msra.mxu0 0
      %1936 = vmatprep.subr.bf16.mxu0 0
      %1937 = vmatpush1.bf16.xpose.msra.mxu0 0
      %1938 = vmatprep.subr.bf16.mxu0 0
      %1939 = vmatpush1.bf16.xpose.msra.mxu0 0
      %1940 = vmatprep.subr.bf16.mxu0 0
      %1941 = vmatpush1.bf16.xpose.msra.mxu0 0
      %1942 = vmatprep.subr.bf16.mxu0 0
      %1943 = vmatpush1.bf16.xpose.msra.mxu0 0
      %1944 = vmatprep.subr.bf16.mxu0 0
      %1945 = vmatpush1.bf16.xpose.msra.mxu0 0
      %1946 = vmatprep.subr.bf16.mxu0 0
      %1947 = vmatpush1.bf16.xpose.msra.mxu0 0
      %1948 = vmatprep.subr.bf16.mxu0 0
      %1949 = vmatpush1.bf16.xpose.msra.mxu0 0
      %1950 = vmatprep.subr.bf16.mxu0 0
      %1951 = vmatpush1.bf16.xpose.msra.mxu0 0
      %1952 = vmatprep.subr.bf16.mxu0 0
      %1953 = vmatpush1.bf16.xpose.msra.mxu0 0
      %1954 = vmatprep.subr.bf16.mxu0 0
      %1955 = vmatpush1.bf16.xpose.msra.mxu0 0
      %1956 = vmatprep.subr.bf16.mxu0 0
      %1957 = vmatpush1.bf16.xpose.msra.mxu0 0
      %1958 = vmatprep.subr.bf16.mxu0 0
      %1959 = vmatpush1.bf16.xpose.msra.mxu0 0
      %1960 = vmatprep.subr.bf16.mxu0 0
      %1961 = vmatpush1.bf16.xpose.msra.mxu0 0
      %1962 = vmatprep.subr.bf16.mxu0 0
      %1963 = vmatpush1.bf16.xpose.msra.mxu0 0
      %1964 = vmatprep.mubr.bf16.mxu0 0
      %1965 = vmatmul.mubr.bf16.gmra.mrb[0].mxu0 %v1930
      %v1966 = vpop.f32.mrb[0].mxu0
      %v1967 = vadd.f32 0.0, %v1966
      %v1968 = vpop.f32.mrb[0].mxu0
      %v1969 = vpop.f32.mrb[0].mxu0
      %v1970 = vadd.f32 0.0, %v1969
      %v1971 = vpop.f32.mrb[0].mxu0
      %1972 = vdwg.mxu0
      %v1973 = vmul.f32 %v1967, 0.2182179
      %v1974 = vmul.f32 %v1970, 0.2182179
      %v1975 = vsel %vm1715, %v1973, -inf
      %v1976 = vsel %vm1716, %v1974, -inf
      %v1977 = vsel %vm1860, %v1975, -inf
      %1978 = vmax.xlane.f32.xlu0 %v1977
      %v1979 = vpop.xlane.xlu0 %1978
      %v1980 = vsel %vm1860, %v1976, -inf
      %1981 = vmax.xlane.f32.xlu0 %v1980
      %v1982 = vpop.xlane.xlu0 %1981
      %v1983 = vsub.f32 %v1975, %v1979
      %v1984 = vsub.f32 %v1976, %v1982
      %v1985 = vmul.f32 %v1983, 1.442695
      %v1986 = vpow.pop %v1985
      %v1987 = vmul.f32 %v1984, 1.442695
      %v1988 = vpow.pop %v1987
      %v1989 = vsel %vm1860, %v1986, 0.0
      %1990 = vadd.xlane.f32.xlu0 %v1989
      %v1991 = vpop.xlane.xlu0 %1990
      %v1992 = vsel %vm1860, %v1988, 0.0
      %1993 = vadd.xlane.f32.xlu0 %v1992
      %v1994 = vpop.xlane.xlu0 %1993
      %v1995 = vrcp.pop %v1991
      %v1996 = vmul.f32 %v1986, %v1995
      %v1997 = vrcp.pop %v1994
      %v1998 = vmul.f32 %v1988, %v1997
      %v1999 = vpack.c.bf16 %v1998, %v1996
      %v2000 = vpack.c.bf16 %v1622, %v1618
      %v2002 = vsel %vm1860, %v1999, 0
      %2004 = vmatprep.subr.bf16.mxu0 0
      %2005 = vmatpush1.bf16.msra.mxu0 %v2000
      %2006 = vmatprep.subr.bf16.mxu0 0
      %2007 = vmatpush1.bf16.msra.mxu0 0
      %2008 = vmatprep.subr.bf16.mxu0 0
      %2009 = vmatpush1.bf16.msra.mxu0 0
      %2010 = vmatprep.subr.bf16.mxu0 0
      %2011 = vmatpush1.bf16.msra.mxu0 0
      %2012 = vmatprep.subr.bf16.mxu0 0
      %2013 = vmatpush1.bf16.msra.mxu0 0
      %2014 = vmatprep.subr.bf16.mxu0 0
      %2015 = vmatpush1.bf16.msra.mxu0 0
      %2016 = vmatprep.subr.bf16.mxu0 0
      %2017 = vmatpush1.bf16.msra.mxu0 0
      %2018 = vmatprep.subr.bf16.mxu0 0
      %2019 = vmatpush1.bf16.msra.mxu0 0
      %2020 = vmatprep.subr.bf16.mxu0 0
      %2021 = vmatpush1.bf16.msra.mxu0 0
      %2022 = vmatprep.subr.bf16.mxu0 0
      %2023 = vmatpush1.bf16.msra.mxu0 0
      %2024 = vmatprep.subr.bf16.mxu0 0
      %2025 = vmatpush1.bf16.msra.mxu0 0
      %2026 = vmatprep.subr.bf16.mxu0 0
      %2027 = vmatpush1.bf16.msra.mxu0 0
      %2028 = vmatprep.subr.bf16.mxu0 0
      %2029 = vmatpush1.bf16.msra.mxu0 0
      %2030 = vmatprep.subr.bf16.mxu0 0
      %2031 = vmatpush1.bf16.msra.mxu0 0
      %2032 = vmatprep.subr.bf16.mxu0 0
      %2033 = vmatpush1.bf16.msra.mxu0 0
      %2034 = vmatprep.subr.bf16.mxu0 0
      %2035 = vmatpush1.bf16.msra.mxu0 0
      %2036 = vmatprep.mubr.bf16.mxu0 0
      %2037 = vmatmul.mubr.bf16.gmra.mrb[0].mxu0 %v2002
      %v2038 = vpop.f32.mrb[0].mxu0
      %v2039 = vadd.f32 0.0, %v2038
      %v2040 = vpop.f32.mrb[0].mxu0
      %v2041 = vpop.f32.mrb[0].mxu0
      %v2042 = vadd.f32 0.0, %v2041
      %v2043 = vpop.f32.mrb[0].mxu0
      %2044 = vdwg.mxu0
      %v2045 = vpack.c.bf16 %v2042, %v2039
      %v2062 = vunpack.c.l.b16 %v1733
      %v2063 = vunpack.c.l.b16 %v1734
      %v2064 = vunpack.c.l.b16 %v1735
      %v2065 = vunpack.c.l.b16 %v1736
      %v2066 = vunpack.c.l.b16 %v1737
      %v2067 = vunpack.c.l.b16 %v1738
      %v2068 = vunpack.c.l.b16 %v1739
      %v2069 = vunpack.c.l.b16 %v1740
      %v2070 = vunpack.c.l.b16 %v1741
      %v2071 = vunpack.c.l.b16 %v1742
      %v2072 = vunpack.c.l.b16 %v1743
      %v2073 = vunpack.c.l.b16 %v1744
      %v2074 = vunpack.c.l.b16 %v1745
      %v2075 = vunpack.c.l.b16 %v1746
      %v2076 = vunpack.c.l.b16 %v1747
      %v2077 = vunpack.c.l.b16 %v1748
      %v2078 = vpack.c.b16 %v2063, %v2062
      %v2079 = vpack.c.b16 %v2065, %v2064
      %v2080 = vpack.c.b16 %v2067, %v2066
      %v2081 = vpack.c.b16 %v2069, %v2068
      %v2082 = vpack.c.b16 %v2071, %v2070
      %v2083 = vpack.c.b16 %v2073, %v2072
      %v2084 = vpack.c.b16 %v2075, %v2074
      %v2085 = vpack.c.b16 %v2077, %v2076
      %2094 = vmatprep.subr.bf16.mxu0 0
      %2095 = vmatpush1.bf16.msra.mxu0 %v2078
      %2096 = vmatprep.subr.bf16.mxu0 0
      %2097 = vmatpush1.bf16.msra.mxu0 %v2079
      %2098 = vmatprep.subr.bf16.mxu0 0
      %2099 = vmatpush1.bf16.msra.mxu0 %v2080
      %2100 = vmatprep.subr.bf16.mxu0 0
      %2101 = vmatpush1.bf16.msra.mxu0 %v2081
      %2102 = vmatprep.subr.bf16.mxu0 0
      %2103 = vmatpush1.bf16.msra.mxu0 %v2082
      %2104 = vmatprep.subr.bf16.mxu0 0
      %2105 = vmatpush1.bf16.msra.mxu0 %v2083
      %2106 = vmatprep.subr.bf16.mxu0 0
      %2107 = vmatpush1.bf16.msra.mxu0 %v2084
      %2108 = vmatprep.subr.bf16.mxu0 0
      %2109 = vmatpush1.bf16.msra.mxu0 %v2085
      %2110 = vmatprep.subr.bf16.mxu0 0
      %2111 = vmatpush1.bf16.msra.mxu0 0
      %2112 = vmatprep.subr.bf16.mxu0 0
      %2113 = vmatpush1.bf16.msra.mxu0 0
      %2114 = vmatprep.subr.bf16.mxu0 0
      %2115 = vmatpush1.bf16.msra.mxu0 0
      %2116 = vmatprep.subr.bf16.mxu0 0
      %2117 = vmatpush1.bf16.msra.mxu0 0
      %2118 = vmatprep.subr.bf16.mxu0 0
      %2119 = vmatpush1.bf16.msra.mxu0 0
      %2120 = vmatprep.subr.bf16.mxu0 0
      %2121 = vmatpush1.bf16.msra.mxu0 0
      %2122 = vmatprep.subr.bf16.mxu0 0
      %2123 = vmatpush1.bf16.msra.mxu0 0
      %2124 = vmatprep.subr.bf16.mxu0 0
      %2125 = vmatpush1.bf16.msra.mxu0 0
      %2126 = vmatprep.mubr.bf16.mxu0 0
      %2127 = vmatmul.mubr.bf16.gmra.mrb[0].mxu0 %v2045
      %v2128 = vpop.f32.mrb[0].mxu0
      %v2129 = vadd.f32 0.0, %v2128
      %v2130 = vpop.f32.mrb[0].mxu0
      %v2131 = vpop.f32.mrb[0].mxu0
      %v2132 = vadd.f32 0.0, %v2131
      %v2133 = vpop.f32.mrb[0].mxu0
      %2134 = vdwg.mxu0
      %v2151 = vunpack.c.l.b16 %v1717
      %v2152 = vunpack.c.l.b16 %v1718
      %v2153 = vunpack.c.l.b16 %v1719
      %v2154 = vunpack.c.l.b16 %v1720
      %v2155 = vunpack.c.l.b16 %v1721
      %v2156 = vunpack.c.l.b16 %v1722
      %v2157 = vunpack.c.l.b16 %v1723
      %v2158 = vunpack.c.l.b16 %v1724
      %v2159 = vunpack.c.l.b16 %v1725
      %v2160 = vunpack.c.l.b16 %v1726
      %v2161 = vunpack.c.l.b16 %v1727
      %v2162 = vunpack.c.l.b16 %v1728
      %v2163 = vunpack.c.l.b16 %v1729
      %v2164 = vunpack.c.l.b16 %v1730
      %v2165 = vunpack.c.l.b16 %v1731
      %v2166 = vunpack.c.l.b16 %v1732
      %v2167 = vpack.c.b16 %v2152, %v2151
      %v2168 = vpack.c.b16 %v2154, %v2153
      %v2169 = vpack.c.b16 %v2156, %v2155
      %v2170 = vpack.c.b16 %v2158, %v2157
      %v2171 = vpack.c.b16 %v2160, %v2159
      %v2172 = vpack.c.b16 %v2162, %v2161
      %v2173 = vpack.c.b16 %v2164, %v2163
      %v2174 = vpack.c.b16 %v2166, %v2165
      %2183 = vmatprep.subr.bf16.mxu0 0
      %2184 = vmatpush1.bf16.msra.mxu0 %v2167
      %2185 = vmatprep.subr.bf16.mxu0 0
      %2186 = vmatpush1.bf16.msra.mxu0 %v2168
      %2187 = vmatprep.subr.bf16.mxu0 0
      %2188 = vmatpush1.bf16.msra.mxu0 %v2169
      %2189 = vmatprep.subr.bf16.mxu0 0
      %2190 = vmatpush1.bf16.msra.mxu0 %v2170
      %2191 = vmatprep.subr.bf16.mxu0 0
      %2192 = vmatpush1.bf16.msra.mxu0 %v2171
      %2193 = vmatprep.subr.bf16.mxu0 0
      %2194 = vmatpush1.bf16.msra.mxu0 %v2172
      %2195 = vmatprep.subr.bf16.mxu0 0
      %2196 = vmatpush1.bf16.msra.mxu0 %v2173
      %2197 = vmatprep.subr.bf16.mxu0 0
      %2198 = vmatpush1.bf16.msra.mxu0 %v2174
      %2199 = vmatprep.subr.bf16.mxu0 0
      %2200 = vmatpush1.bf16.msra.mxu0 0
      %2201 = vmatprep.subr.bf16.mxu0 0
      %2202 = vmatpush1.bf16.msra.mxu0 0
      %2203 = vmatprep.subr.bf16.mxu0 0
      %2204 = vmatpush1.bf16.msra.mxu0 0
      %2205 = vmatprep.subr.bf16.mxu0 0
      %2206 = vmatpush1.bf16.msra.mxu0 0
      %2207 = vmatprep.subr.bf16.mxu0 0
      %2208 = vmatpush1.bf16.msra.mxu0 0
      %2209 = vmatprep.subr.bf16.mxu0 0
      %2210 = vmatpush1.bf16.msra.mxu0 0
      %2211 = vmatprep.subr.bf16.mxu0 0
      %2212 = vmatpush1.bf16.msra.mxu0 0
      %2213 = vmatprep.subr.bf16.mxu0 0
      %2214 = vmatpush1.bf16.msra.mxu0 0
      %2215 = vmatprep.mubr.bf16.mxu0 0
      %2216 = vmatmul.mubr.bf16.gmra.mrb[0].mxu0 %v1929
      %v2217 = vpop.f32.mrb[0].mxu0
      %v2218 = vadd.f32 %v2129, %v2217
      %v2219 = vpop.f32.mrb[0].mxu0
      %v2220 = vpop.f32.mrb[0].mxu0
      %v2221 = vadd.f32 %v2132, %v2220
      %v2222 = vpop.f32.mrb[0].mxu0
      %2223 = vdwg.mxu0
      %v2224 = vpack.c.bf16 %v1405, %v1401
      %v2225 = vpack.c.bf16 %v1534, %v1530
      %2226 = vmatprep.subr.bf16.mxu0 0
      %2227 = vmatpush1.bf16.xpose.msra.mxu0 %v2225
      %2228 = vmatprep.subr.bf16.mxu0 0
      %2229 = vmatpush1.bf16.xpose.msra.mxu0 0
      %2230 = vmatprep.subr.bf16.mxu0 0
      %2231 = vmatpush1.bf16.xpose.msra.mxu0 0
      %2232 = vmatprep.subr.bf16.mxu0 0
      %2233 = vmatpush1.bf16.xpose.msra.mxu0 0
      %2234 = vmatprep.subr.bf16.mxu0 0
      %2235 = vmatpush1.bf16.xpose.msra.mxu0 0
      %2236 = vmatprep.subr.bf16.mxu0 0
      %2237 = vmatpush1.bf16.xpose.msra.mxu0 0
      %2238 = vmatprep.subr.bf16.mxu0 0
      %2239 = vmatpush1.bf16.xpose.msra.mxu0 0
      %2240 = vmatprep.subr.bf16.mxu0 0
      %2241 = vmatpush1.bf16.xpose.msra.mxu0 0
      %2242 = vmatprep.subr.bf16.mxu0 0
      %2243 = vmatpush1.bf16.xpose.msra.mxu0 0
      %2244 = vmatprep.subr.bf16.mxu0 0
      %2245 = vmatpush1.bf16.xpose.msra.mxu0 0
      %2246 = vmatprep.subr.bf16.mxu0 0
      %2247 = vmatpush1.bf16.xpose.msra.mxu0 0
      %2248 = vmatprep.subr.bf16.mxu0 0
      %2249 = vmatpush1.bf16.xpose.msra.mxu0 0
      %2250 = vmatprep.subr.bf16.mxu0 0
      %2251 = vmatpush1.bf16.xpose.msra.mxu0 0
      %2252 = vmatprep.subr.bf16.mxu0 0
      %2253 = vmatpush1.bf16.xpose.msra.mxu0 0
      %2254 = vmatprep.subr.bf16.mxu0 0
      %2255 = vmatpush1.bf16.xpose.msra.mxu0 0
      %2256 = vmatprep.subr.bf16.mxu0 0
      %2257 = vmatpush1.bf16.xpose.msra.mxu0 0
      %2258 = vmatprep.mubr.bf16.mxu0 0
      %2259 = vmatmul.mubr.bf16.gmra.mrb[0].mxu0 %v2224
      %v2260 = vpop.f32.mrb[0].mxu0
      %v2261 = vadd.f32 0.0, %v2260
      %v2262 = vpop.f32.mrb[0].mxu0
      %v2263 = vpop.f32.mrb[0].mxu0
      %v2264 = vadd.f32 0.0, %v2263
      %v2265 = vpop.f32.mrb[0].mxu0
      %2266 = vdwg.mxu0
      %v2267 = vmul.f32 %v2261, 0.2182179
      %v2268 = vmul.f32 %v2264, 0.2182179
      %v2269 = vsel %vm1715, %v2267, -inf
      %v2270 = vsel %vm1716, %v2268, -inf
      %v2271 = vsel %vm1860, %v2269, -inf
      %2272 = vmax.xlane.f32.xlu0 %v2271
      %v2273 = vpop.xlane.xlu0 %2272
      %v2274 = vsel %vm1860, %v2270, -inf
      %2275 = vmax.xlane.f32.xlu0 %v2274
      %v2276 = vpop.xlane.xlu0 %2275
      %v2277 = vsub.f32 %v2269, %v2273
      %v2278 = vsub.f32 %v2270, %v2276
      %v2279 = vmul.f32 %v2277, 1.442695
      %v2280 = vpow.pop %v2279
      %v2281 = vmul.f32 %v2278, 1.442695
      %v2282 = vpow.pop %v2281
      %v2283 = vsel %vm1860, %v2280, 0.0
      %2284 = vadd.xlane.f32.xlu0 %v2283
      %v2285 = vpop.xlane.xlu0 %2284
      %v2286 = vsel %vm1860, %v2282, 0.0
      %2287 = vadd.xlane.f32.xlu0 %v2286
      %v2288 = vpop.xlane.xlu0 %2287
      %v2289 = vrcp.pop %v2285
      %v2290 = vmul.f32 %v2280, %v2289
      %v2291 = vrcp.pop %v2288
      %v2292 = vmul.f32 %v2282, %v2291
      %v2293 = vpack.c.bf16 %v2292, %v2290
      %v2294 = vpack.c.bf16 %v1663, %v1659
      %v2296 = vsel %vm1860, %v2293, 0
      %2298 = vmatprep.subr.bf16.mxu0 0
      %2299 = vmatpush1.bf16.msra.mxu0 %v2294
      %2300 = vmatprep.subr.bf16.mxu0 0
      %2301 = vmatpush1.bf16.msra.mxu0 0
      %2302 = vmatprep.subr.bf16.mxu0 0
      %2303 = vmatpush1.bf16.msra.mxu0 0
      %2304 = vmatprep.subr.bf16.mxu0 0
      %2305 = vmatpush1.bf16.msra.mxu0 0
      %2306 = vmatprep.subr.bf16.mxu0 0
      %2307 = vmatpush1.bf16.msra.mxu0 0
      %2308 = vmatprep.subr.bf16.mxu0 0
      %2309 = vmatpush1.bf16.msra.mxu0 0
      %2310 = vmatprep.subr.bf16.mxu0 0
      %2311 = vmatpush1.bf16.msra.mxu0 0
      %2312 = vmatprep.subr.bf16.mxu0 0
      %2313 = vmatpush1.bf16.msra.mxu0 0
      %2314 = vmatprep.subr.bf16.mxu0 0
      %2315 = vmatpush1.bf16.msra.mxu0 0
      %2316 = vmatprep.subr.bf16.mxu0 0
      %2317 = vmatpush1.bf16.msra.mxu0 0
      %2318 = vmatprep.subr.bf16.mxu0 0
      %2319 = vmatpush1.bf16.msra.mxu0 0
      %2320 = vmatprep.subr.bf16.mxu0 0
      %2321 = vmatpush1.bf16.msra.mxu0 0
      %2322 = vmatprep.subr.bf16.mxu0 0
      %2323 = vmatpush1.bf16.msra.mxu0 0
      %2324 = vmatprep.subr.bf16.mxu0 0
      %2325 = vmatpush1.bf16.msra.mxu0 0
      %2326 = vmatprep.subr.bf16.mxu0 0
      %2327 = vmatpush1.bf16.msra.mxu0 0
      %2328 = vmatprep.subr.bf16.mxu0 0
      %2329 = vmatpush1.bf16.msra.mxu0 0
      %2330 = vmatprep.mubr.bf16.mxu0 0
      %2331 = vmatmul.mubr.bf16.gmra.mrb[0].mxu0 %v2296
      %v2332 = vpop.f32.mrb[0].mxu0
      %v2333 = vadd.f32 0.0, %v2332
      %v2334 = vpop.f32.mrb[0].mxu0
      %v2335 = vpop.f32.mrb[0].mxu0
      %v2336 = vadd.f32 0.0, %v2335
      %v2337 = vpop.f32.mrb[0].mxu0
      %2338 = vdwg.mxu0
      %v2339 = vpack.c.bf16 %v2336, %v2333
      %v2356 = vunpack.c.l.b16 %v1749
      %v2357 = vunpack.c.l.b16 %v1750
      %v2358 = vunpack.c.l.b16 %v1751
      %v2359 = vunpack.c.l.b16 %v1752
      %v2360 = vunpack.c.l.b16 %v1753
      %v2361 = vunpack.c.l.b16 %v1754
      %v2362 = vunpack.c.l.b16 %v1755
      %v2363 = vunpack.c.l.b16 %v1756
      %v2364 = vunpack.c.l.b16 %v1757
      %v2365 = vunpack.c.l.b16 %v1758
      %v2366 = vunpack.c.l.b16 %v1759
      %v2367 = vunpack.c.l.b16 %v1760
      %v2368 = vunpack.c.l.b16 %v1761
      %v2369 = vunpack.c.l.b16 %v1762
      %v2370 = vunpack.c.l.b16 %v1763
      %v2371 = vunpack.c.l.b16 %v1764
      %v2372 = vpack.c.b16 %v2357, %v2356
      %v2373 = vpack.c.b16 %v2359, %v2358
      %v2374 = vpack.c.b16 %v2361, %v2360
      %v2375 = vpack.c.b16 %v2363, %v2362
      %v2376 = vpack.c.b16 %v2365, %v2364
      %v2377 = vpack.c.b16 %v2367, %v2366
      %v2378 = vpack.c.b16 %v2369, %v2368
      %v2379 = vpack.c.b16 %v2371, %v2370
      %2388 = vmatprep.subr.bf16.mxu0 0
      %2389 = vmatpush1.bf16.msra.mxu0 %v2372
      %2390 = vmatprep.subr.bf16.mxu0 0
      %2391 = vmatpush1.bf16.msra.mxu0 %v2373
      %2392 = vmatprep.subr.bf16.mxu0 0
      %2393 = vmatpush1.bf16.msra.mxu0 %v2374
      %2394 = vmatprep.subr.bf16.mxu0 0
      %2395 = vmatpush1.bf16.msra.mxu0 %v2375
      %2396 = vmatprep.subr.bf16.mxu0 0
      %2397 = vmatpush1.bf16.msra.mxu0 %v2376
      %2398 = vmatprep.subr.bf16.mxu0 0
      %2399 = vmatpush1.bf16.msra.mxu0 %v2377
      %2400 = vmatprep.subr.bf16.mxu0 0
      %2401 = vmatpush1.bf16.msra.mxu0 %v2378
      %2402 = vmatprep.subr.bf16.mxu0 0
      %2403 = vmatpush1.bf16.msra.mxu0 %v2379
      %2404 = vmatprep.subr.bf16.mxu0 0
      %2405 = vmatpush1.bf16.msra.mxu0 0
      %2406 = vmatprep.subr.bf16.mxu0 0
      %2407 = vmatpush1.bf16.msra.mxu0 0
      %2408 = vmatprep.subr.bf16.mxu0 0
      %2409 = vmatpush1.bf16.msra.mxu0 0
      %2410 = vmatprep.subr.bf16.mxu0 0
      %2411 = vmatpush1.bf16.msra.mxu0 0
      %2412 = vmatprep.subr.bf16.mxu0 0
      %2413 = vmatpush1.bf16.msra.mxu0 0
      %2414 = vmatprep.subr.bf16.mxu0 0
      %2415 = vmatpush1.bf16.msra.mxu0 0
      %2416 = vmatprep.subr.bf16.mxu0 0
      %2417 = vmatpush1.bf16.msra.mxu0 0
      %2418 = vmatprep.subr.bf16.mxu0 0
      %2419 = vmatpush1.bf16.msra.mxu0 0
      %2420 = vmatprep.mubr.bf16.mxu0 0
      %2421 = vmatmul.mubr.bf16.gmra.mrb[0].mxu0 %v2339
      %v2422 = vpop.f32.mrb[0].mxu0
      %v2423 = vadd.f32 0.0, %v2422
      %v2424 = vpop.f32.mrb[0].mxu0
      %v2425 = vpop.f32.mrb[0].mxu0
      %v2426 = vadd.f32 0.0, %v2425
      %v2427 = vpop.f32.mrb[0].mxu0
      %2428 = vdwg.mxu0
      %v2429 = vadd.f32 %v2218, %v2423
      %v2430 = vadd.f32 %v2221, %v2426
      %v2431 = vpack.c.bf16 %v1407, %v1403
      %v2432 = vpack.c.bf16 %v1536, %v1532
      %2433 = vmatprep.subr.bf16.mxu0 0
      %2434 = vmatpush1.bf16.xpose.msra.mxu0 %v2432
      %2435 = vmatprep.subr.bf16.mxu0 0
      %2436 = vmatpush1.bf16.xpose.msra.mxu0 0
      %2437 = vmatprep.subr.bf16.mxu0 0
      %2438 = vmatpush1.bf16.xpose.msra.mxu0 0
      %2439 = vmatprep.subr.bf16.mxu0 0
      %2440 = vmatpush1.bf16.xpose.msra.mxu0 0
      %2441 = vmatprep.subr.bf16.mxu0 0
      %2442 = vmatpush1.bf16.xpose.msra.mxu0 0
      %2443 = vmatprep.subr.bf16.mxu0 0
      %2444 = vmatpush1.bf16.xpose.msra.mxu0 0
      %2445 = vmatprep.subr.bf16.mxu0 0
      %2446 = vmatpush1.bf16.xpose.msra.mxu0 0
      %2447 = vmatprep.subr.bf16.mxu0 0
      %2448 = vmatpush1.bf16.xpose.msra.mxu0 0
      %2449 = vmatprep.subr.bf16.mxu0 0
      %2450 = vmatpush1.bf16.xpose.msra.mxu0 0
      %2451 = vmatprep.subr.bf16.mxu0 0
      %2452 = vmatpush1.bf16.xpose.msra.mxu0 0
      %2453 = vmatprep.subr.bf16.mxu0 0
      %2454 = vmatpush1.bf16.xpose.msra.mxu0 0
      %2455 = vmatprep.subr.bf16.mxu0 0
      %2456 = vmatpush1.bf16.xpose.msra.mxu0 0
      %2457 = vmatprep.subr.bf16.mxu0 0
      %2458 = vmatpush1.bf16.xpose.msra.mxu0 0
      %2459 = vmatprep.subr.bf16.mxu0 0
      %2460 = vmatpush1.bf16.xpose.msra.mxu0 0
      %2461 = vmatprep.subr.bf16.mxu0 0
      %2462 = vmatpush1.bf16.xpose.msra.mxu0 0
      %2463 = vmatprep.subr.bf16.mxu0 0
      %2464 = vmatpush1.bf16.xpose.msra.mxu0 0
      %2465 = vmatprep.mubr.bf16.mxu0 0
      %2466 = vmatmul.mubr.bf16.gmra.mrb[0].mxu0 %v2431
      %v2467 = vpop.f32.mrb[0].mxu0
      %v2468 = vadd.f32 0.0, %v2467
      %v2469 = vpop.f32.mrb[0].mxu0
      %v2470 = vpop.f32.mrb[0].mxu0
      %v2471 = vadd.f32 0.0, %v2470
      %v2472 = vpop.f32.mrb[0].mxu0
      %2473 = vdwg.mxu0
      %v2474 = vmul.f32 %v2468, 0.2182179
      %v2475 = vmul.f32 %v2471, 0.2182179
      %v2476 = vsel %vm1715, %v2474, -inf
      %v2477 = vsel %vm1716, %v2475, -inf
      %v2478 = vsel %vm1860, %v2476, -inf
      %2479 = vmax.xlane.f32.xlu0 %v2478
      %v2480 = vpop.xlane.xlu0 %2479
      %v2481 = vsel %vm1860, %v2477, -inf
      %2482 = vmax.xlane.f32.xlu0 %v2481
      %v2483 = vpop.xlane.xlu0 %2482
      %v2484 = vsub.f32 %v2476, %v2480
      %v2485 = vsub.f32 %v2477, %v2483
      %v2486 = vmul.f32 %v2484, 1.442695
      %v2487 = vpow.pop %v2486
      %v2488 = vmul.f32 %v2485, 1.442695
      %v2489 = vpow.pop %v2488
      %v2490 = vsel %vm1860, %v2487, 0.0
      %2491 = vadd.xlane.f32.xlu0 %v2490
      %v2492 = vpop.xlane.xlu0 %2491
      %v2493 = vsel %vm1860, %v2489, 0.0
      %2494 = vadd.xlane.f32.xlu0 %v2493
      %v2495 = vpop.xlane.xlu0 %2494
      %v2496 = vrcp.pop %v2492
      %v2497 = vmul.f32 %v2487, %v2496
      %v2498 = vrcp.pop %v2495
      %v2499 = vmul.f32 %v2489, %v2498
      %v2500 = vpack.c.bf16 %v2499, %v2497
      %v2501 = vpack.c.bf16 %v1665, %v1661
      %v2503 = vsel %vm1860, %v2500, 0
      %2505 = vmatprep.subr.bf16.mxu0 0
      %2506 = vmatpush1.bf16.msra.mxu0 %v2501
      %2507 = vmatprep.subr.bf16.mxu0 0
      %2508 = vmatpush1.bf16.msra.mxu0 0
      %2509 = vmatprep.subr.bf16.mxu0 0
      %2510 = vmatpush1.bf16.msra.mxu0 0
      %2511 = vmatprep.subr.bf16.mxu0 0
      %2512 = vmatpush1.bf16.msra.mxu0 0
      %2513 = vmatprep.subr.bf16.mxu0 0
      %2514 = vmatpush1.bf16.msra.mxu0 0
      %2515 = vmatprep.subr.bf16.mxu0 0
      %2516 = vmatpush1.bf16.msra.mxu0 0
      %2517 = vmatprep.subr.bf16.mxu0 0
      %2518 = vmatpush1.bf16.msra.mxu0 0
      %2519 = vmatprep.subr.bf16.mxu0 0
      %2520 = vmatpush1.bf16.msra.mxu0 0
      %2521 = vmatprep.subr.bf16.mxu0 0
      %2522 = vmatpush1.bf16.msra.mxu0 0
      %2523 = vmatprep.subr.bf16.mxu0 0
      %2524 = vmatpush1.bf16.msra.mxu0 0
      %2525 = vmatprep.subr.bf16.mxu0 0
      %2526 = vmatpush1.bf16.msra.mxu0 0
      %2527 = vmatprep.subr.bf16.mxu0 0
      %2528 = vmatpush1.bf16.msra.mxu0 0
      %2529 = vmatprep.subr.bf16.mxu0 0
      %2530 = vmatpush1.bf16.msra.mxu0 0
      %2531 = vmatprep.subr.bf16.mxu0 0
      %2532 = vmatpush1.bf16.msra.mxu0 0
      %2533 = vmatprep.subr.bf16.mxu0 0
      %2534 = vmatpush1.bf16.msra.mxu0 0
      %2535 = vmatprep.subr.bf16.mxu0 0
      %2536 = vmatpush1.bf16.msra.mxu0 0
      %2537 = vmatprep.mubr.bf16.mxu0 0
      %2538 = vmatmul.mubr.bf16.gmra.mrb[0].mxu0 %v2503
      %v2539 = vpop.f32.mrb[0].mxu0
      %v2540 = vadd.f32 0.0, %v2539
      %v2541 = vpop.f32.mrb[0].mxu0
      %v2542 = vpop.f32.mrb[0].mxu0
      %v2543 = vadd.f32 0.0, %v2542
      %v2544 = vpop.f32.mrb[0].mxu0
      %2545 = vdwg.mxu0
      %v2546 = vpack.c.bf16 %v2543, %v2540
      %v2563 = vunpack.c.l.b16 %v1765
      %v2564 = vunpack.c.l.b16 %v1766
      %v2565 = vunpack.c.l.b16 %v1767
      %v2566 = vunpack.c.l.b16 %v1768
      %v2567 = vunpack.c.l.b16 %v1769
      %v2568 = vunpack.c.l.b16 %v1770
      %v2569 = vunpack.c.l.b16 %v1771
      %v2570 = vunpack.c.l.b16 %v1772
      %v2571 = vunpack.c.l.b16 %v1773
      %v2572 = vunpack.c.l.b16 %v1774
      %v2573 = vunpack.c.l.b16 %v1775
      %v2574 = vunpack.c.l.b16 %v1776
      %v2575 = vunpack.c.l.b16 %v1777
      %v2576 = vunpack.c.l.b16 %v1778
      %v2577 = vunpack.c.l.b16 %v1779
      %v2578 = vunpack.c.l.b16 %v1780
      %v2579 = vpack.c.b16 %v2564, %v2563
      %v2580 = vpack.c.b16 %v2566, %v2565
      %v2581 = vpack.c.b16 %v2568, %v2567
      %v2582 = vpack.c.b16 %v2570, %v2569
      %v2583 = vpack.c.b16 %v2572, %v2571
      %v2584 = vpack.c.b16 %v2574, %v2573
      %v2585 = vpack.c.b16 %v2576, %v2575
      %v2586 = vpack.c.b16 %v2578, %v2577
      %2595 = vmatprep.subr.bf16.mxu0 0
      %2596 = vmatpush1.bf16.msra.mxu0 %v2579
      %2597 = vmatprep.subr.bf16.mxu0 0
      %2598 = vmatpush1.bf16.msra.mxu0 %v2580
      %2599 = vmatprep.subr.bf16.mxu0 0
      %2600 = vmatpush1.bf16.msra.mxu0 %v2581
      %2601 = vmatprep.subr.bf16.mxu0 0
      %2602 = vmatpush1.bf16.msra.mxu0 %v2582
      %2603 = vmatprep.subr.bf16.mxu0 0
      %2604 = vmatpush1.bf16.msra.mxu0 %v2583
      %2605 = vmatprep.subr.bf16.mxu0 0
      %2606 = vmatpush1.bf16.msra.mxu0 %v2584
      %2607 = vmatprep.subr.bf16.mxu0 0
      %2608 = vmatpush1.bf16.msra.mxu0 %v2585
      %2609 = vmatprep.subr.bf16.mxu0 0
      %2610 = vmatpush1.bf16.msra.mxu0 %v2586
      %2611 = vmatprep.subr.bf16.mxu0 0
      %2612 = vmatpush1.bf16.msra.mxu0 0
      %2613 = vmatprep.subr.bf16.mxu0 0
      %2614 = vmatpush1.bf16.msra.mxu0 0
      %2615 = vmatprep.subr.bf16.mxu0 0
      %2616 = vmatpush1.bf16.msra.mxu0 0
      %2617 = vmatprep.subr.bf16.mxu0 0
      %2618 = vmatpush1.bf16.msra.mxu0 0
      %2619 = vmatprep.subr.bf16.mxu0 0
      %2620 = vmatpush1.bf16.msra.mxu0 0
      %2621 = vmatprep.subr.bf16.mxu0 0
      %2622 = vmatpush1.bf16.msra.mxu0 0
      %2623 = vmatprep.subr.bf16.mxu0 0
      %2624 = vmatpush1.bf16.msra.mxu0 0
      %2625 = vmatprep.subr.bf16.mxu0 0
      %2626 = vmatpush1.bf16.msra.mxu0 0
      %2627 = vmatprep.mubr.bf16.mxu0 0
      %2628 = vmatmul.mubr.bf16.gmra.mrb[0].mxu0 %v2546
      %v2629 = vpop.f32.mrb[0].mxu0
      %v2630 = vadd.f32 0.0, %v2629
      %v2631 = vpop.f32.mrb[0].mxu0
      %v2632 = vpop.f32.mrb[0].mxu0
      %v2633 = vadd.f32 0.0, %v2632
      %v2634 = vpop.f32.mrb[0].mxu0
      %2635 = vdwg.mxu0
      %v2636 = vadd.f32 %v2429, %v2630
      %v2637 = vadd.f32 %v2430, %v2633
      %v2638 = vpack.c.bf16 %v1448, %v1444
      %v2639 = vpack.c.bf16 %v1577, %v1573
      %2640 = vmatprep.subr.bf16.mxu0 0
      %2641 = vmatpush1.bf16.xpose.msra.mxu0 %v2639
      %2642 = vmatprep.subr.bf16.mxu0 0
      %2643 = vmatpush1.bf16.xpose.msra.mxu0 0
      %2644 = vmatprep.subr.bf16.mxu0 0
      %2645 = vmatpush1.bf16.xpose.msra.mxu0 0
      %2646 = vmatprep.subr.bf16.mxu0 0
      %2647 = vmatpush1.bf16.xpose.msra.mxu0 0
      %2648 = vmatprep.subr.bf16.mxu0 0
      %2649 = vmatpush1.bf16.xpose.msra.mxu0 0
      %2650 = vmatprep.subr.bf16.mxu0 0
      %2651 = vmatpush1.bf16.xpose.msra.mxu0 0
      %2652 = vmatprep.subr.bf16.mxu0 0
      %2653 = vmatpush1.bf16.xpose.msra.mxu0 0
      %2654 = vmatprep.subr.bf16.mxu0 0
      %2655 = vmatpush1.bf16.xpose.msra.mxu0 0
      %2656 = vmatprep.subr.bf16.mxu0 0
      %2657 = vmatpush1.bf16.xpose.msra.mxu0 0
      %2658 = vmatprep.subr.bf16.mxu0 0
      %2659 = vmatpush1.bf16.xpose.msra.mxu0 0
      %2660 = vmatprep.subr.bf16.mxu0 0
      %2661 = vmatpush1.bf16.xpose.msra.mxu0 0
      %2662 = vmatprep.subr.bf16.mxu0 0
      %2663 = vmatpush1.bf16.xpose.msra.mxu0 0
      %2664 = vmatprep.subr.bf16.mxu0 0
      %2665 = vmatpush1.bf16.xpose.msra.mxu0 0
      %2666 = vmatprep.subr.bf16.mxu0 0
      %2667 = vmatpush1.bf16.xpose.msra.mxu0 0
      %2668 = vmatprep.subr.bf16.mxu0 0
      %2669 = vmatpush1.bf16.xpose.msra.mxu0 0
      %2670 = vmatprep.subr.bf16.mxu0 0
      %2671 = vmatpush1.bf16.xpose.msra.mxu0 0
      %2672 = vmatprep.mubr.bf16.mxu0 0
      %2673 = vmatmul.mubr.bf16.gmra.mrb[0].mxu0 %v2638
      %v2674 = vpop.f32.mrb[0].mxu0
      %v2675 = vadd.f32 0.0, %v2674
      %v2676 = vpop.f32.mrb[0].mxu0
      %v2677 = vpop.f32.mrb[0].mxu0
      %v2678 = vadd.f32 0.0, %v2677
      %v2679 = vpop.f32.mrb[0].mxu0
      %2680 = vdwg.mxu0
      %v2681 = vmul.f32 %v2675, 0.2182179
      %v2682 = vmul.f32 %v2678, 0.2182179
      %v2683 = vsel %vm1715, %v2681, -inf
      %v2684 = vsel %vm1716, %v2682, -inf
      %v2685 = vsel %vm1860, %v2683, -inf
      %2686 = vmax.xlane.f32.xlu0 %v2685
      %v2687 = vpop.xlane.xlu0 %2686
      %v2688 = vsel %vm1860, %v2684, -inf
      %2689 = vmax.xlane.f32.xlu0 %v2688
      %v2690 = vpop.xlane.xlu0 %2689
      %v2691 = vsub.f32 %v2683, %v2687
      %v2692 = vsub.f32 %v2684, %v2690
      %v2693 = vmul.f32 %v2691, 1.442695
      %v2694 = vpow.pop %v2693
      %v2695 = vmul.f32 %v2692, 1.442695
      %v2696 = vpow.pop %v2695
      %v2697 = vsel %vm1860, %v2694, 0.0
      %2698 = vadd.xlane.f32.xlu0 %v2697
      %v2699 = vpop.xlane.xlu0 %2698
      %v2700 = vsel %vm1860, %v2696, 0.0
      %2701 = vadd.xlane.f32.xlu0 %v2700
      %v2702 = vpop.xlane.xlu0 %2701
      %v2703 = vrcp.pop %v2699
      %v2704 = vmul.f32 %v2694, %v2703
      %v2705 = vrcp.pop %v2702
      %v2706 = vmul.f32 %v2696, %v2705
      %v2707 = vpack.c.bf16 %v2706, %v2704
      %v2708 = vpack.c.bf16 %v1706, %v1702
      %v2710 = vsel %vm1860, %v2707, 0
      %2712 = vmatprep.subr.bf16.mxu0 0
      %2713 = vmatpush1.bf16.msra.mxu0 %v2708
      %2714 = vmatprep.subr.bf16.mxu0 0
      %2715 = vmatpush1.bf16.msra.mxu0 0
      %2716 = vmatprep.subr.bf16.mxu0 0
      %2717 = vmatpush1.bf16.msra.mxu0 0
      %2718 = vmatprep.subr.bf16.mxu0 0
      %2719 = vmatpush1.bf16.msra.mxu0 0
      %2720 = vmatprep.subr.bf16.mxu0 0
      %2721 = vmatpush1.bf16.msra.mxu0 0
      %2722 = vmatprep.subr.bf16.mxu0 0
      %2723 = vmatpush1.bf16.msra.mxu0 0
      %2724 = vmatprep.subr.bf16.mxu0 0
      %2725 = vmatpush1.bf16.msra.mxu0 0
      %2726 = vmatprep.subr.bf16.mxu0 0
      %2727 = vmatpush1.bf16.msra.mxu0 0
      %2728 = vmatprep.subr.bf16.mxu0 0
      %2729 = vmatpush1.bf16.msra.mxu0 0
      %2730 = vmatprep.subr.bf16.mxu0 0
      %2731 = vmatpush1.bf16.msra.mxu0 0
      %2732 = vmatprep.subr.bf16.mxu0 0
      %2733 = vmatpush1.bf16.msra.mxu0 0
      %2734 = vmatprep.subr.bf16.mxu0 0
      %2735 = vmatpush1.bf16.msra.mxu0 0
      %2736 = vmatprep.subr.bf16.mxu0 0
      %2737 = vmatpush1.bf16.msra.mxu0 0
      %2738 = vmatprep.subr.bf16.mxu0 0
      %2739 = vmatpush1.bf16.msra.mxu0 0
      %2740 = vmatprep.subr.bf16.mxu0 0
      %2741 = vmatpush1.bf16.msra.mxu0 0
      %2742 = vmatprep.subr.bf16.mxu0 0
      %2743 = vmatpush1.bf16.msra.mxu0 0
      %2744 = vmatprep.mubr.bf16.mxu0 0
      %2745 = vmatmul.mubr.bf16.gmra.mrb[0].mxu0 %v2710
      %v2746 = vpop.f32.mrb[0].mxu0
      %v2747 = vadd.f32 0.0, %v2746
      %v2748 = vpop.f32.mrb[0].mxu0
      %v2749 = vpop.f32.mrb[0].mxu0
      %v2750 = vadd.f32 0.0, %v2749
      %v2751 = vpop.f32.mrb[0].mxu0
      %2752 = vdwg.mxu0
      %v2753 = vpack.c.bf16 %v2750, %v2747
      %v2770 = vunpack.c.l.b16 %v1781
      %v2771 = vunpack.c.l.b16 %v1782
      %v2772 = vunpack.c.l.b16 %v1783
      %v2773 = vunpack.c.l.b16 %v1784
      %v2774 = vunpack.c.l.b16 %v1785
      %v2775 = vunpack.c.l.b16 %v1786
      %v2776 = vunpack.c.l.b16 %v1787
      %v2777 = vunpack.c.l.b16 %v1788
      %v2778 = vunpack.c.l.b16 %v1789
      %v2779 = vunpack.c.l.b16 %v1790
      %v2780 = vunpack.c.l.b16 %v1791
      %v2781 = vunpack.c.l.b16 %v1792
      %v2782 = vunpack.c.l.b16 %v1793
      %v2783 = vunpack.c.l.b16 %v1794
      %v2784 = vunpack.c.l.b16 %v1795
      %v2785 = vunpack.c.l.b16 %v1796
      %v2786 = vpack.c.b16 %v2771, %v2770
      %v2787 = vpack.c.b16 %v2773, %v2772
      %v2788 = vpack.c.b16 %v2775, %v2774
      %v2789 = vpack.c.b16 %v2777, %v2776
      %v2790 = vpack.c.b16 %v2779, %v2778
      %v2791 = vpack.c.b16 %v2781, %v2780
      %v2792 = vpack.c.b16 %v2783, %v2782
      %v2793 = vpack.c.b16 %v2785, %v2784
      %2802 = vmatprep.subr.bf16.mxu0 0
      %2803 = vmatpush1.bf16.msra.mxu0 %v2786
      %2804 = vmatprep.subr.bf16.mxu0 0
      %2805 = vmatpush1.bf16.msra.mxu0 %v2787
      %2806 = vmatprep.subr.bf16.mxu0 0
      %2807 = vmatpush1.bf16.msra.mxu0 %v2788
      %2808 = vmatprep.subr.bf16.mxu0 0
      %2809 = vmatpush1.bf16.msra.mxu0 %v2789
      %2810 = vmatprep.subr.bf16.mxu0 0
      %2811 = vmatpush1.bf16.msra.mxu0 %v2790
      %2812 = vmatprep.subr.bf16.mxu0 0
      %2813 = vmatpush1.bf16.msra.mxu0 %v2791
      %2814 = vmatprep.subr.bf16.mxu0 0
      %2815 = vmatpush1.bf16.msra.mxu0 %v2792
      %2816 = vmatprep.subr.bf16.mxu0 0
      %2817 = vmatpush1.bf16.msra.mxu0 %v2793
      %2818 = vmatprep.subr.bf16.mxu0 0
      %2819 = vmatpush1.bf16.msra.mxu0 0
      %2820 = vmatprep.subr.bf16.mxu0 0
      %2821 = vmatpush1.bf16.msra.mxu0 0
      %2822 = vmatprep.subr.bf16.mxu0 0
      %2823 = vmatpush1.bf16.msra.mxu0 0
      %2824 = vmatprep.subr.bf16.mxu0 0
      %2825 = vmatpush1.bf16.msra.mxu0 0
      %2826 = vmatprep.subr.bf16.mxu0 0
      %2827 = vmatpush1.bf16.msra.mxu0 0
      %2828 = vmatprep.subr.bf16.mxu0 0
      %2829 = vmatpush1.bf16.msra.mxu0 0
      %2830 = vmatprep.subr.bf16.mxu0 0
      %2831 = vmatpush1.bf16.msra.mxu0 0
      %2832 = vmatprep.subr.bf16.mxu0 0
      %2833 = vmatpush1.bf16.msra.mxu0 0
      %2834 = vmatprep.mubr.bf16.mxu0 0
      %2835 = vmatmul.mubr.bf16.gmra.mrb[0].mxu0 %v2753
      %v2836 = vpop.f32.mrb[0].mxu0
      %v2837 = vadd.f32 0.0, %v2836
      %v2838 = vpop.f32.mrb[0].mxu0
      %v2839 = vpop.f32.mrb[0].mxu0
      %v2840 = vadd.f32 0.0, %v2839
      %v2841 = vpop.f32.mrb[0].mxu0
      %2842 = vdwg.mxu0
      %v2843 = vadd.f32 %v2636, %v2837
      %v2844 = vadd.f32 %v2637, %v2840
      %v2845 = vpack.c.bf16 %v1450, %v1446
      %v2846 = vpack.c.bf16 %v1579, %v1575
      %2847 = vmatprep.subr.bf16.mxu0 0
      %2848 = vmatpush1.bf16.xpose.msra.mxu0 %v2846
      %2849 = vmatprep.subr.bf16.mxu0 0
      %2850 = vmatpush1.bf16.xpose.msra.mxu0 0
      %2851 = vmatprep.subr.bf16.mxu0 0
      %2852 = vmatpush1.bf16.xpose.msra.mxu0 0
      %2853 = vmatprep.subr.bf16.mxu0 0
      %2854 = vmatpush1.bf16.xpose.msra.mxu0 0
      %2855 = vmatprep.subr.bf16.mxu0 0
      %2856 = vmatpush1.bf16.xpose.msra.mxu0 0
      %2857 = vmatprep.subr.bf16.mxu0 0
      %2858 = vmatpush1.bf16.xpose.msra.mxu0 0
      %2859 = vmatprep.subr.bf16.mxu0 0
      %2860 = vmatpush1.bf16.xpose.msra.mxu0 0
      %2861 = vmatprep.subr.bf16.mxu0 0
      %2862 = vmatpush1.bf16.xpose.msra.mxu0 0
      %2863 = vmatprep.subr.bf16.mxu0 0
      %2864 = vmatpush1.bf16.xpose.msra.mxu0 0
      %2865 = vmatprep.subr.bf16.mxu0 0
      %2866 = vmatpush1.bf16.xpose.msra.mxu0 0
      %2867 = vmatprep.subr.bf16.mxu0 0
      %2868 = vmatpush1.bf16.xpose.msra.mxu0 0
      %2869 = vmatprep.subr.bf16.mxu0 0
      %2870 = vmatpush1.bf16.xpose.msra.mxu0 0
      %2871 = vmatprep.subr.bf16.mxu0 0
      %2872 = vmatpush1.bf16.xpose.msra.mxu0 0
      %2873 = vmatprep.subr.bf16.mxu0 0
      %2874 = vmatpush1.bf16.xpose.msra.mxu0 0
      %2875 = vmatprep.subr.bf16.mxu0 0
      %2876 = vmatpush1.bf16.xpose.msra.mxu0 0
      %2877 = vmatprep.subr.bf16.mxu0 0
      %2878 = vmatpush1.bf16.xpose.msra.mxu0 0
      %2879 = vmatprep.mubr.bf16.mxu0 0
      %2880 = vmatmul.mubr.bf16.gmra.mrb[0].mxu0 %v2845
      %v2881 = vpop.f32.mrb[0].mxu0
      %v2882 = vadd.f32 0.0, %v2881
      %v2883 = vpop.f32.mrb[0].mxu0
      %v2884 = vpop.f32.mrb[0].mxu0
      %v2885 = vadd.f32 0.0, %v2884
      %v2886 = vpop.f32.mrb[0].mxu0
      %2887 = vdwg.mxu0
      %v2888 = vmul.f32 %v2882, 0.2182179
      %v2889 = vmul.f32 %v2885, 0.2182179
      %v2890 = vsel %vm1715, %v2888, -inf
      %v2891 = vsel %vm1716, %v2889, -inf
      %v2892 = vsel %vm1860, %v2890, -inf
      %2893 = vmax.xlane.f32.xlu0 %v2892
      %v2894 = vpop.xlane.xlu0 %2893
      %v2895 = vsel %vm1860, %v2891, -inf
      %2896 = vmax.xlane.f32.xlu0 %v2895
      %v2897 = vpop.xlane.xlu0 %2896
      %v2898 = vsub.f32 %v2890, %v2894
      %v2899 = vsub.f32 %v2891, %v2897
      %v2900 = vmul.f32 %v2898, 1.442695
      %v2901 = vpow.pop %v2900
      %v2902 = vmul.f32 %v2899, 1.442695
      %v2903 = vpow.pop %v2902
      %v2904 = vsel %vm1860, %v2901, 0.0
      %2905 = vadd.xlane.f32.xlu0 %v2904
      %v2906 = vpop.xlane.xlu0 %2905
      %v2907 = vsel %vm1860, %v2903, 0.0
      %2908 = vadd.xlane.f32.xlu0 %v2907
      %v2909 = vpop.xlane.xlu0 %2908
      %v2910 = vrcp.pop %v2906
      %v2911 = vmul.f32 %v2901, %v2910
      %v2912 = vrcp.pop %v2909
      %v2913 = vmul.f32 %v2903, %v2912
      %v2914 = vpack.c.bf16 %v2913, %v2911
      %v2915 = vpack.c.bf16 %v1708, %v1704
      %v2917 = vsel %vm1860, %v2914, 0
      %2919 = vmatprep.subr.bf16.mxu0 0
      %2920 = vmatpush1.bf16.msra.mxu0 %v2915
      %2921 = vmatprep.subr.bf16.mxu0 0
      %2922 = vmatpush1.bf16.msra.mxu0 0
      %2923 = vmatprep.subr.bf16.mxu0 0
      %2924 = vmatpush1.bf16.msra.mxu0 0
      %2925 = vmatprep.subr.bf16.mxu0 0
      %2926 = vmatpush1.bf16.msra.mxu0 0
      %2927 = vmatprep.subr.bf16.mxu0 0
      %2928 = vmatpush1.bf16.msra.mxu0 0
      %2929 = vmatprep.subr.bf16.mxu0 0
      %2930 = vmatpush1.bf16.msra.mxu0 0
      %2931 = vmatprep.subr.bf16.mxu0 0
      %2932 = vmatpush1.bf16.msra.mxu0 0
      %2933 = vmatprep.subr.bf16.mxu0 0
      %2934 = vmatpush1.bf16.msra.mxu0 0
      %2935 = vmatprep.subr.bf16.mxu0 0
      %2936 = vmatpush1.bf16.msra.mxu0 0
      %2937 = vmatprep.subr.bf16.mxu0 0
      %2938 = vmatpush1.bf16.msra.mxu0 0
      %2939 = vmatprep.subr.bf16.mxu0 0
      %2940 = vmatpush1.bf16.msra.mxu0 0
      %2941 = vmatprep.subr.bf16.mxu0 0
      %2942 = vmatpush1.bf16.msra.mxu0 0
      %2943 = vmatprep.subr.bf16.mxu0 0
      %2944 = vmatpush1.bf16.msra.mxu0 0
      %2945 = vmatprep.subr.bf16.mxu0 0
      %2946 = vmatpush1.bf16.msra.mxu0 0
      %2947 = vmatprep.subr.bf16.mxu0 0
      %2948 = vmatpush1.bf16.msra.mxu0 0
      %2949 = vmatprep.subr.bf16.mxu0 0
      %2950 = vmatpush1.bf16.msra.mxu0 0
      %2951 = vmatprep.mubr.bf16.mxu0 0
      %2952 = vmatmul.mubr.bf16.gmra.mrb[0].mxu0 %v2917
      %v2953 = vpop.f32.mrb[0].mxu0
      %v2954 = vadd.f32 0.0, %v2953
      %v2955 = vpop.f32.mrb[0].mxu0
      %v2956 = vpop.f32.mrb[0].mxu0
      %v2957 = vadd.f32 0.0, %v2956
      %v2958 = vpop.f32.mrb[0].mxu0
      %2959 = vdwg.mxu0
      %v2960 = vpack.c.bf16 %v2957, %v2954
      %v2977 = vunpack.c.l.b16 %v1797
      %v2978 = vunpack.c.l.b16 %v1798
      %v2979 = vunpack.c.l.b16 %v1799
      %v2980 = vunpack.c.l.b16 %v1800
      %v2981 = vunpack.c.l.b16 %v1801
      %v2982 = vunpack.c.l.b16 %v1802
      %v2983 = vunpack.c.l.b16 %v1803
      %v2984 = vunpack.c.l.b16 %v1804
      %v2985 = vunpack.c.l.b16 %v1805
      %v2986 = vunpack.c.l.b16 %v1806
      %v2987 = vunpack.c.l.b16 %v1807
      %v2988 = vunpack.c.l.b16 %v1808
      %v2989 = vunpack.c.l.b16 %v1809
      %v2990 = vunpack.c.l.b16 %v1810
      %v2991 = vunpack.c.l.b16 %v1811
      %v2992 = vunpack.c.l.b16 %v1812
      %v2993 = vpack.c.b16 %v2978, %v2977
      %v2994 = vpack.c.b16 %v2980, %v2979
      %v2995 = vpack.c.b16 %v2982, %v2981
      %v2996 = vpack.c.b16 %v2984, %v2983
      %v2997 = vpack.c.b16 %v2986, %v2985
      %v2998 = vpack.c.b16 %v2988, %v2987
      %v2999 = vpack.c.b16 %v2990, %v2989
      %v3000 = vpack.c.b16 %v2992, %v2991
      %3009 = vmatprep.subr.bf16.mxu0 0
      %3010 = vmatpush1.bf16.msra.mxu0 %v2993
      %3011 = vmatprep.subr.bf16.mxu0 0
      %3012 = vmatpush1.bf16.msra.mxu0 %v2994
      %3013 = vmatprep.subr.bf16.mxu0 0
      %3014 = vmatpush1.bf16.msra.mxu0 %v2995
      %3015 = vmatprep.subr.bf16.mxu0 0
      %3016 = vmatpush1.bf16.msra.mxu0 %v2996
      %3017 = vmatprep.subr.bf16.mxu0 0
      %3018 = vmatpush1.bf16.msra.mxu0 %v2997
      %3019 = vmatprep.subr.bf16.mxu0 0
      %3020 = vmatpush1.bf16.msra.mxu0 %v2998
      %3021 = vmatprep.subr.bf16.mxu0 0
      %3022 = vmatpush1.bf16.msra.mxu0 %v2999
      %3023 = vmatprep.subr.bf16.mxu0 0
      %3024 = vmatpush1.bf16.msra.mxu0 %v3000
      %3025 = vmatprep.subr.bf16.mxu0 0
      %3026 = vmatpush1.bf16.msra.mxu0 0
      %3027 = vmatprep.subr.bf16.mxu0 0
      %3028 = vmatpush1.bf16.msra.mxu0 0
      %3029 = vmatprep.subr.bf16.mxu0 0
      %3030 = vmatpush1.bf16.msra.mxu0 0
      %3031 = vmatprep.subr.bf16.mxu0 0
      %3032 = vmatpush1.bf16.msra.mxu0 0
      %3033 = vmatprep.subr.bf16.mxu0 0
      %3034 = vmatpush1.bf16.msra.mxu0 0
      %3035 = vmatprep.subr.bf16.mxu0 0
      %3036 = vmatpush1.bf16.msra.mxu0 0
      %3037 = vmatprep.subr.bf16.mxu0 0
      %3038 = vmatpush1.bf16.msra.mxu0 0
      %3039 = vmatprep.subr.bf16.mxu0 0
      %3040 = vmatpush1.bf16.msra.mxu0 0
      %3041 = vmatprep.mubr.bf16.mxu0 0
      %3042 = vmatmul.mubr.bf16.gmra.mrb[0].mxu0 %v2960
      %v3043 = vpop.f32.mrb[0].mxu0
      %v3044 = vadd.f32 0.0, %v3043
      %v3045 = vpop.f32.mrb[0].mxu0
      %v3046 = vpop.f32.mrb[0].mxu0
      %v3047 = vadd.f32 0.0, %v3046
      %v3048 = vpop.f32.mrb[0].mxu0
      %3049 = vdwg.mxu0
      %v3050 = vadd.f32 %v2843, %v3044
      %v3051 = vadd.f32 %v2844, %v3047
      %v3052 = vadd.f32 %v415, %v3050
      %v3053 = vadd.f32 %v416, %v3051
      %v3054 = vld [vmem:[%s5] sm:$0x1]
      %v3056 = vlaneseq
      %v3057 = vshrl.u32 %v3056, 7
      %v3058 = vsub.s32 0, %v3057
      %v3059 = vrot.slane %v3054, %v3058
      %v3061 = vadd.f32 %v3052, %v3059
      %v3062 = vadd.f32 %v3053, %v3059
      %v3063 = vld [vmem:[%s6] sm:$0x1]
      %v3064 = vld [vmem:[%s7] sm:$0x1]
      %3065 = vadd.xlane.f32.xlu0 %v3061
      %v3066 = vpop.xlane.xlu0 %3065
      %3067 = vadd.xlane.f32.xlu0 %v3062
      %v3068 = vpop.xlane.xlu0 %3067
      %v3069 = vmul.f32 %v3066, %v423
      %v3070 = vmul.f32 %v3068, %v423
      %v3071 = vsub.f32 %v3061, %v3069
      %v3072 = vsub.f32 %v3062, %v3070
      %v3073 = vmul.f32 %v3071, %v3071
      %v3074 = vmul.f32 %v3072, %v3072
      %3075 = vadd.xlane.f32.xlu0 %v3073
      %v3076 = vpop.xlane.xlu0 %3075
      %3077 = vadd.xlane.f32.xlu0 %v3074
      %v3078 = vpop.xlane.xlu0 %3077
      %v3079 = vmul.f32 %v3076, %v423
      %v3080 = vmul.f32 %v3078, %v423
      %v3081 = vadd.f32 %v3079, 1e-05
      %v3082 = vadd.f32 %v3080, 1e-05
      %v3083 = vrsqrt.pop %v3081
      %v3084 = vrsqrt.pop %v3082
      %v3085 = vmul.f32 %v3071, %v3083
      %v3086 = vmul.f32 %v3072, %v3084
      %v3088 = vlaneseq
      %v3089 = vshrl.u32 %v3088, 7
      %v3090 = vsub.s32 0, %v3089
      %v3091 = vrot.slane %v3063, %v3090
      %v3093 = vmul.f32 %v3085, %v3091
      %v3094 = vmul.f32 %v3086, %v3091
      %v3096 = vlaneseq
      %v3097 = vshrl.u32 %v3096, 7
      %v3098 = vsub.s32 0, %v3097
      %v3099 = vrot.slane %v3064, %v3098
      %v3101 = vadd.f32 %v3093, %v3099
      %v3102 = vadd.f32 %v3094, %v3099
      %v3103 = vpack.c.bf16 %v3102, %v3101
      %v3104 = vld [vmem:[%s8] sm:$0xff]
      %v3105 = vld [vmem:[%s8 + $0x8] sm:$0xff]
      %v3106 = vld [vmem:[%s8 + $0x10] sm:$0xff]
      %v3107 = vld [vmem:[%s8 + $0x18] sm:$0xff]
      %v3108 = vld [vmem:[%s8 + $0x20] sm:$0xff]
      %v3109 = vld [vmem:[%s8 + $0x28] sm:$0xff]
      %v3110 = vld [vmem:[%s8 + $0x30] sm:$0xff]
      %v3111 = vld [vmem:[%s8 + $0x38] sm:$0xff]
      %v3112 = vld [vmem:[%s8 + $0x40] sm:$0xff]
      %v3113 = vld [vmem:[%s8 + $0x48] sm:$0xff]
      %v3114 = vld [vmem:[%s8 + $0x50] sm:$0xff]
      %v3115 = vld [vmem:[%s8 + $0x58] sm:$0xff]
      %v3116 = vld [vmem:[%s8 + $0x60] sm:$0xff]
      %v3117 = vld [vmem:[%s8 + $0x68] sm:$0xff]
      %v3118 = vld [vmem:[%s8 + $0x70] sm:$0xff]
      %v3119 = vld [vmem:[%s8 + $0x78] sm:$0xff]
      %v3120 = vld [vmem:[%s8 + $0x80] sm:$0xff]
      %v3121 = vld [vmem:[%s8 + $0x88] sm:$0xff]
      %v3122 = vld [vmem:[%s8 + $0x90] sm:$0xff]
      %v3123 = vld [vmem:[%s8 + $0x98] sm:$0xff]
      %v3124 = vld [vmem:[%s8 + $0xa0] sm:$0xff]
      %v3125 = vld [vmem:[%s8 + $0xa8] sm:$0xff]
      %v3126 = vld [vmem:[%s8 + $0xb0] sm:$0xff]
      %v3127 = vld [vmem:[%s8 + $0xb8] sm:$0xff]
      %v3128 = vld [vmem:[%s8 + $0xc0] sm:$0xff]
      %v3129 = vld [vmem:[%s8 + $0xc8] sm:$0xff]
      %v3130 = vld [vmem:[%s8 + $0xd0] sm:$0xff]
      %v3131 = vld [vmem:[%s8 + $0xd8] sm:$0xff]
      %v3132 = vld [vmem:[%s8 + $0xe0] sm:$0xff]
      %v3133 = vld [vmem:[%s8 + $0xe8] sm:$0xff]
      %v3134 = vld [vmem:[%s8 + $0xf0] sm:$0xff]
      %v3135 = vld [vmem:[%s8 + $0xf8] sm:$0xff]
      %v3136 = vld [vmem:[%s9] sm:$0xf]
      %v3138 = vlaneseq
      %v3139 = vshrl.u32 %v3138, 7
      %v3140 = vsub.s32 0, %v3139
      %v3141 = vrot.slane %v3136, %v3140
      %v3142 = vlaneseq
      %v3143 = vshrl.u32 %v3142, 7
      %v3144 = vsub.s32 1, %v3143
      %v3145 = vrot.slane %v3136, %v3144
      %v3146 = vlaneseq
      %v3147 = vshrl.u32 %v3146, 7
      %v3148 = vsub.s32 2, %v3147
      %v3149 = vrot.slane %v3136, %v3148
      %v3150 = vlaneseq
      %v3151 = vshrl.u32 %v3150, 7
      %v3152 = vsub.s32 3, %v3151
      %v3153 = vrot.slane %v3136, %v3152
      %v3190 = vunpack.c.l.b16 %v3104
      %v3191 = vunpack.c.h.b16 %v3104
      %v3192 = vunpack.c.l.b16 %v3105
      %v3193 = vunpack.c.h.b16 %v3105
      %v3194 = vunpack.c.l.b16 %v3106
      %v3195 = vunpack.c.h.b16 %v3106
      %v3196 = vunpack.c.l.b16 %v3107
      %v3197 = vunpack.c.h.b16 %v3107
      %v3198 = vunpack.c.l.b16 %v3108
      %v3199 = vunpack.c.h.b16 %v3108
      %v3200 = vunpack.c.l.b16 %v3109
      %v3201 = vunpack.c.h.b16 %v3109
      %v3202 = vunpack.c.l.b16 %v3110
      %v3203 = vunpack.c.h.b16 %v3110
      %v3204 = vunpack.c.l.b16 %v3111
      %v3205 = vunpack.c.h.b16 %v3111
      %v3206 = vunpack.c.l.b16 %v3112
      %v3207 = vunpack.c.h.b16 %v3112
      %v3208 = vunpack.c.l.b16 %v3113
      %v3209 = vunpack.c.h.b16 %v3113
      %v3210 = vunpack.c.l.b16 %v3114
      %v3211 = vunpack.c.h.b16 %v3114
      %v3212 = vunpack.c.l.b16 %v3115
      %v3213 = vunpack.c.h.b16 %v3115
      %v3214 = vunpack.c.l.b16 %v3116
      %v3215 = vunpack.c.h.b16 %v3116
      %v3216 = vunpack.c.l.b16 %v3117
      %v3217 = vunpack.c.h.b16 %v3117
      %v3218 = vunpack.c.l.b16 %v3118
      %v3219 = vunpack.c.h.b16 %v3118
      %v3220 = vunpack.c.l.b16 %v3119
      %v3221 = vunpack.c.h.b16 %v3119
      %v3222 = vunpack.c.l.b16 %v3120
      %v3223 = vunpack.c.h.b16 %v3120
      %v3224 = vunpack.c.l.b16 %v3121
      %v3225 = vunpack.c.h.b16 %v3121
      %v3226 = vunpack.c.l.b16 %v3122
      %v3227 = vunpack.c.h.b16 %v3122
      %v3228 = vunpack.c.l.b16 %v3123
      %v3229 = vunpack.c.h.b16 %v3123
      %v3230 = vunpack.c.l.b16 %v3124
      %v3231 = vunpack.c.h.b16 %v3124
      %v3232 = vunpack.c.l.b16 %v3125
      %v3233 = vunpack.c.h.b16 %v3125
      %v3234 = vunpack.c.l.b16 %v3126
      %v3235 = vunpack.c.h.b16 %v3126
      %v3236 = vunpack.c.l.b16 %v3127
      %v3237 = vunpack.c.h.b16 %v3127
      %v3238 = vunpack.c.l.b16 %v3128
      %v3239 = vunpack.c.h.b16 %v3128
      %v3240 = vunpack.c.l.b16 %v3129
      %v3241 = vunpack.c.h.b16 %v3129
      %v3242 = vunpack.c.l.b16 %v3130
      %v3243 = vunpack.c.h.b16 %v3130
      %v3244 = vunpack.c.l.b16 %v3131
      %v3245 = vunpack.c.h.b16 %v3131
      %v3246 = vunpack.c.l.b16 %v3132
      %v3247 = vunpack.c.h.b16 %v3132
      %v3248 = vunpack.c.l.b16 %v3133
      %v3249 = vunpack.c.h.b16 %v3133
      %v3250 = vunpack.c.l.b16 %v3134
      %v3251 = vunpack.c.h.b16 %v3134
      %v3252 = vunpack.c.l.b16 %v3135
      %v3253 = vunpack.c.h.b16 %v3135
      %v3254 = vpack.c.b16 %v3194, %v3190
      %v3255 = vpack.c.b16 %v3195, %v3191
      %v3256 = vpack.c.b16 %v3196, %v3192
      %v3257 = vpack.c.b16 %v3197, %v3193
      %v3258 = vpack.c.b16 %v3202, %v3198
      %v3259 = vpack.c.b16 %v3203, %v3199
      %v3260 = vpack.c.b16 %v3204, %v3200
      %v3261 = vpack.c.b16 %v3205, %v3201
      %v3262 = vpack.c.b16 %v3210, %v3206
      %v3263 = vpack.c.b16 %v3211, %v3207
      %v3264 = vpack.c.b16 %v3212, %v3208
      %v3265 = vpack.c.b16 %v3213, %v3209
      %v3266 = vpack.c.b16 %v3218, %v3214
      %v3267 = vpack.c.b16 %v3219, %v3215
      %v3268 = vpack.c.b16 %v3220, %v3216
      %v3269 = vpack.c.b16 %v3221, %v3217
      %v3270 = vpack.c.b16 %v3226, %v3222
      %v3271 = vpack.c.b16 %v3227, %v3223
      %v3272 = vpack.c.b16 %v3228, %v3224
      %v3273 = vpack.c.b16 %v3229, %v3225
      %v3274 = vpack.c.b16 %v3234, %v3230
      %v3275 = vpack.c.b16 %v3235, %v3231
      %v3276 = vpack.c.b16 %v3236, %v3232
      %v3277 = vpack.c.b16 %v3237, %v3233
      %v3278 = vpack.c.b16 %v3242, %v3238
      %v3279 = vpack.c.b16 %v3243, %v3239
      %v3280 = vpack.c.b16 %v3244, %v3240
      %v3281 = vpack.c.b16 %v3245, %v3241
      %v3282 = vpack.c.b16 %v3250, %v3246
      %v3283 = vpack.c.b16 %v3251, %v3247
      %v3284 = vpack.c.b16 %v3252, %v3248
      %v3285 = vpack.c.b16 %v3253, %v3249
      %3318 = vmatprep.subr.bf16.mxu0 %v3255
      %3319 = vmatpush1.bf16.msra.mxu0 %v3254
      %3320 = vmatprep.subr.bf16.mxu0 %v3259
      %3321 = vmatpush1.bf16.msra.mxu0 %v3258
      %3322 = vmatprep.subr.bf16.mxu0 %v3263
      %3323 = vmatpush1.bf16.msra.mxu0 %v3262
      %3324 = vmatprep.subr.bf16.mxu0 %v3267
      %3325 = vmatpush1.bf16.msra.mxu0 %v3266
      %3326 = vmatprep.subr.bf16.mxu0 %v3271
      %3327 = vmatpush1.bf16.msra.mxu0 %v3270
      %3328 = vmatprep.subr.bf16.mxu0 %v3275
      %3329 = vmatpush1.bf16.msra.mxu0 %v3274
      %3330 = vmatprep.subr.bf16.mxu0 %v3279
      %3331 = vmatpush1.bf16.msra.mxu0 %v3278
      %3332 = vmatprep.subr.bf16.mxu0 %v3283
      %3333 = vmatpush1.bf16.msra.mxu0 %v3282
      %3334 = vmatprep.subr.bf16.mxu0 0
      %3335 = vmatpush1.bf16.msra.mxu0 0
      %3336 = vmatprep.subr.bf16.mxu0 0
      %3337 = vmatpush1.bf16.msra.mxu0 0
      %3338 = vmatprep.subr.bf16.mxu0 0
      %3339 = vmatpush1.bf16.msra.mxu0 0
      %3340 = vmatprep.subr.bf16.mxu0 0
      %3341 = vmatpush1.bf16.msra.mxu0 0
      %3342 = vmatprep.subr.bf16.mxu0 0
      %3343 = vmatpush1.bf16.msra.mxu0 0
      %3344 = vmatprep.subr.bf16.mxu0 0
      %3345 = vmatpush1.bf16.msra.mxu0 0
      %3346 = vmatprep.subr.bf16.mxu0 0
      %3347 = vmatpush1.bf16.msra.mxu0 0
      %3348 = vmatprep.subr.bf16.mxu0 0
      %3349 = vmatpush1.bf16.msra.mxu0 0
      %3350 = vmatprep.mubr.bf16.mxu0 0
      %3351 = vmatmul.mubr.bf16.gmra.mrb[0].mxu0 %v3103
      %v3352 = vpop.f32.mrb[0].mxu0
      %v3353 = vadd.f32 %v3141, %v3352
      %v3354 = vpop.f32.mrb[0].mxu0
      %v3355 = vadd.f32 %v3145, %v3354
      %v3356 = vpop.f32.mrb[0].mxu0
      %v3357 = vadd.f32 %v3141, %v3356
      %v3358 = vpop.f32.mrb[0].mxu0
      %v3359 = vadd.f32 %v3145, %v3358
      %3360 = vdwg.mxu0
      %3361 = vmatprep.subr.bf16.mxu0 %v3257
      %3362 = vmatpush1.bf16.msra.mxu0 %v3256
      %3363 = vmatprep.subr.bf16.mxu0 %v3261
      %3364 = vmatpush1.bf16.msra.mxu0 %v3260
      %3365 = vmatprep.subr.bf16.mxu0 %v3265
      %3366 = vmatpush1.bf16.msra.mxu0 %v3264
      %3367 = vmatprep.subr.bf16.mxu0 %v3269
      %3368 = vmatpush1.bf16.msra.mxu0 %v3268
      %3369 = vmatprep.subr.bf16.mxu0 %v3273
      %3370 = vmatpush1.bf16.msra.mxu0 %v3272
      %3371 = vmatprep.subr.bf16.mxu0 %v3277
      %3372 = vmatpush1.bf16.msra.mxu0 %v3276
      %3373 = vmatprep.subr.bf16.mxu0 %v3281
      %3374 = vmatpush1.bf16.msra.mxu0 %v3280
      %3375 = vmatprep.subr.bf16.mxu0 %v3285
      %3376 = vmatpush1.bf16.msra.mxu0 %v3284
      %3377 = vmatprep.subr.bf16.mxu0 0
      %3378 = vmatpush1.bf16.msra.mxu0 0
      %3379 = vmatprep.subr.bf16.mxu0 0
      %3380 = vmatpush1.bf16.msra.mxu0 0
      %3381 = vmatprep.subr.bf16.mxu0 0
      %3382 = vmatpush1.bf16.msra.mxu0 0
      %3383 = vmatprep.subr.bf16.mxu0 0
      %3384 = vmatpush1.bf16.msra.mxu0 0
      %3385 = vmatprep.subr.bf16.mxu0 0
      %3386 = vmatpush1.bf16.msra.mxu0 0
      %3387 = vmatprep.subr.bf16.mxu0 0
      %3388 = vmatpush1.bf16.msra.mxu0 0
      %3389 = vmatprep.subr.bf16.mxu0 0
      %3390 = vmatpush1.bf16.msra.mxu0 0
      %3391 = vmatprep.subr.bf16.mxu0 0
      %3392 = vmatpush1.bf16.msra.mxu0 0
      %3393 = vmatprep.mubr.bf16.mxu0 0
      %3394 = vmatmul.mubr.bf16.gmra.mrb[0].mxu0 %v3103
      %v3395 = vpop.f32.mrb[0].mxu0
      %v3396 = vadd.f32 %v3149, %v3395
      %v3397 = vpop.f32.mrb[0].mxu0
      %v3398 = vadd.f32 %v3153, %v3397
      %v3399 = vpop.f32.mrb[0].mxu0
      %v3400 = vadd.f32 %v3149, %v3399
      %v3401 = vpop.f32.mrb[0].mxu0
      %v3402 = vadd.f32 %v3153, %v3401
      %3403 = vdwg.mxu0
      %v3404 = vmax.f32 %v3353, 0.0
      %v3405 = vmax.f32 %v3355, 0.0
      %v3406 = vmax.f32 %v3396, 0.0
      %v3407 = vmax.f32 %v3398, 0.0
      %v3408 = vmax.f32 %v3357, 0.0
      %v3409 = vmax.f32 %v3359, 0.0
      %v3410 = vmax.f32 %v3400, 0.0
      %v3411 = vmax.f32 %v3402, 0.0
      %v3412 = vpack.c.bf16 %v3408, %v3404
      %v3413 = vpack.c.bf16 %v3409, %v3405
      %v3414 = vpack.c.bf16 %v3410, %v3406
      %v3415 = vpack.c.bf16 %v3411, %v3407
      %v3416 = vld [vmem:[%s10] sm:$0xf]
      %v3417 = vld [vmem:[%s10 + $0x4] sm:$0xf]
      %v3418 = vld [vmem:[%s10 + $0x8] sm:$0xf]
      %v3419 = vld [vmem:[%s10 + $0xc] sm:$0xf]
      %v3420 = vld [vmem:[%s10 + $0x10] sm:$0xf]
      %v3421 = vld [vmem:[%s10 + $0x14] sm:$0xf]
      %v3422 = vld [vmem:[%s10 + $0x18] sm:$0xf]
      %v3423 = vld [vmem:[%s10 + $0x1c] sm:$0xf]
      %v3424 = vld [vmem:[%s10 + $0x20] sm:$0xf]
      %v3425 = vld [vmem:[%s10 + $0x24] sm:$0xf]
      %v3426 = vld [vmem:[%s10 + $0x28] sm:$0xf]
      %v3427 = vld [vmem:[%s10 + $0x2c] sm:$0xf]
      %v3428 = vld [vmem:[%s10 + $0x30] sm:$0xf]
      %v3429 = vld [vmem:[%s10 + $0x34] sm:$0xf]
      %v3430 = vld [vmem:[%s10 + $0x38] sm:$0xf]
      %v3431 = vld [vmem:[%s10 + $0x3c] sm:$0xf]
      %v3432 = vld [vmem:[%s10 + $0x40] sm:$0xf]
      %v3433 = vld [vmem:[%s10 + $0x44] sm:$0xf]
      %v3434 = vld [vmem:[%s10 + $0x48] sm:$0xf]
      %v3435 = vld [vmem:[%s10 + $0x4c] sm:$0xf]
      %v3436 = vld [vmem:[%s10 + $0x50] sm:$0xf]
      %v3437 = vld [vmem:[%s10 + $0x54] sm:$0xf]
      %v3438 = vld [vmem:[%s10 + $0x58] sm:$0xf]
      %v3439 = vld [vmem:[%s10 + $0x5c] sm:$0xf]
      %v3440 = vld [vmem:[%s10 + $0x60] sm:$0xf]
      %v3441 = vld [vmem:[%s10 + $0x64] sm:$0xf]
      %v3442 = vld [vmem:[%s10 + $0x68] sm:$0xf]
      %v3443 = vld [vmem:[%s10 + $0x6c] sm:$0xf]
      %v3444 = vld [vmem:[%s10 + $0x70] sm:$0xf]
      %v3445 = vld [vmem:[%s10 + $0x74] sm:$0xf]
      %v3446 = vld [vmem:[%s10 + $0x78] sm:$0xf]
      %v3447 = vld [vmem:[%s10 + $0x7c] sm:$0xf]
      %v3448 = vld [vmem:[%s10 + $0x80] sm:$0xf]
      %v3449 = vld [vmem:[%s10 + $0x84] sm:$0xf]
      %v3450 = vld [vmem:[%s10 + $0x88] sm:$0xf]
      %v3451 = vld [vmem:[%s10 + $0x8c] sm:$0xf]
      %v3452 = vld [vmem:[%s10 + $0x90] sm:$0xf]
      %v3453 = vld [vmem:[%s10 + $0x94] sm:$0xf]
      %v3454 = vld [vmem:[%s10 + $0x98] sm:$0xf]
      %v3455 = vld [vmem:[%s10 + $0x9c] sm:$0xf]
      %v3456 = vld [vmem:[%s10 + $0xa0] sm:$0xf]
      %v3457 = vld [vmem:[%s10 + $0xa4] sm:$0xf]
      %v3458 = vld [vmem:[%s10 + $0xa8] sm:$0xf]
      %v3459 = vld [vmem:[%s10 + $0xac] sm:$0xf]
      %v3460 = vld [vmem:[%s10 + $0xb0] sm:$0xf]
      %v3461 = vld [vmem:[%s10 + $0xb4] sm:$0xf]
      %v3462 = vld [vmem:[%s10 + $0xb8] sm:$0xf]
      %v3463 = vld [vmem:[%s10 + $0xbc] sm:$0xf]
      %v3464 = vld [vmem:[%s10 + $0xc0] sm:$0xf]
      %v3465 = vld [vmem:[%s10 + $0xc4] sm:$0xf]
      %v3466 = vld [vmem:[%s10 + $0xc8] sm:$0xf]
      %v3467 = vld [vmem:[%s10 + $0xcc] sm:$0xf]
      %v3468 = vld [vmem:[%s10 + $0xd0] sm:$0xf]
      %v3469 = vld [vmem:[%s10 + $0xd4] sm:$0xf]
      %v3470 = vld [vmem:[%s10 + $0xd8] sm:$0xf]
      %v3471 = vld [vmem:[%s10 + $0xdc] sm:$0xf]
      %v3472 = vld [vmem:[%s10 + $0xe0] sm:$0xf]
      %v3473 = vld [vmem:[%s10 + $0xe4] sm:$0xf]
      %v3474 = vld [vmem:[%s10 + $0xe8] sm:$0xf]
      %v3475 = vld [vmem:[%s10 + $0xec] sm:$0xf]
      %v3476 = vld [vmem:[%s10 + $0xf0] sm:$0xf]
      %v3477 = vld [vmem:[%s10 + $0xf4] sm:$0xf]
      %v3478 = vld [vmem:[%s10 + $0xf8] sm:$0xf]
      %v3479 = vld [vmem:[%s10 + $0xfc] sm:$0xf]
      %v3480 = vld [vmem:[%s11] sm:$0x1]
      %v3482 = vlaneseq
      %v3483 = vshrl.u32 %v3482, 7
      %v3484 = vsub.s32 0, %v3483
      %v3485 = vrot.slane %v3480, %v3484
      %v3551 = vunpack.c.l.b16 %v3416
      %v3552 = vunpack.c.l.b16 %v3417
      %v3553 = vunpack.c.l.b16 %v3418
      %v3554 = vunpack.c.l.b16 %v3419
      %v3555 = vunpack.c.l.b16 %v3420
      %v3556 = vunpack.c.l.b16 %v3421
      %v3557 = vunpack.c.l.b16 %v3422
      %v3558 = vunpack.c.l.b16 %v3423
      %v3559 = vunpack.c.l.b16 %v3424
      %v3560 = vunpack.c.l.b16 %v3425
      %v3561 = vunpack.c.l.b16 %v3426
      %v3562 = vunpack.c.l.b16 %v3427
      %v3563 = vunpack.c.l.b16 %v3428
      %v3564 = vunpack.c.l.b16 %v3429
      %v3565 = vunpack.c.l.b16 %v3430
      %v3566 = vunpack.c.l.b16 %v3431
      %v3567 = vunpack.c.l.b16 %v3432
      %v3568 = vunpack.c.l.b16 %v3433
      %v3569 = vunpack.c.l.b16 %v3434
      %v3570 = vunpack.c.l.b16 %v3435
      %v3571 = vunpack.c.l.b16 %v3436
      %v3572 = vunpack.c.l.b16 %v3437
      %v3573 = vunpack.c.l.b16 %v3438
      %v3574 = vunpack.c.l.b16 %v3439
      %v3575 = vunpack.c.l.b16 %v3440
      %v3576 = vunpack.c.l.b16 %v3441
      %v3577 = vunpack.c.l.b16 %v3442
      %v3578 = vunpack.c.l.b16 %v3443
      %v3579 = vunpack.c.l.b16 %v3444
      %v3580 = vunpack.c.l.b16 %v3445
      %v3581 = vunpack.c.l.b16 %v3446
      %v3582 = vunpack.c.l.b16 %v3447
      %v3583 = vunpack.c.l.b16 %v3448
      %v3584 = vunpack.c.l.b16 %v3449
      %v3585 = vunpack.c.l.b16 %v3450
      %v3586 = vunpack.c.l.b16 %v3451
      %v3587 = vunpack.c.l.b16 %v3452
      %v3588 = vunpack.c.l.b16 %v3453
      %v3589 = vunpack.c.l.b16 %v3454
      %v3590 = vunpack.c.l.b16 %v3455
      %v3591 = vunpack.c.l.b16 %v3456
      %v3592 = vunpack.c.l.b16 %v3457
      %v3593 = vunpack.c.l.b16 %v3458
      %v3594 = vunpack.c.l.b16 %v3459
      %v3595 = vunpack.c.l.b16 %v3460
      %v3596 = vunpack.c.l.b16 %v3461
      %v3597 = vunpack.c.l.b16 %v3462
      %v3598 = vunpack.c.l.b16 %v3463
      %v3599 = vunpack.c.l.b16 %v3464
      %v3600 = vunpack.c.l.b16 %v3465
      %v3601 = vunpack.c.l.b16 %v3466
      %v3602 = vunpack.c.l.b16 %v3467
      %v3603 = vunpack.c.l.b16 %v3468
      %v3604 = vunpack.c.l.b16 %v3469
      %v3605 = vunpack.c.l.b16 %v3470
      %v3606 = vunpack.c.l.b16 %v3471
      %v3607 = vunpack.c.l.b16 %v3472
      %v3608 = vunpack.c.l.b16 %v3473
      %v3609 = vunpack.c.l.b16 %v3474
      %v3610 = vunpack.c.l.b16 %v3475
      %v3611 = vunpack.c.l.b16 %v3476
      %v3612 = vunpack.c.l.b16 %v3477
      %v3613 = vunpack.c.l.b16 %v3478
      %v3614 = vunpack.c.l.b16 %v3479
      %v3615 = vpack.c.b16 %v3552, %v3551
      %v3616 = vpack.c.b16 %v3554, %v3553
      %v3617 = vpack.c.b16 %v3556, %v3555
      %v3618 = vpack.c.b16 %v3558, %v3557
      %v3619 = vpack.c.b16 %v3560, %v3559
      %v3620 = vpack.c.b16 %v3562, %v3561
      %v3621 = vpack.c.b16 %v3564, %v3563
      %v3622 = vpack.c.b16 %v3566, %v3565
      %v3623 = vpack.c.b16 %v3568, %v3567
      %v3624 = vpack.c.b16 %v3570, %v3569
      %v3625 = vpack.c.b16 %v3572, %v3571
      %v3626 = vpack.c.b16 %v3574, %v3573
      %v3627 = vpack.c.b16 %v3576, %v3575
      %v3628 = vpack.c.b16 %v3578, %v3577
      %v3629 = vpack.c.b16 %v3580, %v3579
      %v3630 = vpack.c.b16 %v3582, %v3581
      %v3631 = vpack.c.b16 %v3584, %v3583
      %v3632 = vpack.c.b16 %v3586, %v3585
      %v3633 = vpack.c.b16 %v3588, %v3587
      %v3634 = vpack.c.b16 %v3590, %v3589
      %v3635 = vpack.c.b16 %v3592, %v3591
      %v3636 = vpack.c.b16 %v3594, %v3593
      %v3637 = vpack.c.b16 %v3596, %v3595
      %v3638 = vpack.c.b16 %v3598, %v3597
      %v3639 = vpack.c.b16 %v3600, %v3599
      %v3640 = vpack.c.b16 %v3602, %v3601
      %v3641 = vpack.c.b16 %v3604, %v3603
      %v3642 = vpack.c.b16 %v3606, %v3605
      %v3643 = vpack.c.b16 %v3608, %v3607
      %v3644 = vpack.c.b16 %v3610, %v3609
      %v3645 = vpack.c.b16 %v3612, %v3611
      %v3646 = vpack.c.b16 %v3614, %v3613
      %3679 = vmatprep.subr.bf16.mxu0 0
      %3680 = vmatpush1.bf16.msra.mxu0 %v3615
      %3681 = vmatprep.subr.bf16.mxu0 0
      %3682 = vmatpush1.bf16.msra.mxu0 %v3616
      %3683 = vmatprep.subr.bf16.mxu0 0
      %3684 = vmatpush1.bf16.msra.mxu0 %v3617
      %3685 = vmatprep.subr.bf16.mxu0 0
      %3686 = vmatpush1.bf16.msra.mxu0 %v3618
      %3687 = vmatprep.subr.bf16.mxu0 0
      %3688 = vmatpush1.bf16.msra.mxu0 %v3619
      %3689 = vmatprep.subr.bf16.mxu0 0
      %3690 = vmatpush1.bf16.msra.mxu0 %v3620
      %3691 = vmatprep.subr.bf16.mxu0 0
      %3692 = vmatpush1.bf16.msra.mxu0 %v3621
      %3693 = vmatprep.subr.bf16.mxu0 0
      %3694 = vmatpush1.bf16.msra.mxu0 %v3622
      %3695 = vmatprep.subr.bf16.mxu0 0
      %3696 = vmatpush1.bf16.msra.mxu0 %v3623
      %3697 = vmatprep.subr.bf16.mxu0 0
      %3698 = vmatpush1.bf16.msra.mxu0 %v3624
      %3699 = vmatprep.subr.bf16.mxu0 0
      %3700 = vmatpush1.bf16.msra.mxu0 %v3625
      %3701 = vmatprep.subr.bf16.mxu0 0
      %3702 = vmatpush1.bf16.msra.mxu0 %v3626
      %3703 = vmatprep.subr.bf16.mxu0 0
      %3704 = vmatpush1.bf16.msra.mxu0 %v3627
      %3705 = vmatprep.subr.bf16.mxu0 0
      %3706 = vmatpush1.bf16.msra.mxu0 %v3628
      %3707 = vmatprep.subr.bf16.mxu0 0
      %3708 = vmatpush1.bf16.msra.mxu0 %v3629
      %3709 = vmatprep.subr.bf16.mxu0 0
      %3710 = vmatpush1.bf16.msra.mxu0 %v3630
      %3711 = vmatprep.mubr.bf16.mxu0 %v3413
      %3712 = vmatmul.mubr.bf16.gmra.mrb[0].mxu0 %v3412
      %v3713 = vpop.f32.mrb[0].mxu0
      %v3714 = vadd.f32 %v3485, %v3713
      %v3715 = vpop.f32.mrb[0].mxu0
      %v3716 = vpop.f32.mrb[0].mxu0
      %v3717 = vadd.f32 %v3485, %v3716
      %v3718 = vpop.f32.mrb[0].mxu0
      %3719 = vdwg.mxu0
      %3720 = vmatprep.subr.bf16.mxu0 0
      %3721 = vmatpush1.bf16.msra.mxu0 %v3631
      %3722 = vmatprep.subr.bf16.mxu0 0
      %3723 = vmatpush1.bf16.msra.mxu0 %v3632
      %3724 = vmatprep.subr.bf16.mxu0 0
      %3725 = vmatpush1.bf16.msra.mxu0 %v3633
      %3726 = vmatprep.subr.bf16.mxu0 0
      %3727 = vmatpush1.bf16.msra.mxu0 %v3634
      %3728 = vmatprep.subr.bf16.mxu0 0
      %3729 = vmatpush1.bf16.msra.mxu0 %v3635
      %3730 = vmatprep.subr.bf16.mxu0 0
      %3731 = vmatpush1.bf16.msra.mxu0 %v3636
      %3732 = vmatprep.subr.bf16.mxu0 0
      %3733 = vmatpush1.bf16.msra.mxu0 %v3637
      %3734 = vmatprep.subr.bf16.mxu0 0
      %3735 = vmatpush1.bf16.msra.mxu0 %v3638
      %3736 = vmatprep.subr.bf16.mxu0 0
      %3737 = vmatpush1.bf16.msra.mxu0 %v3639
      %3738 = vmatprep.subr.bf16.mxu0 0
      %3739 = vmatpush1.bf16.msra.mxu0 %v3640
      %3740 = vmatprep.subr.bf16.mxu0 0
      %3741 = vmatpush1.bf16.msra.mxu0 %v3641
      %3742 = vmatprep.subr.bf16.mxu0 0
      %3743 = vmatpush1.bf16.msra.mxu0 %v3642
      %3744 = vmatprep.subr.bf16.mxu0 0
      %3745 = vmatpush1.bf16.msra.mxu0 %v3643
      %3746 = vmatprep.subr.bf16.mxu0 0
      %3747 = vmatpush1.bf16.msra.mxu0 %v3644
      %3748 = vmatprep.subr.bf16.mxu0 0
      %3749 = vmatpush1.bf16.msra.mxu0 %v3645
      %3750 = vmatprep.subr.bf16.mxu0 0
      %3751 = vmatpush1.bf16.msra.mxu0 %v3646
      %3752 = vmatprep.mubr.bf16.mxu0 %v3415
      %3753 = vmatmul.mubr.bf16.gmra.mrb[0].mxu0 %v3414
      %v3754 = vpop.f32.mrb[0].mxu0
      %v3755 = vadd.f32 %v3714, %v3754
      %v3756 = vpop.f32.mrb[0].mxu0
      %v3757 = vpop.f32.mrb[0].mxu0
      %v3758 = vadd.f32 %v3717, %v3757
      %v3759 = vpop.f32.mrb[0].mxu0
      %3760 = vdwg.mxu0
      %v3761 = vadd.f32 %v3061, %v3755
      %v3762 = vadd.f32 %v3062, %v3758
      %3763 = vst [vmem:[%s413] sm:$0xff] %v3761
      %3764 = vst [vmem:[%s413 + $0x8] sm:$0xff] %v3762
      %p3765 = scmp.lt.s32.totalorder %s23, 1
      %s3766 = scalar_select %p3765, %s23, 1
      %s3767 = smul.addr %s3766, 2
      %s3768 = smul.addr %s3767, 8
      %s3769 = scalar_lea.vmem %s12, %s3768
      // Predicated region
      $region69: #{gpt_forward.8} parent=67 // pred_check
        %p3770 = pneg %p298
      $region70: #{gpt_forward.8} parent=67 // pred_check_branch
        %3772 = sbr.rel (%p3770) target = $region72
      $region71: #{gpt_forward.8} parent=67 // pred_region
        _
      $region72: #{gpt_forward.8} parent=67 // pred_fallthru
        _
    $region68: #{gpt_forward.8} parent=5 // pred_fallthru
      _
    %p3773 = scmp.le.s32.totalorder 2, %s18
    // Predicated region
    $region73: #{gpt_forward.8} parent=5 // pred_check
      %p3774 = pneg %p3773
    $region74: #{gpt_forward.8} parent=5 // pred_check_branch
      %3776 = sbr.rel (%p3774) target = $region76
    $region75: #{gpt_forward.8} parent=5 // pred_region
      %s3777 = ssub.s32 %s18, 2
      // Predicated region
      $region77: #{gpt_forward.8} parent=75 // pred_check
        %p3778 = pneg %p304
      $region78: #{gpt_forward.8} parent=75 // pred_check_branch
        %3780 = sbr.rel (%p3778) target = $region80
      $region79: #{gpt_forward.8} parent=75 // pred_region
        %p3781 = scmp.lt.s32.totalorder %s24, 1
        %s3782 = scalar_select %p3781, %s24, 1
        %s3783 = smul.addr %s3782, 2
        %s3784 = smul.addr %s3783, 8
        %s3785 = scalar_lea.vmem %s12, %s3784
      $region80: #{gpt_forward.8} parent=75 // pred_fallthru
        _
    $region76: #{gpt_forward.8} parent=5 // pred_fallthru
      _
  $region6: #{gpt_forward.8} parent=0 // loop_footer
    %s22 = sadd.s32 1, %s18
  $region7: #{gpt_forward.8} parent=0 // loop_footer_branch
    %17 = sbr.rel target = $region3
  $region8: #{gpt_forward.8} parent=0 // loop_exit
    _

// kernel: gpt_forward.7
$region0: #{gpt_forward.7}
  #allocation0 [shape = 'u32[]', space=smem, size = 0x4, offset = 0x4, fixed_abs, tag = 'smem constant byte address 0x4 - core index']
  #allocation1 [shape = 'u32[144,128]{1,0:T(1,128)}', space=vmem, size = 0x12000, scoped, tag = 'internal scratch']
  %s0 = inlined_call_operand.vmem [shape: f32[2,16,128], index: 0, kind: input, shape index: {}]
  %s1 = inlined_call_operand.vmem [shape: f32[1,128], index: 1, kind: input, shape index: {}]
  %s2 = inlined_call_operand.vmem [shape: f32[1,128], index: 2, kind: input, shape index: {}]
  %s3 = inlined_call_operand.hbm [shape: bf16[128,2304], index: 3, kind: input, shape index: {}]
  %s4 = inlined_call_operand.vmem [shape: bf16[768,128], index: 4, kind: input, shape index: {}]
  %s5 = inlined_call_operand.vmem [shape: f32[1,128], index: 5, kind: input, shape index: {}]
  %s6 = inlined_call_operand.vmem [shape: f32[1,128], index: 6, kind: input, shape index: {}]
  %s7 = inlined_call_operand.vmem [shape: f32[1,128], index: 7, kind: input, shape index: {}]
  %s8 = inlined_call_operand.hbm [shape: bf16[128,512], index: 8, kind: input, shape index: {}]
  %s9 = inlined_call_operand.vmem [shape: f32[1,512], index: 9, kind: input, shape index: {}]
  %s10 = inlined_call_operand.hbm [shape: bf16[512,128], index: 10, kind: input, shape index: {}]
  %s11 = inlined_call_operand.vmem [shape: f32[1,128], index: 11, kind: input, shape index: {}]
  %s12 = inlined_call_operand.vmem [shape: f32[2,16,128], index: 12, kind: output, shape index: {}]
  %s13 = sld [smem:[#allocation0]]
  $region93: #{gpt_forward.7} parent=0
    _
  %s15 = ssub.s32 1, %s13
  %s16 = scalar_select 0, %s15, %s13
  $region1: #{gpt_forward.7} parent=0
    #allocation2 [shape = 'u8[589824]{0}', space=vmem, size = 0x90000, scoped, tag = 'input window, operand 3, single buffered']
    #allocation3 [shape = 's32[2]{0}', space=sflag, size = 0x8, scoped, tag = 'scoped memory for gpt_forward.7']
    #allocation4 [shape = 'u8[131072]{0}', space=vmem, size = 0x20000, scoped, tag = 'input window, operand 8, single buffered']
    #allocation5 [shape = 's32[1]{0}', space=sflag, size = 0x4, scoped, tag = 'scoped memory for gpt_forward.7']
    #allocation6 [shape = 'u8[131072]{0}', space=vmem, size = 0x20000, scoped, tag = 'input window, operand 10, single buffered']
    %17 = vsyncpa [#allocation3], 0
    %18 = vsyncpa [#allocation5], 0
    loop: start=0, step=1, limit=4
    $region2: #{gpt_forward.7} parent=1 // loop_pre_header
      _
    $region3: #{gpt_forward.7} parent=1 // loop_header
      %s20 = sphi 0, %s24
      %p21 = scmp.ge.s32.totalorder %s20, 4
      %s30 = sphi 0, %s32
      %s33 = sphi 0, %s30
      %s34 = sphi 0, %s33
      %s50 = sphi 0, %s34
      %s54 = sphi 0, %s54
      %s56 = sphi 0, %s54
      %s57 = sphi 0, %s56
      %s71 = sphi 0, %s57
      %s75 = sphi 0, %s75
      %s77 = sphi 0, %s75
      %s78 = sphi 0, %s77
      %s92 = sphi 0, %s78
      %s96 = sphi 0, %s96
      %s98 = sphi 0, %s96
      %s99 = sphi 0, %s98
      %s113 = sphi 0, %s99
      %s117 = sphi 0, %s117
      %s119 = sphi 0, %s117
      %s120 = sphi 0, %s119
      %s134 = sphi 0, %s120
      %s138 = sphi 0, %s138
      %s140 = sphi 0, %s138
      %s141 = sphi 0, %s140
      %s155 = sphi 0, %s141
      %s159 = sphi 0, %s159
      %s161 = sphi 0, %s159
      %s162 = sphi 0, %s161
      %s176 = sphi 0, %s162
      %s180 = sphi 0, %s180
      %s182 = sphi 0, %s180
      %s183 = sphi 0, %s182
      %s197 = sphi 0, %s183
      %s201 = sphi 0, %s201
      %s203 = sphi 0, %s201
      %s204 = sphi 0, %s203
      %s218 = sphi 0, %s204
      %s222 = sphi 0, %s222
      %s224 = sphi 0, %s222
      %s225 = sphi 0, %s224
      %s239 = sphi 0, %s225
      %s243 = sphi 0, %s243
      %s245 = sphi 0, %s243
      %s246 = sphi 0, %s245
      %s260 = sphi 0, %s246
      %s264 = sphi 0, %s264
      %s266 = sphi 0, %s264
      %s267 = sphi 0, %s266
      %s281 = sphi 0, %s267
      %s287 = sphi 0, %s289
      %s290 = sphi 0, %s287
      %s291 = sphi 0, %s290
      %s307 = sphi 0, %s291
    $region4: #{gpt_forward.7} parent=1 // loop_header_branch
      %23 = sbr.rel (%p21) target = $region8
    $region5: #{gpt_forward.7} parent=1 // loop_body
      %s25 = ssub.s32 %s20, 1
      %s26 = ssub.s32 %s20, 2
      %s27 = sadd.s32 %s20, 1
      %s28 = ssub.s32 %s20, %s27
      %p29 = scmp.eq.s32.totalorder %s28, 0
      %s31 = sadd.s32 %s30, 1
      %s32 = scalar_select %p29, %s30, %s31
      %p35 = pneg %p29
      %p36 = scmp.eq.s32.totalorder %s20, 1
      %p37 = por %p35, %p36
      %p38 = scmp.ne.s32.totalorder %s30, %s33
      %p39 = scmp.eq.s32.totalorder %s20, 0
      %p40 = por %p38, %p39
      %p41 = scmp.ne.s32.totalorder %s30, %s33
      %p42 = scmp.eq.s32.totalorder %s25, 1
      %p43 = por %p41, %p42
      %p44 = scmp.ne.s32.totalorder %s33, %s34
      %p45 = scmp.eq.s32.totalorder %s25, 0
      %p46 = por %p44, %p45
      %p47 = scmp.ne.s32.totalorder %s33, %s34
      %p48 = scmp.eq.s32.totalorder %s26, 1
      %p49 = por %p47, %p48
      %p51 = scmp.ne.s32.totalorder %s34, %s50
      %p52 = scmp.eq.s32.totalorder %s26, 0
      %p53 = por %p51, %p52
      %s55 = sadd.s32 %s54, 1
      %p58 = scmp.eq.s32.totalorder %s20, 1
      %p59 = scmp.ne.s32.totalorder %s54, %s56
      %p60 = scmp.eq.s32.totalorder %s20, 0
      %p61 = por %p59, %p60
      %p62 = scmp.ne.s32.totalorder %s54, %s56
      %p63 = scmp.eq.s32.totalorder %s25, 1
      %p64 = por %p62, %p63
      %p65 = scmp.ne.s32.totalorder %s56, %s57
      %p66 = scmp.eq.s32.totalorder %s25, 0
      %p67 = por %p65, %p66
      %p68 = scmp.ne.s32.totalorder %s56, %s57
      %p69 = scmp.eq.s32.totalorder %s26, 1
      %p70 = por %p68, %p69
      %p72 = scmp.ne.s32.totalorder %s57, %s71
      %p73 = scmp.eq.s32.totalorder %s26, 0
      %p74 = por %p72, %p73
      %s76 = sadd.s32 %s75, 1
      %p79 = scmp.eq.s32.totalorder %s20, 1
      %p80 = scmp.ne.s32.totalorder %s75, %s77
      %p81 = scmp.eq.s32.totalorder %s20, 0
      %p82 = por %p80, %p81
      %p83 = scmp.ne.s32.totalorder %s75, %s77
      %p84 = scmp.eq.s32.totalorder %s25, 1
      %p85 = por %p83, %p84
      %p86 = scmp.ne.s32.totalorder %s77, %s78
      %p87 = scmp.eq.s32.totalorder %s25, 0
      %p88 = por %p86, %p87
      %p89 = scmp.ne.s32.totalorder %s77, %s78
      %p90 = scmp.eq.s32.totalorder %s26, 1
      %p91 = por %p89, %p90
      %p93 = scmp.ne.s32.totalorder %s78, %s92
      %p94 = scmp.eq.s32.totalorder %s26, 0
      %p95 = por %p93, %p94
      %s97 = sadd.s32 %s96, 1
      %p100 = scmp.eq.s32.totalorder %s20, 1
      %p101 = scmp.ne.s32.totalorder %s96, %s98
      %p102 = scmp.eq.s32.totalorder %s20, 0
      %p103 = por %p101, %p102
      %p104 = scmp.ne.s32.totalorder %s96, %s98
      %p105 = scmp.eq.s32.totalorder %s25, 1
      %p106 = por %p104, %p105
      %p107 = scmp.ne.s32.totalorder %s98, %s99
      %p108 = scmp.eq.s32.totalorder %s25, 0
      %p109 = por %p107, %p108
      %p110 = scmp.ne.s32.totalorder %s98, %s99
      %p111 = scmp.eq.s32.totalorder %s26, 1
      %p112 = por %p110, %p111
      %p114 = scmp.ne.s32.totalorder %s99, %s113
      %p115 = scmp.eq.s32.totalorder %s26, 0
      %p116 = por %p114, %p115
      %s118 = sadd.s32 %s117, 1
      %p121 = scmp.eq.s32.totalorder %s20, 1
      %p122 = scmp.ne.s32.totalorder %s117, %s119
      %p123 = scmp.eq.s32.totalorder %s20, 0
      %p124 = por %p122, %p123
      %p125 = scmp.ne.s32.totalorder %s117, %s119
      %p126 = scmp.eq.s32.totalorder %s25, 1
      %p127 = por %p125, %p126
      %p128 = scmp.ne.s32.totalorder %s119, %s120
      %p129 = scmp.eq.s32.totalorder %s25, 0
      %p130 = por %p128, %p129
      %p131 = scmp.ne.s32.totalorder %s119, %s120
      %p132 = scmp.eq.s32.totalorder %s26, 1
      %p133 = por %p131, %p132
      %p135 = scmp.ne.s32.totalorder %s120, %s134
      %p136 = scmp.eq.s32.totalorder %s26, 0
      %p137 = por %p135, %p136
      %s139 = sadd.s32 %s138, 1
      %p142 = scmp.eq.s32.totalorder %s20, 1
      %p143 = scmp.ne.s32.totalorder %s138, %s140
      %p144 = scmp.eq.s32.totalorder %s20, 0
      %p145 = por %p143, %p144
      %p146 = scmp.ne.s32.totalorder %s138, %s140
      %p147 = scmp.eq.s32.totalorder %s25, 1
      %p148 = por %p146, %p147
      %p149 = scmp.ne.s32.totalorder %s140, %s141
      %p150 = scmp.eq.s32.totalorder %s25, 0
      %p151 = por %p149, %p150
      %p152 = scmp.ne.s32.totalorder %s140, %s141
      %p153 = scmp.eq.s32.totalorder %s26, 1
      %p154 = por %p152, %p153
      %p156 = scmp.ne.s32.totalorder %s141, %s155
      %p157 = scmp.eq.s32.totalorder %s26, 0
      %p158 = por %p156, %p157
      %s160 = sadd.s32 %s159, 1
      %p163 = scmp.eq.s32.totalorder %s20, 1
      %p164 = scmp.ne.s32.totalorder %s159, %s161
      %p165 = scmp.eq.s32.totalorder %s20, 0
      %p166 = por %p164, %p165
      %p167 = scmp.ne.s32.totalorder %s159, %s161
      %p168 = scmp.eq.s32.totalorder %s25, 1
      %p169 = por %p167, %p168
      %p170 = scmp.ne.s32.totalorder %s161, %s162
      %p171 = scmp.eq.s32.totalorder %s25, 0
      %p172 = por %p170, %p171
      %p173 = scmp.ne.s32.totalorder %s161, %s162
      %p174 = scmp.eq.s32.totalorder %s26, 1
      %p175 = por %p173, %p174
      %p177 = scmp.ne.s32.totalorder %s162, %s176
      %p178 = scmp.eq.s32.totalorder %s26, 0
      %p179 = por %p177, %p178
      %s181 = sadd.s32 %s180, 1
      %p184 = scmp.eq.s32.totalorder %s20, 1
      %p185 = scmp.ne.s32.totalorder %s180, %s182
      %p186 = scmp.eq.s32.totalorder %s20, 0
      %p187 = por %p185, %p186
      %p188 = scmp.ne.s32.totalorder %s180, %s182
      %p189 = scmp.eq.s32.totalorder %s25, 1
      %p190 = por %p188, %p189
      %p191 = scmp.ne.s32.totalorder %s182, %s183
      %p192 = scmp.eq.s32.totalorder %s25, 0
      %p193 = por %p191, %p192
      %p194 = scmp.ne.s32.totalorder %s182, %s183
      %p195 = scmp.eq.s32.totalorder %s26, 1
      %p196 = por %p194, %p195
      %p198 = scmp.ne.s32.totalorder %s183, %s197
      %p199 = scmp.eq.s32.totalorder %s26, 0
      %p200 = por %p198, %p199
      %s202 = sadd.s32 %s201, 1
      %p205 = scmp.eq.s32.totalorder %s20, 1
      %p206 = scmp.ne.s32.totalorder %s201, %s203
      %p207 = scmp.eq.s32.totalorder %s20, 0
      %p208 = por %p206, %p207
      %p209 = scmp.ne.s32.totalorder %s201, %s203
      %p210 = scmp.eq.s32.totalorder %s25, 1
      %p211 = por %p209, %p210
      %p212 = scmp.ne.s32.totalorder %s203, %s204
      %p213 = scmp.eq.s32.totalorder %s25, 0
      %p214 = por %p212, %p213
      %p215 = scmp.ne.s32.totalorder %s203, %s204
      %p216 = scmp.eq.s32.totalorder %s26, 1
      %p217 = por %p215, %p216
      %p219 = scmp.ne.s32.totalorder %s204, %s218
      %p220 = scmp.eq.s32.totalorder %s26, 0
      %p221 = por %p219, %p220
      %s223 = sadd.s32 %s222, 1
      %p226 = scmp.eq.s32.totalorder %s20, 1
      %p227 = scmp.ne.s32.totalorder %s222, %s224
      %p228 = scmp.eq.s32.totalorder %s20, 0
      %p229 = por %p227, %p228
      %p230 = scmp.ne.s32.totalorder %s222, %s224
      %p231 = scmp.eq.s32.totalorder %s25, 1
      %p232 = por %p230, %p231
      %p233 = scmp.ne.s32.totalorder %s224, %s225
      %p234 = scmp.eq.s32.totalorder %s25, 0
      %p235 = por %p233, %p234
      %p236 = scmp.ne.s32.totalorder %s224, %s225
      %p237 = scmp.eq.s32.totalorder %s26, 1
      %p238 = por %p236, %p237
      %p240 = scmp.ne.s32.totalorder %s225, %s239
      %p241 = scmp.eq.s32.totalorder %s26, 0
      %p242 = por %p240, %p241
      %s244 = sadd.s32 %s243, 1
      %p247 = scmp.eq.s32.totalorder %s20, 1
      %p248 = scmp.ne.s32.totalorder %s243, %s245
      %p249 = scmp.eq.s32.totalorder %s20, 0
      %p250 = por %p248, %p249
      %p251 = scmp.ne.s32.totalorder %s243, %s245
      %p252 = scmp.eq.s32.totalorder %s25, 1
      %p253 = por %p251, %p252
      %p254 = scmp.ne.s32.totalorder %s245, %s246
      %p255 = scmp.eq.s32.totalorder %s25, 0
      %p256 = por %p254, %p255
      %p257 = scmp.ne.s32.totalorder %s245, %s246
      %p258 = scmp.eq.s32.totalorder %s26, 1
      %p259 = por %p257, %p258
      %p261 = scmp.ne.s32.totalorder %s246, %s260
      %p262 = scmp.eq.s32.totalorder %s26, 0
      %p263 = por %p261, %p262
      %s265 = sadd.s32 %s264, 1
      %p268 = scmp.eq.s32.totalorder %s20, 1
      %p269 = scmp.ne.s32.totalorder %s264, %s266
      %p270 = scmp.eq.s32.totalorder %s20, 0
      %p271 = por %p269, %p270
      %p272 = scmp.ne.s32.totalorder %s264, %s266
      %p273 = scmp.eq.s32.totalorder %s25, 1
      %p274 = por %p272, %p273
      %p275 = scmp.ne.s32.totalorder %s266, %s267
      %p276 = scmp.eq.s32.totalorder %s25, 0
      %p277 = por %p275, %p276
      %p278 = scmp.ne.s32.totalorder %s266, %s267
      %p279 = scmp.eq.s32.totalorder %s26, 1
      %p280 = por %p278, %p279
      %p282 = scmp.ne.s32.totalorder %s267, %s281
      %p283 = scmp.eq.s32.totalorder %s26, 0
      %p284 = por %p282, %p283
      %s285 = ssub.s32 %s20, %s27
      %p286 = scmp.eq.s32.totalorder %s285, 0
      %s288 = sadd.s32 %s287, 1
      %s289 = scalar_select %p286, %s287, %s288
      %p292 = pneg %p286
      %p293 = scmp.eq.s32.totalorder %s20, 1
      %p294 = por %p292, %p293
      %p295 = scmp.ne.s32.totalorder %s287, %s290
      %p296 = scmp.eq.s32.totalorder %s20, 0
      %p297 = por %p295, %p296
      %p298 = scmp.ne.s32.totalorder %s287, %s290
      %p299 = scmp.eq.s32.totalorder %s25, 1
      %p300 = por %p298, %p299
      %p301 = scmp.ne.s32.totalorder %s290, %s291
      %p302 = scmp.eq.s32.totalorder %s25, 0
      %p303 = por %p301, %p302
      %p304 = scmp.ne.s32.totalorder %s290, %s291
      %p305 = scmp.eq.s32.totalorder %s26, 1
      %p306 = por %p304, %p305
      %p308 = scmp.ne.s32.totalorder %s291, %s307
      %p309 = scmp.eq.s32.totalorder %s26, 0
      %p310 = por %p308, %p309
      %p311 = scmp.le.s32.totalorder 1, %s20
      %p312 = scmp.lt.s32.totalorder %s20, 3
      %p313 = pnand %p311, %p312
      %p314 = pneg %p313
      // Predicated region
      $region9: #{gpt_forward.7} parent=5 // pred_check
        _
      $region10: #{gpt_forward.7} parent=5 // pred_check_branch
        %316 = sbr.rel (%p313) target = $region12
      $region11: #{gpt_forward.7} parent=5 // pred_region
        %s317 = ssub.s32 %s20, 1
        // Predicated region
        $region13: #{gpt_forward.7} parent=11 // pred_check
          %p318 = pneg %p67
        $region14: #{gpt_forward.7} parent=11 // pred_check_branch
          %320 = sbr.rel (%p318) target = $region16
        $region15: #{gpt_forward.7} parent=11 // pred_region
          _
        $region16: #{gpt_forward.7} parent=11 // pred_fallthru
          _
        // Predicated region
        $region17: #{gpt_forward.7} parent=11 // pred_check
          %p321 = pneg %p88
        $region18: #{gpt_forward.7} parent=11 // pred_check_branch
          %323 = sbr.rel (%p321) target = $region20
        $region19: #{gpt_forward.7} parent=11 // pred_region
          _
        $region20: #{gpt_forward.7} parent=11 // pred_fallthru
          _
        // Predicated region
        $region21: #{gpt_forward.7} parent=11 // pred_check
          %p324 = pneg %p109
        $region22: #{gpt_forward.7} parent=11 // pred_check_branch
          %326 = sbr.rel (%p324) target = $region24
        $region23: #{gpt_forward.7} parent=11 // pred_region
          %s328 = ssub.s32 18432, 18432
          %329 = vsyncadd [#allocation3], %s328
          %s330 = sshll.u32 [#allocation2], 4
          %s331 = int_to_ptr.vmem [resolvable:$true] %s330
          %336 = dma.hbm_to_vmem [thread:$0]  %s3, 18432, %s331, [#allocation3], 1152, 1152, 72
        $region24: #{gpt_forward.7} parent=11 // pred_fallthru
          _
        // Predicated region
        $region25: #{gpt_forward.7} parent=11 // pred_check
          %p337 = pneg %p130
        $region26: #{gpt_forward.7} parent=11 // pred_check_branch
          %339 = sbr.rel (%p337) target = $region28
        $region27: #{gpt_forward.7} parent=11 // pred_region
          _
        $region28: #{gpt_forward.7} parent=11 // pred_fallthru
          _
        // Predicated region
        $region29: #{gpt_forward.7} parent=11 // pred_check
          %p340 = pneg %p151
        $region30: #{gpt_forward.7} parent=11 // pred_check_branch
          %342 = sbr.rel (%p340) target = $region32
        $region31: #{gpt_forward.7} parent=11 // pred_region
          _
        $region32: #{gpt_forward.7} parent=11 // pred_fallthru
          _
        // Predicated region
        $region33: #{gpt_forward.7} parent=11 // pred_check
          %p343 = pneg %p172
        $region34: #{gpt_forward.7} parent=11 // pred_check_branch
          %345 = sbr.rel (%p343) target = $region36
        $region35: #{gpt_forward.7} parent=11 // pred_region
          _
        $region36: #{gpt_forward.7} parent=11 // pred_fallthru
          _
        // Predicated region
        $region37: #{gpt_forward.7} parent=11 // pred_check
          %p346 = pneg %p193
        $region38: #{gpt_forward.7} parent=11 // pred_check_branch
          %348 = sbr.rel (%p346) target = $region40
        $region39: #{gpt_forward.7} parent=11 // pred_region
          _
        $region40: #{gpt_forward.7} parent=11 // pred_fallthru
          _
        // Predicated region
        $region41: #{gpt_forward.7} parent=11 // pred_check
          %p349 = pneg %p214
        $region42: #{gpt_forward.7} parent=11 // pred_check_branch
          %351 = sbr.rel (%p349) target = $region44
        $region43: #{gpt_forward.7} parent=11 // pred_region
          %s353 = ssub.s32 4096, 4096
          %354 = vsyncadd [#allocation5], %s353
          %s355 = sshll.u32 [#allocation4], 4
          %s356 = int_to_ptr.vmem [resolvable:$true] %s355
          %361 = dma.hbm_to_vmem [thread:$0]  %s8, 4096, %s356, [#allocation5], 256, 256, 16
        $region44: #{gpt_forward.7} parent=11 // pred_fallthru
          _
        // Predicated region
        $region45: #{gpt_forward.7} parent=11 // pred_check
          %p362 = pneg %p235
        $region46: #{gpt_forward.7} parent=11 // pred_check_branch
          %364 = sbr.rel (%p362) target = $region48
        $region47: #{gpt_forward.7} parent=11 // pred_region
          _
        $region48: #{gpt_forward.7} parent=11 // pred_fallthru
          _
        // Predicated region
        $region49: #{gpt_forward.7} parent=11 // pred_check
          %p365 = pneg %p256
        $region50: #{gpt_forward.7} parent=11 // pred_check_branch
          %367 = sbr.rel (%p365) target = $region52
        $region51: #{gpt_forward.7} parent=11 // pred_region
          %s369 = ssub.s32 4096, 4096
          %370 = vsyncadd [#allocation5], %s369
          %s371 = sshll.u32 [#allocation6], 4
          %s372 = int_to_ptr.vmem [resolvable:$true] %s371
          %377 = dma.hbm_to_vmem [thread:$0]  %s10, 4096, %s372, [#allocation5], 64, 64, 4
        $region52: #{gpt_forward.7} parent=11 // pred_fallthru
          _
        // Predicated region
        $region53: #{gpt_forward.7} parent=11 // pred_check
          %p378 = pneg %p277
        $region54: #{gpt_forward.7} parent=11 // pred_check_branch
          %380 = sbr.rel (%p378) target = $region56
        $region55: #{gpt_forward.7} parent=11 // pred_region
          _
        $region56: #{gpt_forward.7} parent=11 // pred_fallthru
          _
      $region12: #{gpt_forward.7} parent=5 // pred_fallthru
        _
      %p381 = scmp.lt.s32.totalorder %s20, 2
      // Predicated region
      $region57: #{gpt_forward.7} parent=5 // pred_check
        %p382 = pneg %p381
      $region58: #{gpt_forward.7} parent=5 // pred_check_branch
        %384 = sbr.rel (%p382) target = $region60
      $region59: #{gpt_forward.7} parent=5 // pred_region
        // Predicated region
        $region61: #{gpt_forward.7} parent=59 // pred_check
          %p385 = pneg %p40
        $region62: #{gpt_forward.7} parent=59 // pred_check_branch
          %387 = sbr.rel (%p385) target = $region64
        $region63: #{gpt_forward.7} parent=59 // pred_region
          %p388 = scmp.lt.s32.totalorder %s20, 1
          %s389 = scalar_select %p388, %s20, 1
          %s390 = smul.addr %s389, 2
          %s391 = smul.addr %s390, 8
          %s392 = scalar_lea.vmem %s0, %s391
        $region64: #{gpt_forward.7} parent=59 // pred_fallthru
          _
      $region60: #{gpt_forward.7} parent=5 // pred_fallthru
        _
      %p393 = scmp.le.s32.totalorder 1, %s20
      %p394 = scmp.lt.s32.totalorder %s20, 3
      %p395 = pnand %p393, %p394
      %p396 = pneg %p395
      // Predicated region
      $region65: #{gpt_forward.7} parent=5 // pred_check
        _
      $region66: #{gpt_forward.7} parent=5 // pred_check_branch
        %398 = sbr.rel (%p395) target = $region68
      $region67: #{gpt_forward.7} parent=5 // pred_region
        %s399 = ssub.s32 %s20, 1
        // Predicated region
        $region69: #{gpt_forward.7} parent=67 // pred_check
          %p400 = pneg %p109
        $region70: #{gpt_forward.7} parent=67 // pred_check_branch
          %402 = sbr.rel (%p400) target = $region72
        $region71: #{gpt_forward.7} parent=67 // pred_region
          %403 = dma.done [#allocation3], 18432
        $region72: #{gpt_forward.7} parent=67 // pred_fallthru
          _
        // Predicated region
        $region73: #{gpt_forward.7} parent=67 // pred_check
          %p404 = pneg %p214
        $region74: #{gpt_forward.7} parent=67 // pred_check_branch
          %406 = sbr.rel (%p404) target = $region76
        $region75: #{gpt_forward.7} parent=67 // pred_region
          %407 = dma.done [#allocation5], 4096
        $region76: #{gpt_forward.7} parent=67 // pred_fallthru
          _
        // Predicated region
        $region77: #{gpt_forward.7} parent=67 // pred_check
          %p408 = pneg %p256
        $region78: #{gpt_forward.7} parent=67 // pred_check_branch
          %410 = sbr.rel (%p408) target = $region80
        $region79: #{gpt_forward.7} parent=67 // pred_region
          %411 = dma.done [#allocation5], 4096
        $region80: #{gpt_forward.7} parent=67 // pred_fallthru
          _
        %p412 = scmp.lt.s32.totalorder %s25, 1
        %s413 = scalar_select %p412, %s25, 1
        %s414 = smul.addr %s413, 2
        %s415 = smul.addr %s414, 8
        %s416 = scalar_lea.vmem %s0, %s415
        %p417 = pneg %p46
        %p418 = pneg %p43
        %p419 = pneg %p67
        %p420 = pneg %p64
        %p421 = pneg %p88
        %p422 = pneg %p85
        %p423 = pneg %p109
        %p424 = pneg %p106
        %p425 = pneg %p130
        %p426 = pneg %p127
        %p427 = pneg %p151
        %p428 = pneg %p148
        %p429 = pneg %p172
        %p430 = pneg %p169
        %p431 = pneg %p193
        %p432 = pneg %p190
        %p433 = pneg %p214
        %p434 = pneg %p211
        %p435 = pneg %p235
        %p436 = pneg %p232
        %p437 = pneg %p256
        %p438 = pneg %p253
        %p439 = pneg %p277
        %p440 = pneg %p274
        %p441 = pneg %p303
        %p442 = pneg %p300
        %p443 = scmp.lt.s32.totalorder %s25, 1
        %s444 = scalar_select %p443, %s25, 1
        %s445 = smul.addr %s444, 2
        %s446 = smul.addr %s445, 8
        %s447 = scalar_lea.vmem %s12, %s446
        %p448 = scmp.lt.s32.totalorder %s25, 1
        %s449 = scalar_select %p448, %s25, 1
        %s450 = smul.addr %s449, 2
        %s451 = smul.addr %s450, 8
        %s452 = scalar_lea.vmem %s0, %s451
        %p453 = scmp.lt.s32.totalorder %s25, 1
        %s454 = scalar_select %p453, %s25, 1
        %s455 = smul.addr %s454, 2
        %s456 = smul.addr %s455, 8
        %s457 = scalar_lea.vmem %s12, %s456
        %v459 = vld [vmem:[%s452] sm:$0xff]
        %v460 = vld [vmem:[%s452 + $0x8] sm:$0xff]
        %v461 = vld [vmem:[%s1] sm:$0x1]
        %v462 = vld [vmem:[%s2] sm:$0x1]
        %463 = vadd.xlane.f32.xlu0 %v459
        %v464 = vpop.xlane.xlu0 %463
        %465 = vadd.xlane.f32.xlu0 %v460
        %v466 = vpop.xlane.xlu0 %465
        %v467 = vrcp.pop 128.0
        %v468 = vmul.f32 %v464, %v467
        %v469 = vmul.f32 %v466, %v467
        %v470 = vsub.f32 %v459, %v468
        %v471 = vsub.f32 %v460, %v469
        %v472 = vmul.f32 %v470, %v470
        %v473 = vmul.f32 %v471, %v471
        %474 = vadd.xlane.f32.xlu0 %v472
        %v475 = vpop.xlane.xlu0 %474
        %476 = vadd.xlane.f32.xlu0 %v473
        %v477 = vpop.xlane.xlu0 %476
        %v478 = vmul.f32 %v475, %v467
        %v479 = vmul.f32 %v477, %v467
        %v480 = vadd.f32 %v478, 1e-05
        %v481 = vadd.f32 %v479, 1e-05
        %v482 = vrsqrt.pop %v480
        %v483 = vrsqrt.pop %v481
        %v484 = vmul.f32 %v470, %v482
        %v485 = vmul.f32 %v471, %v483
        %v487 = vlaneseq
        %v488 = vshrl.u32 %v487, 7
        %v489 = vsub.s32 0, %v488
        %v490 = vrot.slane %v461, %v489
        %v492 = vmul.f32 %v484, %v490
        %v493 = vmul.f32 %v485, %v490
        %v495 = vlaneseq
        %v496 = vshrl.u32 %v495, 7
        %v497 = vsub.s32 0, %v496
        %v498 = vrot.slane %v462, %v497
        %v500 = vadd.f32 %v492, %v498
        %v501 = vadd.f32 %v493, %v498
        %v502 = vpack.c.bf16 %v501, %v500
        %v503 = vld [vmem:[#allocation2] sm:$0xff]
        %v504 = vld [vmem:[#allocation2 + $0x8] sm:$0xff]
        %v505 = vld [vmem:[#allocation2 + $0x10] sm:$0xff]
        %v506 = vld [vmem:[#allocation2 + $0x18] sm:$0xff]
        %v507 = vld [vmem:[#allocation2 + $0x20] sm:$0xff]
        %v508 = vld [vmem:[#allocation2 + $0x28] sm:$0xff]
        %v509 = vld [vmem:[#allocation2 + $0x30] sm:$0xff]
        %v510 = vld [vmem:[#allocation2 + $0x38] sm:$0xff]
        %v511 = vld [vmem:[#allocation2 + $0x40] sm:$0xff]
        %v512 = vld [vmem:[#allocation2 + $0x48] sm:$0xff]
        %v513 = vld [vmem:[#allocation2 + $0x50] sm:$0xff]
        %v514 = vld [vmem:[#allocation2 + $0x58] sm:$0xff]
        %v515 = vld [vmem:[#allocation2 + $0x60] sm:$0xff]
        %v516 = vld [vmem:[#allocation2 + $0x68] sm:$0xff]
        %v517 = vld [vmem:[#allocation2 + $0x70] sm:$0xff]
        %v518 = vld [vmem:[#allocation2 + $0x78] sm:$0xff]
        %v519 = vld [vmem:[#allocation2 + $0x80] sm:$0xff]
        %v520 = vld [vmem:[#allocation2 + $0x88] sm:$0xff]
        %v521 = vld [vmem:[#allocation2 + $0x90] sm:$0xff]
        %v522 = vld [vmem:[#allocation2 + $0x98] sm:$0xff]
        %v523 = vld [vmem:[#allocation2 + $0xa0] sm:$0xff]
        %v524 = vld [vmem:[#allocation2 + $0xa8] sm:$0xff]
        %v525 = vld [vmem:[#allocation2 + $0xb0] sm:$0xff]
        %v526 = vld [vmem:[#allocation2 + $0xb8] sm:$0xff]
        %v527 = vld [vmem:[#allocation2 + $0xc0] sm:$0xff]
        %v528 = vld [vmem:[#allocation2 + $0xc8] sm:$0xff]
        %v529 = vld [vmem:[#allocation2 + $0xd0] sm:$0xff]
        %v530 = vld [vmem:[#allocation2 + $0xd8] sm:$0xff]
        %v531 = vld [vmem:[#allocation2 + $0xe0] sm:$0xff]
        %v532 = vld [vmem:[#allocation2 + $0xe8] sm:$0xff]
        %v533 = vld [vmem:[#allocation2 + $0xf0] sm:$0xff]
        %v534 = vld [vmem:[#allocation2 + $0xf8] sm:$0xff]
        %v535 = vld [vmem:[#allocation2 + $0x100] sm:$0xff]
        %v536 = vld [vmem:[#allocation2 + $0x108] sm:$0xff]
        %v537 = vld [vmem:[#allocation2 + $0x110] sm:$0xff]
        %v538 = vld [vmem:[#allocation2 + $0x118] sm:$0xff]
        %v539 = vld [vmem:[#allocation2 + $0x120] sm:$0xff]
        %v540 = vld [vmem:[#allocation2 + $0x128] sm:$0xff]
        %v541 = vld [vmem:[#allocation2 + $0x130] sm:$0xff]
        %v542 = vld [vmem:[#allocation2 + $0x138] sm:$0xff]
        %v543 = vld [vmem:[#allocation2 + $0x140] sm:$0xff]
        %v544 = vld [vmem:[#allocation2 + $0x148] sm:$0xff]
        %v545 = vld [vmem:[#allocation2 + $0x150] sm:$0xff]
        %v546 = vld [vmem:[#allocation2 + $0x158] sm:$0xff]
        %v547 = vld [vmem:[#allocation2 + $0x160] sm:$0xff]
        %v548 = vld [vmem:[#allocation2 + $0x168] sm:$0xff]
        %v549 = vld [vmem:[#allocation2 + $0x170] sm:$0xff]
        %v550 = vld [vmem:[#allocation2 + $0x178] sm:$0xff]
        %v551 = vld [vmem:[#allocation2 + $0x180] sm:$0xff]
        %v552 = vld [vmem:[#allocation2 + $0x188] sm:$0xff]
        %v553 = vld [vmem:[#allocation2 + $0x190] sm:$0xff]
        %v554 = vld [vmem:[#allocation2 + $0x198] sm:$0xff]
        %v555 = vld [vmem:[#allocation2 + $0x1a0] sm:$0xff]
        %v556 = vld [vmem:[#allocation2 + $0x1a8] sm:$0xff]
        %v557 = vld [vmem:[#allocation2 + $0x1b0] sm:$0xff]
        %v558 = vld [vmem:[#allocation2 + $0x1b8] sm:$0xff]
        %v559 = vld [vmem:[#allocation2 + $0x1c0] sm:$0xff]
        %v560 = vld [vmem:[#allocation2 + $0x1c8] sm:$0xff]
        %v561 = vld [vmem:[#allocation2 + $0x1d0] sm:$0xff]
        %v562 = vld [vmem:[#allocation2 + $0x1d8] sm:$0xff]
        %v563 = vld [vmem:[#allocation2 + $0x1e0] sm:$0xff]
        %v564 = vld [vmem:[#allocation2 + $0x1e8] sm:$0xff]
        %v565 = vld [vmem:[#allocation2 + $0x1f0] sm:$0xff]
        %v566 = vld [vmem:[#allocation2 + $0x1f8] sm:$0xff]
        %v567 = vld [vmem:[#allocation2 + $0x200] sm:$0xff]
        %v568 = vld [vmem:[#allocation2 + $0x208] sm:$0xff]
        %v569 = vld [vmem:[#allocation2 + $0x210] sm:$0xff]
        %v570 = vld [vmem:[#allocation2 + $0x218] sm:$0xff]
        %v571 = vld [vmem:[#allocation2 + $0x220] sm:$0xff]
        %v572 = vld [vmem:[#allocation2 + $0x228] sm:$0xff]
        %v573 = vld [vmem:[#allocation2 + $0x230] sm:$0xff]
        %v574 = vld [vmem:[#allocation2 + $0x238] sm:$0xff]
        %v575 = vld [vmem:[#allocation2 + $0x240] sm:$0xff]
        %v576 = vld [vmem:[#allocation2 + $0x248] sm:$0xff]
        %v577 = vld [vmem:[#allocation2 + $0x250] sm:$0xff]
        %v578 = vld [vmem:[#allocation2 + $0x258] sm:$0xff]
        %v579 = vld [vmem:[#allocation2 + $0x260] sm:$0xff]
        %v580 = vld [vmem:[#allocation2 + $0x268] sm:$0xff]
        %v581 = vld [vmem:[#allocation2 + $0x270] sm:$0xff]
        %v582 = vld [vmem:[#allocation2 + $0x278] sm:$0xff]
        %v583 = vld [vmem:[#allocation2 + $0x280] sm:$0xff]
        %v584 = vld [vmem:[#allocation2 + $0x288] sm:$0xff]
        %v585 = vld [vmem:[#allocation2 + $0x290] sm:$0xff]
        %v586 = vld [vmem:[#allocation2 + $0x298] sm:$0xff]
        %v587 = vld [vmem:[#allocation2 + $0x2a0] sm:$0xff]
        %v588 = vld [vmem:[#allocation2 + $0x2a8] sm:$0xff]
        %v589 = vld [vmem:[#allocation2 + $0x2b0] sm:$0xff]
        %v590 = vld [vmem:[#allocation2 + $0x2b8] sm:$0xff]
        %v591 = vld [vmem:[#allocation2 + $0x2c0] sm:$0xff]
        %v592 = vld [vmem:[#allocation2 + $0x2c8] sm:$0xff]
        %v593 = vld [vmem:[#allocation2 + $0x2d0] sm:$0xff]
        %v594 = vld [vmem:[#allocation2 + $0x2d8] sm:$0xff]
        %v595 = vld [vmem:[#allocation2 + $0x2e0] sm:$0xff]
        %v596 = vld [vmem:[#allocation2 + $0x2e8] sm:$0xff]
        %v597 = vld [vmem:[#allocation2 + $0x2f0] sm:$0xff]
        %v598 = vld [vmem:[#allocation2 + $0x2f8] sm:$0xff]
        %v599 = vld [vmem:[#allocation2 + $0x300] sm:$0xff]
        %v600 = vld [vmem:[#allocation2 + $0x308] sm:$0xff]
        %v601 = vld [vmem:[#allocation2 + $0x310] sm:$0xff]
        %v602 = vld [vmem:[#allocation2 + $0x318] sm:$0xff]
        %v603 = vld [vmem:[#allocation2 + $0x320] sm:$0xff]
        %v604 = vld [vmem:[#allocation2 + $0x328] sm:$0xff]
        %v605 = vld [vmem:[#allocation2 + $0x330] sm:$0xff]
        %v606 = vld [vmem:[#allocation2 + $0x338] sm:$0xff]
        %v607 = vld [vmem:[#allocation2 + $0x340] sm:$0xff]
        %v608 = vld [vmem:[#allocation2 + $0x348] sm:$0xff]
        %v609 = vld [vmem:[#allocation2 + $0x350] sm:$0xff]
        %v610 = vld [vmem:[#allocation2 + $0x358] sm:$0xff]
        %v611 = vld [vmem:[#allocation2 + $0x360] sm:$0xff]
        %v612 = vld [vmem:[#allocation2 + $0x368] sm:$0xff]
        %v613 = vld [vmem:[#allocation2 + $0x370] sm:$0xff]
        %v614 = vld [vmem:[#allocation2 + $0x378] sm:$0xff]
        %v615 = vld [vmem:[#allocation2 + $0x380] sm:$0xff]
        %v616 = vld [vmem:[#allocation2 + $0x388] sm:$0xff]
        %v617 = vld [vmem:[#allocation2 + $0x390] sm:$0xff]
        %v618 = vld [vmem:[#allocation2 + $0x398] sm:$0xff]
        %v619 = vld [vmem:[#allocation2 + $0x3a0] sm:$0xff]
        %v620 = vld [vmem:[#allocation2 + $0x3a8] sm:$0xff]
        %v621 = vld [vmem:[#allocation2 + $0x3b0] sm:$0xff]
        %v622 = vld [vmem:[#allocation2 + $0x3b8] sm:$0xff]
        %v623 = vld [vmem:[#allocation2 + $0x3c0] sm:$0xff]
        %v624 = vld [vmem:[#allocation2 + $0x3c8] sm:$0xff]
        %v625 = vld [vmem:[#allocation2 + $0x3d0] sm:$0xff]
        %v626 = vld [vmem:[#allocation2 + $0x3d8] sm:$0xff]
        %v627 = vld [vmem:[#allocation2 + $0x3e0] sm:$0xff]
        %v628 = vld [vmem:[#allocation2 + $0x3e8] sm:$0xff]
        %v629 = vld [vmem:[#allocation2 + $0x3f0] sm:$0xff]
        %v630 = vld [vmem:[#allocation2 + $0x3f8] sm:$0xff]
        %v631 = vld [vmem:[#allocation2 + $0x400] sm:$0xff]
        %v632 = vld [vmem:[#allocation2 + $0x408] sm:$0xff]
        %v633 = vld [vmem:[#allocation2 + $0x410] sm:$0xff]
        %v634 = vld [vmem:[#allocation2 + $0x418] sm:$0xff]
        %v635 = vld [vmem:[#allocation2 + $0x420] sm:$0xff]
        %v636 = vld [vmem:[#allocation2 + $0x428] sm:$0xff]
        %v637 = vld [vmem:[#allocation2 + $0x430] sm:$0xff]
        %v638 = vld [vmem:[#allocation2 + $0x438] sm:$0xff]
        %v639 = vld [vmem:[#allocation2 + $0x440] sm:$0xff]
        %v640 = vld [vmem:[#allocation2 + $0x448] sm:$0xff]
        %v641 = vld [vmem:[#allocation2 + $0x450] sm:$0xff]
        %v642 = vld [vmem:[#allocation2 + $0x458] sm:$0xff]
        %v643 = vld [vmem:[#allocation2 + $0x460] sm:$0xff]
        %v644 = vld [vmem:[#allocation2 + $0x468] sm:$0xff]
        %v645 = vld [vmem:[#allocation2 + $0x470] sm:$0xff]
        %v646 = vld [vmem:[#allocation2 + $0x478] sm:$0xff]
        %v791 = vunpack.c.l.b16 %v503
        %v792 = vunpack.c.h.b16 %v503
        %v793 = vunpack.c.l.b16 %v504
        %v794 = vunpack.c.h.b16 %v504
        %v795 = vunpack.c.l.b16 %v505
        %v796 = vunpack.c.h.b16 %v505
        %v797 = vunpack.c.l.b16 %v506
        %v798 = vunpack.c.h.b16 %v506
        %v799 = vunpack.c.l.b16 %v507
        %v800 = vunpack.c.h.b16 %v507
        %v801 = vunpack.c.l.b16 %v508
        %v802 = vunpack.c.h.b16 %v508
        %v803 = vunpack.c.l.b16 %v509
        %v804 = vunpack.c.h.b16 %v509
        %v805 = vunpack.c.l.b16 %v510
        %v806 = vunpack.c.h.b16 %v510
        %v807 = vunpack.c.l.b16 %v511
        %v808 = vunpack.c.h.b16 %v511
        %v809 = vunpack.c.l.b16 %v512
        %v810 = vunpack.c.h.b16 %v512
        %v811 = vunpack.c.l.b16 %v513
        %v812 = vunpack.c.h.b16 %v513
        %v813 = vunpack.c.l.b16 %v514
        %v814 = vunpack.c.h.b16 %v514
        %v815 = vunpack.c.l.b16 %v515
        %v816 = vunpack.c.h.b16 %v515
        %v817 = vunpack.c.l.b16 %v516
        %v818 = vunpack.c.h.b16 %v516
        %v819 = vunpack.c.l.b16 %v517
        %v820 = vunpack.c.h.b16 %v517
        %v821 = vunpack.c.l.b16 %v518
        %v822 = vunpack.c.h.b16 %v518
        %v823 = vunpack.c.l.b16 %v519
        %v824 = vunpack.c.h.b16 %v519
        %v825 = vunpack.c.l.b16 %v520
        %v826 = vunpack.c.h.b16 %v520
        %v827 = vunpack.c.l.b16 %v521
        %v828 = vunpack.c.h.b16 %v521
        %v829 = vunpack.c.l.b16 %v522
        %v830 = vunpack.c.h.b16 %v522
        %v831 = vunpack.c.l.b16 %v523
        %v832 = vunpack.c.h.b16 %v523
        %v833 = vunpack.c.l.b16 %v524
        %v834 = vunpack.c.h.b16 %v524
        %v835 = vunpack.c.l.b16 %v525
        %v836 = vunpack.c.h.b16 %v525
        %v837 = vunpack.c.l.b16 %v526
        %v838 = vunpack.c.h.b16 %v526
        %v839 = vunpack.c.l.b16 %v527
        %v840 = vunpack.c.h.b16 %v527
        %v841 = vunpack.c.l.b16 %v528
        %v842 = vunpack.c.h.b16 %v528
        %v843 = vunpack.c.l.b16 %v529
        %v844 = vunpack.c.h.b16 %v529
        %v845 = vunpack.c.l.b16 %v530
        %v846 = vunpack.c.h.b16 %v530
        %v847 = vunpack.c.l.b16 %v531
        %v848 = vunpack.c.h.b16 %v531
        %v849 = vunpack.c.l.b16 %v532
        %v850 = vunpack.c.h.b16 %v532
        %v851 = vunpack.c.l.b16 %v533
        %v852 = vunpack.c.h.b16 %v533
        %v853 = vunpack.c.l.b16 %v534
        %v854 = vunpack.c.h.b16 %v534
        %v855 = vunpack.c.l.b16 %v535
        %v856 = vunpack.c.h.b16 %v535
        %v857 = vunpack.c.l.b16 %v536
        %v858 = vunpack.c.h.b16 %v536
        %v859 = vunpack.c.l.b16 %v537
        %v860 = vunpack.c.h.b16 %v537
        %v861 = vunpack.c.l.b16 %v538
        %v862 = vunpack.c.h.b16 %v538
        %v863 = vunpack.c.l.b16 %v539
        %v864 = vunpack.c.h.b16 %v539
        %v865 = vunpack.c.l.b16 %v540
        %v866 = vunpack.c.h.b16 %v540
        %v867 = vunpack.c.l.b16 %v541
        %v868 = vunpack.c.h.b16 %v541
        %v869 = vunpack.c.l.b16 %v542
        %v870 = vunpack.c.h.b16 %v542
        %v871 = vunpack.c.l.b16 %v543
        %v872 = vunpack.c.h.b16 %v543
        %v873 = vunpack.c.l.b16 %v544
        %v874 = vunpack.c.h.b16 %v544
        %v875 = vunpack.c.l.b16 %v545
        %v876 = vunpack.c.h.b16 %v545
        %v877 = vunpack.c.l.b16 %v546
        %v878 = vunpack.c.h.b16 %v546
        %v879 = vunpack.c.l.b16 %v547
        %v880 = vunpack.c.h.b16 %v547
        %v881 = vunpack.c.l.b16 %v548
        %v882 = vunpack.c.h.b16 %v548
        %v883 = vunpack.c.l.b16 %v549
        %v884 = vunpack.c.h.b16 %v549
        %v885 = vunpack.c.l.b16 %v550
        %v886 = vunpack.c.h.b16 %v550
        %v887 = vunpack.c.l.b16 %v551
        %v888 = vunpack.c.h.b16 %v551
        %v889 = vunpack.c.l.b16 %v552
        %v890 = vunpack.c.h.b16 %v552
        %v891 = vunpack.c.l.b16 %v553
        %v892 = vunpack.c.h.b16 %v553
        %v893 = vunpack.c.l.b16 %v554
        %v894 = vunpack.c.h.b16 %v554
        %v895 = vunpack.c.l.b16 %v555
        %v896 = vunpack.c.h.b16 %v555
        %v897 = vunpack.c.l.b16 %v556
        %v898 = vunpack.c.h.b16 %v556
        %v899 = vunpack.c.l.b16 %v557
        %v900 = vunpack.c.h.b16 %v557
        %v901 = vunpack.c.l.b16 %v558
        %v902 = vunpack.c.h.b16 %v558
        %v903 = vunpack.c.l.b16 %v559
        %v904 = vunpack.c.h.b16 %v559
        %v905 = vunpack.c.l.b16 %v560
        %v906 = vunpack.c.h.b16 %v560
        %v907 = vunpack.c.l.b16 %v561
        %v908 = vunpack.c.h.b16 %v561
        %v909 = vunpack.c.l.b16 %v562
        %v910 = vunpack.c.h.b16 %v562
        %v911 = vunpack.c.l.b16 %v563
        %v912 = vunpack.c.h.b16 %v563
        %v913 = vunpack.c.l.b16 %v564
        %v914 = vunpack.c.h.b16 %v564
        %v915 = vunpack.c.l.b16 %v565
        %v916 = vunpack.c.h.b16 %v565
        %v917 = vunpack.c.l.b16 %v566
        %v918 = vunpack.c.h.b16 %v566
        %v919 = vunpack.c.l.b16 %v567
        %v920 = vunpack.c.h.b16 %v567
        %v921 = vunpack.c.l.b16 %v568
        %v922 = vunpack.c.h.b16 %v568
        %v923 = vunpack.c.l.b16 %v569
        %v924 = vunpack.c.h.b16 %v569
        %v925 = vunpack.c.l.b16 %v570
        %v926 = vunpack.c.h.b16 %v570
        %v927 = vunpack.c.l.b16 %v571
        %v928 = vunpack.c.h.b16 %v571
        %v929 = vunpack.c.l.b16 %v572
        %v930 = vunpack.c.h.b16 %v572
        %v931 = vunpack.c.l.b16 %v573
        %v932 = vunpack.c.h.b16 %v573
        %v933 = vunpack.c.l.b16 %v574
        %v934 = vunpack.c.h.b16 %v574
        %v935 = vunpack.c.l.b16 %v575
        %v936 = vunpack.c.h.b16 %v575
        %v937 = vunpack.c.l.b16 %v576
        %v938 = vunpack.c.h.b16 %v576
        %v939 = vunpack.c.l.b16 %v577
        %v940 = vunpack.c.h.b16 %v577
        %v941 = vunpack.c.l.b16 %v578
        %v942 = vunpack.c.h.b16 %v578
        %v943 = vunpack.c.l.b16 %v579
        %v944 = vunpack.c.h.b16 %v579
        %v945 = vunpack.c.l.b16 %v580
        %v946 = vunpack.c.h.b16 %v580
        %v947 = vunpack.c.l.b16 %v581
        %v948 = vunpack.c.h.b16 %v581
        %v949 = vunpack.c.l.b16 %v582
        %v950 = vunpack.c.h.b16 %v582
        %v951 = vunpack.c.l.b16 %v583
        %v952 = vunpack.c.h.b16 %v583
        %v953 = vunpack.c.l.b16 %v584
        %v954 = vunpack.c.h.b16 %v584
        %v955 = vunpack.c.l.b16 %v585
        %v956 = vunpack.c.h.b16 %v585
        %v957 = vunpack.c.l.b16 %v586
        %v958 = vunpack.c.h.b16 %v586
        %v959 = vunpack.c.l.b16 %v587
        %v960 = vunpack.c.h.b16 %v587
        %v961 = vunpack.c.l.b16 %v588
        %v962 = vunpack.c.h.b16 %v588
        %v963 = vunpack.c.l.b16 %v589
        %v964 = vunpack.c.h.b16 %v589
        %v965 = vunpack.c.l.b16 %v590
        %v966 = vunpack.c.h.b16 %v590
        %v967 = vunpack.c.l.b16 %v591
        %v968 = vunpack.c.h.b16 %v591
        %v969 = vunpack.c.l.b16 %v592
        %v970 = vunpack.c.h.b16 %v592
        %v971 = vunpack.c.l.b16 %v593
        %v972 = vunpack.c.h.b16 %v593
        %v973 = vunpack.c.l.b16 %v594
        %v974 = vunpack.c.h.b16 %v594
        %v975 = vunpack.c.l.b16 %v595
        %v976 = vunpack.c.h.b16 %v595
        %v977 = vunpack.c.l.b16 %v596
        %v978 = vunpack.c.h.b16 %v596
        %v979 = vunpack.c.l.b16 %v597
        %v980 = vunpack.c.h.b16 %v597
        %v981 = vunpack.c.l.b16 %v598
        %v982 = vunpack.c.h.b16 %v598
        %v983 = vunpack.c.l.b16 %v599
        %v984 = vunpack.c.h.b16 %v599
        %v985 = vunpack.c.l.b16 %v600
        %v986 = vunpack.c.h.b16 %v600
        %v987 = vunpack.c.l.b16 %v601
        %v988 = vunpack.c.h.b16 %v601
        %v989 = vunpack.c.l.b16 %v602
        %v990 = vunpack.c.h.b16 %v602
        %v991 = vunpack.c.l.b16 %v603
        %v992 = vunpack.c.h.b16 %v603
        %v993 = vunpack.c.l.b16 %v604
        %v994 = vunpack.c.h.b16 %v604
        %v995 = vunpack.c.l.b16 %v605
        %v996 = vunpack.c.h.b16 %v605
        %v997 = vunpack.c.l.b16 %v606
        %v998 = vunpack.c.h.b16 %v606
        %v999 = vunpack.c.l.b16 %v607
        %v1000 = vunpack.c.h.b16 %v607
        %v1001 = vunpack.c.l.b16 %v608
        %v1002 = vunpack.c.h.b16 %v608
        %v1003 = vunpack.c.l.b16 %v609
        %v1004 = vunpack.c.h.b16 %v609
        %v1005 = vunpack.c.l.b16 %v610
        %v1006 = vunpack.c.h.b16 %v610
        %v1007 = vunpack.c.l.b16 %v611
        %v1008 = vunpack.c.h.b16 %v611
        %v1009 = vunpack.c.l.b16 %v612
        %v1010 = vunpack.c.h.b16 %v612
        %v1011 = vunpack.c.l.b16 %v613
        %v1012 = vunpack.c.h.b16 %v613
        %v1013 = vunpack.c.l.b16 %v614
        %v1014 = vunpack.c.h.b16 %v614
        %v1015 = vunpack.c.l.b16 %v615
        %v1016 = vunpack.c.h.b16 %v615
        %v1017 = vunpack.c.l.b16 %v616
        %v1018 = vunpack.c.h.b16 %v616
        %v1019 = vunpack.c.l.b16 %v617
        %v1020 = vunpack.c.h.b16 %v617
        %v1021 = vunpack.c.l.b16 %v618
        %v1022 = vunpack.c.h.b16 %v618
        %v1023 = vunpack.c.l.b16 %v619
        %v1024 = vunpack.c.h.b16 %v619
        %v1025 = vunpack.c.l.b16 %v620
        %v1026 = vunpack.c.h.b16 %v620
        %v1027 = vunpack.c.l.b16 %v621
        %v1028 = vunpack.c.h.b16 %v621
        %v1029 = vunpack.c.l.b16 %v622
        %v1030 = vunpack.c.h.b16 %v622
        %v1031 = vunpack.c.l.b16 %v623
        %v1032 = vunpack.c.h.b16 %v623
        %v1033 = vunpack.c.l.b16 %v624
        %v1034 = vunpack.c.h.b16 %v624
        %v1035 = vunpack.c.l.b16 %v625
        %v1036 = vunpack.c.h.b16 %v625
        %v1037 = vunpack.c.l.b16 %v626
        %v1038 = vunpack.c.h.b16 %v626
        %v1039 = vunpack.c.l.b16 %v627
        %v1040 = vunpack.c.h.b16 %v627
        %v1041 = vunpack.c.l.b16 %v628
        %v1042 = vunpack.c.h.b16 %v628
        %v1043 = vunpack.c.l.b16 %v629
        %v1044 = vunpack.c.h.b16 %v629
        %v1045 = vunpack.c.l.b16 %v630
        %v1046 = vunpack.c.h.b16 %v630
        %v1047 = vunpack.c.l.b16 %v631
        %v1048 = vunpack.c.h.b16 %v631
        %v1049 = vunpack.c.l.b16 %v632
        %v1050 = vunpack.c.h.b16 %v632
        %v1051 = vunpack.c.l.b16 %v633
        %v1052 = vunpack.c.h.b16 %v633
        %v1053 = vunpack.c.l.b16 %v634
        %v1054 = vunpack.c.h.b16 %v634
        %v1055 = vunpack.c.l.b16 %v635
        %v1056 = vunpack.c.h.b16 %v635
        %v1057 = vunpack.c.l.b16 %v636
        %v1058 = vunpack.c.h.b16 %v636
        %v1059 = vunpack.c.l.b16 %v637
        %v1060 = vunpack.c.h.b16 %v637
        %v1061 = vunpack.c.l.b16 %v638
        %v1062 = vunpack.c.h.b16 %v638
        %v1063 = vunpack.c.l.b16 %v639
        %v1064 = vunpack.c.h.b16 %v639
        %v1065 = vunpack.c.l.b16 %v640
        %v1066 = vunpack.c.h.b16 %v640
        %v1067 = vunpack.c.l.b16 %v641
        %v1068 = vunpack.c.h.b16 %v641
        %v1069 = vunpack.c.l.b16 %v642
        %v1070 = vunpack.c.h.b16 %v642
        %v1071 = vunpack.c.l.b16 %v643
        %v1072 = vunpack.c.h.b16 %v643
        %v1073 = vunpack.c.l.b16 %v644
        %v1074 = vunpack.c.h.b16 %v644
        %v1075 = vunpack.c.l.b16 %v645
        %v1076 = vunpack.c.h.b16 %v645
        %v1077 = vunpack.c.l.b16 %v646
        %v1078 = vunpack.c.h.b16 %v646
        %v1079 = vpack.c.b16 %v809, %v791
        %v1080 = vpack.c.b16 %v810, %v792
        %v1081 = vpack.c.b16 %v811, %v793
        %v1082 = vpack.c.b16 %v812, %v794
        %v1083 = vpack.c.b16 %v813, %v795
        %v1084 = vpack.c.b16 %v814, %v796
        %v1085 = vpack.c.b16 %v815, %v797
        %v1086 = vpack.c.b16 %v816, %v798
        %v1087 = vpack.c.b16 %v817, %v799
        %v1088 = vpack.c.b16 %v818, %v800
        %v1089 = vpack.c.b16 %v819, %v801
        %v1090 = vpack.c.b16 %v820, %v802
        %v1091 = vpack.c.b16 %v821, %v803
        %v1092 = vpack.c.b16 %v822, %v804
        %v1093 = vpack.c.b16 %v823, %v805
        %v1094 = vpack.c.b16 %v824, %v806
        %v1095 = vpack.c.b16 %v825, %v807
        %v1096 = vpack.c.b16 %v826, %v808
        %v1097 = vpack.c.b16 %v845, %v827
        %v1098 = vpack.c.b16 %v846, %v828
        %v1099 = vpack.c.b16 %v847, %v829
        %v1100 = vpack.c.b16 %v848, %v830
        %v1101 = vpack.c.b16 %v849, %v831
        %v1102 = vpack.c.b16 %v850, %v832
        %v1103 = vpack.c.b16 %v851, %v833
        %v1104 = vpack.c.b16 %v852, %v834
        %v1105 = vpack.c.b16 %v853, %v835
        %v1106 = vpack.c.b16 %v854, %v836
        %v1107 = vpack.c.b16 %v855, %v837
        %v1108 = vpack.c.b16 %v856, %v838
        %v1109 = vpack.c.b16 %v857, %v839
        %v1110 = vpack.c.b16 %v858, %v840
        %v1111 = vpack.c.b16 %v859, %v841
        %v1112 = vpack.c.b16 %v860, %v842
        %v1113 = vpack.c.b16 %v861, %v843
        %v1114 = vpack.c.b16 %v862, %v844
        %v1115 = vpack.c.b16 %v881, %v863
        %v1116 = vpack.c.b16 %v882, %v864
        %v1117 = vpack.c.b16 %v883, %v865
        %v1118 = vpack.c.b16 %v884, %v866
        %v1119 = vpack.c.b16 %v885, %v867
        %v1120 = vpack.c.b16 %v886, %v868
        %v1121 = vpack.c.b16 %v887, %v869
        %v1122 = vpack.c.b16 %v888, %v870
        %v1123 = vpack.c.b16 %v889, %v871
        %v1124 = vpack.c.b16 %v890, %v872
        %v1125 = vpack.c.b16 %v891, %v873
        %v1126 = vpack.c.b16 %v892, %v874
        %v1127 = vpack.c.b16 %v893, %v875
        %v1128 = vpack.c.b16 %v894, %v876
        %v1129 = vpack.c.b16 %v895, %v877
        %v1130 = vpack.c.b16 %v896, %v878
        %v1131 = vpack.c.b16 %v897, %v879
        %v1132 = vpack.c.b16 %v898, %v880
        %v1133 = vpack.c.b16 %v917, %v899
        %v1134 = vpack.c.b16 %v918, %v900
        %v1135 = vpack.c.b16 %v919, %v901
        %v1136 = vpack.c.b16 %v920, %v902
        %v1137 = vpack.c.b16 %v921, %v903
        %v1138 = vpack.c.b16 %v922, %v904
        %v1139 = vpack.c.b16 %v923, %v905
        %v1140 = vpack.c.b16 %v924, %v906
        %v1141 = vpack.c.b16 %v925, %v907
        %v1142 = vpack.c.b16 %v926, %v908
        %v1143 = vpack.c.b16 %v927, %v909
        %v1144 = vpack.c.b16 %v928, %v910
        %v1145 = vpack.c.b16 %v929, %v911
        %v1146 = vpack.c.b16 %v930, %v912
        %v1147 = vpack.c.b16 %v931, %v913
        %v1148 = vpack.c.b16 %v932, %v914
        %v1149 = vpack.c.b16 %v933, %v915
        %v1150 = vpack.c.b16 %v934, %v916
        %v1151 = vpack.c.b16 %v953, %v935
        %v1152 = vpack.c.b16 %v954, %v936
        %v1153 = vpack.c.b16 %v955, %v937
        %v1154 = vpack.c.b16 %v956, %v938
        %v1155 = vpack.c.b16 %v957, %v939
        %v1156 = vpack.c.b16 %v958, %v940
        %v1157 = vpack.c.b16 %v959, %v941
        %v1158 = vpack.c.b16 %v960, %v942
        %v1159 = vpack.c.b16 %v961, %v943
        %v1160 = vpack.c.b16 %v962, %v944
        %v1161 = vpack.c.b16 %v963, %v945
        %v1162 = vpack.c.b16 %v964, %v946
        %v1163 = vpack.c.b16 %v965, %v947
        %v1164 = vpack.c.b16 %v966, %v948
        %v1165 = vpack.c.b16 %v967, %v949
        %v1166 = vpack.c.b16 %v968, %v950
        %v1167 = vpack.c.b16 %v969, %v951
        %v1168 = vpack.c.b16 %v970, %v952
        %v1169 = vpack.c.b16 %v989, %v971
        %v1170 = vpack.c.b16 %v990, %v972
        %v1171 = vpack.c.b16 %v991, %v973
        %v1172 = vpack.c.b16 %v992, %v974
        %v1173 = vpack.c.b16 %v993, %v975
        %v1174 = vpack.c.b16 %v994, %v976
        %v1175 = vpack.c.b16 %v995, %v977
        %v1176 = vpack.c.b16 %v996, %v978
        %v1177 = vpack.c.b16 %v997, %v979
        %v1178 = vpack.c.b16 %v998, %v980
        %v1179 = vpack.c.b16 %v999, %v981
        %v1180 = vpack.c.b16 %v1000, %v982
        %v1181 = vpack.c.b16 %v1001, %v983
        %v1182 = vpack.c.b16 %v1002, %v984
        %v1183 = vpack.c.b16 %v1003, %v985
        %v1184 = vpack.c.b16 %v1004, %v986
        %v1185 = vpack.c.b16 %v1005, %v987
        %v1186 = vpack.c.b16 %v1006, %v988
        %v1187 = vpack.c.b16 %v1025, %v1007
        %v1188 = vpack.c.b16 %v1026, %v1008
        %v1189 = vpack.c.b16 %v1027, %v1009
        %v1190 = vpack.c.b16 %v1028, %v1010
        %v1191 = vpack.c.b16 %v1029, %v1011
        %v1192 = vpack.c.b16 %v1030, %v1012
        %v1193 = vpack.c.b16 %v1031, %v1013
        %v1194 = vpack.c.b16 %v1032, %v1014
        %v1195 = vpack.c.b16 %v1033, %v1015
        %v1196 = vpack.c.b16 %v1034, %v1016
        %v1197 = vpack.c.b16 %v1035, %v1017
        %v1198 = vpack.c.b16 %v1036, %v1018
        %v1199 = vpack.c.b16 %v1037, %v1019
        %v1200 = vpack.c.b16 %v1038, %v1020
        %v1201 = vpack.c.b16 %v1039, %v1021
        %v1202 = vpack.c.b16 %v1040, %v1022
        %v1203 = vpack.c.b16 %v1041, %v1023
        %v1204 = vpack.c.b16 %v1042, %v1024
        %v1205 = vpack.c.b16 %v1061, %v1043
        %v1206 = vpack.c.b16 %v1062, %v1044
        %v1207 = vpack.c.b16 %v1063, %v1045
        %v1208 = vpack.c.b16 %v1064, %v1046
        %v1209 = vpack.c.b16 %v1065, %v1047
        %v1210 = vpack.c.b16 %v1066, %v1048
        %v1211 = vpack.c.b16 %v1067, %v1049
        %v1212 = vpack.c.b16 %v1068, %v1050
        %v1213 = vpack.c.b16 %v1069, %v1051
        %v1214 = vpack.c.b16 %v1070, %v1052
        %v1215 = vpack.c.b16 %v1071, %v1053
        %v1216 = vpack.c.b16 %v1072, %v1054
        %v1217 = vpack.c.b16 %v1073, %v1055
        %v1218 = vpack.c.b16 %v1074, %v1056
        %v1219 = vpack.c.b16 %v1075, %v1057
        %v1220 = vpack.c.b16 %v1076, %v1058
        %v1221 = vpack.c.b16 %v1077, %v1059
        %v1222 = vpack.c.b16 %v1078, %v1060
        %1367 = vmatprep.subr.bf16.mxu0 %v1080
        %1368 = vmatpush1.bf16.msra.mxu0 %v1079
        %1369 = vmatprep.subr.bf16.mxu0 %v1098
        %1370 = vmatpush1.bf16.msra.mxu0 %v1097
        %1371 = vmatprep.subr.bf16.mxu0 %v1116
        %1372 = vmatpush1.bf16.msra.mxu0 %v1115
        %1373 = vmatprep.subr.bf16.mxu0 %v1134
        %1374 = vmatpush1.bf16.msra.mxu0 %v1133
        %1375 = vmatprep.subr.bf16.mxu0 %v1152
        %1376 = vmatpush1.bf16.msra.mxu0 %v1151
        %1377 = vmatprep.subr.bf16.mxu0 %v1170
        %1378 = vmatpush1.bf16.msra.mxu0 %v1169
        %1379 = vmatprep.subr.bf16.mxu0 %v1188
        %1380 = vmatpush1.bf16.msra.mxu0 %v1187
        %1381 = vmatprep.subr.bf16.mxu0 %v1206
        %1382 = vmatpush1.bf16.msra.mxu0 %v1205
        %1383 = vmatprep.subr.bf16.mxu0 0
        %1384 = vmatpush1.bf16.msra.mxu0 0
        %1385 = vmatprep.subr.bf16.mxu0 0
        %1386 = vmatpush1.bf16.msra.mxu0 0
        %1387 = vmatprep.subr.bf16.mxu0 0
        %1388 = vmatpush1.bf16.msra.mxu0 0
        %1389 = vmatprep.subr.bf16.mxu0 0
        %1390 = vmatpush1.bf16.msra.mxu0 0
        %1391 = vmatprep.subr.bf16.mxu0 0
        %1392 = vmatpush1.bf16.msra.mxu0 0
        %1393 = vmatprep.subr.bf16.mxu0 0
        %1394 = vmatpush1.bf16.msra.mxu0 0
        %1395 = vmatprep.subr.bf16.mxu0 0
        %1396 = vmatpush1.bf16.msra.mxu0 0
        %1397 = vmatprep.subr.bf16.mxu0 0
        %1398 = vmatpush1.bf16.msra.mxu0 0
        %1399 = vmatprep.mubr.bf16.mxu0 0
        %1400 = vmatmul.mubr.bf16.gmra.mrb[0].mxu0 %v502
        %v1401 = vpop.f32.mrb[0].mxu0
        %v1402 = vadd.f32 0.0, %v1401
        %v1403 = vpop.f32.mrb[0].mxu0
        %v1404 = vadd.f32 0.0, %v1403
        %v1405 = vpop.f32.mrb[0].mxu0
        %v1406 = vadd.f32 0.0, %v1405
        %v1407 = vpop.f32.mrb[0].mxu0
        %v1408 = vadd.f32 0.0, %v1407
        %1409 = vdwg.mxu0
        %1410 = vmatprep.subr.bf16.mxu0 %v1082
        %1411 = vmatpush1.bf16.msra.mxu0 %v1081
        %1412 = vmatprep.subr.bf16.mxu0 %v1100
        %1413 = vmatpush1.bf16.msra.mxu0 %v1099
        %1414 = vmatprep.subr.bf16.mxu0 %v1118
        %1415 = vmatpush1.bf16.msra.mxu0 %v1117
        %1416 = vmatprep.subr.bf16.mxu0 %v1136
        %1417 = vmatpush1.bf16.msra.mxu0 %v1135
        %1418 = vmatprep.subr.bf16.mxu0 %v1154
        %1419 = vmatpush1.bf16.msra.mxu0 %v1153
        %1420 = vmatprep.subr.bf16.mxu0 %v1172
        %1421 = vmatpush1.bf16.msra.mxu0 %v1171
        %1422 = vmatprep.subr.bf16.mxu0 %v1190
        %1423 = vmatpush1.bf16.msra.mxu0 %v1189
        %1424 = vmatprep.subr.bf16.mxu0 %v1208
        %1425 = vmatpush1.bf16.msra.mxu0 %v1207
        %1426 = vmatprep.subr.bf16.mxu0 0
        %1427 = vmatpush1.bf16.msra.mxu0 0
        %1428 = vmatprep.subr.bf16.mxu0 0
        %1429 = vmatpush1.bf16.msra.mxu0 0
        %1430 = vmatprep.subr.bf16.mxu0 0
        %1431 = vmatpush1.bf16.msra.mxu0 0
        %1432 = vmatprep.subr.bf16.mxu0 0
        %1433 = vmatpush1.bf16.msra.mxu0 0
        %1434 = vmatprep.subr.bf16.mxu0 0
        %1435 = vmatpush1.bf16.msra.mxu0 0
        %1436 = vmatprep.subr.bf16.mxu0 0
        %1437 = vmatpush1.bf16.msra.mxu0 0
        %1438 = vmatprep.subr.bf16.mxu0 0
        %1439 = vmatpush1.bf16.msra.mxu0 0
        %1440 = vmatprep.subr.bf16.mxu0 0
        %1441 = vmatpush1.bf16.msra.mxu0 0
        %1442 = vmatprep.mubr.bf16.mxu0 0
        %1443 = vmatmul.mubr.bf16.gmra.mrb[0].mxu0 %v502
        %v1444 = vpop.f32.mrb[0].mxu0
        %v1445 = vadd.f32 0.0, %v1444
        %v1446 = vpop.f32.mrb[0].mxu0
        %v1447 = vadd.f32 0.0, %v1446
        %v1448 = vpop.f32.mrb[0].mxu0
        %v1449 = vadd.f32 0.0, %v1448
        %v1450 = vpop.f32.mrb[0].mxu0
        %v1451 = vadd.f32 0.0, %v1450
        %1452 = vdwg.mxu0
        %1453 = vmatprep.subr.bf16.mxu0 %v1084
        %1454 = vmatpush1.bf16.msra.mxu0 %v1083
        %1455 = vmatprep.subr.bf16.mxu0 %v1102
        %1456 = vmatpush1.bf16.msra.mxu0 %v1101
        %1457 = vmatprep.subr.bf16.mxu0 %v1120
        %1458 = vmatpush1.bf16.msra.mxu0 %v1119
        %1459 = vmatprep.subr.bf16.mxu0 %v1138
        %1460 = vmatpush1.bf16.msra.mxu0 %v1137
        %1461 = vmatprep.subr.bf16.mxu0 %v1156
        %1462 = vmatpush1.bf16.msra.mxu0 %v1155
        %1463 = vmatprep.subr.bf16.mxu0 %v1174
        %1464 = vmatpush1.bf16.msra.mxu0 %v1173
        %1465 = vmatprep.subr.bf16.mxu0 %v1192
        %1466 = vmatpush1.bf16.msra.mxu0 %v1191
        %1467 = vmatprep.subr.bf16.mxu0 %v1210
        %1468 = vmatpush1.bf16.msra.mxu0 %v1209
        %1469 = vmatprep.subr.bf16.mxu0 0
        %1470 = vmatpush1.bf16.msra.mxu0 0
        %1471 = vmatprep.subr.bf16.mxu0 0
        %1472 = vmatpush1.bf16.msra.mxu0 0
        %1473 = vmatprep.subr.bf16.mxu0 0
        %1474 = vmatpush1.bf16.msra.mxu0 0
        %1475 = vmatprep.subr.bf16.mxu0 0
        %1476 = vmatpush1.bf16.msra.mxu0 0
        %1477 = vmatprep.subr.bf16.mxu0 0
        %1478 = vmatpush1.bf16.msra.mxu0 0
        %1479 = vmatprep.subr.bf16.mxu0 0
        %1480 = vmatpush1.bf16.msra.mxu0 0
        %1481 = vmatprep.subr.bf16.mxu0 0
        %1482 = vmatpush1.bf16.msra.mxu0 0
        %1483 = vmatprep.subr.bf16.mxu0 0
        %1484 = vmatpush1.bf16.msra.mxu0 0
        %1485 = vmatprep.mubr.bf16.mxu0 0
        %1486 = vmatmul.mubr.bf16.gmra.mrb[0].mxu0 %v502
        %v1487 = vpop.f32.mrb[0].mxu0
        %v1488 = vadd.f32 0.0, %v1487
        %v1489 = vpop.f32.mrb[0].mxu0
        %v1490 = vadd.f32 0.0, %v1489
        %v1491 = vpop.f32.mrb[0].mxu0
        %v1492 = vadd.f32 0.0, %v1491
        %v1493 = vpop.f32.mrb[0].mxu0
        %v1494 = vadd.f32 0.0, %v1493
        %1495 = vdwg.mxu0
        %1496 = vmatprep.subr.bf16.mxu0 %v1086
        %1497 = vmatpush1.bf16.msra.mxu0 %v1085
        %1498 = vmatprep.subr.bf16.mxu0 %v1104
        %1499 = vmatpush1.bf16.msra.mxu0 %v1103
        %1500 = vmatprep.subr.bf16.mxu0 %v1122
        %1501 = vmatpush1.bf16.msra.mxu0 %v1121
        %1502 = vmatprep.subr.bf16.mxu0 %v1140
        %1503 = vmatpush1.bf16.msra.mxu0 %v1139
        %1504 = vmatprep.subr.bf16.mxu0 %v1158
        %1505 = vmatpush1.bf16.msra.mxu0 %v1157
        %1506 = vmatprep.subr.bf16.mxu0 %v1176
        %1507 = vmatpush1.bf16.msra.mxu0 %v1175
        %1508 = vmatprep.subr.bf16.mxu0 %v1194
        %1509 = vmatpush1.bf16.msra.mxu0 %v1193
        %1510 = vmatprep.subr.bf16.mxu0 %v1212
        %1511 = vmatpush1.bf16.msra.mxu0 %v1211
        %1512 = vmatprep.subr.bf16.mxu0 0
        %1513 = vmatpush1.bf16.msra.mxu0 0
        %1514 = vmatprep.subr.bf16.mxu0 0
        %1515 = vmatpush1.bf16.msra.mxu0 0
        %1516 = vmatprep.subr.bf16.mxu0 0
        %1517 = vmatpush1.bf16.msra.mxu0 0
        %1518 = vmatprep.subr.bf16.mxu0 0
        %1519 = vmatpush1.bf16.msra.mxu0 0
        %1520 = vmatprep.subr.bf16.mxu0 0
        %1521 = vmatpush1.bf16.msra.mxu0 0
        %1522 = vmatprep.subr.bf16.mxu0 0
        %1523 = vmatpush1.bf16.msra.mxu0 0
        %1524 = vmatprep.subr.bf16.mxu0 0
        %1525 = vmatpush1.bf16.msra.mxu0 0
        %1526 = vmatprep.subr.bf16.mxu0 0
        %1527 = vmatpush1.bf16.msra.mxu0 0
        %1528 = vmatprep.mubr.bf16.mxu0 0
        %1529 = vmatmul.mubr.bf16.gmra.mrb[0].mxu0 %v502
        %v1530 = vpop.f32.mrb[0].mxu0
        %v1531 = vadd.f32 0.0, %v1530
        %v1532 = vpop.f32.mrb[0].mxu0
        %v1533 = vadd.f32 0.0, %v1532
        %v1534 = vpop.f32.mrb[0].mxu0
        %v1535 = vadd.f32 0.0, %v1534
        %v1536 = vpop.f32.mrb[0].mxu0
        %v1537 = vadd.f32 0.0, %v1536
        %1538 = vdwg.mxu0
        %1539 = vmatprep.subr.bf16.mxu0 %v1088
        %1540 = vmatpush1.bf16.msra.mxu0 %v1087
        %1541 = vmatprep.subr.bf16.mxu0 %v1106
        %1542 = vmatpush1.bf16.msra.mxu0 %v1105
        %1543 = vmatprep.subr.bf16.mxu0 %v1124
        %1544 = vmatpush1.bf16.msra.mxu0 %v1123
        %1545 = vmatprep.subr.bf16.mxu0 %v1142
        %1546 = vmatpush1.bf16.msra.mxu0 %v1141
        %1547 = vmatprep.subr.bf16.mxu0 %v1160
        %1548 = vmatpush1.bf16.msra.mxu0 %v1159
        %1549 = vmatprep.subr.bf16.mxu0 %v1178
        %1550 = vmatpush1.bf16.msra.mxu0 %v1177
        %1551 = vmatprep.subr.bf16.mxu0 %v1196
        %1552 = vmatpush1.bf16.msra.mxu0 %v1195
        %1553 = vmatprep.subr.bf16.mxu0 %v1214
        %1554 = vmatpush1.bf16.msra.mxu0 %v1213
        %1555 = vmatprep.subr.bf16.mxu0 0
        %1556 = vmatpush1.bf16.msra.mxu0 0
        %1557 = vmatprep.subr.bf16.mxu0 0
        %1558 = vmatpush1.bf16.msra.mxu0 0
        %1559 = vmatprep.subr.bf16.mxu0 0
        %1560 = vmatpush1.bf16.msra.mxu0 0
        %1561 = vmatprep.subr.bf16.mxu0 0
        %1562 = vmatpush1.bf16.msra.mxu0 0
        %1563 = vmatprep.subr.bf16.mxu0 0
        %1564 = vmatpush1.bf16.msra.mxu0 0
        %1565 = vmatprep.subr.bf16.mxu0 0
        %1566 = vmatpush1.bf16.msra.mxu0 0
        %1567 = vmatprep.subr.bf16.mxu0 0
        %1568 = vmatpush1.bf16.msra.mxu0 0
        %1569 = vmatprep.subr.bf16.mxu0 0
        %1570 = vmatpush1.bf16.msra.mxu0 0
        %1571 = vmatprep.mubr.bf16.mxu0 0
        %1572 = vmatmul.mubr.bf16.gmra.mrb[0].mxu0 %v502
        %v1573 = vpop.f32.mrb[0].mxu0
        %v1574 = vadd.f32 0.0, %v1573
        %v1575 = vpop.f32.mrb[0].mxu0
        %v1576 = vadd.f32 0.0, %v1575
        %v1577 = vpop.f32.mrb[0].mxu0
        %v1578 = vadd.f32 0.0, %v1577
        %v1579 = vpop.f32.mrb[0].mxu0
        %v1580 = vadd.f32 0.0, %v1579
        %1581 = vdwg.mxu0
        %1582 = vmatprep.subr.bf16.mxu0 %v1090
        %1583 = vmatpush1.bf16.msra.mxu0 %v1089
        %1584 = vmatprep.subr.bf16.mxu0 %v1108
        %1585 = vmatpush1.bf16.msra.mxu0 %v1107
        %1586 = vmatprep.subr.bf16.mxu0 %v1126
        %1587 = vmatpush1.bf16.msra.mxu0 %v1125
        %1588 = vmatprep.subr.bf16.mxu0 %v1144
        %1589 = vmatpush1.bf16.msra.mxu0 %v1143
        %1590 = vmatprep.subr.bf16.mxu0 %v1162
        %1591 = vmatpush1.bf16.msra.mxu0 %v1161
        %1592 = vmatprep.subr.bf16.mxu0 %v1180
        %1593 = vmatpush1.bf16.msra.mxu0 %v1179
        %1594 = vmatprep.subr.bf16.mxu0 %v1198
        %1595 = vmatpush1.bf16.msra.mxu0 %v1197
        %1596 = vmatprep.subr.bf16.mxu0 %v1216
        %1597 = vmatpush1.bf16.msra.mxu0 %v1215
        %1598 = vmatprep.subr.bf16.mxu0 0
        %1599 = vmatpush1.bf16.msra.mxu0 0
        %1600 = vmatprep.subr.bf16.mxu0 0
        %1601 = vmatpush1.bf16.msra.mxu0 0
        %1602 = vmatprep.subr.bf16.mxu0 0
        %1603 = vmatpush1.bf16.msra.mxu0 0
        %1604 = vmatprep.subr.bf16.mxu0 0
        %1605 = vmatpush1.bf16.msra.mxu0 0
        %1606 = vmatprep.subr.bf16.mxu0 0
        %1607 = vmatpush1.bf16.msra.mxu0 0
        %1608 = vmatprep.subr.bf16.mxu0 0
        %1609 = vmatpush1.bf16.msra.mxu0 0
        %1610 = vmatprep.subr.bf16.mxu0 0
        %1611 = vmatpush1.bf16.msra.mxu0 0
        %1612 = vmatprep.subr.bf16.mxu0 0
        %1613 = vmatpush1.bf16.msra.mxu0 0
        %1614 = vmatprep.mubr.bf16.mxu0 0
        %1615 = vmatmul.mubr.bf16.gmra.mrb[0].mxu0 %v502
        %v1616 = vpop.f32.mrb[0].mxu0
        %v1617 = vadd.f32 0.0, %v1616
        %v1618 = vpop.f32.mrb[0].mxu0
        %v1619 = vadd.f32 0.0, %v1618
        %v1620 = vpop.f32.mrb[0].mxu0
        %v1621 = vadd.f32 0.0, %v1620
        %v1622 = vpop.f32.mrb[0].mxu0
        %v1623 = vadd.f32 0.0, %v1622
        %1624 = vdwg.mxu0
        %1625 = vmatprep.subr.bf16.mxu0 %v1092
        %1626 = vmatpush1.bf16.msra.mxu0 %v1091
        %1627 = vmatprep.subr.bf16.mxu0 %v1110
        %1628 = vmatpush1.bf16.msra.mxu0 %v1109
        %1629 = vmatprep.subr.bf16.mxu0 %v1128
        %1630 = vmatpush1.bf16.msra.mxu0 %v1127
        %1631 = vmatprep.subr.bf16.mxu0 %v1146
        %1632 = vmatpush1.bf16.msra.mxu0 %v1145
        %1633 = vmatprep.subr.bf16.mxu0 %v1164
        %1634 = vmatpush1.bf16.msra.mxu0 %v1163
        %1635 = vmatprep.subr.bf16.mxu0 %v1182
        %1636 = vmatpush1.bf16.msra.mxu0 %v1181
        %1637 = vmatprep.subr.bf16.mxu0 %v1200
        %1638 = vmatpush1.bf16.msra.mxu0 %v1199
        %1639 = vmatprep.subr.bf16.mxu0 %v1218
        %1640 = vmatpush1.bf16.msra.mxu0 %v1217
        %1641 = vmatprep.subr.bf16.mxu0 0
        %1642 = vmatpush1.bf16.msra.mxu0 0
        %1643 = vmatprep.subr.bf16.mxu0 0
        %1644 = vmatpush1.bf16.msra.mxu0 0
        %1645 = vmatprep.subr.bf16.mxu0 0
        %1646 = vmatpush1.bf16.msra.mxu0 0
        %1647 = vmatprep.subr.bf16.mxu0 0
        %1648 = vmatpush1.bf16.msra.mxu0 0
        %1649 = vmatprep.subr.bf16.mxu0 0
        %1650 = vmatpush1.bf16.msra.mxu0 0
        %1651 = vmatprep.subr.bf16.mxu0 0
        %1652 = vmatpush1.bf16.msra.mxu0 0
        %1653 = vmatprep.subr.bf16.mxu0 0
        %1654 = vmatpush1.bf16.msra.mxu0 0
        %1655 = vmatprep.subr.bf16.mxu0 0
        %1656 = vmatpush1.bf16.msra.mxu0 0
        %1657 = vmatprep.mubr.bf16.mxu0 0
        %1658 = vmatmul.mubr.bf16.gmra.mrb[0].mxu0 %v502
        %v1659 = vpop.f32.mrb[0].mxu0
        %v1660 = vadd.f32 0.0, %v1659
        %v1661 = vpop.f32.mrb[0].mxu0
        %v1662 = vadd.f32 0.0, %v1661
        %v1663 = vpop.f32.mrb[0].mxu0
        %v1664 = vadd.f32 0.0, %v1663
        %v1665 = vpop.f32.mrb[0].mxu0
        %v1666 = vadd.f32 0.0, %v1665
        %1667 = vdwg.mxu0
        %1668 = vmatprep.subr.bf16.mxu0 %v1094
        %1669 = vmatpush1.bf16.msra.mxu0 %v1093
        %1670 = vmatprep.subr.bf16.mxu0 %v1112
        %1671 = vmatpush1.bf16.msra.mxu0 %v1111
        %1672 = vmatprep.subr.bf16.mxu0 %v1130
        %1673 = vmatpush1.bf16.msra.mxu0 %v1129
        %1674 = vmatprep.subr.bf16.mxu0 %v1148
        %1675 = vmatpush1.bf16.msra.mxu0 %v1147
        %1676 = vmatprep.subr.bf16.mxu0 %v1166
        %1677 = vmatpush1.bf16.msra.mxu0 %v1165
        %1678 = vmatprep.subr.bf16.mxu0 %v1184
        %1679 = vmatpush1.bf16.msra.mxu0 %v1183
        %1680 = vmatprep.subr.bf16.mxu0 %v1202
        %1681 = vmatpush1.bf16.msra.mxu0 %v1201
        %1682 = vmatprep.subr.bf16.mxu0 %v1220
        %1683 = vmatpush1.bf16.msra.mxu0 %v1219
        %1684 = vmatprep.subr.bf16.mxu0 0
        %1685 = vmatpush1.bf16.msra.mxu0 0
        %1686 = vmatprep.subr.bf16.mxu0 0
        %1687 = vmatpush1.bf16.msra.mxu0 0
        %1688 = vmatprep.subr.bf16.mxu0 0
        %1689 = vmatpush1.bf16.msra.mxu0 0
        %1690 = vmatprep.subr.bf16.mxu0 0
        %1691 = vmatpush1.bf16.msra.mxu0 0
        %1692 = vmatprep.subr.bf16.mxu0 0
        %1693 = vmatpush1.bf16.msra.mxu0 0
        %1694 = vmatprep.subr.bf16.mxu0 0
        %1695 = vmatpush1.bf16.msra.mxu0 0
        %1696 = vmatprep.subr.bf16.mxu0 0
        %1697 = vmatpush1.bf16.msra.mxu0 0
        %1698 = vmatprep.subr.bf16.mxu0 0
        %1699 = vmatpush1.bf16.msra.mxu0 0
        %1700 = vmatprep.mubr.bf16.mxu0 0
        %1701 = vmatmul.mubr.bf16.gmra.mrb[0].mxu0 %v502
        %v1702 = vpop.f32.mrb[0].mxu0
        %v1703 = vadd.f32 0.0, %v1702
        %v1704 = vpop.f32.mrb[0].mxu0
        %v1705 = vadd.f32 0.0, %v1704
        %v1706 = vpop.f32.mrb[0].mxu0
        %v1707 = vadd.f32 0.0, %v1706
        %v1708 = vpop.f32.mrb[0].mxu0
        %v1709 = vadd.f32 0.0, %v1708
        %1710 = vdwg.mxu0
        %1711 = vmatprep.subr.bf16.mxu0 %v1096
        %1712 = vmatpush1.bf16.msra.mxu0 %v1095
        %1713 = vmatprep.subr.bf16.mxu0 %v1114
        %1714 = vmatpush1.bf16.msra.mxu0 %v1113
        %1715 = vmatprep.subr.bf16.mxu0 %v1132
        %1716 = vmatpush1.bf16.msra.mxu0 %v1131
        %1717 = vmatprep.subr.bf16.mxu0 %v1150
        %1718 = vmatpush1.bf16.msra.mxu0 %v1149
        %1719 = vmatprep.subr.bf16.mxu0 %v1168
        %1720 = vmatpush1.bf16.msra.mxu0 %v1167
        %1721 = vmatprep.subr.bf16.mxu0 %v1186
        %1722 = vmatpush1.bf16.msra.mxu0 %v1185
        %1723 = vmatprep.subr.bf16.mxu0 %v1204
        %1724 = vmatpush1.bf16.msra.mxu0 %v1203
        %1725 = vmatprep.subr.bf16.mxu0 %v1222
        %1726 = vmatpush1.bf16.msra.mxu0 %v1221
        %1727 = vmatprep.subr.bf16.mxu0 0
        %1728 = vmatpush1.bf16.msra.mxu0 0
        %1729 = vmatprep.subr.bf16.mxu0 0
        %1730 = vmatpush1.bf16.msra.mxu0 0
        %1731 = vmatprep.subr.bf16.mxu0 0
        %1732 = vmatpush1.bf16.msra.mxu0 0
        %1733 = vmatprep.subr.bf16.mxu0 0
        %1734 = vmatpush1.bf16.msra.mxu0 0
        %1735 = vmatprep.subr.bf16.mxu0 0
        %1736 = vmatpush1.bf16.msra.mxu0 0
        %1737 = vmatprep.subr.bf16.mxu0 0
        %1738 = vmatpush1.bf16.msra.mxu0 0
        %1739 = vmatprep.subr.bf16.mxu0 0
        %1740 = vmatpush1.bf16.msra.mxu0 0
        %1741 = vmatprep.subr.bf16.mxu0 0
        %1742 = vmatpush1.bf16.msra.mxu0 0
        %1743 = vmatprep.mubr.bf16.mxu0 0
        %1744 = vmatmul.mubr.bf16.gmra.mrb[0].mxu0 %v502
        %v1745 = vpop.f32.mrb[0].mxu0
        %v1746 = vadd.f32 0.0, %v1745
        %v1747 = vpop.f32.mrb[0].mxu0
        %v1748 = vadd.f32 0.0, %v1747
        %v1749 = vpop.f32.mrb[0].mxu0
        %v1750 = vadd.f32 0.0, %v1749
        %v1751 = vpop.f32.mrb[0].mxu0
        %v1752 = vadd.f32 0.0, %v1751
        %1753 = vdwg.mxu0
        %v1754 = vlaneseq
        %v1755 = vshrl.u32 %v1754, 7
        %v1756 = vadd.s32 %v1755, 8
        %v1757 = vlaneseq
        %v1758 = vand.u32 %v1757, 127
        %vm1759 = vcmp.le.s32.totalorder %v1758, %v1755
        %vm1760 = vcmp.le.s32.totalorder %v1758, %v1756
        %v1761 = vld [vmem:[%s4] sm:$0xf]
        %v1762 = vld [vmem:[%s4 + $0x4] sm:$0xf]
        %v1763 = vld [vmem:[%s4 + $0x8] sm:$0xf]
        %v1764 = vld [vmem:[%s4 + $0xc] sm:$0xf]
        %v1765 = vld [vmem:[%s4 + $0x10] sm:$0xf]
        %v1766 = vld [vmem:[%s4 + $0x14] sm:$0xf]
        %v1767 = vld [vmem:[%s4 + $0x18] sm:$0xf]
        %v1768 = vld [vmem:[%s4 + $0x1c] sm:$0xf]
        %v1769 = vld [vmem:[%s4 + $0x20] sm:$0xf]
        %v1770 = vld [vmem:[%s4 + $0x24] sm:$0xf]
        %v1771 = vld [vmem:[%s4 + $0x28] sm:$0xf]
        %v1772 = vld [vmem:[%s4 + $0x2c] sm:$0xf]
        %v1773 = vld [vmem:[%s4 + $0x30] sm:$0xf]
        %v1774 = vld [vmem:[%s4 + $0x34] sm:$0xf]
        %v1775 = vld [vmem:[%s4 + $0x38] sm:$0xf]
        %v1776 = vld [vmem:[%s4 + $0x3c] sm:$0xf]
        %v1777 = vld [vmem:[%s4 + $0x40] sm:$0xf]
        %v1778 = vld [vmem:[%s4 + $0x44] sm:$0xf]
        %v1779 = vld [vmem:[%s4 + $0x48] sm:$0xf]
        %v1780 = vld [vmem:[%s4 + $0x4c] sm:$0xf]
        %v1781 = vld [vmem:[%s4 + $0x50] sm:$0xf]
        %v1782 = vld [vmem:[%s4 + $0x54] sm:$0xf]
        %v1783 = vld [vmem:[%s4 + $0x58] sm:$0xf]
        %v1784 = vld [vmem:[%s4 + $0x5c] sm:$0xf]
        %v1785 = vld [vmem:[%s4 + $0x60] sm:$0xf]
        %v1786 = vld [vmem:[%s4 + $0x64] sm:$0xf]
        %v1787 = vld [vmem:[%s4 + $0x68] sm:$0xf]
        %v1788 = vld [vmem:[%s4 + $0x6c] sm:$0xf]
        %v1789 = vld [vmem:[%s4 + $0x70] sm:$0xf]
        %v1790 = vld [vmem:[%s4 + $0x74] sm:$0xf]
        %v1791 = vld [vmem:[%s4 + $0x78] sm:$0xf]
        %v1792 = vld [vmem:[%s4 + $0x7c] sm:$0xf]
        %v1793 = vld [vmem:[%s4 + $0x80] sm:$0xf]
        %v1794 = vld [vmem:[%s4 + $0x84] sm:$0xf]
        %v1795 = vld [vmem:[%s4 + $0x88] sm:$0xf]
        %v1796 = vld [vmem:[%s4 + $0x8c] sm:$0xf]
        %v1797 = vld [vmem:[%s4 + $0x90] sm:$0xf]
        %v1798 = vld [vmem:[%s4 + $0x94] sm:$0xf]
        %v1799 = vld [vmem:[%s4 + $0x98] sm:$0xf]
        %v1800 = vld [vmem:[%s4 + $0x9c] sm:$0xf]
        %v1801 = vld [vmem:[%s4 + $0xa0] sm:$0xf]
        %v1802 = vld [vmem:[%s4 + $0xa4] sm:$0xf]
        %v1803 = vld [vmem:[%s4 + $0xa8] sm:$0xf]
        %v1804 = vld [vmem:[%s4 + $0xac] sm:$0xf]
        %v1805 = vld [vmem:[%s4 + $0xb0] sm:$0xf]
        %v1806 = vld [vmem:[%s4 + $0xb4] sm:$0xf]
        %v1807 = vld [vmem:[%s4 + $0xb8] sm:$0xf]
        %v1808 = vld [vmem:[%s4 + $0xbc] sm:$0xf]
        %v1809 = vld [vmem:[%s4 + $0xc0] sm:$0xf]
        %v1810 = vld [vmem:[%s4 + $0xc4] sm:$0xf]
        %v1811 = vld [vmem:[%s4 + $0xc8] sm:$0xf]
        %v1812 = vld [vmem:[%s4 + $0xcc] sm:$0xf]
        %v1813 = vld [vmem:[%s4 + $0xd0] sm:$0xf]
        %v1814 = vld [vmem:[%s4 + $0xd4] sm:$0xf]
        %v1815 = vld [vmem:[%s4 + $0xd8] sm:$0xf]
        %v1816 = vld [vmem:[%s4 + $0xdc] sm:$0xf]
        %v1817 = vld [vmem:[%s4 + $0xe0] sm:$0xf]
        %v1818 = vld [vmem:[%s4 + $0xe4] sm:$0xf]
        %v1819 = vld [vmem:[%s4 + $0xe8] sm:$0xf]
        %v1820 = vld [vmem:[%s4 + $0xec] sm:$0xf]
        %v1821 = vld [vmem:[%s4 + $0xf0] sm:$0xf]
        %v1822 = vld [vmem:[%s4 + $0xf4] sm:$0xf]
        %v1823 = vld [vmem:[%s4 + $0xf8] sm:$0xf]
        %v1824 = vld [vmem:[%s4 + $0xfc] sm:$0xf]
        %v1825 = vld [vmem:[%s4 + $0x100] sm:$0xf]
        %v1826 = vld [vmem:[%s4 + $0x104] sm:$0xf]
        %v1827 = vld [vmem:[%s4 + $0x108] sm:$0xf]
        %v1828 = vld [vmem:[%s4 + $0x10c] sm:$0xf]
        %v1829 = vld [vmem:[%s4 + $0x110] sm:$0xf]
        %v1830 = vld [vmem:[%s4 + $0x114] sm:$0xf]
        %v1831 = vld [vmem:[%s4 + $0x118] sm:$0xf]
        %v1832 = vld [vmem:[%s4 + $0x11c] sm:$0xf]
        %v1833 = vld [vmem:[%s4 + $0x120] sm:$0xf]
        %v1834 = vld [vmem:[%s4 + $0x124] sm:$0xf]
        %v1835 = vld [vmem:[%s4 + $0x128] sm:$0xf]
        %v1836 = vld [vmem:[%s4 + $0x12c] sm:$0xf]
        %v1837 = vld [vmem:[%s4 + $0x130] sm:$0xf]
        %v1838 = vld [vmem:[%s4 + $0x134] sm:$0xf]
        %v1839 = vld [vmem:[%s4 + $0x138] sm:$0xf]
        %v1840 = vld [vmem:[%s4 + $0x13c] sm:$0xf]
        %v1841 = vld [vmem:[%s4 + $0x140] sm:$0xf]
        %v1842 = vld [vmem:[%s4 + $0x144] sm:$0xf]
        %v1843 = vld [vmem:[%s4 + $0x148] sm:$0xf]
        %v1844 = vld [vmem:[%s4 + $0x14c] sm:$0xf]
        %v1845 = vld [vmem:[%s4 + $0x150] sm:$0xf]
        %v1846 = vld [vmem:[%s4 + $0x154] sm:$0xf]
        %v1847 = vld [vmem:[%s4 + $0x158] sm:$0xf]
        %v1848 = vld [vmem:[%s4 + $0x15c] sm:$0xf]
        %v1849 = vld [vmem:[%s4 + $0x160] sm:$0xf]
        %v1850 = vld [vmem:[%s4 + $0x164] sm:$0xf]
        %v1851 = vld [vmem:[%s4 + $0x168] sm:$0xf]
        %v1852 = vld [vmem:[%s4 + $0x16c] sm:$0xf]
        %v1853 = vld [vmem:[%s4 + $0x170] sm:$0xf]
        %v1854 = vld [vmem:[%s4 + $0x174] sm:$0xf]
        %v1855 = vld [vmem:[%s4 + $0x178] sm:$0xf]
        %v1856 = vld [vmem:[%s4 + $0x17c] sm:$0xf]
        %v1857 = vpack.c.bf16 %v1406, %v1402
        %v1858 = vpack.c.bf16 %v1535, %v1531
        %1859 = vmatprep.subr.bf16.mxu0 0
        %1860 = vmatpush1.bf16.xpose.msra.mxu0 %v1858
        %1861 = vmatprep.subr.bf16.mxu0 0
        %1862 = vmatpush1.bf16.xpose.msra.mxu0 0
        %1863 = vmatprep.subr.bf16.mxu0 0
        %1864 = vmatpush1.bf16.xpose.msra.mxu0 0
        %1865 = vmatprep.subr.bf16.mxu0 0
        %1866 = vmatpush1.bf16.xpose.msra.mxu0 0
        %1867 = vmatprep.subr.bf16.mxu0 0
        %1868 = vmatpush1.bf16.xpose.msra.mxu0 0
        %1869 = vmatprep.subr.bf16.mxu0 0
        %1870 = vmatpush1.bf16.xpose.msra.mxu0 0
        %1871 = vmatprep.subr.bf16.mxu0 0
        %1872 = vmatpush1.bf16.xpose.msra.mxu0 0
        %1873 = vmatprep.subr.bf16.mxu0 0
        %1874 = vmatpush1.bf16.xpose.msra.mxu0 0
        %1875 = vmatprep.subr.bf16.mxu0 0
        %1876 = vmatpush1.bf16.xpose.msra.mxu0 0
        %1877 = vmatprep.subr.bf16.mxu0 0
        %1878 = vmatpush1.bf16.xpose.msra.mxu0 0
        %1879 = vmatprep.subr.bf16.mxu0 0
        %1880 = vmatpush1.bf16.xpose.msra.mxu0 0
        %1881 = vmatprep.subr.bf16.mxu0 0
        %1882 = vmatpush1.bf16.xpose.msra.mxu0 0
        %1883 = vmatprep.subr.bf16.mxu0 0
        %1884 = vmatpush1.bf16.xpose.msra.mxu0 0
        %1885 = vmatprep.subr.bf16.mxu0 0
        %1886 = vmatpush1.bf16.xpose.msra.mxu0 0
        %1887 = vmatprep.subr.bf16.mxu0 0
        %1888 = vmatpush1.bf16.xpose.msra.mxu0 0
        %1889 = vmatprep.subr.bf16.mxu0 0
        %1890 = vmatpush1.bf16.xpose.msra.mxu0 0
        %1891 = vmatprep.mubr.bf16.mxu0 0
        %1892 = vmatmul.mubr.bf16.gmra.mrb[0].mxu0 %v1857
        %v1893 = vpop.f32.mrb[0].mxu0
        %v1894 = vadd.f32 0.0, %v1893
        %v1895 = vpop.f32.mrb[0].mxu0
        %v1896 = vpop.f32.mrb[0].mxu0
        %v1897 = vadd.f32 0.0, %v1896
        %v1898 = vpop.f32.mrb[0].mxu0
        %1899 = vdwg.mxu0
        %v1900 = vmul.f32 %v1894, 0.2182179
        %v1901 = vmul.f32 %v1897, 0.2182179
        %v1902 = vsel %vm1759, %v1900, -inf
        %v1903 = vsel %vm1760, %v1901, -inf
        %vm1904 = vcmask 130048
        %v1905 = vsel %vm1904, %v1902, -inf
        %1906 = vmax.xlane.f32.xlu0 %v1905
        %v1907 = vpop.xlane.xlu0 %1906
        %v1908 = vsel %vm1904, %v1903, -inf
        %1909 = vmax.xlane.f32.xlu0 %v1908
        %v1910 = vpop.xlane.xlu0 %1909
        %v1911 = vsub.f32 %v1902, %v1907
        %v1912 = vsub.f32 %v1903, %v1910
        %v1913 = vmul.f32 %v1911, 1.442695
        %v1914 = vpow.pop %v1913
        %v1915 = vmul.f32 %v1912, 1.442695
        %v1916 = vpow.pop %v1915
        %v1917 = vsel %vm1904, %v1914, 0.0
        %1918 = vadd.xlane.f32.xlu0 %v1917
        %v1919 = vpop.xlane.xlu0 %1918
        %v1920 = vsel %vm1904, %v1916, 0.0
        %1921 = vadd.xlane.f32.xlu0 %v1920
        %v1922 = vpop.xlane.xlu0 %1921
        %v1923 = vrcp.pop %v1919
        %v1924 = vmul.f32 %v1914, %v1923
        %v1925 = vrcp.pop %v1922
        %v1926 = vmul.f32 %v1916, %v1925
        %v1927 = vpack.c.bf16 %v1926, %v1924
        %v1928 = vpack.c.bf16 %v1664, %v1660
        %v1930 = vsel %vm1904, %v1927, 0
        %1932 = vmatprep.subr.bf16.mxu0 0
        %1933 = vmatpush1.bf16.msra.mxu0 %v1928
        %1934 = vmatprep.subr.bf16.mxu0 0
        %1935 = vmatpush1.bf16.msra.mxu0 0
        %1936 = vmatprep.subr.bf16.mxu0 0
        %1937 = vmatpush1.bf16.msra.mxu0 0
        %1938 = vmatprep.subr.bf16.mxu0 0
        %1939 = vmatpush1.bf16.msra.mxu0 0
        %1940 = vmatprep.subr.bf16.mxu0 0
        %1941 = vmatpush1.bf16.msra.mxu0 0
        %1942 = vmatprep.subr.bf16.mxu0 0
        %1943 = vmatpush1.bf16.msra.mxu0 0
        %1944 = vmatprep.subr.bf16.mxu0 0
        %1945 = vmatpush1.bf16.msra.mxu0 0
        %1946 = vmatprep.subr.bf16.mxu0 0
        %1947 = vmatpush1.bf16.msra.mxu0 0
        %1948 = vmatprep.subr.bf16.mxu0 0
        %1949 = vmatpush1.bf16.msra.mxu0 0
        %1950 = vmatprep.subr.bf16.mxu0 0
        %1951 = vmatpush1.bf16.msra.mxu0 0
        %1952 = vmatprep.subr.bf16.mxu0 0
        %1953 = vmatpush1.bf16.msra.mxu0 0
        %1954 = vmatprep.subr.bf16.mxu0 0
        %1955 = vmatpush1.bf16.msra.mxu0 0
        %1956 = vmatprep.subr.bf16.mxu0 0
        %1957 = vmatpush1.bf16.msra.mxu0 0
        %1958 = vmatprep.subr.bf16.mxu0 0
        %1959 = vmatpush1.bf16.msra.mxu0 0
        %1960 = vmatprep.subr.bf16.mxu0 0
        %1961 = vmatpush1.bf16.msra.mxu0 0
        %1962 = vmatprep.subr.bf16.mxu0 0
        %1963 = vmatpush1.bf16.msra.mxu0 0
        %1964 = vmatprep.mubr.bf16.mxu0 0
        %1965 = vmatmul.mubr.bf16.gmra.mrb[0].mxu0 %v1930
        %v1966 = vpop.f32.mrb[0].mxu0
        %v1967 = vadd.f32 0.0, %v1966
        %v1968 = vpop.f32.mrb[0].mxu0
        %v1969 = vpop.f32.mrb[0].mxu0
        %v1970 = vadd.f32 0.0, %v1969
        %v1971 = vpop.f32.mrb[0].mxu0
        %1972 = vdwg.mxu0
        %v1973 = vpack.c.bf16 %v1970, %v1967
        %v1974 = vpack.c.bf16 %v1408, %v1404
        %v1975 = vpack.c.bf16 %v1537, %v1533
        %1976 = vmatprep.subr.bf16.mxu0 0
        %1977 = vmatpush1.bf16.xpose.msra.mxu0 %v1975
        %1978 = vmatprep.subr.bf16.mxu0 0
        %1979 = vmatpush1.bf16.xpose.msra.mxu0 0
        %1980 = vmatprep.subr.bf16.mxu0 0
        %1981 = vmatpush1.bf16.xpose.msra.mxu0 0
        %1982 = vmatprep.subr.bf16.mxu0 0
        %1983 = vmatpush1.bf16.xpose.msra.mxu0 0
        %1984 = vmatprep.subr.bf16.mxu0 0
        %1985 = vmatpush1.bf16.xpose.msra.mxu0 0
        %1986 = vmatprep.subr.bf16.mxu0 0
        %1987 = vmatpush1.bf16.xpose.msra.mxu0 0
        %1988 = vmatprep.subr.bf16.mxu0 0
        %1989 = vmatpush1.bf16.xpose.msra.mxu0 0
        %1990 = vmatprep.subr.bf16.mxu0 0
        %1991 = vmatpush1.bf16.xpose.msra.mxu0 0
        %1992 = vmatprep.subr.bf16.mxu0 0
        %1993 = vmatpush1.bf16.xpose.msra.mxu0 0
        %1994 = vmatprep.subr.bf16.mxu0 0
        %1995 = vmatpush1.bf16.xpose.msra.mxu0 0
        %1996 = vmatprep.subr.bf16.mxu0 0
        %1997 = vmatpush1.bf16.xpose.msra.mxu0 0
        %1998 = vmatprep.subr.bf16.mxu0 0
        %1999 = vmatpush1.bf16.xpose.msra.mxu0 0
        %2000 = vmatprep.subr.bf16.mxu0 0
        %2001 = vmatpush1.bf16.xpose.msra.mxu0 0
        %2002 = vmatprep.subr.bf16.mxu0 0
        %2003 = vmatpush1.bf16.xpose.msra.mxu0 0
        %2004 = vmatprep.subr.bf16.mxu0 0
        %2005 = vmatpush1.bf16.xpose.msra.mxu0 0
        %2006 = vmatprep.subr.bf16.mxu0 0
        %2007 = vmatpush1.bf16.xpose.msra.mxu0 0
        %2008 = vmatprep.mubr.bf16.mxu0 0
        %2009 = vmatmul.mubr.bf16.gmra.mrb[0].mxu0 %v1974
        %v2010 = vpop.f32.mrb[0].mxu0
        %v2011 = vadd.f32 0.0, %v2010
        %v2012 = vpop.f32.mrb[0].mxu0
        %v2013 = vpop.f32.mrb[0].mxu0
        %v2014 = vadd.f32 0.0, %v2013
        %v2015 = vpop.f32.mrb[0].mxu0
        %2016 = vdwg.mxu0
        %v2017 = vmul.f32 %v2011, 0.2182179
        %v2018 = vmul.f32 %v2014, 0.2182179
        %v2019 = vsel %vm1759, %v2017, -inf
        %v2020 = vsel %vm1760, %v2018, -inf
        %v2021 = vsel %vm1904, %v2019, -inf
        %2022 = vmax.xlane.f32.xlu0 %v2021
        %v2023 = vpop.xlane.xlu0 %2022
        %v2024 = vsel %vm1904, %v2020, -inf
        %2025 = vmax.xlane.f32.xlu0 %v2024
        %v2026 = vpop.xlane.xlu0 %2025
        %v2027 = vsub.f32 %v2019, %v2023
        %v2028 = vsub.f32 %v2020, %v2026
        %v2029 = vmul.f32 %v2027, 1.442695
        %v2030 = vpow.pop %v2029
        %v2031 = vmul.f32 %v2028, 1.442695
        %v2032 = vpow.pop %v2031
        %v2033 = vsel %vm1904, %v2030, 0.0
        %2034 = vadd.xlane.f32.xlu0 %v2033
        %v2035 = vpop.xlane.xlu0 %2034
        %v2036 = vsel %vm1904, %v2032, 0.0
        %2037 = vadd.xlane.f32.xlu0 %v2036
        %v2038 = vpop.xlane.xlu0 %2037
        %v2039 = vrcp.pop %v2035
        %v2040 = vmul.f32 %v2030, %v2039
        %v2041 = vrcp.pop %v2038
        %v2042 = vmul.f32 %v2032, %v2041
        %v2043 = vpack.c.bf16 %v2042, %v2040
        %v2044 = vpack.c.bf16 %v1666, %v1662
        %v2046 = vsel %vm1904, %v2043, 0
        %2048 = vmatprep.subr.bf16.mxu0 0
        %2049 = vmatpush1.bf16.msra.mxu0 %v2044
        %2050 = vmatprep.subr.bf16.mxu0 0
        %2051 = vmatpush1.bf16.msra.mxu0 0
        %2052 = vmatprep.subr.bf16.mxu0 0
        %2053 = vmatpush1.bf16.msra.mxu0 0
        %2054 = vmatprep.subr.bf16.mxu0 0
        %2055 = vmatpush1.bf16.msra.mxu0 0
        %2056 = vmatprep.subr.bf16.mxu0 0
        %2057 = vmatpush1.bf16.msra.mxu0 0
        %2058 = vmatprep.subr.bf16.mxu0 0
        %2059 = vmatpush1.bf16.msra.mxu0 0
        %2060 = vmatprep.subr.bf16.mxu0 0
        %2061 = vmatpush1.bf16.msra.mxu0 0
        %2062 = vmatprep.subr.bf16.mxu0 0
        %2063 = vmatpush1.bf16.msra.mxu0 0
        %2064 = vmatprep.subr.bf16.mxu0 0
        %2065 = vmatpush1.bf16.msra.mxu0 0
        %2066 = vmatprep.subr.bf16.mxu0 0
        %2067 = vmatpush1.bf16.msra.mxu0 0
        %2068 = vmatprep.subr.bf16.mxu0 0
        %2069 = vmatpush1.bf16.msra.mxu0 0
        %2070 = vmatprep.subr.bf16.mxu0 0
        %2071 = vmatpush1.bf16.msra.mxu0 0
        %2072 = vmatprep.subr.bf16.mxu0 0
        %2073 = vmatpush1.bf16.msra.mxu0 0
        %2074 = vmatprep.subr.bf16.mxu0 0
        %2075 = vmatpush1.bf16.msra.mxu0 0
        %2076 = vmatprep.subr.bf16.mxu0 0
        %2077 = vmatpush1.bf16.msra.mxu0 0
        %2078 = vmatprep.subr.bf16.mxu0 0
        %2079 = vmatpush1.bf16.msra.mxu0 0
        %2080 = vmatprep.mubr.bf16.mxu0 0
        %2081 = vmatmul.mubr.bf16.gmra.mrb[0].mxu0 %v2046
        %v2082 = vpop.f32.mrb[0].mxu0
        %v2083 = vadd.f32 0.0, %v2082
        %v2084 = vpop.f32.mrb[0].mxu0
        %v2085 = vpop.f32.mrb[0].mxu0
        %v2086 = vadd.f32 0.0, %v2085
        %v2087 = vpop.f32.mrb[0].mxu0
        %2088 = vdwg.mxu0
        %v2089 = vpack.c.bf16 %v2086, %v2083
        %v2106 = vunpack.c.l.b16 %v1777
        %v2107 = vunpack.c.l.b16 %v1778
        %v2108 = vunpack.c.l.b16 %v1779
        %v2109 = vunpack.c.l.b16 %v1780
        %v2110 = vunpack.c.l.b16 %v1781
        %v2111 = vunpack.c.l.b16 %v1782
        %v2112 = vunpack.c.l.b16 %v1783
        %v2113 = vunpack.c.l.b16 %v1784
        %v2114 = vunpack.c.l.b16 %v1785
        %v2115 = vunpack.c.l.b16 %v1786
        %v2116 = vunpack.c.l.b16 %v1787
        %v2117 = vunpack.c.l.b16 %v1788
        %v2118 = vunpack.c.l.b16 %v1789
        %v2119 = vunpack.c.l.b16 %v1790
        %v2120 = vunpack.c.l.b16 %v1791
        %v2121 = vunpack.c.l.b16 %v1792
        %v2122 = vpack.c.b16 %v2107, %v2106
        %v2123 = vpack.c.b16 %v2109, %v2108
        %v2124 = vpack.c.b16 %v2111, %v2110
        %v2125 = vpack.c.b16 %v2113, %v2112
        %v2126 = vpack.c.b16 %v2115, %v2114
        %v2127 = vpack.c.b16 %v2117, %v2116
        %v2128 = vpack.c.b16 %v2119, %v2118
        %v2129 = vpack.c.b16 %v2121, %v2120
        %2138 = vmatprep.subr.bf16.mxu0 0
        %2139 = vmatpush1.bf16.msra.mxu0 %v2122
        %2140 = vmatprep.subr.bf16.mxu0 0
        %2141 = vmatpush1.bf16.msra.mxu0 %v2123
        %2142 = vmatprep.subr.bf16.mxu0 0
        %2143 = vmatpush1.bf16.msra.mxu0 %v2124
        %2144 = vmatprep.subr.bf16.mxu0 0
        %2145 = vmatpush1.bf16.msra.mxu0 %v2125
        %2146 = vmatprep.subr.bf16.mxu0 0
        %2147 = vmatpush1.bf16.msra.mxu0 %v2126
        %2148 = vmatprep.subr.bf16.mxu0 0
        %2149 = vmatpush1.bf16.msra.mxu0 %v2127
        %2150 = vmatprep.subr.bf16.mxu0 0
        %2151 = vmatpush1.bf16.msra.mxu0 %v2128
        %2152 = vmatprep.subr.bf16.mxu0 0
        %2153 = vmatpush1.bf16.msra.mxu0 %v2129
        %2154 = vmatprep.subr.bf16.mxu0 0
        %2155 = vmatpush1.bf16.msra.mxu0 0
        %2156 = vmatprep.subr.bf16.mxu0 0
        %2157 = vmatpush1.bf16.msra.mxu0 0
        %2158 = vmatprep.subr.bf16.mxu0 0
        %2159 = vmatpush1.bf16.msra.mxu0 0
        %2160 = vmatprep.subr.bf16.mxu0 0
        %2161 = vmatpush1.bf16.msra.mxu0 0
        %2162 = vmatprep.subr.bf16.mxu0 0
        %2163 = vmatpush1.bf16.msra.mxu0 0
        %2164 = vmatprep.subr.bf16.mxu0 0
        %2165 = vmatpush1.bf16.msra.mxu0 0
        %2166 = vmatprep.subr.bf16.mxu0 0
        %2167 = vmatpush1.bf16.msra.mxu0 0
        %2168 = vmatprep.subr.bf16.mxu0 0
        %2169 = vmatpush1.bf16.msra.mxu0 0
        %2170 = vmatprep.mubr.bf16.mxu0 0
        %2171 = vmatmul.mubr.bf16.gmra.mrb[0].mxu0 %v2089
        %v2172 = vpop.f32.mrb[0].mxu0
        %v2173 = vadd.f32 0.0, %v2172
        %v2174 = vpop.f32.mrb[0].mxu0
        %v2175 = vpop.f32.mrb[0].mxu0
        %v2176 = vadd.f32 0.0, %v2175
        %v2177 = vpop.f32.mrb[0].mxu0
        %2178 = vdwg.mxu0
        %v2195 = vunpack.c.l.b16 %v1761
        %v2196 = vunpack.c.l.b16 %v1762
        %v2197 = vunpack.c.l.b16 %v1763
        %v2198 = vunpack.c.l.b16 %v1764
        %v2199 = vunpack.c.l.b16 %v1765
        %v2200 = vunpack.c.l.b16 %v1766
        %v2201 = vunpack.c.l.b16 %v1767
        %v2202 = vunpack.c.l.b16 %v1768
        %v2203 = vunpack.c.l.b16 %v1769
        %v2204 = vunpack.c.l.b16 %v1770
        %v2205 = vunpack.c.l.b16 %v1771
        %v2206 = vunpack.c.l.b16 %v1772
        %v2207 = vunpack.c.l.b16 %v1773
        %v2208 = vunpack.c.l.b16 %v1774
        %v2209 = vunpack.c.l.b16 %v1775
        %v2210 = vunpack.c.l.b16 %v1776
        %v2211 = vpack.c.b16 %v2196, %v2195
        %v2212 = vpack.c.b16 %v2198, %v2197
        %v2213 = vpack.c.b16 %v2200, %v2199
        %v2214 = vpack.c.b16 %v2202, %v2201
        %v2215 = vpack.c.b16 %v2204, %v2203
        %v2216 = vpack.c.b16 %v2206, %v2205
        %v2217 = vpack.c.b16 %v2208, %v2207
        %v2218 = vpack.c.b16 %v2210, %v2209
        %2227 = vmatprep.subr.bf16.mxu0 0
        %2228 = vmatpush1.bf16.msra.mxu0 %v2211
        %2229 = vmatprep.subr.bf16.mxu0 0
        %2230 = vmatpush1.bf16.msra.mxu0 %v2212
        %2231 = vmatprep.subr.bf16.mxu0 0
        %2232 = vmatpush1.bf16.msra.mxu0 %v2213
        %2233 = vmatprep.subr.bf16.mxu0 0
        %2234 = vmatpush1.bf16.msra.mxu0 %v2214
        %2235 = vmatprep.subr.bf16.mxu0 0
        %2236 = vmatpush1.bf16.msra.mxu0 %v2215
        %2237 = vmatprep.subr.bf16.mxu0 0
        %2238 = vmatpush1.bf16.msra.mxu0 %v2216
        %2239 = vmatprep.subr.bf16.mxu0 0
        %2240 = vmatpush1.bf16.msra.mxu0 %v2217
        %2241 = vmatprep.subr.bf16.mxu0 0
        %2242 = vmatpush1.bf16.msra.mxu0 %v2218
        %2243 = vmatprep.subr.bf16.mxu0 0
        %2244 = vmatpush1.bf16.msra.mxu0 0
        %2245 = vmatprep.subr.bf16.mxu0 0
        %2246 = vmatpush1.bf16.msra.mxu0 0
        %2247 = vmatprep.subr.bf16.mxu0 0
        %2248 = vmatpush1.bf16.msra.mxu0 0
        %2249 = vmatprep.subr.bf16.mxu0 0
        %2250 = vmatpush1.bf16.msra.mxu0 0
        %2251 = vmatprep.subr.bf16.mxu0 0
        %2252 = vmatpush1.bf16.msra.mxu0 0
        %2253 = vmatprep.subr.bf16.mxu0 0
        %2254 = vmatpush1.bf16.msra.mxu0 0
        %2255 = vmatprep.subr.bf16.mxu0 0
        %2256 = vmatpush1.bf16.msra.mxu0 0
        %2257 = vmatprep.subr.bf16.mxu0 0
        %2258 = vmatpush1.bf16.msra.mxu0 0
        %2259 = vmatprep.mubr.bf16.mxu0 0
        %2260 = vmatmul.mubr.bf16.gmra.mrb[0].mxu0 %v1973
        %v2261 = vpop.f32.mrb[0].mxu0
        %v2262 = vadd.f32 %v2173, %v2261
        %v2263 = vpop.f32.mrb[0].mxu0
        %v2264 = vpop.f32.mrb[0].mxu0
        %v2265 = vadd.f32 %v2176, %v2264
        %v2266 = vpop.f32.mrb[0].mxu0
        %2267 = vdwg.mxu0
        %v2268 = vpack.c.bf16 %v1449, %v1445
        %v2269 = vpack.c.bf16 %v1578, %v1574
        %2270 = vmatprep.subr.bf16.mxu0 0
        %2271 = vmatpush1.bf16.xpose.msra.mxu0 %v2269
        %2272 = vmatprep.subr.bf16.mxu0 0
        %2273 = vmatpush1.bf16.xpose.msra.mxu0 0
        %2274 = vmatprep.subr.bf16.mxu0 0
        %2275 = vmatpush1.bf16.xpose.msra.mxu0 0
        %2276 = vmatprep.subr.bf16.mxu0 0
        %2277 = vmatpush1.bf16.xpose.msra.mxu0 0
        %2278 = vmatprep.subr.bf16.mxu0 0
        %2279 = vmatpush1.bf16.xpose.msra.mxu0 0
        %2280 = vmatprep.subr.bf16.mxu0 0
        %2281 = vmatpush1.bf16.xpose.msra.mxu0 0
        %2282 = vmatprep.subr.bf16.mxu0 0
        %2283 = vmatpush1.bf16.xpose.msra.mxu0 0
        %2284 = vmatprep.subr.bf16.mxu0 0
        %2285 = vmatpush1.bf16.xpose.msra.mxu0 0
        %2286 = vmatprep.subr.bf16.mxu0 0
        %2287 = vmatpush1.bf16.xpose.msra.mxu0 0
        %2288 = vmatprep.subr.bf16.mxu0 0
        %2289 = vmatpush1.bf16.xpose.msra.mxu0 0
        %2290 = vmatprep.subr.bf16.mxu0 0
        %2291 = vmatpush1.bf16.xpose.msra.mxu0 0
        %2292 = vmatprep.subr.bf16.mxu0 0
        %2293 = vmatpush1.bf16.xpose.msra.mxu0 0
        %2294 = vmatprep.subr.bf16.mxu0 0
        %2295 = vmatpush1.bf16.xpose.msra.mxu0 0
        %2296 = vmatprep.subr.bf16.mxu0 0
        %2297 = vmatpush1.bf16.xpose.msra.mxu0 0
        %2298 = vmatprep.subr.bf16.mxu0 0
        %2299 = vmatpush1.bf16.xpose.msra.mxu0 0
        %2300 = vmatprep.subr.bf16.mxu0 0
        %2301 = vmatpush1.bf16.xpose.msra.mxu0 0
        %2302 = vmatprep.mubr.bf16.mxu0 0
        %2303 = vmatmul.mubr.bf16.gmra.mrb[0].mxu0 %v2268
        %v2304 = vpop.f32.mrb[0].mxu0
        %v2305 = vadd.f32 0.0, %v2304
        %v2306 = vpop.f32.mrb[0].mxu0
        %v2307 = vpop.f32.mrb[0].mxu0
        %v2308 = vadd.f32 0.0, %v2307
        %v2309 = vpop.f32.mrb[0].mxu0
        %2310 = vdwg.mxu0
        %v2311 = vmul.f32 %v2305, 0.2182179
        %v2312 = vmul.f32 %v2308, 0.2182179
        %v2313 = vsel %vm1759, %v2311, -inf
        %v2314 = vsel %vm1760, %v2312, -inf
        %v2315 = vsel %vm1904, %v2313, -inf
        %2316 = vmax.xlane.f32.xlu0 %v2315
        %v2317 = vpop.xlane.xlu0 %2316
        %v2318 = vsel %vm1904, %v2314, -inf
        %2319 = vmax.xlane.f32.xlu0 %v2318
        %v2320 = vpop.xlane.xlu0 %2319
        %v2321 = vsub.f32 %v2313, %v2317
        %v2322 = vsub.f32 %v2314, %v2320
        %v2323 = vmul.f32 %v2321, 1.442695
        %v2324 = vpow.pop %v2323
        %v2325 = vmul.f32 %v2322, 1.442695
        %v2326 = vpow.pop %v2325
        %v2327 = vsel %vm1904, %v2324, 0.0
        %2328 = vadd.xlane.f32.xlu0 %v2327
        %v2329 = vpop.xlane.xlu0 %2328
        %v2330 = vsel %vm1904, %v2326, 0.0
        %2331 = vadd.xlane.f32.xlu0 %v2330
        %v2332 = vpop.xlane.xlu0 %2331
        %v2333 = vrcp.pop %v2329
        %v2334 = vmul.f32 %v2324, %v2333
        %v2335 = vrcp.pop %v2332
        %v2336 = vmul.f32 %v2326, %v2335
        %v2337 = vpack.c.bf16 %v2336, %v2334
        %v2338 = vpack.c.bf16 %v1707, %v1703
        %v2340 = vsel %vm1904, %v2337, 0
        %2342 = vmatprep.subr.bf16.mxu0 0
        %2343 = vmatpush1.bf16.msra.mxu0 %v2338
        %2344 = vmatprep.subr.bf16.mxu0 0
        %2345 = vmatpush1.bf16.msra.mxu0 0
        %2346 = vmatprep.subr.bf16.mxu0 0
        %2347 = vmatpush1.bf16.msra.mxu0 0
        %2348 = vmatprep.subr.bf16.mxu0 0
        %2349 = vmatpush1.bf16.msra.mxu0 0
        %2350 = vmatprep.subr.bf16.mxu0 0
        %2351 = vmatpush1.bf16.msra.mxu0 0
        %2352 = vmatprep.subr.bf16.mxu0 0
        %2353 = vmatpush1.bf16.msra.mxu0 0
        %2354 = vmatprep.subr.bf16.mxu0 0
        %2355 = vmatpush1.bf16.msra.mxu0 0
        %2356 = vmatprep.subr.bf16.mxu0 0
        %2357 = vmatpush1.bf16.msra.mxu0 0
        %2358 = vmatprep.subr.bf16.mxu0 0
        %2359 = vmatpush1.bf16.msra.mxu0 0
        %2360 = vmatprep.subr.bf16.mxu0 0
        %2361 = vmatpush1.bf16.msra.mxu0 0
        %2362 = vmatprep.subr.bf16.mxu0 0
        %2363 = vmatpush1.bf16.msra.mxu0 0
        %2364 = vmatprep.subr.bf16.mxu0 0
        %2365 = vmatpush1.bf16.msra.mxu0 0
        %2366 = vmatprep.subr.bf16.mxu0 0
        %2367 = vmatpush1.bf16.msra.mxu0 0
        %2368 = vmatprep.subr.bf16.mxu0 0
        %2369 = vmatpush1.bf16.msra.mxu0 0
        %2370 = vmatprep.subr.bf16.mxu0 0
        %2371 = vmatpush1.bf16.msra.mxu0 0
        %2372 = vmatprep.subr.bf16.mxu0 0
        %2373 = vmatpush1.bf16.msra.mxu0 0
        %2374 = vmatprep.mubr.bf16.mxu0 0
        %2375 = vmatmul.mubr.bf16.gmra.mrb[0].mxu0 %v2340
        %v2376 = vpop.f32.mrb[0].mxu0
        %v2377 = vadd.f32 0.0, %v2376
        %v2378 = vpop.f32.mrb[0].mxu0
        %v2379 = vpop.f32.mrb[0].mxu0
        %v2380 = vadd.f32 0.0, %v2379
        %v2381 = vpop.f32.mrb[0].mxu0
        %2382 = vdwg.mxu0
        %v2383 = vpack.c.bf16 %v2380, %v2377
        %v2400 = vunpack.c.l.b16 %v1793
        %v2401 = vunpack.c.l.b16 %v1794
        %v2402 = vunpack.c.l.b16 %v1795
        %v2403 = vunpack.c.l.b16 %v1796
        %v2404 = vunpack.c.l.b16 %v1797
        %v2405 = vunpack.c.l.b16 %v1798
        %v2406 = vunpack.c.l.b16 %v1799
        %v2407 = vunpack.c.l.b16 %v1800
        %v2408 = vunpack.c.l.b16 %v1801
        %v2409 = vunpack.c.l.b16 %v1802
        %v2410 = vunpack.c.l.b16 %v1803
        %v2411 = vunpack.c.l.b16 %v1804
        %v2412 = vunpack.c.l.b16 %v1805
        %v2413 = vunpack.c.l.b16 %v1806
        %v2414 = vunpack.c.l.b16 %v1807
        %v2415 = vunpack.c.l.b16 %v1808
        %v2416 = vpack.c.b16 %v2401, %v2400
        %v2417 = vpack.c.b16 %v2403, %v2402
        %v2418 = vpack.c.b16 %v2405, %v2404
        %v2419 = vpack.c.b16 %v2407, %v2406
        %v2420 = vpack.c.b16 %v2409, %v2408
        %v2421 = vpack.c.b16 %v2411, %v2410
        %v2422 = vpack.c.b16 %v2413, %v2412
        %v2423 = vpack.c.b16 %v2415, %v2414
        %2432 = vmatprep.subr.bf16.mxu0 0
        %2433 = vmatpush1.bf16.msra.mxu0 %v2416
        %2434 = vmatprep.subr.bf16.mxu0 0
        %2435 = vmatpush1.bf16.msra.mxu0 %v2417
        %2436 = vmatprep.subr.bf16.mxu0 0
        %2437 = vmatpush1.bf16.msra.mxu0 %v2418
        %2438 = vmatprep.subr.bf16.mxu0 0
        %2439 = vmatpush1.bf16.msra.mxu0 %v2419
        %2440 = vmatprep.subr.bf16.mxu0 0
        %2441 = vmatpush1.bf16.msra.mxu0 %v2420
        %2442 = vmatprep.subr.bf16.mxu0 0
        %2443 = vmatpush1.bf16.msra.mxu0 %v2421
        %2444 = vmatprep.subr.bf16.mxu0 0
        %2445 = vmatpush1.bf16.msra.mxu0 %v2422
        %2446 = vmatprep.subr.bf16.mxu0 0
        %2447 = vmatpush1.bf16.msra.mxu0 %v2423
        %2448 = vmatprep.subr.bf16.mxu0 0
        %2449 = vmatpush1.bf16.msra.mxu0 0
        %2450 = vmatprep.subr.bf16.mxu0 0
        %2451 = vmatpush1.bf16.msra.mxu0 0
        %2452 = vmatprep.subr.bf16.mxu0 0
        %2453 = vmatpush1.bf16.msra.mxu0 0
        %2454 = vmatprep.subr.bf16.mxu0 0
        %2455 = vmatpush1.bf16.msra.mxu0 0
        %2456 = vmatprep.subr.bf16.mxu0 0
        %2457 = vmatpush1.bf16.msra.mxu0 0
        %2458 = vmatprep.subr.bf16.mxu0 0
        %2459 = vmatpush1.bf16.msra.mxu0 0
        %2460 = vmatprep.subr.bf16.mxu0 0
        %2461 = vmatpush1.bf16.msra.mxu0 0
        %2462 = vmatprep.subr.bf16.mxu0 0
        %2463 = vmatpush1.bf16.msra.mxu0 0
        %2464 = vmatprep.mubr.bf16.mxu0 0
        %2465 = vmatmul.mubr.bf16.gmra.mrb[0].mxu0 %v2383
        %v2466 = vpop.f32.mrb[0].mxu0
        %v2467 = vadd.f32 0.0, %v2466
        %v2468 = vpop.f32.mrb[0].mxu0
        %v2469 = vpop.f32.mrb[0].mxu0
        %v2470 = vadd.f32 0.0, %v2469
        %v2471 = vpop.f32.mrb[0].mxu0
        %2472 = vdwg.mxu0
        %v2473 = vadd.f32 %v2262, %v2467
        %v2474 = vadd.f32 %v2265, %v2470
        %v2475 = vpack.c.bf16 %v1451, %v1447
        %v2476 = vpack.c.bf16 %v1580, %v1576
        %2477 = vmatprep.subr.bf16.mxu0 0
        %2478 = vmatpush1.bf16.xpose.msra.mxu0 %v2476
        %2479 = vmatprep.subr.bf16.mxu0 0
        %2480 = vmatpush1.bf16.xpose.msra.mxu0 0
        %2481 = vmatprep.subr.bf16.mxu0 0
        %2482 = vmatpush1.bf16.xpose.msra.mxu0 0
        %2483 = vmatprep.subr.bf16.mxu0 0
        %2484 = vmatpush1.bf16.xpose.msra.mxu0 0
        %2485 = vmatprep.subr.bf16.mxu0 0
        %2486 = vmatpush1.bf16.xpose.msra.mxu0 0
        %2487 = vmatprep.subr.bf16.mxu0 0
        %2488 = vmatpush1.bf16.xpose.msra.mxu0 0
        %2489 = vmatprep.subr.bf16.mxu0 0
        %2490 = vmatpush1.bf16.xpose.msra.mxu0 0
        %2491 = vmatprep.subr.bf16.mxu0 0
        %2492 = vmatpush1.bf16.xpose.msra.mxu0 0
        %2493 = vmatprep.subr.bf16.mxu0 0
        %2494 = vmatpush1.bf16.xpose.msra.mxu0 0
        %2495 = vmatprep.subr.bf16.mxu0 0
        %2496 = vmatpush1.bf16.xpose.msra.mxu0 0
        %2497 = vmatprep.subr.bf16.mxu0 0
        %2498 = vmatpush1.bf16.xpose.msra.mxu0 0
        %2499 = vmatprep.subr.bf16.mxu0 0
        %2500 = vmatpush1.bf16.xpose.msra.mxu0 0
        %2501 = vmatprep.subr.bf16.mxu0 0
        %2502 = vmatpush1.bf16.xpose.msra.mxu0 0
        %2503 = vmatprep.subr.bf16.mxu0 0
        %2504 = vmatpush1.bf16.xpose.msra.mxu0 0
        %2505 = vmatprep.subr.bf16.mxu0 0
        %2506 = vmatpush1.bf16.xpose.msra.mxu0 0
        %2507 = vmatprep.subr.bf16.mxu0 0
        %2508 = vmatpush1.bf16.xpose.msra.mxu0 0
        %2509 = vmatprep.mubr.bf16.mxu0 0
        %2510 = vmatmul.mubr.bf16.gmra.mrb[0].mxu0 %v2475
        %v2511 = vpop.f32.mrb[0].mxu0
        %v2512 = vadd.f32 0.0, %v2511
        %v2513 = vpop.f32.mrb[0].mxu0
        %v2514 = vpop.f32.mrb[0].mxu0
        %v2515 = vadd.f32 0.0, %v2514
        %v2516 = vpop.f32.mrb[0].mxu0
        %2517 = vdwg.mxu0
        %v2518 = vmul.f32 %v2512, 0.2182179
        %v2519 = vmul.f32 %v2515, 0.2182179
        %v2520 = vsel %vm1759, %v2518, -inf
        %v2521 = vsel %vm1760, %v2519, -inf
        %v2522 = vsel %vm1904, %v2520, -inf
        %2523 = vmax.xlane.f32.xlu0 %v2522
        %v2524 = vpop.xlane.xlu0 %2523
        %v2525 = vsel %vm1904, %v2521, -inf
        %2526 = vmax.xlane.f32.xlu0 %v2525
        %v2527 = vpop.xlane.xlu0 %2526
        %v2528 = vsub.f32 %v2520, %v2524
        %v2529 = vsub.f32 %v2521, %v2527
        %v2530 = vmul.f32 %v2528, 1.442695
        %v2531 = vpow.pop %v2530
        %v2532 = vmul.f32 %v2529, 1.442695
        %v2533 = vpow.pop %v2532
        %v2534 = vsel %vm1904, %v2531, 0.0
        %2535 = vadd.xlane.f32.xlu0 %v2534
        %v2536 = vpop.xlane.xlu0 %2535
        %v2537 = vsel %vm1904, %v2533, 0.0
        %2538 = vadd.xlane.f32.xlu0 %v2537
        %v2539 = vpop.xlane.xlu0 %2538
        %v2540 = vrcp.pop %v2536
        %v2541 = vmul.f32 %v2531, %v2540
        %v2542 = vrcp.pop %v2539
        %v2543 = vmul.f32 %v2533, %v2542
        %v2544 = vpack.c.bf16 %v2543, %v2541
        %v2545 = vpack.c.bf16 %v1709, %v1705
        %v2547 = vsel %vm1904, %v2544, 0
        %2549 = vmatprep.subr.bf16.mxu0 0
        %2550 = vmatpush1.bf16.msra.mxu0 %v2545
        %2551 = vmatprep.subr.bf16.mxu0 0
        %2552 = vmatpush1.bf16.msra.mxu0 0
        %2553 = vmatprep.subr.bf16.mxu0 0
        %2554 = vmatpush1.bf16.msra.mxu0 0
        %2555 = vmatprep.subr.bf16.mxu0 0
        %2556 = vmatpush1.bf16.msra.mxu0 0
        %2557 = vmatprep.subr.bf16.mxu0 0
        %2558 = vmatpush1.bf16.msra.mxu0 0
        %2559 = vmatprep.subr.bf16.mxu0 0
        %2560 = vmatpush1.bf16.msra.mxu0 0
        %2561 = vmatprep.subr.bf16.mxu0 0
        %2562 = vmatpush1.bf16.msra.mxu0 0
        %2563 = vmatprep.subr.bf16.mxu0 0
        %2564 = vmatpush1.bf16.msra.mxu0 0
        %2565 = vmatprep.subr.bf16.mxu0 0
        %2566 = vmatpush1.bf16.msra.mxu0 0
        %2567 = vmatprep.subr.bf16.mxu0 0
        %2568 = vmatpush1.bf16.msra.mxu0 0
        %2569 = vmatprep.subr.bf16.mxu0 0
        %2570 = vmatpush1.bf16.msra.mxu0 0
        %2571 = vmatprep.subr.bf16.mxu0 0
        %2572 = vmatpush1.bf16.msra.mxu0 0
        %2573 = vmatprep.subr.bf16.mxu0 0
        %2574 = vmatpush1.bf16.msra.mxu0 0
        %2575 = vmatprep.subr.bf16.mxu0 0
        %2576 = vmatpush1.bf16.msra.mxu0 0
        %2577 = vmatprep.subr.bf16.mxu0 0
        %2578 = vmatpush1.bf16.msra.mxu0 0
        %2579 = vmatprep.subr.bf16.mxu0 0
        %2580 = vmatpush1.bf16.msra.mxu0 0
        %2581 = vmatprep.mubr.bf16.mxu0 0
        %2582 = vmatmul.mubr.bf16.gmra.mrb[0].mxu0 %v2547
        %v2583 = vpop.f32.mrb[0].mxu0
        %v2584 = vadd.f32 0.0, %v2583
        %v2585 = vpop.f32.mrb[0].mxu0
        %v2586 = vpop.f32.mrb[0].mxu0
        %v2587 = vadd.f32 0.0, %v2586
        %v2588 = vpop.f32.mrb[0].mxu0
        %2589 = vdwg.mxu0
        %v2590 = vpack.c.bf16 %v2587, %v2584
        %v2607 = vunpack.c.l.b16 %v1809
        %v2608 = vunpack.c.l.b16 %v1810
        %v2609 = vunpack.c.l.b16 %v1811
        %v2610 = vunpack.c.l.b16 %v1812
        %v2611 = vunpack.c.l.b16 %v1813
        %v2612 = vunpack.c.l.b16 %v1814
        %v2613 = vunpack.c.l.b16 %v1815
        %v2614 = vunpack.c.l.b16 %v1816
        %v2615 = vunpack.c.l.b16 %v1817
        %v2616 = vunpack.c.l.b16 %v1818
        %v2617 = vunpack.c.l.b16 %v1819
        %v2618 = vunpack.c.l.b16 %v1820
        %v2619 = vunpack.c.l.b16 %v1821
        %v2620 = vunpack.c.l.b16 %v1822
        %v2621 = vunpack.c.l.b16 %v1823
        %v2622 = vunpack.c.l.b16 %v1824
        %v2623 = vpack.c.b16 %v2608, %v2607
        %v2624 = vpack.c.b16 %v2610, %v2609
        %v2625 = vpack.c.b16 %v2612, %v2611
        %v2626 = vpack.c.b16 %v2614, %v2613
        %v2627 = vpack.c.b16 %v2616, %v2615
        %v2628 = vpack.c.b16 %v2618, %v2617
        %v2629 = vpack.c.b16 %v2620, %v2619
        %v2630 = vpack.c.b16 %v2622, %v2621
        %2639 = vmatprep.subr.bf16.mxu0 0
        %2640 = vmatpush1.bf16.msra.mxu0 %v2623
        %2641 = vmatprep.subr.bf16.mxu0 0
        %2642 = vmatpush1.bf16.msra.mxu0 %v2624
        %2643 = vmatprep.subr.bf16.mxu0 0
        %2644 = vmatpush1.bf16.msra.mxu0 %v2625
        %2645 = vmatprep.subr.bf16.mxu0 0
        %2646 = vmatpush1.bf16.msra.mxu0 %v2626
        %2647 = vmatprep.subr.bf16.mxu0 0
        %2648 = vmatpush1.bf16.msra.mxu0 %v2627
        %2649 = vmatprep.subr.bf16.mxu0 0
        %2650 = vmatpush1.bf16.msra.mxu0 %v2628
        %2651 = vmatprep.subr.bf16.mxu0 0
        %2652 = vmatpush1.bf16.msra.mxu0 %v2629
        %2653 = vmatprep.subr.bf16.mxu0 0
        %2654 = vmatpush1.bf16.msra.mxu0 %v2630
        %2655 = vmatprep.subr.bf16.mxu0 0
        %2656 = vmatpush1.bf16.msra.mxu0 0
        %2657 = vmatprep.subr.bf16.mxu0 0
        %2658 = vmatpush1.bf16.msra.mxu0 0
        %2659 = vmatprep.subr.bf16.mxu0 0
        %2660 = vmatpush1.bf16.msra.mxu0 0
        %2661 = vmatprep.subr.bf16.mxu0 0
        %2662 = vmatpush1.bf16.msra.mxu0 0
        %2663 = vmatprep.subr.bf16.mxu0 0
        %2664 = vmatpush1.bf16.msra.mxu0 0
        %2665 = vmatprep.subr.bf16.mxu0 0
        %2666 = vmatpush1.bf16.msra.mxu0 0
        %2667 = vmatprep.subr.bf16.mxu0 0
        %2668 = vmatpush1.bf16.msra.mxu0 0
        %2669 = vmatprep.subr.bf16.mxu0 0
        %2670 = vmatpush1.bf16.msra.mxu0 0
        %2671 = vmatprep.mubr.bf16.mxu0 0
        %2672 = vmatmul.mubr.bf16.gmra.mrb[0].mxu0 %v2590
        %v2673 = vpop.f32.mrb[0].mxu0
        %v2674 = vadd.f32 0.0, %v2673
        %v2675 = vpop.f32.mrb[0].mxu0
        %v2676 = vpop.f32.mrb[0].mxu0
        %v2677 = vadd.f32 0.0, %v2676
        %v2678 = vpop.f32.mrb[0].mxu0
        %2679 = vdwg.mxu0
        %v2680 = vadd.f32 %v2473, %v2674
        %v2681 = vadd.f32 %v2474, %v2677
        %v2682 = vpack.c.bf16 %v1492, %v1488
        %v2683 = vpack.c.bf16 %v1621, %v1617
        %2684 = vmatprep.subr.bf16.mxu0 0
        %2685 = vmatpush1.bf16.xpose.msra.mxu0 %v2683
        %2686 = vmatprep.subr.bf16.mxu0 0
        %2687 = vmatpush1.bf16.xpose.msra.mxu0 0
        %2688 = vmatprep.subr.bf16.mxu0 0
        %2689 = vmatpush1.bf16.xpose.msra.mxu0 0
        %2690 = vmatprep.subr.bf16.mxu0 0
        %2691 = vmatpush1.bf16.xpose.msra.mxu0 0
        %2692 = vmatprep.subr.bf16.mxu0 0
        %2693 = vmatpush1.bf16.xpose.msra.mxu0 0
        %2694 = vmatprep.subr.bf16.mxu0 0
        %2695 = vmatpush1.bf16.xpose.msra.mxu0 0
        %2696 = vmatprep.subr.bf16.mxu0 0
        %2697 = vmatpush1.bf16.xpose.msra.mxu0 0
        %2698 = vmatprep.subr.bf16.mxu0 0
        %2699 = vmatpush1.bf16.xpose.msra.mxu0 0
        %2700 = vmatprep.subr.bf16.mxu0 0
        %2701 = vmatpush1.bf16.xpose.msra.mxu0 0
        %2702 = vmatprep.subr.bf16.mxu0 0
        %2703 = vmatpush1.bf16.xpose.msra.mxu0 0
        %2704 = vmatprep.subr.bf16.mxu0 0
        %2705 = vmatpush1.bf16.xpose.msra.mxu0 0
        %2706 = vmatprep.subr.bf16.mxu0 0
        %2707 = vmatpush1.bf16.xpose.msra.mxu0 0
        %2708 = vmatprep.subr.bf16.mxu0 0
        %2709 = vmatpush1.bf16.xpose.msra.mxu0 0
        %2710 = vmatprep.subr.bf16.mxu0 0
        %2711 = vmatpush1.bf16.xpose.msra.mxu0 0
        %2712 = vmatprep.subr.bf16.mxu0 0
        %2713 = vmatpush1.bf16.xpose.msra.mxu0 0
        %2714 = vmatprep.subr.bf16.mxu0 0
        %2715 = vmatpush1.bf16.xpose.msra.mxu0 0
        %2716 = vmatprep.mubr.bf16.mxu0 0
        %2717 = vmatmul.mubr.bf16.gmra.mrb[0].mxu0 %v2682
        %v2718 = vpop.f32.mrb[0].mxu0
        %v2719 = vadd.f32 0.0, %v2718
        %v2720 = vpop.f32.mrb[0].mxu0
        %v2721 = vpop.f32.mrb[0].mxu0
        %v2722 = vadd.f32 0.0, %v2721
        %v2723 = vpop.f32.mrb[0].mxu0
        %2724 = vdwg.mxu0
        %v2725 = vmul.f32 %v2719, 0.2182179
        %v2726 = vmul.f32 %v2722, 0.2182179
        %v2727 = vsel %vm1759, %v2725, -inf
        %v2728 = vsel %vm1760, %v2726, -inf
        %v2729 = vsel %vm1904, %v2727, -inf
        %2730 = vmax.xlane.f32.xlu0 %v2729
        %v2731 = vpop.xlane.xlu0 %2730
        %v2732 = vsel %vm1904, %v2728, -inf
        %2733 = vmax.xlane.f32.xlu0 %v2732
        %v2734 = vpop.xlane.xlu0 %2733
        %v2735 = vsub.f32 %v2727, %v2731
        %v2736 = vsub.f32 %v2728, %v2734
        %v2737 = vmul.f32 %v2735, 1.442695
        %v2738 = vpow.pop %v2737
        %v2739 = vmul.f32 %v2736, 1.442695
        %v2740 = vpow.pop %v2739
        %v2741 = vsel %vm1904, %v2738, 0.0
        %2742 = vadd.xlane.f32.xlu0 %v2741
        %v2743 = vpop.xlane.xlu0 %2742
        %v2744 = vsel %vm1904, %v2740, 0.0
        %2745 = vadd.xlane.f32.xlu0 %v2744
        %v2746 = vpop.xlane.xlu0 %2745
        %v2747 = vrcp.pop %v2743
        %v2748 = vmul.f32 %v2738, %v2747
        %v2749 = vrcp.pop %v2746
        %v2750 = vmul.f32 %v2740, %v2749
        %v2751 = vpack.c.bf16 %v2750, %v2748
        %v2752 = vpack.c.bf16 %v1750, %v1746
        %v2754 = vsel %vm1904, %v2751, 0
        %2756 = vmatprep.subr.bf16.mxu0 0
        %2757 = vmatpush1.bf16.msra.mxu0 %v2752
        %2758 = vmatprep.subr.bf16.mxu0 0
        %2759 = vmatpush1.bf16.msra.mxu0 0
        %2760 = vmatprep.subr.bf16.mxu0 0
        %2761 = vmatpush1.bf16.msra.mxu0 0
        %2762 = vmatprep.subr.bf16.mxu0 0
        %2763 = vmatpush1.bf16.msra.mxu0 0
        %2764 = vmatprep.subr.bf16.mxu0 0
        %2765 = vmatpush1.bf16.msra.mxu0 0
        %2766 = vmatprep.subr.bf16.mxu0 0
        %2767 = vmatpush1.bf16.msra.mxu0 0
        %2768 = vmatprep.subr.bf16.mxu0 0
        %2769 = vmatpush1.bf16.msra.mxu0 0
        %2770 = vmatprep.subr.bf16.mxu0 0
        %2771 = vmatpush1.bf16.msra.mxu0 0
        %2772 = vmatprep.subr.bf16.mxu0 0
        %2773 = vmatpush1.bf16.msra.mxu0 0
        %2774 = vmatprep.subr.bf16.mxu0 0
        %2775 = vmatpush1.bf16.msra.mxu0 0
        %2776 = vmatprep.subr.bf16.mxu0 0
        %2777 = vmatpush1.bf16.msra.mxu0 0
        %2778 = vmatprep.subr.bf16.mxu0 0
        %2779 = vmatpush1.bf16.msra.mxu0 0
        %2780 = vmatprep.subr.bf16.mxu0 0
        %2781 = vmatpush1.bf16.msra.mxu0 0
        %2782 = vmatprep.subr.bf16.mxu0 0
        %2783 = vmatpush1.bf16.msra.mxu0 0
        %2784 = vmatprep.subr.bf16.mxu0 0
        %2785 = vmatpush1.bf16.msra.mxu0 0
        %2786 = vmatprep.subr.bf16.mxu0 0
        %2787 = vmatpush1.bf16.msra.mxu0 0
        %2788 = vmatprep.mubr.bf16.mxu0 0
        %2789 = vmatmul.mubr.bf16.gmra.mrb[0].mxu0 %v2754
        %v2790 = vpop.f32.mrb[0].mxu0
        %v2791 = vadd.f32 0.0, %v2790
        %v2792 = vpop.f32.mrb[0].mxu0
        %v2793 = vpop.f32.mrb[0].mxu0
        %v2794 = vadd.f32 0.0, %v2793
        %v2795 = vpop.f32.mrb[0].mxu0
        %2796 = vdwg.mxu0
        %v2797 = vpack.c.bf16 %v2794, %v2791
        %v2814 = vunpack.c.l.b16 %v1825
        %v2815 = vunpack.c.l.b16 %v1826
        %v2816 = vunpack.c.l.b16 %v1827
        %v2817 = vunpack.c.l.b16 %v1828
        %v2818 = vunpack.c.l.b16 %v1829
        %v2819 = vunpack.c.l.b16 %v1830
        %v2820 = vunpack.c.l.b16 %v1831
        %v2821 = vunpack.c.l.b16 %v1832
        %v2822 = vunpack.c.l.b16 %v1833
        %v2823 = vunpack.c.l.b16 %v1834
        %v2824 = vunpack.c.l.b16 %v1835
        %v2825 = vunpack.c.l.b16 %v1836
        %v2826 = vunpack.c.l.b16 %v1837
        %v2827 = vunpack.c.l.b16 %v1838
        %v2828 = vunpack.c.l.b16 %v1839
        %v2829 = vunpack.c.l.b16 %v1840
        %v2830 = vpack.c.b16 %v2815, %v2814
        %v2831 = vpack.c.b16 %v2817, %v2816
        %v2832 = vpack.c.b16 %v2819, %v2818
        %v2833 = vpack.c.b16 %v2821, %v2820
        %v2834 = vpack.c.b16 %v2823, %v2822
        %v2835 = vpack.c.b16 %v2825, %v2824
        %v2836 = vpack.c.b16 %v2827, %v2826
        %v2837 = vpack.c.b16 %v2829, %v2828
        %2846 = vmatprep.subr.bf16.mxu0 0
        %2847 = vmatpush1.bf16.msra.mxu0 %v2830
        %2848 = vmatprep.subr.bf16.mxu0 0
        %2849 = vmatpush1.bf16.msra.mxu0 %v2831
        %2850 = vmatprep.subr.bf16.mxu0 0
        %2851 = vmatpush1.bf16.msra.mxu0 %v2832
        %2852 = vmatprep.subr.bf16.mxu0 0
        %2853 = vmatpush1.bf16.msra.mxu0 %v2833
        %2854 = vmatprep.subr.bf16.mxu0 0
        %2855 = vmatpush1.bf16.msra.mxu0 %v2834
        %2856 = vmatprep.subr.bf16.mxu0 0
        %2857 = vmatpush1.bf16.msra.mxu0 %v2835
        %2858 = vmatprep.subr.bf16.mxu0 0
        %2859 = vmatpush1.bf16.msra.mxu0 %v2836
        %2860 = vmatprep.subr.bf16.mxu0 0
        %2861 = vmatpush1.bf16.msra.mxu0 %v2837
        %2862 = vmatprep.subr.bf16.mxu0 0
        %2863 = vmatpush1.bf16.msra.mxu0 0
        %2864 = vmatprep.subr.bf16.mxu0 0
        %2865 = vmatpush1.bf16.msra.mxu0 0
        %2866 = vmatprep.subr.bf16.mxu0 0
        %2867 = vmatpush1.bf16.msra.mxu0 0
        %2868 = vmatprep.subr.bf16.mxu0 0
        %2869 = vmatpush1.bf16.msra.mxu0 0
        %2870 = vmatprep.subr.bf16.mxu0 0
        %2871 = vmatpush1.bf16.msra.mxu0 0
        %2872 = vmatprep.subr.bf16.mxu0 0
        %2873 = vmatpush1.bf16.msra.mxu0 0
        %2874 = vmatprep.subr.bf16.mxu0 0
        %2875 = vmatpush1.bf16.msra.mxu0 0
        %2876 = vmatprep.subr.bf16.mxu0 0
        %2877 = vmatpush1.bf16.msra.mxu0 0
        %2878 = vmatprep.mubr.bf16.mxu0 0
        %2879 = vmatmul.mubr.bf16.gmra.mrb[0].mxu0 %v2797
        %v2880 = vpop.f32.mrb[0].mxu0
        %v2881 = vadd.f32 0.0, %v2880
        %v2882 = vpop.f32.mrb[0].mxu0
        %v2883 = vpop.f32.mrb[0].mxu0
        %v2884 = vadd.f32 0.0, %v2883
        %v2885 = vpop.f32.mrb[0].mxu0
        %2886 = vdwg.mxu0
        %v2887 = vadd.f32 %v2680, %v2881
        %v2888 = vadd.f32 %v2681, %v2884
        %v2889 = vpack.c.bf16 %v1494, %v1490
        %v2890 = vpack.c.bf16 %v1623, %v1619
        %2891 = vmatprep.subr.bf16.mxu0 0
        %2892 = vmatpush1.bf16.xpose.msra.mxu0 %v2890
        %2893 = vmatprep.subr.bf16.mxu0 0
        %2894 = vmatpush1.bf16.xpose.msra.mxu0 0
        %2895 = vmatprep.subr.bf16.mxu0 0
        %2896 = vmatpush1.bf16.xpose.msra.mxu0 0
        %2897 = vmatprep.subr.bf16.mxu0 0
        %2898 = vmatpush1.bf16.xpose.msra.mxu0 0
        %2899 = vmatprep.subr.bf16.mxu0 0
        %2900 = vmatpush1.bf16.xpose.msra.mxu0 0
        %2901 = vmatprep.subr.bf16.mxu0 0
        %2902 = vmatpush1.bf16.xpose.msra.mxu0 0
        %2903 = vmatprep.subr.bf16.mxu0 0
        %2904 = vmatpush1.bf16.xpose.msra.mxu0 0
        %2905 = vmatprep.subr.bf16.mxu0 0
        %2906 = vmatpush1.bf16.xpose.msra.mxu0 0
        %2907 = vmatprep.subr.bf16.mxu0 0
        %2908 = vmatpush1.bf16.xpose.msra.mxu0 0
        %2909 = vmatprep.subr.bf16.mxu0 0
        %2910 = vmatpush1.bf16.xpose.msra.mxu0 0
        %2911 = vmatprep.subr.bf16.mxu0 0
        %2912 = vmatpush1.bf16.xpose.msra.mxu0 0
        %2913 = vmatprep.subr.bf16.mxu0 0
        %2914 = vmatpush1.bf16.xpose.msra.mxu0 0
        %2915 = vmatprep.subr.bf16.mxu0 0
        %2916 = vmatpush1.bf16.xpose.msra.mxu0 0
        %2917 = vmatprep.subr.bf16.mxu0 0
        %2918 = vmatpush1.bf16.xpose.msra.mxu0 0
        %2919 = vmatprep.subr.bf16.mxu0 0
        %2920 = vmatpush1.bf16.xpose.msra.mxu0 0
        %2921 = vmatprep.subr.bf16.mxu0 0
        %2922 = vmatpush1.bf16.xpose.msra.mxu0 0
        %2923 = vmatprep.mubr.bf16.mxu0 0
        %2924 = vmatmul.mubr.bf16.gmra.mrb[0].mxu0 %v2889
        %v2925 = vpop.f32.mrb[0].mxu0
        %v2926 = vadd.f32 0.0, %v2925
        %v2927 = vpop.f32.mrb[0].mxu0
        %v2928 = vpop.f32.mrb[0].mxu0
        %v2929 = vadd.f32 0.0, %v2928
        %v2930 = vpop.f32.mrb[0].mxu0
        %2931 = vdwg.mxu0
        %v2932 = vmul.f32 %v2926, 0.2182179
        %v2933 = vmul.f32 %v2929, 0.2182179
        %v2934 = vsel %vm1759, %v2932, -inf
        %v2935 = vsel %vm1760, %v2933, -inf
        %v2936 = vsel %vm1904, %v2934, -inf
        %2937 = vmax.xlane.f32.xlu0 %v2936
        %v2938 = vpop.xlane.xlu0 %2937
        %v2939 = vsel %vm1904, %v2935, -inf
        %2940 = vmax.xlane.f32.xlu0 %v2939
        %v2941 = vpop.xlane.xlu0 %2940
        %v2942 = vsub.f32 %v2934, %v2938
        %v2943 = vsub.f32 %v2935, %v2941
        %v2944 = vmul.f32 %v2942, 1.442695
        %v2945 = vpow.pop %v2944
        %v2946 = vmul.f32 %v2943, 1.442695
        %v2947 = vpow.pop %v2946
        %v2948 = vsel %vm1904, %v2945, 0.0
        %2949 = vadd.xlane.f32.xlu0 %v2948
        %v2950 = vpop.xlane.xlu0 %2949
        %v2951 = vsel %vm1904, %v2947, 0.0
        %2952 = vadd.xlane.f32.xlu0 %v2951
        %v2953 = vpop.xlane.xlu0 %2952
        %v2954 = vrcp.pop %v2950
        %v2955 = vmul.f32 %v2945, %v2954
        %v2956 = vrcp.pop %v2953
        %v2957 = vmul.f32 %v2947, %v2956
        %v2958 = vpack.c.bf16 %v2957, %v2955
        %v2959 = vpack.c.bf16 %v1752, %v1748
        %v2961 = vsel %vm1904, %v2958, 0
        %2963 = vmatprep.subr.bf16.mxu0 0
        %2964 = vmatpush1.bf16.msra.mxu0 %v2959
        %2965 = vmatprep.subr.bf16.mxu0 0
        %2966 = vmatpush1.bf16.msra.mxu0 0
        %2967 = vmatprep.subr.bf16.mxu0 0
        %2968 = vmatpush1.bf16.msra.mxu0 0
        %2969 = vmatprep.subr.bf16.mxu0 0
        %2970 = vmatpush1.bf16.msra.mxu0 0
        %2971 = vmatprep.subr.bf16.mxu0 0
        %2972 = vmatpush1.bf16.msra.mxu0 0
        %2973 = vmatprep.subr.bf16.mxu0 0
        %2974 = vmatpush1.bf16.msra.mxu0 0
        %2975 = vmatprep.subr.bf16.mxu0 0
        %2976 = vmatpush1.bf16.msra.mxu0 0
        %2977 = vmatprep.subr.bf16.mxu0 0
        %2978 = vmatpush1.bf16.msra.mxu0 0
        %2979 = vmatprep.subr.bf16.mxu0 0
        %2980 = vmatpush1.bf16.msra.mxu0 0
        %2981 = vmatprep.subr.bf16.mxu0 0
        %2982 = vmatpush1.bf16.msra.mxu0 0
        %2983 = vmatprep.subr.bf16.mxu0 0
        %2984 = vmatpush1.bf16.msra.mxu0 0
        %2985 = vmatprep.subr.bf16.mxu0 0
        %2986 = vmatpush1.bf16.msra.mxu0 0
        %2987 = vmatprep.subr.bf16.mxu0 0
        %2988 = vmatpush1.bf16.msra.mxu0 0
        %2989 = vmatprep.subr.bf16.mxu0 0
        %2990 = vmatpush1.bf16.msra.mxu0 0
        %2991 = vmatprep.subr.bf16.mxu0 0
        %2992 = vmatpush1.bf16.msra.mxu0 0
        %2993 = vmatprep.subr.bf16.mxu0 0
        %2994 = vmatpush1.bf16.msra.mxu0 0
        %2995 = vmatprep.mubr.bf16.mxu0 0
        %2996 = vmatmul.mubr.bf16.gmra.mrb[0].mxu0 %v2961
        %v2997 = vpop.f32.mrb[0].mxu0
        %v2998 = vadd.f32 0.0, %v2997
        %v2999 = vpop.f32.mrb[0].mxu0
        %v3000 = vpop.f32.mrb[0].mxu0
        %v3001 = vadd.f32 0.0, %v3000
        %v3002 = vpop.f32.mrb[0].mxu0
        %3003 = vdwg.mxu0
        %v3004 = vpack.c.bf16 %v3001, %v2998
        %v3021 = vunpack.c.l.b16 %v1841
        %v3022 = vunpack.c.l.b16 %v1842
        %v3023 = vunpack.c.l.b16 %v1843
        %v3024 = vunpack.c.l.b16 %v1844
        %v3025 = vunpack.c.l.b16 %v1845
        %v3026 = vunpack.c.l.b16 %v1846
        %v3027 = vunpack.c.l.b16 %v1847
        %v3028 = vunpack.c.l.b16 %v1848
        %v3029 = vunpack.c.l.b16 %v1849
        %v3030 = vunpack.c.l.b16 %v1850
        %v3031 = vunpack.c.l.b16 %v1851
        %v3032 = vunpack.c.l.b16 %v1852
        %v3033 = vunpack.c.l.b16 %v1853
        %v3034 = vunpack.c.l.b16 %v1854
        %v3035 = vunpack.c.l.b16 %v1855
        %v3036 = vunpack.c.l.b16 %v1856
        %v3037 = vpack.c.b16 %v3022, %v3021
        %v3038 = vpack.c.b16 %v3024, %v3023
        %v3039 = vpack.c.b16 %v3026, %v3025
        %v3040 = vpack.c.b16 %v3028, %v3027
        %v3041 = vpack.c.b16 %v3030, %v3029
        %v3042 = vpack.c.b16 %v3032, %v3031
        %v3043 = vpack.c.b16 %v3034, %v3033
        %v3044 = vpack.c.b16 %v3036, %v3035
        %3053 = vmatprep.subr.bf16.mxu0 0
        %3054 = vmatpush1.bf16.msra.mxu0 %v3037
        %3055 = vmatprep.subr.bf16.mxu0 0
        %3056 = vmatpush1.bf16.msra.mxu0 %v3038
        %3057 = vmatprep.subr.bf16.mxu0 0
        %3058 = vmatpush1.bf16.msra.mxu0 %v3039
        %3059 = vmatprep.subr.bf16.mxu0 0
        %3060 = vmatpush1.bf16.msra.mxu0 %v3040
        %3061 = vmatprep.subr.bf16.mxu0 0
        %3062 = vmatpush1.bf16.msra.mxu0 %v3041
        %3063 = vmatprep.subr.bf16.mxu0 0
        %3064 = vmatpush1.bf16.msra.mxu0 %v3042
        %3065 = vmatprep.subr.bf16.mxu0 0
        %3066 = vmatpush1.bf16.msra.mxu0 %v3043
        %3067 = vmatprep.subr.bf16.mxu0 0
        %3068 = vmatpush1.bf16.msra.mxu0 %v3044
        %3069 = vmatprep.subr.bf16.mxu0 0
        %3070 = vmatpush1.bf16.msra.mxu0 0
        %3071 = vmatprep.subr.bf16.mxu0 0
        %3072 = vmatpush1.bf16.msra.mxu0 0
        %3073 = vmatprep.subr.bf16.mxu0 0
        %3074 = vmatpush1.bf16.msra.mxu0 0
        %3075 = vmatprep.subr.bf16.mxu0 0
        %3076 = vmatpush1.bf16.msra.mxu0 0
        %3077 = vmatprep.subr.bf16.mxu0 0
        %3078 = vmatpush1.bf16.msra.mxu0 0
        %3079 = vmatprep.subr.bf16.mxu0 0
        %3080 = vmatpush1.bf16.msra.mxu0 0
        %3081 = vmatprep.subr.bf16.mxu0 0
        %3082 = vmatpush1.bf16.msra.mxu0 0
        %3083 = vmatprep.subr.bf16.mxu0 0
        %3084 = vmatpush1.bf16.msra.mxu0 0
        %3085 = vmatprep.mubr.bf16.mxu0 0
        %3086 = vmatmul.mubr.bf16.gmra.mrb[0].mxu0 %v3004
        %v3087 = vpop.f32.mrb[0].mxu0
        %v3088 = vadd.f32 0.0, %v3087
        %v3089 = vpop.f32.mrb[0].mxu0
        %v3090 = vpop.f32.mrb[0].mxu0
        %v3091 = vadd.f32 0.0, %v3090
        %v3092 = vpop.f32.mrb[0].mxu0
        %3093 = vdwg.mxu0
        %v3094 = vadd.f32 %v2887, %v3088
        %v3095 = vadd.f32 %v2888, %v3091
        %v3096 = vadd.f32 %v459, %v3094
        %v3097 = vadd.f32 %v460, %v3095
        %v3098 = vld [vmem:[%s5] sm:$0x1]
        %v3100 = vlaneseq
        %v3101 = vshrl.u32 %v3100, 7
        %v3102 = vsub.s32 0, %v3101
        %v3103 = vrot.slane %v3098, %v3102
        %v3105 = vadd.f32 %v3096, %v3103
        %v3106 = vadd.f32 %v3097, %v3103
        %v3107 = vld [vmem:[%s6] sm:$0x1]
        %v3108 = vld [vmem:[%s7] sm:$0x1]
        %3109 = vadd.xlane.f32.xlu0 %v3105
        %v3110 = vpop.xlane.xlu0 %3109
        %3111 = vadd.xlane.f32.xlu0 %v3106
        %v3112 = vpop.xlane.xlu0 %3111
        %v3113 = vmul.f32 %v3110, %v467
        %v3114 = vmul.f32 %v3112, %v467
        %v3115 = vsub.f32 %v3105, %v3113
        %v3116 = vsub.f32 %v3106, %v3114
        %v3117 = vmul.f32 %v3115, %v3115
        %v3118 = vmul.f32 %v3116, %v3116
        %3119 = vadd.xlane.f32.xlu0 %v3117
        %v3120 = vpop.xlane.xlu0 %3119
        %3121 = vadd.xlane.f32.xlu0 %v3118
        %v3122 = vpop.xlane.xlu0 %3121
        %v3123 = vmul.f32 %v3120, %v467
        %v3124 = vmul.f32 %v3122, %v467
        %v3125 = vadd.f32 %v3123, 1e-05
        %v3126 = vadd.f32 %v3124, 1e-05
        %v3127 = vrsqrt.pop %v3125
        %v3128 = vrsqrt.pop %v3126
        %v3129 = vmul.f32 %v3115, %v3127
        %v3130 = vmul.f32 %v3116, %v3128
        %v3132 = vlaneseq
        %v3133 = vshrl.u32 %v3132, 7
        %v3134 = vsub.s32 0, %v3133
        %v3135 = vrot.slane %v3107, %v3134
        %v3137 = vmul.f32 %v3129, %v3135
        %v3138 = vmul.f32 %v3130, %v3135
        %v3140 = vlaneseq
        %v3141 = vshrl.u32 %v3140, 7
        %v3142 = vsub.s32 0, %v3141
        %v3143 = vrot.slane %v3108, %v3142
        %v3145 = vadd.f32 %v3137, %v3143
        %v3146 = vadd.f32 %v3138, %v3143
        %v3147 = vpack.c.bf16 %v3146, %v3145
        %v3148 = vld [vmem:[#allocation4] sm:$0xff]
        %v3149 = vld [vmem:[#allocation4 + $0x8] sm:$0xff]
        %v3150 = vld [vmem:[#allocation4 + $0x10] sm:$0xff]
        %v3151 = vld [vmem:[#allocation4 + $0x18] sm:$0xff]
        %v3152 = vld [vmem:[#allocation4 + $0x20] sm:$0xff]
        %v3153 = vld [vmem:[#allocation4 + $0x28] sm:$0xff]
        %v3154 = vld [vmem:[#allocation4 + $0x30] sm:$0xff]
        %v3155 = vld [vmem:[#allocation4 + $0x38] sm:$0xff]
        %v3156 = vld [vmem:[#allocation4 + $0x40] sm:$0xff]
        %v3157 = vld [vmem:[#allocation4 + $0x48] sm:$0xff]
        %v3158 = vld [vmem:[#allocation4 + $0x50] sm:$0xff]
        %v3159 = vld [vmem:[#allocation4 + $0x58] sm:$0xff]
        %v3160 = vld [vmem:[#allocation4 + $0x60] sm:$0xff]
        %v3161 = vld [vmem:[#allocation4 + $0x68] sm:$0xff]
        %v3162 = vld [vmem:[#allocation4 + $0x70] sm:$0xff]
        %v3163 = vld [vmem:[#allocation4 + $0x78] sm:$0xff]
        %v3164 = vld [vmem:[#allocation4 + $0x80] sm:$0xff]
        %v3165 = vld [vmem:[#allocation4 + $0x88] sm:$0xff]
        %v3166 = vld [vmem:[#allocation4 + $0x90] sm:$0xff]
        %v3167 = vld [vmem:[#allocation4 + $0x98] sm:$0xff]
        %v3168 = vld [vmem:[#allocation4 + $0xa0] sm:$0xff]
        %v3169 = vld [vmem:[#allocation4 + $0xa8] sm:$0xff]
        %v3170 = vld [vmem:[#allocation4 + $0xb0] sm:$0xff]
        %v3171 = vld [vmem:[#allocation4 + $0xb8] sm:$0xff]
        %v3172 = vld [vmem:[#allocation4 + $0xc0] sm:$0xff]
        %v3173 = vld [vmem:[#allocation4 + $0xc8] sm:$0xff]
        %v3174 = vld [vmem:[#allocation4 + $0xd0] sm:$0xff]
        %v3175 = vld [vmem:[#allocation4 + $0xd8] sm:$0xff]
        %v3176 = vld [vmem:[#allocation4 + $0xe0] sm:$0xff]
        %v3177 = vld [vmem:[#allocation4 + $0xe8] sm:$0xff]
        %v3178 = vld [vmem:[#allocation4 + $0xf0] sm:$0xff]
        %v3179 = vld [vmem:[#allocation4 + $0xf8] sm:$0xff]
        %v3180 = vld [vmem:[%s9] sm:$0xf]
        %v3182 = vlaneseq
        %v3183 = vshrl.u32 %v3182, 7
        %v3184 = vsub.s32 0, %v3183
        %v3185 = vrot.slane %v3180, %v3184
        %v3186 = vlaneseq
        %v3187 = vshrl.u32 %v3186, 7
        %v3188 = vsub.s32 1, %v3187
        %v3189 = vrot.slane %v3180, %v3188
        %v3190 = vlaneseq
        %v3191 = vshrl.u32 %v3190, 7
        %v3192 = vsub.s32 2, %v3191
        %v3193 = vrot.slane %v3180, %v3192
        %v3194 = vlaneseq
        %v3195 = vshrl.u32 %v3194, 7
        %v3196 = vsub.s32 3, %v3195
        %v3197 = vrot.slane %v3180, %v3196
        %v3234 = vunpack.c.l.b16 %v3148
        %v3235 = vunpack.c.h.b16 %v3148
        %v3236 = vunpack.c.l.b16 %v3149
        %v3237 = vunpack.c.h.b16 %v3149
        %v3238 = vunpack.c.l.b16 %v3150
        %v3239 = vunpack.c.h.b16 %v3150
        %v3240 = vunpack.c.l.b16 %v3151
        %v3241 = vunpack.c.h.b16 %v3151
        %v3242 = vunpack.c.l.b16 %v3152
        %v3243 = vunpack.c.h.b16 %v3152
        %v3244 = vunpack.c.l.b16 %v3153
        %v3245 = vunpack.c.h.b16 %v3153
        %v3246 = vunpack.c.l.b16 %v3154
        %v3247 = vunpack.c.h.b16 %v3154
        %v3248 = vunpack.c.l.b16 %v3155
        %v3249 = vunpack.c.h.b16 %v3155
        %v3250 = vunpack.c.l.b16 %v3156
        %v3251 = vunpack.c.h.b16 %v3156
        %v3252 = vunpack.c.l.b16 %v3157
        %v3253 = vunpack.c.h.b16 %v3157
        %v3254 = vunpack.c.l.b16 %v3158
        %v3255 = vunpack.c.h.b16 %v3158
        %v3256 = vunpack.c.l.b16 %v3159
        %v3257 = vunpack.c.h.b16 %v3159
        %v3258 = vunpack.c.l.b16 %v3160
        %v3259 = vunpack.c.h.b16 %v3160
        %v3260 = vunpack.c.l.b16 %v3161
        %v3261 = vunpack.c.h.b16 %v3161
        %v3262 = vunpack.c.l.b16 %v3162
        %v3263 = vunpack.c.h.b16 %v3162
        %v3264 = vunpack.c.l.b16 %v3163
        %v3265 = vunpack.c.h.b16 %v3163
        %v3266 = vunpack.c.l.b16 %v3164
        %v3267 = vunpack.c.h.b16 %v3164
        %v3268 = vunpack.c.l.b16 %v3165
        %v3269 = vunpack.c.h.b16 %v3165
        %v3270 = vunpack.c.l.b16 %v3166
        %v3271 = vunpack.c.h.b16 %v3166
        %v3272 = vunpack.c.l.b16 %v3167
        %v3273 = vunpack.c.h.b16 %v3167
        %v3274 = vunpack.c.l.b16 %v3168
        %v3275 = vunpack.c.h.b16 %v3168
        %v3276 = vunpack.c.l.b16 %v3169
        %v3277 = vunpack.c.h.b16 %v3169
        %v3278 = vunpack.c.l.b16 %v3170
        %v3279 = vunpack.c.h.b16 %v3170
        %v3280 = vunpack.c.l.b16 %v3171
        %v3281 = vunpack.c.h.b16 %v3171
        %v3282 = vunpack.c.l.b16 %v3172
        %v3283 = vunpack.c.h.b16 %v3172
        %v3284 = vunpack.c.l.b16 %v3173
        %v3285 = vunpack.c.h.b16 %v3173
        %v3286 = vunpack.c.l.b16 %v3174
        %v3287 = vunpack.c.h.b16 %v3174
        %v3288 = vunpack.c.l.b16 %v3175
        %v3289 = vunpack.c.h.b16 %v3175
        %v3290 = vunpack.c.l.b16 %v3176
        %v3291 = vunpack.c.h.b16 %v3176
        %v3292 = vunpack.c.l.b16 %v3177
        %v3293 = vunpack.c.h.b16 %v3177
        %v3294 = vunpack.c.l.b16 %v3178
        %v3295 = vunpack.c.h.b16 %v3178
        %v3296 = vunpack.c.l.b16 %v3179
        %v3297 = vunpack.c.h.b16 %v3179
        %v3298 = vpack.c.b16 %v3238, %v3234
        %v3299 = vpack.c.b16 %v3239, %v3235
        %v3300 = vpack.c.b16 %v3240, %v3236
        %v3301 = vpack.c.b16 %v3241, %v3237
        %v3302 = vpack.c.b16 %v3246, %v3242
        %v3303 = vpack.c.b16 %v3247, %v3243
        %v3304 = vpack.c.b16 %v3248, %v3244
        %v3305 = vpack.c.b16 %v3249, %v3245
        %v3306 = vpack.c.b16 %v3254, %v3250
        %v3307 = vpack.c.b16 %v3255, %v3251
        %v3308 = vpack.c.b16 %v3256, %v3252
        %v3309 = vpack.c.b16 %v3257, %v3253
        %v3310 = vpack.c.b16 %v3262, %v3258
        %v3311 = vpack.c.b16 %v3263, %v3259
        %v3312 = vpack.c.b16 %v3264, %v3260
        %v3313 = vpack.c.b16 %v3265, %v3261
        %v3314 = vpack.c.b16 %v3270, %v3266
        %v3315 = vpack.c.b16 %v3271, %v3267
        %v3316 = vpack.c.b16 %v3272, %v3268
        %v3317 = vpack.c.b16 %v3273, %v3269
        %v3318 = vpack.c.b16 %v3278, %v3274
        %v3319 = vpack.c.b16 %v3279, %v3275
        %v3320 = vpack.c.b16 %v3280, %v3276
        %v3321 = vpack.c.b16 %v3281, %v3277
        %v3322 = vpack.c.b16 %v3286, %v3282
        %v3323 = vpack.c.b16 %v3287, %v3283
        %v3324 = vpack.c.b16 %v3288, %v3284
        %v3325 = vpack.c.b16 %v3289, %v3285
        %v3326 = vpack.c.b16 %v3294, %v3290
        %v3327 = vpack.c.b16 %v3295, %v3291
        %v3328 = vpack.c.b16 %v3296, %v3292
        %v3329 = vpack.c.b16 %v3297, %v3293
        %3362 = vmatprep.subr.bf16.mxu0 %v3299
        %3363 = vmatpush1.bf16.msra.mxu0 %v3298
        %3364 = vmatprep.subr.bf16.mxu0 %v3303
        %3365 = vmatpush1.bf16.msra.mxu0 %v3302
        %3366 = vmatprep.subr.bf16.mxu0 %v3307
        %3367 = vmatpush1.bf16.msra.mxu0 %v3306
        %3368 = vmatprep.subr.bf16.mxu0 %v3311
        %3369 = vmatpush1.bf16.msra.mxu0 %v3310
        %3370 = vmatprep.subr.bf16.mxu0 %v3315
        %3371 = vmatpush1.bf16.msra.mxu0 %v3314
        %3372 = vmatprep.subr.bf16.mxu0 %v3319
        %3373 = vmatpush1.bf16.msra.mxu0 %v3318
        %3374 = vmatprep.subr.bf16.mxu0 %v3323
        %3375 = vmatpush1.bf16.msra.mxu0 %v3322
        %3376 = vmatprep.subr.bf16.mxu0 %v3327
        %3377 = vmatpush1.bf16.msra.mxu0 %v3326
        %3378 = vmatprep.subr.bf16.mxu0 0
        %3379 = vmatpush1.bf16.msra.mxu0 0
        %3380 = vmatprep.subr.bf16.mxu0 0
        %3381 = vmatpush1.bf16.msra.mxu0 0
        %3382 = vmatprep.subr.bf16.mxu0 0
        %3383 = vmatpush1.bf16.msra.mxu0 0
        %3384 = vmatprep.subr.bf16.mxu0 0
        %3385 = vmatpush1.bf16.msra.mxu0 0
        %3386 = vmatprep.subr.bf16.mxu0 0
        %3387 = vmatpush1.bf16.msra.mxu0 0
        %3388 = vmatprep.subr.bf16.mxu0 0
        %3389 = vmatpush1.bf16.msra.mxu0 0
        %3390 = vmatprep.subr.bf16.mxu0 0
        %3391 = vmatpush1.bf16.msra.mxu0 0
        %3392 = vmatprep.subr.bf16.mxu0 0
        %3393 = vmatpush1.bf16.msra.mxu0 0
        %3394 = vmatprep.mubr.bf16.mxu0 0
        %3395 = vmatmul.mubr.bf16.gmra.mrb[0].mxu0 %v3147
        %v3396 = vpop.f32.mrb[0].mxu0
        %v3397 = vadd.f32 %v3185, %v3396
        %v3398 = vpop.f32.mrb[0].mxu0
        %v3399 = vadd.f32 %v3189, %v3398
        %v3400 = vpop.f32.mrb[0].mxu0
        %v3401 = vadd.f32 %v3185, %v3400
        %v3402 = vpop.f32.mrb[0].mxu0
        %v3403 = vadd.f32 %v3189, %v3402
        %3404 = vdwg.mxu0
        %3405 = vmatprep.subr.bf16.mxu0 %v3301
        %3406 = vmatpush1.bf16.msra.mxu0 %v3300
        %3407 = vmatprep.subr.bf16.mxu0 %v3305
        %3408 = vmatpush1.bf16.msra.mxu0 %v3304
        %3409 = vmatprep.subr.bf16.mxu0 %v3309
        %3410 = vmatpush1.bf16.msra.mxu0 %v3308
        %3411 = vmatprep.subr.bf16.mxu0 %v3313
        %3412 = vmatpush1.bf16.msra.mxu0 %v3312
        %3413 = vmatprep.subr.bf16.mxu0 %v3317
        %3414 = vmatpush1.bf16.msra.mxu0 %v3316
        %3415 = vmatprep.subr.bf16.mxu0 %v3321
        %3416 = vmatpush1.bf16.msra.mxu0 %v3320
        %3417 = vmatprep.subr.bf16.mxu0 %v3325
        %3418 = vmatpush1.bf16.msra.mxu0 %v3324
        %3419 = vmatprep.subr.bf16.mxu0 %v3329
        %3420 = vmatpush1.bf16.msra.mxu0 %v3328
        %3421 = vmatprep.subr.bf16.mxu0 0
        %3422 = vmatpush1.bf16.msra.mxu0 0
        %3423 = vmatprep.subr.bf16.mxu0 0
        %3424 = vmatpush1.bf16.msra.mxu0 0
        %3425 = vmatprep.subr.bf16.mxu0 0
        %3426 = vmatpush1.bf16.msra.mxu0 0
        %3427 = vmatprep.subr.bf16.mxu0 0
        %3428 = vmatpush1.bf16.msra.mxu0 0
        %3429 = vmatprep.subr.bf16.mxu0 0
        %3430 = vmatpush1.bf16.msra.mxu0 0
        %3431 = vmatprep.subr.bf16.mxu0 0
        %3432 = vmatpush1.bf16.msra.mxu0 0
        %3433 = vmatprep.subr.bf16.mxu0 0
        %3434 = vmatpush1.bf16.msra.mxu0 0
        %3435 = vmatprep.subr.bf16.mxu0 0
        %3436 = vmatpush1.bf16.msra.mxu0 0
        %3437 = vmatprep.mubr.bf16.mxu0 0
        %3438 = vmatmul.mubr.bf16.gmra.mrb[0].mxu0 %v3147
        %v3439 = vpop.f32.mrb[0].mxu0
        %v3440 = vadd.f32 %v3193, %v3439
        %v3441 = vpop.f32.mrb[0].mxu0
        %v3442 = vadd.f32 %v3197, %v3441
        %v3443 = vpop.f32.mrb[0].mxu0
        %v3444 = vadd.f32 %v3193, %v3443
        %v3445 = vpop.f32.mrb[0].mxu0
        %v3446 = vadd.f32 %v3197, %v3445
        %3447 = vdwg.mxu0
        %v3448 = vmax.f32 %v3397, 0.0
        %v3449 = vmax.f32 %v3399, 0.0
        %v3450 = vmax.f32 %v3440, 0.0
        %v3451 = vmax.f32 %v3442, 0.0
        %v3452 = vmax.f32 %v3401, 0.0
        %v3453 = vmax.f32 %v3403, 0.0
        %v3454 = vmax.f32 %v3444, 0.0
        %v3455 = vmax.f32 %v3446, 0.0
        %v3456 = vpack.c.bf16 %v3452, %v3448
        %v3457 = vpack.c.bf16 %v3453, %v3449
        %v3458 = vpack.c.bf16 %v3454, %v3450
        %v3459 = vpack.c.bf16 %v3455, %v3451
        %v3460 = vld [vmem:[#allocation6] sm:$0xf]
        %v3461 = vld [vmem:[#allocation6 + $0x4] sm:$0xf]
        %v3462 = vld [vmem:[#allocation6 + $0x8] sm:$0xf]
        %v3463 = vld [vmem:[#allocation6 + $0xc] sm:$0xf]
        %v3464 = vld [vmem:[#allocation6 + $0x10] sm:$0xf]
        %v3465 = vld [vmem:[#allocation6 + $0x14] sm:$0xf]
        %v3466 = vld [vmem:[#allocation6 + $0x18] sm:$0xf]
        %v3467 = vld [vmem:[#allocation6 + $0x1c] sm:$0xf]
        %v3468 = vld [vmem:[#allocation6 + $0x20] sm:$0xf]
        %v3469 = vld [vmem:[#allocation6 + $0x24] sm:$0xf]
        %v3470 = vld [vmem:[#allocation6 + $0x28] sm:$0xf]
        %v3471 = vld [vmem:[#allocation6 + $0x2c] sm:$0xf]
        %v3472 = vld [vmem:[#allocation6 + $0x30] sm:$0xf]
        %v3473 = vld [vmem:[#allocation6 + $0x34] sm:$0xf]
        %v3474 = vld [vmem:[#allocation6 + $0x38] sm:$0xf]
        %v3475 = vld [vmem:[#allocation6 + $0x3c] sm:$0xf]
        %v3476 = vld [vmem:[#allocation6 + $0x40] sm:$0xf]
        %v3477 = vld [vmem:[#allocation6 + $0x44] sm:$0xf]
        %v3478 = vld [vmem:[#allocation6 + $0x48] sm:$0xf]
        %v3479 = vld [vmem:[#allocation6 + $0x4c] sm:$0xf]
        %v3480 = vld [vmem:[#allocation6 + $0x50] sm:$0xf]
        %v3481 = vld [vmem:[#allocation6 + $0x54] sm:$0xf]
        %v3482 = vld [vmem:[#allocation6 + $0x58] sm:$0xf]
        %v3483 = vld [vmem:[#allocation6 + $0x5c] sm:$0xf]
        %v3484 = vld [vmem:[#allocation6 + $0x60] sm:$0xf]
        %v3485 = vld [vmem:[#allocation6 + $0x64] sm:$0xf]
        %v3486 = vld [vmem:[#allocation6 + $0x68] sm:$0xf]
        %v3487 = vld [vmem:[#allocation6 + $0x6c] sm:$0xf]
        %v3488 = vld [vmem:[#allocation6 + $0x70] sm:$0xf]
        %v3489 = vld [vmem:[#allocation6 + $0x74] sm:$0xf]
        %v3490 = vld [vmem:[#allocation6 + $0x78] sm:$0xf]
        %v3491 = vld [vmem:[#allocation6 + $0x7c] sm:$0xf]
        %v3492 = vld [vmem:[#allocation6 + $0x80] sm:$0xf]
        %v3493 = vld [vmem:[#allocation6 + $0x84] sm:$0xf]
        %v3494 = vld [vmem:[#allocation6 + $0x88] sm:$0xf]
        %v3495 = vld [vmem:[#allocation6 + $0x8c] sm:$0xf]
        %v3496 = vld [vmem:[#allocation6 + $0x90] sm:$0xf]
        %v3497 = vld [vmem:[#allocation6 + $0x94] sm:$0xf]
        %v3498 = vld [vmem:[#allocation6 + $0x98] sm:$0xf]
        %v3499 = vld [vmem:[#allocation6 + $0x9c] sm:$0xf]
        %v3500 = vld [vmem:[#allocation6 + $0xa0] sm:$0xf]
        %v3501 = vld [vmem:[#allocation6 + $0xa4] sm:$0xf]
        %v3502 = vld [vmem:[#allocation6 + $0xa8] sm:$0xf]
        %v3503 = vld [vmem:[#allocation6 + $0xac] sm:$0xf]
        %v3504 = vld [vmem:[#allocation6 + $0xb0] sm:$0xf]
        %v3505 = vld [vmem:[#allocation6 + $0xb4] sm:$0xf]
        %v3506 = vld [vmem:[#allocation6 + $0xb8] sm:$0xf]
        %v3507 = vld [vmem:[#allocation6 + $0xbc] sm:$0xf]
        %v3508 = vld [vmem:[#allocation6 + $0xc0] sm:$0xf]
        %v3509 = vld [vmem:[#allocation6 + $0xc4] sm:$0xf]
        %v3510 = vld [vmem:[#allocation6 + $0xc8] sm:$0xf]
        %v3511 = vld [vmem:[#allocation6 + $0xcc] sm:$0xf]
        %v3512 = vld [vmem:[#allocation6 + $0xd0] sm:$0xf]
        %v3513 = vld [vmem:[#allocation6 + $0xd4] sm:$0xf]
        %v3514 = vld [vmem:[#allocation6 + $0xd8] sm:$0xf]
        %v3515 = vld [vmem:[#allocation6 + $0xdc] sm:$0xf]
        %v3516 = vld [vmem:[#allocation6 + $0xe0] sm:$0xf]
        %v3517 = vld [vmem:[#allocation6 + $0xe4] sm:$0xf]
        %v3518 = vld [vmem:[#allocation6 + $0xe8] sm:$0xf]
        %v3519 = vld [vmem:[#allocation6 + $0xec] sm:$0xf]
        %v3520 = vld [vmem:[#allocation6 + $0xf0] sm:$0xf]
        %v3521 = vld [vmem:[#allocation6 + $0xf4] sm:$0xf]
        %v3522 = vld [vmem:[#allocation6 + $0xf8] sm:$0xf]
        %v3523 = vld [vmem:[#allocation6 + $0xfc] sm:$0xf]
        %v3524 = vld [vmem:[%s11] sm:$0x1]
        %v3526 = vlaneseq
        %v3527 = vshrl.u32 %v3526, 7
        %v3528 = vsub.s32 0, %v3527
        %v3529 = vrot.slane %v3524, %v3528
        %v3595 = vunpack.c.l.b16 %v3460
        %v3596 = vunpack.c.l.b16 %v3461
        %v3597 = vunpack.c.l.b16 %v3462
        %v3598 = vunpack.c.l.b16 %v3463
        %v3599 = vunpack.c.l.b16 %v3464
        %v3600 = vunpack.c.l.b16 %v3465
        %v3601 = vunpack.c.l.b16 %v3466
        %v3602 = vunpack.c.l.b16 %v3467
        %v3603 = vunpack.c.l.b16 %v3468
        %v3604 = vunpack.c.l.b16 %v3469
        %v3605 = vunpack.c.l.b16 %v3470
        %v3606 = vunpack.c.l.b16 %v3471
        %v3607 = vunpack.c.l.b16 %v3472
        %v3608 = vunpack.c.l.b16 %v3473
        %v3609 = vunpack.c.l.b16 %v3474
        %v3610 = vunpack.c.l.b16 %v3475
        %v3611 = vunpack.c.l.b16 %v3476
        %v3612 = vunpack.c.l.b16 %v3477
        %v3613 = vunpack.c.l.b16 %v3478
        %v3614 = vunpack.c.l.b16 %v3479
        %v3615 = vunpack.c.l.b16 %v3480
        %v3616 = vunpack.c.l.b16 %v3481
        %v3617 = vunpack.c.l.b16 %v3482
        %v3618 = vunpack.c.l.b16 %v3483
        %v3619 = vunpack.c.l.b16 %v3484
        %v3620 = vunpack.c.l.b16 %v3485
        %v3621 = vunpack.c.l.b16 %v3486
        %v3622 = vunpack.c.l.b16 %v3487
        %v3623 = vunpack.c.l.b16 %v3488
        %v3624 = vunpack.c.l.b16 %v3489
        %v3625 = vunpack.c.l.b16 %v3490
        %v3626 = vunpack.c.l.b16 %v3491
        %v3627 = vunpack.c.l.b16 %v3492
        %v3628 = vunpack.c.l.b16 %v3493
        %v3629 = vunpack.c.l.b16 %v3494
        %v3630 = vunpack.c.l.b16 %v3495
        %v3631 = vunpack.c.l.b16 %v3496
        %v3632 = vunpack.c.l.b16 %v3497
        %v3633 = vunpack.c.l.b16 %v3498
        %v3634 = vunpack.c.l.b16 %v3499
        %v3635 = vunpack.c.l.b16 %v3500
        %v3636 = vunpack.c.l.b16 %v3501
        %v3637 = vunpack.c.l.b16 %v3502
        %v3638 = vunpack.c.l.b16 %v3503
        %v3639 = vunpack.c.l.b16 %v3504
        %v3640 = vunpack.c.l.b16 %v3505
        %v3641 = vunpack.c.l.b16 %v3506
        %v3642 = vunpack.c.l.b16 %v3507
        %v3643 = vunpack.c.l.b16 %v3508
        %v3644 = vunpack.c.l.b16 %v3509
        %v3645 = vunpack.c.l.b16 %v3510
        %v3646 = vunpack.c.l.b16 %v3511
        %v3647 = vunpack.c.l.b16 %v3512
        %v3648 = vunpack.c.l.b16 %v3513
        %v3649 = vunpack.c.l.b16 %v3514
        %v3650 = vunpack.c.l.b16 %v3515
        %v3651 = vunpack.c.l.b16 %v3516
        %v3652 = vunpack.c.l.b16 %v3517
        %v3653 = vunpack.c.l.b16 %v3518
        %v3654 = vunpack.c.l.b16 %v3519
        %v3655 = vunpack.c.l.b16 %v3520
        %v3656 = vunpack.c.l.b16 %v3521
        %v3657 = vunpack.c.l.b16 %v3522
        %v3658 = vunpack.c.l.b16 %v3523
        %v3659 = vpack.c.b16 %v3596, %v3595
        %v3660 = vpack.c.b16 %v3598, %v3597
        %v3661 = vpack.c.b16 %v3600, %v3599
        %v3662 = vpack.c.b16 %v3602, %v3601
        %v3663 = vpack.c.b16 %v3604, %v3603
        %v3664 = vpack.c.b16 %v3606, %v3605
        %v3665 = vpack.c.b16 %v3608, %v3607
        %v3666 = vpack.c.b16 %v3610, %v3609
        %v3667 = vpack.c.b16 %v3612, %v3611
        %v3668 = vpack.c.b16 %v3614, %v3613
        %v3669 = vpack.c.b16 %v3616, %v3615
        %v3670 = vpack.c.b16 %v3618, %v3617
        %v3671 = vpack.c.b16 %v3620, %v3619
        %v3672 = vpack.c.b16 %v3622, %v3621
        %v3673 = vpack.c.b16 %v3624, %v3623
        %v3674 = vpack.c.b16 %v3626, %v3625
        %v3675 = vpack.c.b16 %v3628, %v3627
        %v3676 = vpack.c.b16 %v3630, %v3629
        %v3677 = vpack.c.b16 %v3632, %v3631
        %v3678 = vpack.c.b16 %v3634, %v3633
        %v3679 = vpack.c.b16 %v3636, %v3635
        %v3680 = vpack.c.b16 %v3638, %v3637
        %v3681 = vpack.c.b16 %v3640, %v3639
        %v3682 = vpack.c.b16 %v3642, %v3641
        %v3683 = vpack.c.b16 %v3644, %v3643
        %v3684 = vpack.c.b16 %v3646, %v3645
        %v3685 = vpack.c.b16 %v3648, %v3647
        %v3686 = vpack.c.b16 %v3650, %v3649
        %v3687 = vpack.c.b16 %v3652, %v3651
        %v3688 = vpack.c.b16 %v3654, %v3653
        %v3689 = vpack.c.b16 %v3656, %v3655
        %v3690 = vpack.c.b16 %v3658, %v3657
        %3723 = vmatprep.subr.bf16.mxu0 0
        %3724 = vmatpush1.bf16.msra.mxu0 %v3659
        %3725 = vmatprep.subr.bf16.mxu0 0
        %3726 = vmatpush1.bf16.msra.mxu0 %v3660
        %3727 = vmatprep.subr.bf16.mxu0 0
        %3728 = vmatpush1.bf16.msra.mxu0 %v3661
        %3729 = vmatprep.subr.bf16.mxu0 0
        %3730 = vmatpush1.bf16.msra.mxu0 %v3662
        %3731 = vmatprep.subr.bf16.mxu0 0
        %3732 = vmatpush1.bf16.msra.mxu0 %v3663
        %3733 = vmatprep.subr.bf16.mxu0 0
        %3734 = vmatpush1.bf16.msra.mxu0 %v3664
        %3735 = vmatprep.subr.bf16.mxu0 0
        %3736 = vmatpush1.bf16.msra.mxu0 %v3665
        %3737 = vmatprep.subr.bf16.mxu0 0
        %3738 = vmatpush1.bf16.msra.mxu0 %v3666
        %3739 = vmatprep.subr.bf16.mxu0 0
        %3740 = vmatpush1.bf16.msra.mxu0 %v3667
        %3741 = vmatprep.subr.bf16.mxu0 0
        %3742 = vmatpush1.bf16.msra.mxu0 %v3668
        %3743 = vmatprep.subr.bf16.mxu0 0
        %3744 = vmatpush1.bf16.msra.mxu0 %v3669
        %3745 = vmatprep.subr.bf16.mxu0 0
        %3746 = vmatpush1.bf16.msra.mxu0 %v3670
        %3747 = vmatprep.subr.bf16.mxu0 0
        %3748 = vmatpush1.bf16.msra.mxu0 %v3671
        %3749 = vmatprep.subr.bf16.mxu0 0
        %3750 = vmatpush1.bf16.msra.mxu0 %v3672
        %3751 = vmatprep.subr.bf16.mxu0 0
        %3752 = vmatpush1.bf16.msra.mxu0 %v3673
        %3753 = vmatprep.subr.bf16.mxu0 0
        %3754 = vmatpush1.bf16.msra.mxu0 %v3674
        %3755 = vmatprep.mubr.bf16.mxu0 %v3457
        %3756 = vmatmul.mubr.bf16.gmra.mrb[0].mxu0 %v3456
        %v3757 = vpop.f32.mrb[0].mxu0
        %v3758 = vadd.f32 %v3529, %v3757
        %v3759 = vpop.f32.mrb[0].mxu0
        %v3760 = vpop.f32.mrb[0].mxu0
        %v3761 = vadd.f32 %v3529, %v3760
        %v3762 = vpop.f32.mrb[0].mxu0
        %3763 = vdwg.mxu0
        %3764 = vmatprep.subr.bf16.mxu0 0
        %3765 = vmatpush1.bf16.msra.mxu0 %v3675
        %3766 = vmatprep.subr.bf16.mxu0 0
        %3767 = vmatpush1.bf16.msra.mxu0 %v3676
        %3768 = vmatprep.subr.bf16.mxu0 0
        %3769 = vmatpush1.bf16.msra.mxu0 %v3677
        %3770 = vmatprep.subr.bf16.mxu0 0
        %3771 = vmatpush1.bf16.msra.mxu0 %v3678
        %3772 = vmatprep.subr.bf16.mxu0 0
        %3773 = vmatpush1.bf16.msra.mxu0 %v3679
        %3774 = vmatprep.subr.bf16.mxu0 0
        %3775 = vmatpush1.bf16.msra.mxu0 %v3680
        %3776 = vmatprep.subr.bf16.mxu0 0
        %3777 = vmatpush1.bf16.msra.mxu0 %v3681
        %3778 = vmatprep.subr.bf16.mxu0 0
        %3779 = vmatpush1.bf16.msra.mxu0 %v3682
        %3780 = vmatprep.subr.bf16.mxu0 0
        %3781 = vmatpush1.bf16.msra.mxu0 %v3683
        %3782 = vmatprep.subr.bf16.mxu0 0
        %3783 = vmatpush1.bf16.msra.mxu0 %v3684
        %3784 = vmatprep.subr.bf16.mxu0 0
        %3785 = vmatpush1.bf16.msra.mxu0 %v3685
        %3786 = vmatprep.subr.bf16.mxu0 0
        %3787 = vmatpush1.bf16.msra.mxu0 %v3686
        %3788 = vmatprep.subr.bf16.mxu0 0
        %3789 = vmatpush1.bf16.msra.mxu0 %v3687
        %3790 = vmatprep.subr.bf16.mxu0 0
        %3791 = vmatpush1.bf16.msra.mxu0 %v3688
        %3792 = vmatprep.subr.bf16.mxu0 0
        %3793 = vmatpush1.bf16.msra.mxu0 %v3689
        %3794 = vmatprep.subr.bf16.mxu0 0
        %3795 = vmatpush1.bf16.msra.mxu0 %v3690
        %3796 = vmatprep.mubr.bf16.mxu0 %v3459
        %3797 = vmatmul.mubr.bf16.gmra.mrb[0].mxu0 %v3458
        %v3798 = vpop.f32.mrb[0].mxu0
        %v3799 = vadd.f32 %v3758, %v3798
        %v3800 = vpop.f32.mrb[0].mxu0
        %v3801 = vpop.f32.mrb[0].mxu0
        %v3802 = vadd.f32 %v3761, %v3801
        %v3803 = vpop.f32.mrb[0].mxu0
        %3804 = vdwg.mxu0
        %v3805 = vadd.f32 %v3105, %v3799
        %v3806 = vadd.f32 %v3106, %v3802
        %3807 = vst [vmem:[%s457] sm:$0xff] %v3805
        %3808 = vst [vmem:[%s457 + $0x8] sm:$0xff] %v3806
        %p3809 = scmp.lt.s32.totalorder %s25, 1
        %s3810 = scalar_select %p3809, %s25, 1
        %s3811 = smul.addr %s3810, 2
        %s3812 = smul.addr %s3811, 8
        %s3813 = scalar_lea.vmem %s12, %s3812
        // Predicated region
        $region81: #{gpt_forward.7} parent=67 // pred_check
          %p3814 = pneg %p300
        $region82: #{gpt_forward.7} parent=67 // pred_check_branch
          %3816 = sbr.rel (%p3814) target = $region84
        $region83: #{gpt_forward.7} parent=67 // pred_region
          _
        $region84: #{gpt_forward.7} parent=67 // pred_fallthru
          _
      $region68: #{gpt_forward.7} parent=5 // pred_fallthru
        _
      %p3817 = scmp.le.s32.totalorder 2, %s20
      // Predicated region
      $region85: #{gpt_forward.7} parent=5 // pred_check
        %p3818 = pneg %p3817
      $region86: #{gpt_forward.7} parent=5 // pred_check_branch
        %3820 = sbr.rel (%p3818) target = $region88
      $region87: #{gpt_forward.7} parent=5 // pred_region
        %s3821 = ssub.s32 %s20, 2
        // Predicated region
        $region89: #{gpt_forward.7} parent=87 // pred_check
          %p3822 = pneg %p306
        $region90: #{gpt_forward.7} parent=87 // pred_check_branch
          %3824 = sbr.rel (%p3822) target = $region92
        $region91: #{gpt_forward.7} parent=87 // pred_region
          %p3825 = scmp.lt.s32.totalorder %s26, 1
          %s3826 = scalar_select %p3825, %s26, 1
          %s3827 = smul.addr %s3826, 2
          %s3828 = smul.addr %s3827, 8
          %s3829 = scalar_lea.vmem %s12, %s3828
        $region92: #{gpt_forward.7} parent=87 // pred_fallthru
          _
      $region88: #{gpt_forward.7} parent=5 // pred_fallthru
        _
    $region6: #{gpt_forward.7} parent=1 // loop_footer
      %s24 = sadd.s32 1, %s20
    $region7: #{gpt_forward.7} parent=1 // loop_footer_branch
      %19 = sbr.rel target = $region3
    $region8: #{gpt_forward.7} parent=1 // loop_exit
      _
    %3830 = vsyncpa [#allocation3], 1
    %s3831 = scalar_lea.sflag [#allocation3], 1
    %3832 = vsyncpa %s3831, 1
    %3833 = vsyncpa [#allocation5], 1

</llo_original>
